<compile_context>
chip_gen: v6e
topology: v6e:2x2x1
jax: 0.10.0
libtpu: 0.0.40
codegen_flags: <defaults>
</compile_context>

<pallas_src>
import numpy as np
import jax
import jax.numpy as jnp
from jax.experimental import pallas as pl
from jax.experimental.pallas import tpu as pltpu


# --------------------------------------------------------------------------- #
# Fused kernel: attention + LSTMCell recurrence + logits MLP epilogue.
# Grid: one program per batch tile of BB rows.
# --------------------------------------------------------------------------- #
def caption_kernel(feat_ref, emb_ref,
                   w_init_ref, b_init_ref,
                   wk_ref, bk_ref,
                   wih_e_ref, wih_a_ref, whh_ref, bg_ref,
                   wlog_ref, blog_ref,
                   logits_ref, att_ref,
                   rec_ref):
    feats = feat_ref[...]                                  # [BB, O, C]
    embs = emb_ref[...]                                    # [BB, T, E]
    BB, O, C = feats.shape
    T, E = embs.shape[1], embs.shape[2]
    U = whh_ref.shape[0]
    Krec = rec_ref.shape[-1]                               # 128 (padded rec width)

    # Hoist loop-invariant weights (JAX does not CSE broadcasts).
    w_ih_att = wih_a_ref[...]                              # [C, 4U]
    w_hh = whh_ref[...]                                    # [U, 4U]

    # Fused initial-state projection: [cell | hid] in a single MXU matmul.
    feats_mean = jnp.mean(feats, axis=1)                   # [BB, C]
    init = jnp.dot(feats_mean, w_init_ref[...],
                   preferred_element_type=jnp.float32) + b_init_ref[...]
    cell = init[:, :U]
    hid = init[:, U:]

    # Attention keys: Linear(C -> U) over all objects (one MXU matmul).
    key = (jnp.dot(feats.reshape(BB * O, C), wk_ref[...],
                   preferred_element_type=jnp.float32)
           + bk_ref[...]).reshape(BB, O, U)

    # Hoisted embedding -> gate contribution (one M = BB*T matmul, bias fused),
    # sliced [BB, 4U] per timestep inside the loop.
    emb_gates = (jnp.dot(embs.reshape(BB * T, E), wih_e_ref[...],
                         preferred_element_type=jnp.float32)
                 + bg_ref[...]).reshape(BB, T, 4 * U)

    inv_sqrt_u = 1.0 / (U ** 0.5)
    pad_w = Krec - (U + C + E)
    pad = jnp.zeros((BB, pad_w), jnp.float32) if pad_w > 0 else None

    # Static loop is fine at toy caption length (T=8); switch to
    # lax.fori_loop(..., unroll=True) carrying (hid, cell) for long captions
    # to bound vreg live ranges.
    for t in range(T):
        emb_t = embs[:, t, :]                              # [BB, E]

        # ---- scaled dot-product attention -------------------------------- #
        # Batched matvecs (M=1 per batch item): VPU broadcast-mul + XLU reduce
        # keeps MXU push/pop latency off the serial recurrence path.  Use the
        # MXU einsum form instead when U / O / C are >= 128.
        scores = jnp.sum(hid[:, None, :] * key, axis=-1) * inv_sqrt_u   # [BB, O]
        scores = scores - jnp.max(scores, axis=-1, keepdims=True)
        p = jnp.exp(scores)
        denom = jnp.sum(p, axis=-1, keepdims=True)
        r = pl.reciprocal(denom, approx=True)              # EUP slot
        r = r * (2.0 - denom * r)                          # Newton step -> f32-accurate
        w = p * r                                          # softmax weights [BB, O]
        a = jnp.sum(w[:, :, None] * feats, axis=1)         # context [BB, C]

        # ---- LSTMCell (torch gate order i,f,g,o); emb term hoisted above -- #
        gates = (emb_gates[:, t, :]
                 + jnp.dot(a, w_ih_att, preferred_element_type=jnp.float32)
                 + jnp.dot(hid, w_hh, preferred_element_type=jnp.float32))
        # Nonlinearities only on the slices that need them (single EUP slot;
        # avoids doubling transcendental pushes at production U).
        i_g = jax.nn.sigmoid(gates[:, 0:U])
        f_g = jax.nn.sigmoid(gates[:, U:2 * U])
        g_g = jnp.tanh(gates[:, 2 * U:3 * U])
        o_g = jax.nn.sigmoid(gates[:, 3 * U:4 * U])
        cell = f_g * cell + i_g * g_g
        hid = o_g * jnp.tanh(cell)

        # One lane-dense 128-wide store per step: rec = [hid | a | emb | 0pad].
        parts = [hid, a, emb_t] + ([pad] if pad is not None else [])
        rec_row = jnp.concatenate(parts, axis=-1)          # [BB, Krec]
        rec_ref[:, t:t + 1, :] = rec_row[:, None, :]
        # Narrow (O-lane) side output, kept separate per the review.
        att_ref[:, t:t + 1, :] = w[:, None, :]

    # ---- logits epilogue: single K=128 MXU matmul against the repacked ---- #
    # [Krec, Npad] weight (zero rows cover the rec pad lanes).
    rec = rec_ref[...].reshape(BB * T, Krec)
    logits = (jnp.dot(rec, wlog_ref[...], preferred_element_type=jnp.float32)
              + blog_ref[...])
    logits_ref[...] = logits.reshape(BB, T, -1)


def caption_net_forward(params, image_features, captions_ix):
    """image_features: [B, cnn_channels, H*W]; captions_ix: [B, T] int32."""
    B, C, O = image_features.shape
    T = captions_ix.shape[1]
    U = params["w_h0"].shape[1]
    E = params["emb"].shape[1]
    n_tokens = params["w_logits"].shape[1]

    # --- glue: embedding lookup with max_norm=5 renormalisation ------------- #
    rows = params["emb"][captions_ix]                      # [B, T, E]
    norms = jnp.sqrt(jnp.sum(rows * rows, axis=-1, keepdims=True))
    embs = rows * jnp.minimum(1.0, 5.0 / (norms + 1e-7))

    feats = jnp.transpose(image_features, (0, 2, 1))       # [B, O, C]

    # --- pad batch to a sublane multiple of 8; padded rows sliced off -------- #
    BB = 8                                                 # batch tile (grid axis)
    Bp = -(-B // BB) * BB
    if Bp != B:
        feats = jnp.pad(feats, ((0, Bp - B), (0, 0), (0, 0)))
        embs = jnp.pad(embs, ((0, Bp - B), (0, 0), (0, 0)))

    # --- one-time weight re-packing (cheap XLA ops) --------------------------- #
    w_init = jnp.concatenate([params["w_c0"], params["w_h0"]], axis=1)   # [C, 2U]
    b_init = jnp.concatenate([params["b_c0"], params["b_h0"]], axis=1)   # [1, 2U]
    w_ih_emb = params["w_ih"][:E, :]                                     # [E, 4U]
    w_ih_att = params["w_ih"][E:, :]                                     # [C, 4U]
    b_gates = params["b_ih"] + params["b_hh"]                            # [1, 4U]

    # Fused rec row layout is [hid | a | emb | 0pad] padded to Krec lanes.
    # Repack w_logits to [Krec, Npad]: zero rows for the pad lanes, vocab padded
    # to a lane multiple of 128 so the logits store is lane-dense.
    Krec = -(-(U + C + E) // 128) * 128
    Npad = -(-n_tokens // 128) * 128
    w_log_packed = jnp.zeros((Krec, Npad), jnp.float32)
    w_log_packed = w_log_packed.at[:U + C + E, :n_tokens].set(params["w_logits"])
    b_log = jnp.zeros((1, Npad), jnp.float32)
    b_log = b_log.at[:, :n_tokens].set(params["b_logits"])
    # NOTE(perf): at production vocab cast w_log_packed / b_log to bf16 (fp8 on
    # v7x) and stream them in a dedicated gridded logits kernel; kept f32 +
    # fused here so the 1e-3 check against the f32 reference stays meaningful.

    grid = (Bp // BB,)
    full = lambda shp: pl.BlockSpec(shp, lambda i, _s=shp: (0,) * len(_s))

    rec_inputs = (feats, embs, w_init, b_init,
                  params["w_key"], params["b_key"],
                  w_ih_emb, w_ih_att, params["w_hh"], b_gates,
                  w_log_packed, b_log)

    logits_pad, att_map = pl.pallas_call(
        caption_kernel,
        out_shape=(jax.ShapeDtypeStruct((Bp, T, Npad), jnp.float32),
                   jax.ShapeDtypeStruct((Bp, T, O), jnp.float32)),
        grid=grid,
        in_specs=[pl.BlockSpec((BB, O, C), lambda i: (i, 0, 0)),
                  pl.BlockSpec((BB, T, E), lambda i: (i, 0, 0)),
                  full(w_init.shape), full(b_init.shape),
                  full(params["w_key"].shape), full(params["b_key"].shape),
                  full(w_ih_emb.shape), full(w_ih_att.shape),
                  full(params["w_hh"].shape), full(b_gates.shape),
                  full(w_log_packed.shape), full(b_log.shape)],
        out_specs=(pl.BlockSpec((BB, T, Npad), lambda i: (i, 0, 0)),
                   pl.BlockSpec((BB, T, O), lambda i: (i, 0, 0))),
        scratch_shapes=[pltpu.VMEM((BB, T, Krec), jnp.float32)],
        compiler_params=pltpu.CompilerParams(
            dimension_semantics=("parallel",),      # shards batch tiles over v7x's 2 TCs
            vmem_limit_bytes=32 << 20),
    )(*rec_inputs)

    logits = logits_pad[:B, :, :n_tokens]
    return logits, att_map[:B]


# --------------------------------------------------------------------------- #
# Pure-JAX reference mirroring the PyTorch forward, for validation.
# --------------------------------------------------------------------------- #
def reference_forward(params, image_features, captions_ix):
    rows = params["emb"][captions_ix]
    norms = jnp.sqrt(jnp.sum(rows * rows, axis=-1, keepdims=True))
    embs = rows * jnp.minimum(1.0, 5.0 / (norms + 1e-7))
    feats = jnp.transpose(image_features, (0, 2, 1))
    feats_mean = jnp.mean(feats, axis=1)
    cell = feats_mean @ params["w_c0"] + params["b_c0"]
    hid = feats_mean @ params["w_h0"] + params["b_h0"]
    key = feats @ params["w_key"] + params["b_key"]
    U = hid.shape[1]
    logits_list, att_list = [], []
    for t in range(captions_ix.shape[1]):
        emb_t = embs[:, t]
        scores = jnp.einsum('bu,bou->bo', hid, key) / np.sqrt(U)
        w = jax.nn.softmax(scores, axis=-1)
        a = jnp.einsum('bo,boc->bc', w, feats)
        x = jnp.concatenate([emb_t, a], axis=1)
        gates = (x @ params["w_ih"] + params["b_ih"]
                 + hid @ params["w_hh"] + params["b_hh"])
        i_g, f_g, g_g, o_g = jnp.split(gates, 4, axis=1)
        i_g, f_g, o_g = jax.nn.sigmoid(i_g), jax.nn.sigmoid(f_g), jax.nn.sigmoid(o_g)
        g_g = jnp.tanh(g_g)
        cell = f_g * cell + i_g * g_g
        hid = o_g * jnp.tanh(cell)
        rec = jnp.concatenate([hid, a, emb_t], axis=1)
        logits_list.append(rec @ params["w_logits"] + params["b_logits"])
        att_list.append(w)
    return jnp.stack(logits_list, axis=1), jnp.stack(att_list, axis=1)


def init_params(key, n_tokens, emb_size, lstm_units, cnn_channels):
    ks = jax.random.split(key, 7)

    def lin(k, fan_in, fan_out):
        bound = 1.0 / np.sqrt(fan_in)
        kw, kb = jax.random.split(k)
        w = jax.random.uniform(kw, (fan_in, fan_out), jnp.float32, -bound, bound)
        b = jax.random.uniform(kb, (1, fan_out), jnp.float32, -bound, bound)
        return w, b

    w_c0, b_c0 = lin(ks[0], cnn_channels, lstm_units)
    w_h0, b_h0 = lin(ks[1], cnn_channels, lstm_units)
    w_key, b_key = lin(ks[2], cnn_channels, lstm_units)
    w_ih, b_ih = lin(ks[3], cnn_channels + emb_size, 4 * lstm_units)
    w_hh, b_hh = lin(ks[4], lstm_units, 4 * lstm_units)
    w_logits, b_logits = lin(ks[5], cnn_channels + emb_size + lstm_units, n_tokens)
    emb = jax.random.normal(ks[6], (n_tokens, emb_size), jnp.float32)
    return dict(w_c0=w_c0, b_c0=b_c0, w_h0=w_h0, b_h0=b_h0,
                w_key=w_key, b_key=b_key,
                w_ih=w_ih, b_ih=b_ih, w_hh=w_hh, b_hh=b_hh,
                w_logits=w_logits, b_logits=b_logits, emb=emb)


if __name__ == "__main__":
    # Small shapes consistent with the forward:
    # batch=2, cnn_channels=32, H*W=16, seq_len=8, emb_size=16, lstm_units=32, n_tokens=64
    B, C, O, T = 2, 32, 16, 8
    EMB, UNITS, N_TOK = 16, 32, 64

    root = jax.random.PRNGKey(0)
    k_param, k_feat, k_cap = jax.random.split(root, 3)

    params = init_params(k_param, N_TOK, EMB, UNITS, C)
    image_features = jax.random.normal(k_feat, (B, C, O), jnp.float32)
    captions_ix = jax.random.randint(k_cap, (B, T), 0, N_TOK, dtype=jnp.int32)

    logits, att_map = caption_net_forward(params, image_features, captions_ix)
    logits = jax.block_until_ready(logits)
    att_map = jax.block_until_ready(att_map)

    # Validate against the pure-JAX reference.
    ref_logits, ref_att = reference_forward(params, image_features, captions_ix)
    np.testing.assert_allclose(np.asarray(logits), np.asarray(ref_logits),
                               rtol=1e-3, atol=1e-3)
    np.testing.assert_allclose(np.asarray(att_map), np.asarray(ref_att),
                               rtol=1e-3, atol=1e-3)

    assert logits.shape == (B, T, N_TOK)
    assert att_map.shape == (B, T, O)
    print("KERNEL_OK")
</pallas_src>

<mosaic_0001>
module attributes {stable_mosaic.version = 11 : i64} {
  func.func @caption_kernel(%arg0: i32, %arg1: memref<8x16x32xf32, #tpu.memory_space<vmem>>, %arg2: memref<8x8x16xf32, #tpu.memory_space<vmem>>, %arg3: memref<32x64xf32, #tpu.memory_space<vmem>>, %arg4: memref<1x64xf32, #tpu.memory_space<vmem>>, %arg5: memref<32x32xf32, #tpu.memory_space<vmem>>, %arg6: memref<1x32xf32, #tpu.memory_space<vmem>>, %arg7: memref<16x128xf32, #tpu.memory_space<vmem>>, %arg8: memref<32x128xf32, #tpu.memory_space<vmem>>, %arg9: memref<32x128xf32, #tpu.memory_space<vmem>>, %arg10: memref<1x128xf32, #tpu.memory_space<vmem>>, %arg11: memref<128x128xf32, #tpu.memory_space<vmem>>, %arg12: memref<1x128xf32, #tpu.memory_space<vmem>>, %arg13: memref<8x8x128xf32, #tpu.memory_space<vmem>>, %arg14: memref<8x8x16xf32, #tpu.memory_space<vmem>>, %arg15: memref<8x8x128xf32, #tpu.memory_space<vmem>>) attributes {dimension_semantics = [#tpu.dimension_semantics<parallel>], iteration_bounds = array<i64: 1>, scalar_prefetch = 0 : i64, scratch_operands = 1 : i64, tpu.core_type = #tpu.core_type<tc>, window_params = [{transform_indices = @transform_0, window_bounds = array<i64: 8, 16, 32>}, {transform_indices = @transform_1, window_bounds = array<i64: 8, 8, 16>}, {pipeline_mode = #tpu.pipeline_mode<synchronous>, transform_indices = @transform_2, window_bounds = array<i64: 32, 64>}, {pipeline_mode = #tpu.pipeline_mode<synchronous>, transform_indices = @transform_3, window_bounds = array<i64: 1, 64>}, {pipeline_mode = #tpu.pipeline_mode<synchronous>, transform_indices = @transform_4, window_bounds = array<i64: 32, 32>}, {pipeline_mode = #tpu.pipeline_mode<synchronous>, transform_indices = @transform_5, window_bounds = array<i64: 1, 32>}, {pipeline_mode = #tpu.pipeline_mode<synchronous>, transform_indices = @transform_6, window_bounds = array<i64: 16, 128>}, {pipeline_mode = #tpu.pipeline_mode<synchronous>, transform_indices = @transform_7, window_bounds = array<i64: 32, 128>}, {pipeline_mode = #tpu.pipeline_mode<synchronous>, transform_indices = @transform_8, window_bounds = array<i64: 32, 128>}, {pipeline_mode = #tpu.pipeline_mode<synchronous>, transform_indices = @transform_9, window_bounds = array<i64: 1, 128>}, {pipeline_mode = #tpu.pipeline_mode<synchronous>, transform_indices = @transform_10, window_bounds = array<i64: 128, 128>}, {pipeline_mode = #tpu.pipeline_mode<synchronous>, transform_indices = @transform_11, window_bounds = array<i64: 1, 128>}, {transform_indices = @transform_12, window_bounds = array<i64: 8, 8, 128>}, {transform_indices = @transform_13, window_bounds = array<i64: 8, 8, 16>}]} {
    %c0 = arith.constant 0 : index
    %c0_0 = arith.constant 0 : index
    %c0_1 = arith.constant 0 : index
    %0 = vector.load %arg1[%c0, %c0_0, %c0_1] : memref<8x16x32xf32, #tpu.memory_space<vmem>>, vector<8x16x32xf32>
    %c0_2 = arith.constant 0 : index
    %c0_3 = arith.constant 0 : index
    %c0_4 = arith.constant 0 : index
    %1 = vector.load %arg2[%c0_2, %c0_3, %c0_4] : memref<8x8x16xf32, #tpu.memory_space<vmem>>, vector<8x8x16xf32>
    %c0_5 = arith.constant 0 : index
    %c0_6 = arith.constant 0 : index
    %2 = vector.load %arg8[%c0_5, %c0_6] : memref<32x128xf32, #tpu.memory_space<vmem>>, vector<32x128xf32>
    %c0_7 = arith.constant 0 : index
    %c0_8 = arith.constant 0 : index
    %3 = vector.load %arg9[%c0_7, %c0_8] : memref<32x128xf32, #tpu.memory_space<vmem>>, vector<32x128xf32>
    %cst = arith.constant dense<0.000000e+00> : vector<8x32xf32>
    %4 = vector.multi_reduction <add>, %0, %cst [1] : vector<8x16x32xf32> to vector<8x32xf32>
    %cst_9 = arith.constant 1.600000e+01 : f32
    %5 = vector.broadcast %cst_9 : f32 to vector<8x32xf32>
    %6 = arith.divf %4, %5 : vector<8x32xf32>
    %c0_10 = arith.constant 0 : index
    %c0_11 = arith.constant 0 : index
    %7 = vector.load %arg3[%c0_10, %c0_11] : memref<32x64xf32, #tpu.memory_space<vmem>>, vector<32x64xf32>
    %cst_12 = arith.constant dense<0.000000e+00> : vector<8x64xf32>
    %8 = tpu.matmul %6, %7, %cst_12 {dimension_numbers = #tpu.dot_dimension_numbers<[1], [0], [0], [1], [0, 0, 1, 1], [], []>} : vector<8x32xf32>, vector<32x64xf32>, vector<8x64xf32> -> vector<8x64xf32>
    %c0_13 = arith.constant 0 : index
    %c0_14 = arith.constant 0 : index
    %9 = vector.load %arg4[%c0_13, %c0_14] : memref<1x64xf32, #tpu.memory_space<vmem>>, vector<1x64xf32>
    %10 = vector.broadcast %9 : vector<1x64xf32> to vector<8x64xf32>
    %11 = arith.addf %8, %10 : vector<8x64xf32>
    %12 = vector.extract_strided_slice %11 {offsets = [0, 0], sizes = [8, 32], strides = [1, 1]} : vector<8x64xf32> to vector<8x32xf32>
    %13 = vector.extract_strided_slice %11 {offsets = [0, 32], sizes = [8, 32], strides = [1, 1]} : vector<8x64xf32> to vector<8x32xf32>
    %14 = vector.shape_cast %0 : vector<8x16x32xf32> to vector<128x32xf32>
    %c0_15 = arith.constant 0 : index
    %c0_16 = arith.constant 0 : index
    %15 = vector.load %arg5[%c0_15, %c0_16] : memref<32x32xf32, #tpu.memory_space<vmem>>, vector<32x32xf32>
    %cst_17 = arith.constant dense<0.000000e+00> : vector<128x32xf32>
    %16 = tpu.matmul %14, %15, %cst_17 {dimension_numbers = #tpu.dot_dimension_numbers<[1], [0], [0], [1], [0, 0, 1, 1], [], []>} : vector<128x32xf32>, vector<32x32xf32>, vector<128x32xf32> -> vector<128x32xf32>
    %c0_18 = arith.constant 0 : index
    %c0_19 = arith.constant 0 : index
    %17 = vector.load %arg6[%c0_18, %c0_19] : memref<1x32xf32, #tpu.memory_space<vmem>>, vector<1x32xf32>
    %18 = vector.broadcast %17 : vector<1x32xf32> to vector<128x32xf32>
    %19 = arith.addf %16, %18 : vector<128x32xf32>
    %20 = vector.shape_cast %19 : vector<128x32xf32> to vector<8x16x32xf32>
    %21 = vector.shape_cast %1 : vector<8x8x16xf32> to vector<64x16xf32>
    %c0_20 = arith.constant 0 : index
    %c0_21 = arith.constant 0 : index
    %22 = vector.load %arg7[%c0_20, %c0_21] : memref<16x128xf32, #tpu.memory_space<vmem>>, vector<16x128xf32>
    %cst_22 = arith.constant dense<0.000000e+00> : vector<64x128xf32>
    %23 = tpu.matmul %21, %22, %cst_22 {dimension_numbers = #tpu.dot_dimension_numbers<[1], [0], [0], [1], [0, 0, 1, 1], [], []>} : vector<64x16xf32>, vector<16x128xf32>, vector<64x128xf32> -> vector<64x128xf32>
    %c0_23 = arith.constant 0 : index
    %c0_24 = arith.constant 0 : index
    %24 = vector.load %arg10[%c0_23, %c0_24] : memref<1x128xf32, #tpu.memory_space<vmem>>, vector<1x128xf32>
    %25 = vector.broadcast %24 : vector<1x128xf32> to vector<64x128xf32>
    %26 = arith.addf %23, %25 : vector<64x128xf32>
    %27 = vector.shape_cast %26 : vector<64x128xf32> to vector<8x8x128xf32>
    %cst_25 = arith.constant 0.000000e+00 : f32
    %28 = vector.broadcast %cst_25 : f32 to vector<8x48xf32>
    %29 = vector.extract_strided_slice %1 {offsets = [0, 0, 0], sizes = [8, 1, 16], strides = [1, 1, 1]} : vector<8x8x16xf32> to vector<8x1x16xf32>
    %30 = vector.shape_cast %29 : vector<8x1x16xf32> to vector<8x16xf32>
    %31 = vector.shape_cast %13 : vector<8x32xf32> to vector<8x1x32xf32>
    %32 = vector.broadcast %31 : vector<8x1x32xf32> to vector<8x16x32xf32>
    %33 = arith.mulf %32, %20 : vector<8x16x32xf32>
    %cst_26 = arith.constant dense<0.000000e+00> : vector<8x16xf32>
    %34 = vector.multi_reduction <add>, %33, %cst_26 [2] : vector<8x16x32xf32> to vector<8x16xf32>
    %cst_27 = arith.constant 0.176776692 : f32
    %35 = vector.broadcast %cst_27 : f32 to vector<8x16xf32>
    %36 = arith.mulf %34, %35 : vector<8x16xf32>
    %cst_28 = arith.constant dense<0xFF800000> : vector<8xf32>
    %37 = vector.multi_reduction <maximumf>, %36, %cst_28 [1] : vector<8x16xf32> to vector<8xf32>
    %38 = vector.shape_cast %37 : vector<8xf32> to vector<8x1xf32>
    %39 = vector.broadcast %38 : vector<8x1xf32> to vector<8x16xf32>
    %40 = arith.subf %36, %39 : vector<8x16xf32>
    %41 = math.exp %40 : vector<8x16xf32>
    %cst_29 = arith.constant dense<0.000000e+00> : vector<8xf32>
    %42 = vector.multi_reduction <add>, %41, %cst_29 [1] : vector<8x16xf32> to vector<8xf32>
    %43 = vector.shape_cast %42 : vector<8xf32> to vector<8x1xf32>
    %44 = tpu.reciprocal %43 {approx = true} : vector<8x1xf32> -> vector<8x1xf32>
    %45 = arith.mulf %43, %44 : vector<8x1xf32>
    %cst_30 = arith.constant 2.000000e+00 : f32
    %46 = vector.broadcast %cst_30 : f32 to vector<8x1xf32>
    %47 = arith.subf %46, %45 : vector<8x1xf32>
    %48 = arith.mulf %44, %47 : vector<8x1xf32>
    %49 = vector.broadcast %48 : vector<8x1xf32> to vector<8x16xf32>
    %50 = arith.mulf %41, %49 : vector<8x16xf32>
    %51 = vector.shape_cast %50 : vector<8x16xf32> to vector<8x16x1xf32>
    %52 = vector.broadcast %51 : vector<8x16x1xf32> to vector<8x16x32xf32>
    %53 = arith.mulf %52, %0 : vector<8x16x32xf32>
    %cst_31 = arith.constant dense<0.000000e+00> : vector<8x32xf32>
    %54 = vector.multi_reduction <add>, %53, %cst_31 [1] : vector<8x16x32xf32> to vector<8x32xf32>
    %55 = vector.extract_strided_slice %27 {offsets = [0, 0, 0], sizes = [8, 1, 128], strides = [1, 1, 1]} : vector<8x8x128xf32> to vector<8x1x128xf32>
    %56 = vector.shape_cast %55 : vector<8x1x128xf32> to vector<8x128xf32>
    %cst_32 = arith.constant dense<0.000000e+00> : vector<8x128xf32>
    %57 = tpu.matmul %54, %2, %cst_32 {dimension_numbers = #tpu.dot_dimension_numbers<[1], [0], [0], [1], [0, 0, 1, 1], [], []>} : vector<8x32xf32>, vector<32x128xf32>, vector<8x128xf32> -> vector<8x128xf32>
    %58 = arith.addf %56, %57 : vector<8x128xf32>
    %cst_33 = arith.constant dense<0.000000e+00> : vector<8x128xf32>
    %59 = tpu.matmul %13, %3, %cst_33 {dimension_numbers = #tpu.dot_dimension_numbers<[1], [0], [0], [1], [0, 0, 1, 1], [], []>} : vector<8x32xf32>, vector<32x128xf32>, vector<8x128xf32> -> vector<8x128xf32>
    %60 = arith.addf %58, %59 : vector<8x128xf32>
    %61 = vector.extract_strided_slice %60 {offsets = [0, 0], sizes = [8, 32], strides = [1, 1]} : vector<8x128xf32> to vector<8x32xf32>
    %62 = arith.negf %61 : vector<8x32xf32>
    %63 = math.exp %62 : vector<8x32xf32>
    %cst_34 = arith.constant 1.000000e+00 : f32
    %64 = vector.broadcast %cst_34 : f32 to vector<8x32xf32>
    %65 = arith.addf %64, %63 : vector<8x32xf32>
    %66 = arith.divf %64, %65 : vector<8x32xf32>
    %67 = vector.extract_strided_slice %60 {offsets = [0, 32], sizes = [8, 32], strides = [1, 1]} : vector<8x128xf32> to vector<8x32xf32>
    %68 = arith.negf %67 : vector<8x32xf32>
    %69 = math.exp %68 : vector<8x32xf32>
    %cst_35 = arith.constant 1.000000e+00 : f32
    %70 = vector.broadcast %cst_35 : f32 to vector<8x32xf32>
    %71 = arith.addf %70, %69 : vector<8x32xf32>
    %72 = arith.divf %70, %71 : vector<8x32xf32>
    %73 = vector.extract_strided_slice %60 {offsets = [0, 64], sizes = [8, 32], strides = [1, 1]} : vector<8x128xf32> to vector<8x32xf32>
    %74 = math.tanh %73 : vector<8x32xf32>
    %75 = vector.extract_strided_slice %60 {offsets = [0, 96], sizes = [8, 32], strides = [1, 1]} : vector<8x128xf32> to vector<8x32xf32>
    %76 = arith.negf %75 : vector<8x32xf32>
    %77 = math.exp %76 : vector<8x32xf32>
    %cst_36 = arith.constant 1.000000e+00 : f32
    %78 = vector.broadcast %cst_36 : f32 to vector<8x32xf32>
    %79 = arith.addf %78, %77 : vector<8x32xf32>
    %80 = arith.divf %78, %79 : vector<8x32xf32>
    %81 = arith.mulf %72, %12 : vector<8x32xf32>
    %82 = arith.mulf %66, %74 : vector<8x32xf32>
    %83 = arith.addf %81, %82 : vector<8x32xf32>
    %84 = math.tanh %83 : vector<8x32xf32>
    %85 = arith.mulf %80, %84 : vector<8x32xf32>
    %86 = tpu.concatenate %85, %54, %30, %28 in 1 : vector<8x32xf32>, vector<8x32xf32>, vector<8x16xf32>, vector<8x48xf32> -> vector<8x128xf32>
    %87 = vector.shape_cast %86 : vector<8x128xf32> to vector<8x1x128xf32>
    %c0_37 = arith.constant 0 : index
    %c0_38 = arith.constant 0 : index
    %c0_39 = arith.constant 0 : index
    %88 = vector.load %arg15[%c0_37, %c0_38, %c0_39] : memref<8x8x128xf32, #tpu.memory_space<vmem>>, vector<8x1x128xf32>
    tpu.vector_store %arg15[%c0_37, %c0_38, %c0_39], %87 {strides = array<i32>} : memref<8x8x128xf32, #tpu.memory_space<vmem>>, vector<8x1x128xf32>,
    %89 = vector.shape_cast %50 : vector<8x16xf32> to vector<8x1x16xf32>
    %c0_40 = arith.constant 0 : index
    %c0_41 = arith.constant 0 : index
    %c0_42 = arith.constant 0 : index
    %90 = vector.load %arg14[%c0_40, %c0_41, %c0_42] : memref<8x8x16xf32, #tpu.memory_space<vmem>>, vector<8x1x16xf32>
    tpu.vector_store %arg14[%c0_40, %c0_41, %c0_42], %89 {strides = array<i32>} : memref<8x8x16xf32, #tpu.memory_space<vmem>>, vector<8x1x16xf32>,
    %91 = vector.extract_strided_slice %1 {offsets = [0, 1, 0], sizes = [8, 1, 16], strides = [1, 1, 1]} : vector<8x8x16xf32> to vector<8x1x16xf32>
    %92 = vector.shape_cast %91 : vector<8x1x16xf32> to vector<8x16xf32>
    %93 = vector.shape_cast %85 : vector<8x32xf32> to vector<8x1x32xf32>
    %94 = vector.broadcast %93 : vector<8x1x32xf32> to vector<8x16x32xf32>
    %95 = arith.mulf %94, %20 : vector<8x16x32xf32>
    %cst_43 = arith.constant dense<0.000000e+00> : vector<8x16xf32>
    %96 = vector.multi_reduction <add>, %95, %cst_43 [2] : vector<8x16x32xf32> to vector<8x16xf32>
    %cst_44 = arith.constant 0.176776692 : f32
    %97 = vector.broadcast %cst_44 : f32 to vector<8x16xf32>
    %98 = arith.mulf %96, %97 : vector<8x16xf32>
    %cst_45 = arith.constant dense<0xFF800000> : vector<8xf32>
    %99 = vector.multi_reduction <maximumf>, %98, %cst_45 [1] : vector<8x16xf32> to vector<8xf32>
    %100 = vector.shape_cast %99 : vector<8xf32> to vector<8x1xf32>
    %101 = vector.broadcast %100 : vector<8x1xf32> to vector<8x16xf32>
    %102 = arith.subf %98, %101 : vector<8x16xf32>
    %103 = math.exp %102 : vector<8x16xf32>
    %cst_46 = arith.constant dense<0.000000e+00> : vector<8xf32>
    %104 = vector.multi_reduction <add>, %103, %cst_46 [1] : vector<8x16xf32> to vector<8xf32>
    %105 = vector.shape_cast %104 : vector<8xf32> to vector<8x1xf32>
    %106 = tpu.reciprocal %105 {approx = true} : vector<8x1xf32> -> vector<8x1xf32>
    %107 = arith.mulf %105, %106 : vector<8x1xf32>
    %cst_47 = arith.constant 2.000000e+00 : f32
    %108 = vector.broadcast %cst_47 : f32 to vector<8x1xf32>
    %109 = arith.subf %108, %107 : vector<8x1xf32>
    %110 = arith.mulf %106, %109 : vector<8x1xf32>
    %111 = vector.broadcast %110 : vector<8x1xf32> to vector<8x16xf32>
    %112 = arith.mulf %103, %111 : vector<8x16xf32>
    %113 = vector.shape_cast %112 : vector<8x16xf32> to vector<8x16x1xf32>
    %114 = vector.broadcast %113 : vector<8x16x1xf32> to vector<8x16x32xf32>
    %115 = arith.mulf %114, %0 : vector<8x16x32xf32>
    %cst_48 = arith.constant dense<0.000000e+00> : vector<8x32xf32>
    %116 = vector.multi_reduction <add>, %115, %cst_48 [1] : vector<8x16x32xf32> to vector<8x32xf32>
    %117 = vector.extract_strided_slice %27 {offsets = [0, 1, 0], sizes = [8, 1, 128], strides = [1, 1, 1]} : vector<8x8x128xf32> to vector<8x1x128xf32>
    %118 = vector.shape_cast %117 : vector<8x1x128xf32> to vector<8x128xf32>
    %cst_49 = arith.constant dense<0.000000e+00> : vector<8x128xf32>
    %119 = tpu.matmul %116, %2, %cst_49 {dimension_numbers = #tpu.dot_dimension_numbers<[1], [0], [0], [1], [0, 0, 1, 1], [], []>} : vector<8x32xf32>, vector<32x128xf32>, vector<8x128xf32> -> vector<8x128xf32>
    %120 = arith.addf %118, %119 : vector<8x128xf32>
    %cst_50 = arith.constant dense<0.000000e+00> : vector<8x128xf32>
    %121 = tpu.matmul %85, %3, %cst_50 {dimension_numbers = #tpu.dot_dimension_numbers<[1], [0], [0], [1], [0, 0, 1, 1], [], []>} : vector<8x32xf32>, vector<32x128xf32>, vector<8x128xf32> -> vector<8x128xf32>
    %122 = arith.addf %120, %121 : vector<8x128xf32>
    %123 = vector.extract_strided_slice %122 {offsets = [0, 0], sizes = [8, 32], strides = [1, 1]} : vector<8x128xf32> to vector<8x32xf32>
    %124 = arith.negf %123 : vector<8x32xf32>
    %125 = math.exp %124 : vector<8x32xf32>
    %cst_51 = arith.constant 1.000000e+00 : f32
    %126 = vector.broadcast %cst_51 : f32 to vector<8x32xf32>
    %127 = arith.addf %126, %125 : vector<8x32xf32>
    %128 = arith.divf %126, %127 : vector<8x32xf32>
    %129 = vector.extract_strided_slice %122 {offsets = [0, 32], sizes = [8, 32], strides = [1, 1]} : vector<8x128xf32> to vector<8x32xf32>
    %130 = arith.negf %129 : vector<8x32xf32>
    %131 = math.exp %130 : vector<8x32xf32>
    %cst_52 = arith.constant 1.000000e+00 : f32
    %132 = vector.broadcast %cst_52 : f32 to vector<8x32xf32>
    %133 = arith.addf %132, %131 : vector<8x32xf32>
    %134 = arith.divf %132, %133 : vector<8x32xf32>
    %135 = vector.extract_strided_slice %122 {offsets = [0, 64], sizes = [8, 32], strides = [1, 1]} : vector<8x128xf32> to vector<8x32xf32>
    %136 = math.tanh %135 : vector<8x32xf32>
    %137 = vector.extract_strided_slice %122 {offsets = [0, 96], sizes = [8, 32], strides = [1, 1]} : vector<8x128xf32> to vector<8x32xf32>
    %138 = arith.negf %137 : vector<8x32xf32>
    %139 = math.exp %138 : vector<8x32xf32>
    %cst_53 = arith.constant 1.000000e+00 : f32
    %140 = vector.broadcast %cst_53 : f32 to vector<8x32xf32>
    %141 = arith.addf %140, %139 : vector<8x32xf32>
    %142 = arith.divf %140, %141 : vector<8x32xf32>
    %143 = arith.mulf %134, %83 : vector<8x32xf32>
    %144 = arith.mulf %128, %136 : vector<8x32xf32>
    %145 = arith.addf %143, %144 : vector<8x32xf32>
    %146 = math.tanh %145 : vector<8x32xf32>
    %147 = arith.mulf %142, %146 : vector<8x32xf32>
    %148 = tpu.concatenate %147, %116, %92, %28 in 1 : vector<8x32xf32>, vector<8x32xf32>, vector<8x16xf32>, vector<8x48xf32> -> vector<8x128xf32>
    %149 = vector.shape_cast %148 : vector<8x128xf32> to vector<8x1x128xf32>
    %c0_54 = arith.constant 0 : index
    %c1 = arith.constant 1 : index
    %c0_55 = arith.constant 0 : index
    %150 = vector.load %arg15[%c0_54, %c1, %c0_55] : memref<8x8x128xf32, #tpu.memory_space<vmem>>, vector<8x1x128xf32>
    tpu.vector_store %arg15[%c0_54, %c1, %c0_55], %149 {strides = array<i32>} : memref<8x8x128xf32, #tpu.memory_space<vmem>>, vector<8x1x128xf32>,
    %151 = vector.shape_cast %112 : vector<8x16xf32> to vector<8x1x16xf32>
    %c0_56 = arith.constant 0 : index
    %c1_57 = arith.constant 1 : index
    %c0_58 = arith.constant 0 : index
    %152 = vector.load %arg14[%c0_56, %c1_57, %c0_58] : memref<8x8x16xf32, #tpu.memory_space<vmem>>, vector<8x1x16xf32>
    tpu.vector_store %arg14[%c0_56, %c1_57, %c0_58], %151 {strides = array<i32>} : memref<8x8x16xf32, #tpu.memory_space<vmem>>, vector<8x1x16xf32>,
    %153 = vector.extract_strided_slice %1 {offsets = [0, 2, 0], sizes = [8, 1, 16], strides = [1, 1, 1]} : vector<8x8x16xf32> to vector<8x1x16xf32>
    %154 = vector.shape_cast %153 : vector<8x1x16xf32> to vector<8x16xf32>
    %155 = vector.shape_cast %147 : vector<8x32xf32> to vector<8x1x32xf32>
    %156 = vector.broadcast %155 : vector<8x1x32xf32> to vector<8x16x32xf32>
    %157 = arith.mulf %156, %20 : vector<8x16x32xf32>
    %cst_59 = arith.constant dense<0.000000e+00> : vector<8x16xf32>
    %158 = vector.multi_reduction <add>, %157, %cst_59 [2] : vector<8x16x32xf32> to vector<8x16xf32>
    %cst_60 = arith.constant 0.176776692 : f32
    %159 = vector.broadcast %cst_60 : f32 to vector<8x16xf32>
    %160 = arith.mulf %158, %159 : vector<8x16xf32>
    %cst_61 = arith.constant dense<0xFF800000> : vector<8xf32>
    %161 = vector.multi_reduction <maximumf>, %160, %cst_61 [1] : vector<8x16xf32> to vector<8xf32>
    %162 = vector.shape_cast %161 : vector<8xf32> to vector<8x1xf32>
    %163 = vector.broadcast %162 : vector<8x1xf32> to vector<8x16xf32>
    %164 = arith.subf %160, %163 : vector<8x16xf32>
    %165 = math.exp %164 : vector<8x16xf32>
    %cst_62 = arith.constant dense<0.000000e+00> : vector<8xf32>
    %166 = vector.multi_reduction <add>, %165, %cst_62 [1] : vector<8x16xf32> to vector<8xf32>
    %167 = vector.shape_cast %166 : vector<8xf32> to vector<8x1xf32>
    %168 = tpu.reciprocal %167 {approx = true} : vector<8x1xf32> -> vector<8x1xf32>
    %169 = arith.mulf %167, %168 : vector<8x1xf32>
    %cst_63 = arith.constant 2.000000e+00 : f32
    %170 = vector.broadcast %cst_63 : f32 to vector<8x1xf32>
    %171 = arith.subf %170, %169 : vector<8x1xf32>
    %172 = arith.mulf %168, %171 : vector<8x1xf32>
    %173 = vector.broadcast %172 : vector<8x1xf32> to vector<8x16xf32>
    %174 = arith.mulf %165, %173 : vector<8x16xf32>
    %175 = vector.shape_cast %174 : vector<8x16xf32> to vector<8x16x1xf32>
    %176 = vector.broadcast %175 : vector<8x16x1xf32> to vector<8x16x32xf32>
    %177 = arith.mulf %176, %0 : vector<8x16x32xf32>
    %cst_64 = arith.constant dense<0.000000e+00> : vector<8x32xf32>
    %178 = vector.multi_reduction <add>, %177, %cst_64 [1] : vector<8x16x32xf32> to vector<8x32xf32>
    %179 = vector.extract_strided_slice %27 {offsets = [0, 2, 0], sizes = [8, 1, 128], strides = [1, 1, 1]} : vector<8x8x128xf32> to vector<8x1x128xf32>
    %180 = vector.shape_cast %179 : vector<8x1x128xf32> to vector<8x128xf32>
    %cst_65 = arith.constant dense<0.000000e+00> : vector<8x128xf32>
    %181 = tpu.matmul %178, %2, %cst_65 {dimension_numbers = #tpu.dot_dimension_numbers<[1], [0], [0], [1], [0, 0, 1, 1], [], []>} : vector<8x32xf32>, vector<32x128xf32>, vector<8x128xf32> -> vector<8x128xf32>
    %182 = arith.addf %180, %181 : vector<8x128xf32>
    %cst_66 = arith.constant dense<0.000000e+00> : vector<8x128xf32>
    %183 = tpu.matmul %147, %3, %cst_66 {dimension_numbers = #tpu.dot_dimension_numbers<[1], [0], [0], [1], [0, 0, 1, 1], [], []>} : vector<8x32xf32>, vector<32x128xf32>, vector<8x128xf32> -> vector<8x128xf32>
    %184 = arith.addf %182, %183 : vector<8x128xf32>
    %185 = vector.extract_strided_slice %184 {offsets = [0, 0], sizes = [8, 32], strides = [1, 1]} : vector<8x128xf32> to vector<8x32xf32>
    %186 = arith.negf %185 : vector<8x32xf32>
    %187 = math.exp %186 : vector<8x32xf32>
    %cst_67 = arith.constant 1.000000e+00 : f32
    %188 = vector.broadcast %cst_67 : f32 to vector<8x32xf32>
    %189 = arith.addf %188, %187 : vector<8x32xf32>
    %190 = arith.divf %188, %189 : vector<8x32xf32>
    %191 = vector.extract_strided_slice %184 {offsets = [0, 32], sizes = [8, 32], strides = [1, 1]} : vector<8x128xf32> to vector<8x32xf32>
    %192 = arith.negf %191 : vector<8x32xf32>
    %193 = math.exp %192 : vector<8x32xf32>
    %cst_68 = arith.constant 1.000000e+00 : f32
    %194 = vector.broadcast %cst_68 : f32 to vector<8x32xf32>
    %195 = arith.addf %194, %193 : vector<8x32xf32>
    %196 = arith.divf %194, %195 : vector<8x32xf32>
    %197 = vector.extract_strided_slice %184 {offsets = [0, 64], sizes = [8, 32], strides = [1, 1]} : vector<8x128xf32> to vector<8x32xf32>
    %198 = math.tanh %197 : vector<8x32xf32>
    %199 = vector.extract_strided_slice %184 {offsets = [0, 96], sizes = [8, 32], strides = [1, 1]} : vector<8x128xf32> to vector<8x32xf32>
    %200 = arith.negf %199 : vector<8x32xf32>
    %201 = math.exp %200 : vector<8x32xf32>
    %cst_69 = arith.constant 1.000000e+00 : f32
    %202 = vector.broadcast %cst_69 : f32 to vector<8x32xf32>
    %203 = arith.addf %202, %201 : vector<8x32xf32>
    %204 = arith.divf %202, %203 : vector<8x32xf32>
    %205 = arith.mulf %196, %145 : vector<8x32xf32>
    %206 = arith.mulf %190, %198 : vector<8x32xf32>
    %207 = arith.addf %205, %206 : vector<8x32xf32>
    %208 = math.tanh %207 : vector<8x32xf32>
    %209 = arith.mulf %204, %208 : vector<8x32xf32>
    %210 = tpu.concatenate %209, %178, %154, %28 in 1 : vector<8x32xf32>, vector<8x32xf32>, vector<8x16xf32>, vector<8x48xf32> -> vector<8x128xf32>
    %211 = vector.shape_cast %210 : vector<8x128xf32> to vector<8x1x128xf32>
    %c0_70 = arith.constant 0 : index
    %c2 = arith.constant 2 : index
    %c0_71 = arith.constant 0 : index
    %212 = vector.load %arg15[%c0_70, %c2, %c0_71] : memref<8x8x128xf32, #tpu.memory_space<vmem>>, vector<8x1x128xf32>
    tpu.vector_store %arg15[%c0_70, %c2, %c0_71], %211 {strides = array<i32>} : memref<8x8x128xf32, #tpu.memory_space<vmem>>, vector<8x1x128xf32>,
    %213 = vector.shape_cast %174 : vector<8x16xf32> to vector<8x1x16xf32>
    %c0_72 = arith.constant 0 : index
    %c2_73 = arith.constant 2 : index
    %c0_74 = arith.constant 0 : index
    %214 = vector.load %arg14[%c0_72, %c2_73, %c0_74] : memref<8x8x16xf32, #tpu.memory_space<vmem>>, vector<8x1x16xf32>
    tpu.vector_store %arg14[%c0_72, %c2_73, %c0_74], %213 {strides = array<i32>} : memref<8x8x16xf32, #tpu.memory_space<vmem>>, vector<8x1x16xf32>,
    %215 = vector.extract_strided_slice %1 {offsets = [0, 3, 0], sizes = [8, 1, 16], strides = [1, 1, 1]} : vector<8x8x16xf32> to vector<8x1x16xf32>
    %216 = vector.shape_cast %215 : vector<8x1x16xf32> to vector<8x16xf32>
    %217 = vector.shape_cast %209 : vector<8x32xf32> to vector<8x1x32xf32>
    %218 = vector.broadcast %217 : vector<8x1x32xf32> to vector<8x16x32xf32>
    %219 = arith.mulf %218, %20 : vector<8x16x32xf32>
    %cst_75 = arith.constant dense<0.000000e+00> : vector<8x16xf32>
    %220 = vector.multi_reduction <add>, %219, %cst_75 [2] : vector<8x16x32xf32> to vector<8x16xf32>
    %cst_76 = arith.constant 0.176776692 : f32
    %221 = vector.broadcast %cst_76 : f32 to vector<8x16xf32>
    %222 = arith.mulf %220, %221 : vector<8x16xf32>
    %cst_77 = arith.constant dense<0xFF800000> : vector<8xf32>
    %223 = vector.multi_reduction <maximumf>, %222, %cst_77 [1] : vector<8x16xf32> to vector<8xf32>
    %224 = vector.shape_cast %223 : vector<8xf32> to vector<8x1xf32>
    %225 = vector.broadcast %224 : vector<8x1xf32> to vector<8x16xf32>
    %226 = arith.subf %222, %225 : vector<8x16xf32>
    %227 = math.exp %226 : vector<8x16xf32>
    %cst_78 = arith.constant dense<0.000000e+00> : vector<8xf32>
    %228 = vector.multi_reduction <add>, %227, %cst_78 [1] : vector<8x16xf32> to vector<8xf32>
    %229 = vector.shape_cast %228 : vector<8xf32> to vector<8x1xf32>
    %230 = tpu.reciprocal %229 {approx = true} : vector<8x1xf32> -> vector<8x1xf32>
    %231 = arith.mulf %229, %230 : vector<8x1xf32>
    %cst_79 = arith.constant 2.000000e+00 : f32
    %232 = vector.broadcast %cst_79 : f32 to vector<8x1xf32>
    %233 = arith.subf %232, %231 : vector<8x1xf32>
    %234 = arith.mulf %230, %233 : vector<8x1xf32>
    %235 = vector.broadcast %234 : vector<8x1xf32> to vector<8x16xf32>
    %236 = arith.mulf %227, %235 : vector<8x16xf32>
    %237 = vector.shape_cast %236 : vector<8x16xf32> to vector<8x16x1xf32>
    %238 = vector.broadcast %237 : vector<8x16x1xf32> to vector<8x16x32xf32>
    %239 = arith.mulf %238, %0 : vector<8x16x32xf32>
    %cst_80 = arith.constant dense<0.000000e+00> : vector<8x32xf32>
    %240 = vector.multi_reduction <add>, %239, %cst_80 [1] : vector<8x16x32xf32> to vector<8x32xf32>
    %241 = vector.extract_strided_slice %27 {offsets = [0, 3, 0], sizes = [8, 1, 128], strides = [1, 1, 1]} : vector<8x8x128xf32> to vector<8x1x128xf32>
    %242 = vector.shape_cast %241 : vector<8x1x128xf32> to vector<8x128xf32>
    %cst_81 = arith.constant dense<0.000000e+00> : vector<8x128xf32>
    %243 = tpu.matmul %240, %2, %cst_81 {dimension_numbers = #tpu.dot_dimension_numbers<[1], [0], [0], [1], [0, 0, 1, 1], [], []>} : vector<8x32xf32>, vector<32x128xf32>, vector<8x128xf32> -> vector<8x128xf32>
    %244 = arith.addf %242, %243 : vector<8x128xf32>
    %cst_82 = arith.constant dense<0.000000e+00> : vector<8x128xf32>
    %245 = tpu.matmul %209, %3, %cst_82 {dimension_numbers = #tpu.dot_dimension_numbers<[1], [0], [0], [1], [0, 0, 1, 1], [], []>} : vector<8x32xf32>, vector<32x128xf32>, vector<8x128xf32> -> vector<8x128xf32>
    %246 = arith.addf %244, %245 : vector<8x128xf32>
    %247 = vector.extract_strided_slice %246 {offsets = [0, 0], sizes = [8, 32], strides = [1, 1]} : vector<8x128xf32> to vector<8x32xf32>
    %248 = arith.negf %247 : vector<8x32xf32>
    %249 = math.exp %248 : vector<8x32xf32>
    %cst_83 = arith.constant 1.000000e+00 : f32
    %250 = vector.broadcast %cst_83 : f32 to vector<8x32xf32>
    %251 = arith.addf %250, %249 : vector<8x32xf32>
    %252 = arith.divf %250, %251 : vector<8x32xf32>
    %253 = vector.extract_strided_slice %246 {offsets = [0, 32], sizes = [8, 32], strides = [1, 1]} : vector<8x128xf32> to vector<8x32xf32>
    %254 = arith.negf %253 : vector<8x32xf32>
    %255 = math.exp %254 : vector<8x32xf32>
    %cst_84 = arith.constant 1.000000e+00 : f32
    %256 = vector.broadcast %cst_84 : f32 to vector<8x32xf32>
    %257 = arith.addf %256, %255 : vector<8x32xf32>
    %258 = arith.divf %256, %257 : vector<8x32xf32>
    %259 = vector.extract_strided_slice %246 {offsets = [0, 64], sizes = [8, 32], strides = [1, 1]} : vector<8x128xf32> to vector<8x32xf32>
    %260 = math.tanh %259 : vector<8x32xf32>
    %261 = vector.extract_strided_slice %246 {offsets = [0, 96], sizes = [8, 32], strides = [1, 1]} : vector<8x128xf32> to vector<8x32xf32>
    %262 = arith.negf %261 : vector<8x32xf32>
    %263 = math.exp %262 : vector<8x32xf32>
    %cst_85 = arith.constant 1.000000e+00 : f32
    %264 = vector.broadcast %cst_85 : f32 to vector<8x32xf32>
    %265 = arith.addf %264, %263 : vector<8x32xf32>
    %266 = arith.divf %264, %265 : vector<8x32xf32>
    %267 = arith.mulf %258, %207 : vector<8x32xf32>
    %268 = arith.mulf %252, %260 : vector<8x32xf32>
    %269 = arith.addf %267, %268 : vector<8x32xf32>
    %270 = math.tanh %269 : vector<8x32xf32>
    %271 = arith.mulf %266, %270 : vector<8x32xf32>
    %272 = tpu.concatenate %271, %240, %216, %28 in 1 : vector<8x32xf32>, vector<8x32xf32>, vector<8x16xf32>, vector<8x48xf32> -> vector<8x128xf32>
    %273 = vector.shape_cast %272 : vector<8x128xf32> to vector<8x1x128xf32>
    %c0_86 = arith.constant 0 : index
    %c3 = arith.constant 3 : index
    %c0_87 = arith.constant 0 : index
    %274 = vector.load %arg15[%c0_86, %c3, %c0_87] : memref<8x8x128xf32, #tpu.memory_space<vmem>>, vector<8x1x128xf32>
    tpu.vector_store %arg15[%c0_86, %c3, %c0_87], %273 {strides = array<i32>} : memref<8x8x128xf32, #tpu.memory_space<vmem>>, vector<8x1x128xf32>,
    %275 = vector.shape_cast %236 : vector<8x16xf32> to vector<8x1x16xf32>
    %c0_88 = arith.constant 0 : index
    %c3_89 = arith.constant 3 : index
    %c0_90 = arith.constant 0 : index
    %276 = vector.load %arg14[%c0_88, %c3_89, %c0_90] : memref<8x8x16xf32, #tpu.memory_space<vmem>>, vector<8x1x16xf32>
    tpu.vector_store %arg14[%c0_88, %c3_89, %c0_90], %275 {strides = array<i32>} : memref<8x8x16xf32, #tpu.memory_space<vmem>>, vector<8x1x16xf32>,
    %277 = vector.extract_strided_slice %1 {offsets = [0, 4, 0], sizes = [8, 1, 16], strides = [1, 1, 1]} : vector<8x8x16xf32> to vector<8x1x16xf32>
    %278 = vector.shape_cast %277 : vector<8x1x16xf32> to vector<8x16xf32>
    %279 = vector.shape_cast %271 : vector<8x32xf32> to vector<8x1x32xf32>
    %280 = vector.broadcast %279 : vector<8x1x32xf32> to vector<8x16x32xf32>
    %281 = arith.mulf %280, %20 : vector<8x16x32xf32>
    %cst_91 = arith.constant dense<0.000000e+00> : vector<8x16xf32>
    %282 = vector.multi_reduction <add>, %281, %cst_91 [2] : vector<8x16x32xf32> to vector<8x16xf32>
    %cst_92 = arith.constant 0.176776692 : f32
    %283 = vector.broadcast %cst_92 : f32 to vector<8x16xf32>
    %284 = arith.mulf %282, %283 : vector<8x16xf32>
    %cst_93 = arith.constant dense<0xFF800000> : vector<8xf32>
    %285 = vector.multi_reduction <maximumf>, %284, %cst_93 [1] : vector<8x16xf32> to vector<8xf32>
    %286 = vector.shape_cast %285 : vector<8xf32> to vector<8x1xf32>
    %287 = vector.broadcast %286 : vector<8x1xf32> to vector<8x16xf32>
    %288 = arith.subf %284, %287 : vector<8x16xf32>
    %289 = math.exp %288 : vector<8x16xf32>
    %cst_94 = arith.constant dense<0.000000e+00> : vector<8xf32>
    %290 = vector.multi_reduction <add>, %289, %cst_94 [1] : vector<8x16xf32> to vector<8xf32>
    %291 = vector.shape_cast %290 : vector<8xf32> to vector<8x1xf32>
    %292 = tpu.reciprocal %291 {approx = true} : vector<8x1xf32> -> vector<8x1xf32>
    %293 = arith.mulf %291, %292 : vector<8x1xf32>
    %cst_95 = arith.constant 2.000000e+00 : f32
    %294 = vector.broadcast %cst_95 : f32 to vector<8x1xf32>
    %295 = arith.subf %294, %293 : vector<8x1xf32>
    %296 = arith.mulf %292, %295 : vector<8x1xf32>
    %297 = vector.broadcast %296 : vector<8x1xf32> to vector<8x16xf32>
    %298 = arith.mulf %289, %297 : vector<8x16xf32>
    %299 = vector.shape_cast %298 : vector<8x16xf32> to vector<8x16x1xf32>
    %300 = vector.broadcast %299 : vector<8x16x1xf32> to vector<8x16x32xf32>
    %301 = arith.mulf %300, %0 : vector<8x16x32xf32>
    %cst_96 = arith.constant dense<0.000000e+00> : vector<8x32xf32>
    %302 = vector.multi_reduction <add>, %301, %cst_96 [1] : vector<8x16x32xf32> to vector<8x32xf32>
    %303 = vector.extract_strided_slice %27 {offsets = [0, 4, 0], sizes = [8, 1, 128], strides = [1, 1, 1]} : vector<8x8x128xf32> to vector<8x1x128xf32>
    %304 = vector.shape_cast %303 : vector<8x1x128xf32> to vector<8x128xf32>
    %cst_97 = arith.constant dense<0.000000e+00> : vector<8x128xf32>
    %305 = tpu.matmul %302, %2, %cst_97 {dimension_numbers = #tpu.dot_dimension_numbers<[1], [0], [0], [1], [0, 0, 1, 1], [], []>} : vector<8x32xf32>, vector<32x128xf32>, vector<8x128xf32> -> vector<8x128xf32>
    %306 = arith.addf %304, %305 : vector<8x128xf32>
    %cst_98 = arith.constant dense<0.000000e+00> : vector<8x128xf32>
    %307 = tpu.matmul %271, %3, %cst_98 {dimension_numbers = #tpu.dot_dimension_numbers<[1], [0], [0], [1], [0, 0, 1, 1], [], []>} : vector<8x32xf32>, vector<32x128xf32>, vector<8x128xf32> -> vector<8x128xf32>
    %308 = arith.addf %306, %307 : vector<8x128xf32>
    %309 = vector.extract_strided_slice %308 {offsets = [0, 0], sizes = [8, 32], strides = [1, 1]} : vector<8x128xf32> to vector<8x32xf32>
    %310 = arith.negf %309 : vector<8x32xf32>
    %311 = math.exp %310 : vector<8x32xf32>
    %cst_99 = arith.constant 1.000000e+00 : f32
    %312 = vector.broadcast %cst_99 : f32 to vector<8x32xf32>
    %313 = arith.addf %312, %311 : vector<8x32xf32>
    %314 = arith.divf %312, %313 : vector<8x32xf32>
    %315 = vector.extract_strided_slice %308 {offsets = [0, 32], sizes = [8, 32], strides = [1, 1]} : vector<8x128xf32> to vector<8x32xf32>
    %316 = arith.negf %315 : vector<8x32xf32>
    %317 = math.exp %316 : vector<8x32xf32>
    %cst_100 = arith.constant 1.000000e+00 : f32
    %318 = vector.broadcast %cst_100 : f32 to vector<8x32xf32>
    %319 = arith.addf %318, %317 : vector<8x32xf32>
    %320 = arith.divf %318, %319 : vector<8x32xf32>
    %321 = vector.extract_strided_slice %308 {offsets = [0, 64], sizes = [8, 32], strides = [1, 1]} : vector<8x128xf32> to vector<8x32xf32>
    %322 = math.tanh %321 : vector<8x32xf32>
    %323 = vector.extract_strided_slice %308 {offsets = [0, 96], sizes = [8, 32], strides = [1, 1]} : vector<8x128xf32> to vector<8x32xf32>
    %324 = arith.negf %323 : vector<8x32xf32>
    %325 = math.exp %324 : vector<8x32xf32>
    %cst_101 = arith.constant 1.000000e+00 : f32
    %326 = vector.broadcast %cst_101 : f32 to vector<8x32xf32>
    %327 = arith.addf %326, %325 : vector<8x32xf32>
    %328 = arith.divf %326, %327 : vector<8x32xf32>
    %329 = arith.mulf %320, %269 : vector<8x32xf32>
    %330 = arith.mulf %314, %322 : vector<8x32xf32>
    %331 = arith.addf %329, %330 : vector<8x32xf32>
    %332 = math.tanh %331 : vector<8x32xf32>
    %333 = arith.mulf %328, %332 : vector<8x32xf32>
    %334 = tpu.concatenate %333, %302, %278, %28 in 1 : vector<8x32xf32>, vector<8x32xf32>, vector<8x16xf32>, vector<8x48xf32> -> vector<8x128xf32>
    %335 = vector.shape_cast %334 : vector<8x128xf32> to vector<8x1x128xf32>
    %c0_102 = arith.constant 0 : index
    %c4 = arith.constant 4 : index
    %c0_103 = arith.constant 0 : index
    %336 = vector.load %arg15[%c0_102, %c4, %c0_103] : memref<8x8x128xf32, #tpu.memory_space<vmem>>, vector<8x1x128xf32>
    tpu.vector_store %arg15[%c0_102, %c4, %c0_103], %335 {strides = array<i32>} : memref<8x8x128xf32, #tpu.memory_space<vmem>>, vector<8x1x128xf32>,
    %337 = vector.shape_cast %298 : vector<8x16xf32> to vector<8x1x16xf32>
    %c0_104 = arith.constant 0 : index
    %c4_105 = arith.constant 4 : index
    %c0_106 = arith.constant 0 : index
    %338 = vector.load %arg14[%c0_104, %c4_105, %c0_106] : memref<8x8x16xf32, #tpu.memory_space<vmem>>, vector<8x1x16xf32>
    tpu.vector_store %arg14[%c0_104, %c4_105, %c0_106], %337 {strides = array<i32>} : memref<8x8x16xf32, #tpu.memory_space<vmem>>, vector<8x1x16xf32>,
    %339 = vector.extract_strided_slice %1 {offsets = [0, 5, 0], sizes = [8, 1, 16], strides = [1, 1, 1]} : vector<8x8x16xf32> to vector<8x1x16xf32>
    %340 = vector.shape_cast %339 : vector<8x1x16xf32> to vector<8x16xf32>
    %341 = vector.shape_cast %333 : vector<8x32xf32> to vector<8x1x32xf32>
    %342 = vector.broadcast %341 : vector<8x1x32xf32> to vector<8x16x32xf32>
    %343 = arith.mulf %342, %20 : vector<8x16x32xf32>
    %cst_107 = arith.constant dense<0.000000e+00> : vector<8x16xf32>
    %344 = vector.multi_reduction <add>, %343, %cst_107 [2] : vector<8x16x32xf32> to vector<8x16xf32>
    %cst_108 = arith.constant 0.176776692 : f32
    %345 = vector.broadcast %cst_108 : f32 to vector<8x16xf32>
    %346 = arith.mulf %344, %345 : vector<8x16xf32>
    %cst_109 = arith.constant dense<0xFF800000> : vector<8xf32>
    %347 = vector.multi_reduction <maximumf>, %346, %cst_109 [1] : vector<8x16xf32> to vector<8xf32>
    %348 = vector.shape_cast %347 : vector<8xf32> to vector<8x1xf32>
    %349 = vector.broadcast %348 : vector<8x1xf32> to vector<8x16xf32>
    %350 = arith.subf %346, %349 : vector<8x16xf32>
    %351 = math.exp %350 : vector<8x16xf32>
    %cst_110 = arith.constant dense<0.000000e+00> : vector<8xf32>
    %352 = vector.multi_reduction <add>, %351, %cst_110 [1] : vector<8x16xf32> to vector<8xf32>
    %353 = vector.shape_cast %352 : vector<8xf32> to vector<8x1xf32>
    %354 = tpu.reciprocal %353 {approx = true} : vector<8x1xf32> -> vector<8x1xf32>
    %355 = arith.mulf %353, %354 : vector<8x1xf32>
    %cst_111 = arith.constant 2.000000e+00 : f32
    %356 = vector.broadcast %cst_111 : f32 to vector<8x1xf32>
    %357 = arith.subf %356, %355 : vector<8x1xf32>
    %358 = arith.mulf %354, %357 : vector<8x1xf32>
    %359 = vector.broadcast %358 : vector<8x1xf32> to vector<8x16xf32>
    %360 = arith.mulf %351, %359 : vector<8x16xf32>
    %361 = vector.shape_cast %360 : vector<8x16xf32> to vector<8x16x1xf32>
    %362 = vector.broadcast %361 : vector<8x16x1xf32> to vector<8x16x32xf32>
    %363 = arith.mulf %362, %0 : vector<8x16x32xf32>
    %cst_112 = arith.constant dense<0.000000e+00> : vector<8x32xf32>
    %364 = vector.multi_reduction <add>, %363, %cst_112 [1] : vector<8x16x32xf32> to vector<8x32xf32>
    %365 = vector.extract_strided_slice %27 {offsets = [0, 5, 0], sizes = [8, 1, 128], strides = [1, 1, 1]} : vector<8x8x128xf32> to vector<8x1x128xf32>
    %366 = vector.shape_cast %365 : vector<8x1x128xf32> to vector<8x128xf32>
    %cst_113 = arith.constant dense<0.000000e+00> : vector<8x128xf32>
    %367 = tpu.matmul %364, %2, %cst_113 {dimension_numbers = #tpu.dot_dimension_numbers<[1], [0], [0], [1], [0, 0, 1, 1], [], []>} : vector<8x32xf32>, vector<32x128xf32>, vector<8x128xf32> -> vector<8x128xf32>
    %368 = arith.addf %366, %367 : vector<8x128xf32>
    %cst_114 = arith.constant dense<0.000000e+00> : vector<8x128xf32>
    %369 = tpu.matmul %333, %3, %cst_114 {dimension_numbers = #tpu.dot_dimension_numbers<[1], [0], [0], [1], [0, 0, 1, 1], [], []>} : vector<8x32xf32>, vector<32x128xf32>, vector<8x128xf32> -> vector<8x128xf32>
    %370 = arith.addf %368, %369 : vector<8x128xf32>
    %371 = vector.extract_strided_slice %370 {offsets = [0, 0], sizes = [8, 32], strides = [1, 1]} : vector<8x128xf32> to vector<8x32xf32>
    %372 = arith.negf %371 : vector<8x32xf32>
    %373 = math.exp %372 : vector<8x32xf32>
    %cst_115 = arith.constant 1.000000e+00 : f32
    %374 = vector.broadcast %cst_115 : f32 to vector<8x32xf32>
    %375 = arith.addf %374, %373 : vector<8x32xf32>
    %376 = arith.divf %374, %375 : vector<8x32xf32>
    %377 = vector.extract_strided_slice %370 {offsets = [0, 32], sizes = [8, 32], strides = [1, 1]} : vector<8x128xf32> to vector<8x32xf32>
    %378 = arith.negf %377 : vector<8x32xf32>
    %379 = math.exp %378 : vector<8x32xf32>
    %cst_116 = arith.constant 1.000000e+00 : f32
    %380 = vector.broadcast %cst_116 : f32 to vector<8x32xf32>
    %381 = arith.addf %380, %379 : vector<8x32xf32>
    %382 = arith.divf %380, %381 : vector<8x32xf32>
    %383 = vector.extract_strided_slice %370 {offsets = [0, 64], sizes = [8, 32], strides = [1, 1]} : vector<8x128xf32> to vector<8x32xf32>
    %384 = math.tanh %383 : vector<8x32xf32>
    %385 = vector.extract_strided_slice %370 {offsets = [0, 96], sizes = [8, 32], strides = [1, 1]} : vector<8x128xf32> to vector<8x32xf32>
    %386 = arith.negf %385 : vector<8x32xf32>
    %387 = math.exp %386 : vector<8x32xf32>
    %cst_117 = arith.constant 1.000000e+00 : f32
    %388 = vector.broadcast %cst_117 : f32 to vector<8x32xf32>
    %389 = arith.addf %388, %387 : vector<8x32xf32>
    %390 = arith.divf %388, %389 : vector<8x32xf32>
    %391 = arith.mulf %382, %331 : vector<8x32xf32>
    %392 = arith.mulf %376, %384 : vector<8x32xf32>
    %393 = arith.addf %391, %392 : vector<8x32xf32>
    %394 = math.tanh %393 : vector<8x32xf32>
    %395 = arith.mulf %390, %394 : vector<8x32xf32>
    %396 = tpu.concatenate %395, %364, %340, %28 in 1 : vector<8x32xf32>, vector<8x32xf32>, vector<8x16xf32>, vector<8x48xf32> -> vector<8x128xf32>
    %397 = vector.shape_cast %396 : vector<8x128xf32> to vector<8x1x128xf32>
    %c0_118 = arith.constant 0 : index
    %c5 = arith.constant 5 : index
    %c0_119 = arith.constant 0 : index
    %398 = vector.load %arg15[%c0_118, %c5, %c0_119] : memref<8x8x128xf32, #tpu.memory_space<vmem>>, vector<8x1x128xf32>
    tpu.vector_store %arg15[%c0_118, %c5, %c0_119], %397 {strides = array<i32>} : memref<8x8x128xf32, #tpu.memory_space<vmem>>, vector<8x1x128xf32>,
    %399 = vector.shape_cast %360 : vector<8x16xf32> to vector<8x1x16xf32>
    %c0_120 = arith.constant 0 : index
    %c5_121 = arith.constant 5 : index
    %c0_122 = arith.constant 0 : index
    %400 = vector.load %arg14[%c0_120, %c5_121, %c0_122] : memref<8x8x16xf32, #tpu.memory_space<vmem>>, vector<8x1x16xf32>
    tpu.vector_store %arg14[%c0_120, %c5_121, %c0_122], %399 {strides = array<i32>} : memref<8x8x16xf32, #tpu.memory_space<vmem>>, vector<8x1x16xf32>,
    %401 = vector.extract_strided_slice %1 {offsets = [0, 6, 0], sizes = [8, 1, 16], strides = [1, 1, 1]} : vector<8x8x16xf32> to vector<8x1x16xf32>
    %402 = vector.shape_cast %401 : vector<8x1x16xf32> to vector<8x16xf32>
    %403 = vector.shape_cast %395 : vector<8x32xf32> to vector<8x1x32xf32>
    %404 = vector.broadcast %403 : vector<8x1x32xf32> to vector<8x16x32xf32>
    %405 = arith.mulf %404, %20 : vector<8x16x32xf32>
    %cst_123 = arith.constant dense<0.000000e+00> : vector<8x16xf32>
    %406 = vector.multi_reduction <add>, %405, %cst_123 [2] : vector<8x16x32xf32> to vector<8x16xf32>
    %cst_124 = arith.constant 0.176776692 : f32
    %407 = vector.broadcast %cst_124 : f32 to vector<8x16xf32>
    %408 = arith.mulf %406, %407 : vector<8x16xf32>
    %cst_125 = arith.constant dense<0xFF800000> : vector<8xf32>
    %409 = vector.multi_reduction <maximumf>, %408, %cst_125 [1] : vector<8x16xf32> to vector<8xf32>
    %410 = vector.shape_cast %409 : vector<8xf32> to vector<8x1xf32>
    %411 = vector.broadcast %410 : vector<8x1xf32> to vector<8x16xf32>
    %412 = arith.subf %408, %411 : vector<8x16xf32>
    %413 = math.exp %412 : vector<8x16xf32>
    %cst_126 = arith.constant dense<0.000000e+00> : vector<8xf32>
    %414 = vector.multi_reduction <add>, %413, %cst_126 [1] : vector<8x16xf32> to vector<8xf32>
    %415 = vector.shape_cast %414 : vector<8xf32> to vector<8x1xf32>
    %416 = tpu.reciprocal %415 {approx = true} : vector<8x1xf32> -> vector<8x1xf32>
    %417 = arith.mulf %415, %416 : vector<8x1xf32>
    %cst_127 = arith.constant 2.000000e+00 : f32
    %418 = vector.broadcast %cst_127 : f32 to vector<8x1xf32>
    %419 = arith.subf %418, %417 : vector<8x1xf32>
    %420 = arith.mulf %416, %419 : vector<8x1xf32>
    %421 = vector.broadcast %420 : vector<8x1xf32> to vector<8x16xf32>
    %422 = arith.mulf %413, %421 : vector<8x16xf32>
    %423 = vector.shape_cast %422 : vector<8x16xf32> to vector<8x16x1xf32>
    %424 = vector.broadcast %423 : vector<8x16x1xf32> to vector<8x16x32xf32>
    %425 = arith.mulf %424, %0 : vector<8x16x32xf32>
    %cst_128 = arith.constant dense<0.000000e+00> : vector<8x32xf32>
    %426 = vector.multi_reduction <add>, %425, %cst_128 [1] : vector<8x16x32xf32> to vector<8x32xf32>
    %427 = vector.extract_strided_slice %27 {offsets = [0, 6, 0], sizes = [8, 1, 128], strides = [1, 1, 1]} : vector<8x8x128xf32> to vector<8x1x128xf32>
    %428 = vector.shape_cast %427 : vector<8x1x128xf32> to vector<8x128xf32>
    %cst_129 = arith.constant dense<0.000000e+00> : vector<8x128xf32>
    %429 = tpu.matmul %426, %2, %cst_129 {dimension_numbers = #tpu.dot_dimension_numbers<[1], [0], [0], [1], [0, 0, 1, 1], [], []>} : vector<8x32xf32>, vector<32x128xf32>, vector<8x128xf32> -> vector<8x128xf32>
    %430 = arith.addf %428, %429 : vector<8x128xf32>
    %cst_130 = arith.constant dense<0.000000e+00> : vector<8x128xf32>
    %431 = tpu.matmul %395, %3, %cst_130 {dimension_numbers = #tpu.dot_dimension_numbers<[1], [0], [0], [1], [0, 0, 1, 1], [], []>} : vector<8x32xf32>, vector<32x128xf32>, vector<8x128xf32> -> vector<8x128xf32>
    %432 = arith.addf %430, %431 : vector<8x128xf32>
    %433 = vector.extract_strided_slice %432 {offsets = [0, 0], sizes = [8, 32], strides = [1, 1]} : vector<8x128xf32> to vector<8x32xf32>
    %434 = arith.negf %433 : vector<8x32xf32>
    %435 = math.exp %434 : vector<8x32xf32>
    %cst_131 = arith.constant 1.000000e+00 : f32
    %436 = vector.broadcast %cst_131 : f32 to vector<8x32xf32>
    %437 = arith.addf %436, %435 : vector<8x32xf32>
    %438 = arith.divf %436, %437 : vector<8x32xf32>
    %439 = vector.extract_strided_slice %432 {offsets = [0, 32], sizes = [8, 32], strides = [1, 1]} : vector<8x128xf32> to vector<8x32xf32>
    %440 = arith.negf %439 : vector<8x32xf32>
    %441 = math.exp %440 : vector<8x32xf32>
    %cst_132 = arith.constant 1.000000e+00 : f32
    %442 = vector.broadcast %cst_132 : f32 to vector<8x32xf32>
    %443 = arith.addf %442, %441 : vector<8x32xf32>
    %444 = arith.divf %442, %443 : vector<8x32xf32>
    %445 = vector.extract_strided_slice %432 {offsets = [0, 64], sizes = [8, 32], strides = [1, 1]} : vector<8x128xf32> to vector<8x32xf32>
    %446 = math.tanh %445 : vector<8x32xf32>
    %447 = vector.extract_strided_slice %432 {offsets = [0, 96], sizes = [8, 32], strides = [1, 1]} : vector<8x128xf32> to vector<8x32xf32>
    %448 = arith.negf %447 : vector<8x32xf32>
    %449 = math.exp %448 : vector<8x32xf32>
    %cst_133 = arith.constant 1.000000e+00 : f32
    %450 = vector.broadcast %cst_133 : f32 to vector<8x32xf32>
    %451 = arith.addf %450, %449 : vector<8x32xf32>
    %452 = arith.divf %450, %451 : vector<8x32xf32>
    %453 = arith.mulf %444, %393 : vector<8x32xf32>
    %454 = arith.mulf %438, %446 : vector<8x32xf32>
    %455 = arith.addf %453, %454 : vector<8x32xf32>
    %456 = math.tanh %455 : vector<8x32xf32>
    %457 = arith.mulf %452, %456 : vector<8x32xf32>
    %458 = tpu.concatenate %457, %426, %402, %28 in 1 : vector<8x32xf32>, vector<8x32xf32>, vector<8x16xf32>, vector<8x48xf32> -> vector<8x128xf32>
    %459 = vector.shape_cast %458 : vector<8x128xf32> to vector<8x1x128xf32>
    %c0_134 = arith.constant 0 : index
    %c6 = arith.constant 6 : index
    %c0_135 = arith.constant 0 : index
    %460 = vector.load %arg15[%c0_134, %c6, %c0_135] : memref<8x8x128xf32, #tpu.memory_space<vmem>>, vector<8x1x128xf32>
    tpu.vector_store %arg15[%c0_134, %c6, %c0_135], %459 {strides = array<i32>} : memref<8x8x128xf32, #tpu.memory_space<vmem>>, vector<8x1x128xf32>,
    %461 = vector.shape_cast %422 : vector<8x16xf32> to vector<8x1x16xf32>
    %c0_136 = arith.constant 0 : index
    %c6_137 = arith.constant 6 : index
    %c0_138 = arith.constant 0 : index
    %462 = vector.load %arg14[%c0_136, %c6_137, %c0_138] : memref<8x8x16xf32, #tpu.memory_space<vmem>>, vector<8x1x16xf32>
    tpu.vector_store %arg14[%c0_136, %c6_137, %c0_138], %461 {strides = array<i32>} : memref<8x8x16xf32, #tpu.memory_space<vmem>>, vector<8x1x16xf32>,
    %463 = vector.extract_strided_slice %1 {offsets = [0, 7, 0], sizes = [8, 1, 16], strides = [1, 1, 1]} : vector<8x8x16xf32> to vector<8x1x16xf32>
    %464 = vector.shape_cast %463 : vector<8x1x16xf32> to vector<8x16xf32>
    %465 = vector.shape_cast %457 : vector<8x32xf32> to vector<8x1x32xf32>
    %466 = vector.broadcast %465 : vector<8x1x32xf32> to vector<8x16x32xf32>
    %467 = arith.mulf %466, %20 : vector<8x16x32xf32>
    %cst_139 = arith.constant dense<0.000000e+00> : vector<8x16xf32>
    %468 = vector.multi_reduction <add>, %467, %cst_139 [2] : vector<8x16x32xf32> to vector<8x16xf32>
    %cst_140 = arith.constant 0.176776692 : f32
    %469 = vector.broadcast %cst_140 : f32 to vector<8x16xf32>
    %470 = arith.mulf %468, %469 : vector<8x16xf32>
    %cst_141 = arith.constant dense<0xFF800000> : vector<8xf32>
    %471 = vector.multi_reduction <maximumf>, %470, %cst_141 [1] : vector<8x16xf32> to vector<8xf32>
    %472 = vector.shape_cast %471 : vector<8xf32> to vector<8x1xf32>
    %473 = vector.broadcast %472 : vector<8x1xf32> to vector<8x16xf32>
    %474 = arith.subf %470, %473 : vector<8x16xf32>
    %475 = math.exp %474 : vector<8x16xf32>
    %cst_142 = arith.constant dense<0.000000e+00> : vector<8xf32>
    %476 = vector.multi_reduction <add>, %475, %cst_142 [1] : vector<8x16xf32> to vector<8xf32>
    %477 = vector.shape_cast %476 : vector<8xf32> to vector<8x1xf32>
    %478 = tpu.reciprocal %477 {approx = true} : vector<8x1xf32> -> vector<8x1xf32>
    %479 = arith.mulf %477, %478 : vector<8x1xf32>
    %cst_143 = arith.constant 2.000000e+00 : f32
    %480 = vector.broadcast %cst_143 : f32 to vector<8x1xf32>
    %481 = arith.subf %480, %479 : vector<8x1xf32>
    %482 = arith.mulf %478, %481 : vector<8x1xf32>
    %483 = vector.broadcast %482 : vector<8x1xf32> to vector<8x16xf32>
    %484 = arith.mulf %475, %483 : vector<8x16xf32>
    %485 = vector.shape_cast %484 : vector<8x16xf32> to vector<8x16x1xf32>
    %486 = vector.broadcast %485 : vector<8x16x1xf32> to vector<8x16x32xf32>
    %487 = arith.mulf %486, %0 : vector<8x16x32xf32>
    %cst_144 = arith.constant dense<0.000000e+00> : vector<8x32xf32>
    %488 = vector.multi_reduction <add>, %487, %cst_144 [1] : vector<8x16x32xf32> to vector<8x32xf32>
    %489 = vector.extract_strided_slice %27 {offsets = [0, 7, 0], sizes = [8, 1, 128], strides = [1, 1, 1]} : vector<8x8x128xf32> to vector<8x1x128xf32>
    %490 = vector.shape_cast %489 : vector<8x1x128xf32> to vector<8x128xf32>
    %cst_145 = arith.constant dense<0.000000e+00> : vector<8x128xf32>
    %491 = tpu.matmul %488, %2, %cst_145 {dimension_numbers = #tpu.dot_dimension_numbers<[1], [0], [0], [1], [0, 0, 1, 1], [], []>} : vector<8x32xf32>, vector<32x128xf32>, vector<8x128xf32> -> vector<8x128xf32>
    %492 = arith.addf %490, %491 : vector<8x128xf32>
    %cst_146 = arith.constant dense<0.000000e+00> : vector<8x128xf32>
    %493 = tpu.matmul %457, %3, %cst_146 {dimension_numbers = #tpu.dot_dimension_numbers<[1], [0], [0], [1], [0, 0, 1, 1], [], []>} : vector<8x32xf32>, vector<32x128xf32>, vector<8x128xf32> -> vector<8x128xf32>
    %494 = arith.addf %492, %493 : vector<8x128xf32>
    %495 = vector.extract_strided_slice %494 {offsets = [0, 0], sizes = [8, 32], strides = [1, 1]} : vector<8x128xf32> to vector<8x32xf32>
    %496 = arith.negf %495 : vector<8x32xf32>
    %497 = math.exp %496 : vector<8x32xf32>
    %cst_147 = arith.constant 1.000000e+00 : f32
    %498 = vector.broadcast %cst_147 : f32 to vector<8x32xf32>
    %499 = arith.addf %498, %497 : vector<8x32xf32>
    %500 = arith.divf %498, %499 : vector<8x32xf32>
    %501 = vector.extract_strided_slice %494 {offsets = [0, 32], sizes = [8, 32], strides = [1, 1]} : vector<8x128xf32> to vector<8x32xf32>
    %502 = arith.negf %501 : vector<8x32xf32>
    %503 = math.exp %502 : vector<8x32xf32>
    %cst_148 = arith.constant 1.000000e+00 : f32
    %504 = vector.broadcast %cst_148 : f32 to vector<8x32xf32>
    %505 = arith.addf %504, %503 : vector<8x32xf32>
    %506 = arith.divf %504, %505 : vector<8x32xf32>
    %507 = vector.extract_strided_slice %494 {offsets = [0, 64], sizes = [8, 32], strides = [1, 1]} : vector<8x128xf32> to vector<8x32xf32>
    %508 = math.tanh %507 : vector<8x32xf32>
    %509 = vector.extract_strided_slice %494 {offsets = [0, 96], sizes = [8, 32], strides = [1, 1]} : vector<8x128xf32> to vector<8x32xf32>
    %510 = arith.negf %509 : vector<8x32xf32>
    %511 = math.exp %510 : vector<8x32xf32>
    %cst_149 = arith.constant 1.000000e+00 : f32
    %512 = vector.broadcast %cst_149 : f32 to vector<8x32xf32>
    %513 = arith.addf %512, %511 : vector<8x32xf32>
    %514 = arith.divf %512, %513 : vector<8x32xf32>
    %515 = arith.mulf %506, %455 : vector<8x32xf32>
    %516 = arith.mulf %500, %508 : vector<8x32xf32>
    %517 = arith.addf %515, %516 : vector<8x32xf32>
    %518 = math.tanh %517 : vector<8x32xf32>
    %519 = arith.mulf %514, %518 : vector<8x32xf32>
    %520 = tpu.concatenate %519, %488, %464, %28 in 1 : vector<8x32xf32>, vector<8x32xf32>, vector<8x16xf32>, vector<8x48xf32> -> vector<8x128xf32>
    %521 = vector.shape_cast %520 : vector<8x128xf32> to vector<8x1x128xf32>
    %c0_150 = arith.constant 0 : index
    %c7 = arith.constant 7 : index
    %c0_151 = arith.constant 0 : index
    %522 = vector.load %arg15[%c0_150, %c7, %c0_151] : memref<8x8x128xf32, #tpu.memory_space<vmem>>, vector<8x1x128xf32>
    tpu.vector_store %arg15[%c0_150, %c7, %c0_151], %521 {strides = array<i32>} : memref<8x8x128xf32, #tpu.memory_space<vmem>>, vector<8x1x128xf32>,
    %523 = vector.shape_cast %484 : vector<8x16xf32> to vector<8x1x16xf32>
    %c0_152 = arith.constant 0 : index
    %c7_153 = arith.constant 7 : index
    %c0_154 = arith.constant 0 : index
    %524 = vector.load %arg14[%c0_152, %c7_153, %c0_154] : memref<8x8x16xf32, #tpu.memory_space<vmem>>, vector<8x1x16xf32>
    tpu.vector_store %arg14[%c0_152, %c7_153, %c0_154], %523 {strides = array<i32>} : memref<8x8x16xf32, #tpu.memory_space<vmem>>, vector<8x1x16xf32>,
    %c0_155 = arith.constant 0 : index
    %c0_156 = arith.constant 0 : index
    %c0_157 = arith.constant 0 : index
    %525 = vector.load %arg15[%c0_155, %c0_156, %c0_157] : memref<8x8x128xf32, #tpu.memory_space<vmem>>, vector<8x8x128xf32>
    %526 = vector.shape_cast %525 : vector<8x8x128xf32> to vector<64x128xf32>
    %c0_158 = arith.constant 0 : index
    %c0_159 = arith.constant 0 : index
    %527 = vector.load %arg11[%c0_158, %c0_159] : memref<128x128xf32, #tpu.memory_space<vmem>>, vector<128x128xf32>
    %cst_160 = arith.constant dense<0.000000e+00> : vector<64x128xf32>
    %528 = tpu.matmul %526, %527, %cst_160 {dimension_numbers = #tpu.dot_dimension_numbers<[1], [0], [0], [1], [0, 0, 1, 1], [], []>} : vector<64x128xf32>, vector<128x128xf32>, vector<64x128xf32> -> vector<64x128xf32>
    %c0_161 = arith.constant 0 : index
    %c0_162 = arith.constant 0 : index
    %529 = vector.load %arg12[%c0_161, %c0_162] : memref<1x128xf32, #tpu.memory_space<vmem>>, vector<1x128xf32>
    %530 = vector.broadcast %529 : vector<1x128xf32> to vector<64x128xf32>
    %531 = arith.addf %528, %530 : vector<64x128xf32>
    %532 = vector.shape_cast %531 : vector<64x128xf32> to vector<8x8x128xf32>
    %c0_163 = arith.constant 0 : index
    %c0_164 = arith.constant 0 : index
    %c0_165 = arith.constant 0 : index
    %533 = vector.load %arg13[%c0_163, %c0_164, %c0_165] : memref<8x8x128xf32, #tpu.memory_space<vmem>>, vector<8x8x128xf32>
    tpu.vector_store %arg13[%c0_163, %c0_164, %c0_165], %532 {strides = array<i32>} : memref<8x8x128xf32, #tpu.memory_space<vmem>>, vector<8x8x128xf32>,
    return
  }
  func.func @transform_0(%arg0: i32) -> (i32, i32, i32) {
    %c0_i32 = arith.constant 0 : i32
    %c0_i32_0 = arith.constant 0 : i32
    %c0_i32_1 = arith.constant 0 : i32
    return %arg0, %c0_i32, %c0_i32_0 : i32, i32, i32
  }
  func.func @transform_1(%arg0: i32) -> (i32, i32, i32) {
    %c0_i32 = arith.constant 0 : i32
    %c0_i32_0 = arith.constant 0 : i32
    %c0_i32_1 = arith.constant 0 : i32
    return %arg0, %c0_i32, %c0_i32_0 : i32, i32, i32
  }
  func.func @transform_2(%arg0: i32) -> (i32, i32) {
    %c0_i32 = arith.constant 0 : i32
    %c0_i32_0 = arith.constant 0 : i32
    %c0_i32_1 = arith.constant 0 : i32
    return %c0_i32, %c0_i32_0 : i32, i32
  }
  func.func @transform_3(%arg0: i32) -> (i32, i32) {
    %c0_i32 = arith.constant 0 : i32
    %c0_i32_0 = arith.constant 0 : i32
    %c0_i32_1 = arith.constant 0 : i32
    return %c0_i32, %c0_i32_0 : i32, i32
  }
  func.func @transform_4(%arg0: i32) -> (i32, i32) {
    %c0_i32 = arith.constant 0 : i32
    %c0_i32_0 = arith.constant 0 : i32
    %c0_i32_1 = arith.constant 0 : i32
    return %c0_i32, %c0_i32_0 : i32, i32
  }
  func.func @transform_5(%arg0: i32) -> (i32, i32) {
    %c0_i32 = arith.constant 0 : i32
    %c0_i32_0 = arith.constant 0 : i32
    %c0_i32_1 = arith.constant 0 : i32
    return %c0_i32, %c0_i32_0 : i32, i32
  }
  func.func @transform_6(%arg0: i32) -> (i32, i32) {
    %c0_i32 = arith.constant 0 : i32
    %c0_i32_0 = arith.constant 0 : i32
    %c0_i32_1 = arith.constant 0 : i32
    return %c0_i32, %c0_i32_0 : i32, i32
  }
  func.func @transform_7(%arg0: i32) -> (i32, i32) {
    %c0_i32 = arith.constant 0 : i32
    %c0_i32_0 = arith.constant 0 : i32
    %c0_i32_1 = arith.constant 0 : i32
    return %c0_i32, %c0_i32_0 : i32, i32
  }
  func.func @transform_8(%arg0: i32) -> (i32, i32) {
    %c0_i32 = arith.constant 0 : i32
    %c0_i32_0 = arith.constant 0 : i32
    %c0_i32_1 = arith.constant 0 : i32
    return %c0_i32, %c0_i32_0 : i32, i32
  }
  func.func @transform_9(%arg0: i32) -> (i32, i32) {
    %c0_i32 = arith.constant 0 : i32
    %c0_i32_0 = arith.constant 0 : i32
    %c0_i32_1 = arith.constant 0 : i32
    return %c0_i32, %c0_i32_0 : i32, i32
  }
  func.func @transform_10(%arg0: i32) -> (i32, i32) {
    %c0_i32 = arith.constant 0 : i32
    %c0_i32_0 = arith.constant 0 : i32
    %c0_i32_1 = arith.constant 0 : i32
    return %c0_i32, %c0_i32_0 : i32, i32
  }
  func.func @transform_11(%arg0: i32) -> (i32, i32) {
    %c0_i32 = arith.constant 0 : i32
    %c0_i32_0 = arith.constant 0 : i32
    %c0_i32_1 = arith.constant 0 : i32
    return %c0_i32, %c0_i32_0 : i32, i32
  }
  func.func @transform_12(%arg0: i32) -> (i32, i32, i32) {
    %c0_i32 = arith.constant 0 : i32
    %c0_i32_0 = arith.constant 0 : i32
    %c0_i32_1 = arith.constant 0 : i32
    return %arg0, %c0_i32, %c0_i32_0 : i32, i32, i32
  }
  func.func @transform_13(%arg0: i32) -> (i32, i32, i32) {
    %c0_i32 = arith.constant 0 : i32
    %c0_i32_0 = arith.constant 0 : i32
    %c0_i32_1 = arith.constant 0 : i32
    return %arg0, %c0_i32, %c0_i32_0 : i32, i32, i32
  }
}

</mosaic_0001>

<llo_original>
// kernel: tpu_custom_call.1
$region0: #{tpu_custom_call.1}
  #allocation0 [shape = 'u32[]', space=smem, size = 0x4, offset = 0x4, fixed_abs, tag = 'smem constant byte address 0x4 - core index']
  #allocation1 [shape = 'u32[144,128]{1,0:T(1,128)}', space=vmem, size = 0x12000, scoped, tag = 'internal scratch']
  #allocation2 [shape = 'f32[8,8,128]{2,1,0:T(8,128)}', space=vmem, size = 0x8000, scoped, tag = 'scratch operand']
  %s0 = inlined_call_operand.hbm [shape: f32[8,16,32], index: 0, kind: input, shape index: {}]
  %s1 = inlined_call_operand.hbm [shape: f32[8,8,16], index: 1, kind: input, shape index: {}]
  %s2 = inlined_call_operand.hbm [shape: f32[32,64], index: 2, kind: input, shape index: {}]
  %s3 = inlined_call_operand.vmem [shape: f32[1,64], index: 3, kind: input, shape index: {}]
  %s4 = inlined_call_operand.hbm [shape: f32[32,32], index: 4, kind: input, shape index: {}]
  %s5 = inlined_call_operand.vmem [shape: f32[1,32], index: 5, kind: input, shape index: {}]
  %s6 = inlined_call_operand.hbm [shape: f32[16,128], index: 6, kind: input, shape index: {}]
  %s7 = inlined_call_operand.hbm [shape: f32[32,128], index: 7, kind: input, shape index: {}]
  %s8 = inlined_call_operand.hbm [shape: f32[32,128], index: 8, kind: input, shape index: {}]
  %s9 = inlined_call_operand.vmem [shape: f32[1,128], index: 9, kind: input, shape index: {}]
  %s10 = inlined_call_operand.hbm [shape: f32[128,128], index: 10, kind: input, shape index: {}]
  %s11 = inlined_call_operand.vmem [shape: f32[1,128], index: 11, kind: input, shape index: {}]
  %s12 = inlined_call_operand.hbm [shape: f32[8,8,128], index: 12, kind: output, shape index: {0}]
  %s13 = inlined_call_operand.hbm [shape: f32[8,8,16], index: 13, kind: output, shape index: {1}]
  %14 = xla_tuple %s12, %s13
  %s15 = sld [smem:[#allocation0]]
  $region98: #{tpu_custom_call.1} parent=0
    _
  %s17 = ssub.s32 1, %s15
  %s18 = scalar_select 0, %s17, %s15
  $region1: #{tpu_custom_call.1} parent=0
    #allocation3 [shape = 'u8[65536]{0}', space=vmem, size = 0x10000, scoped, tag = 'input window, operand 0, single buffered']
    #allocation4 [shape = 's32[1]{0}', space=sflag, size = 0x4, scoped, tag = 'scoped memory for tpu_custom_call.1']
    #allocation5 [shape = 's32[1]{0}', space=sflag, size = 0x4, scoped, tag = 'scoped memory for tpu_custom_call.1']
    #allocation6 [shape = 'u8[32768]{0}', space=vmem, size = 0x8000, scoped, tag = 'input window, operand 1, single buffered']
    #allocation7 [shape = 's32[1]{0}', space=sflag, size = 0x4, scoped, tag = 'scoped memory for tpu_custom_call.1']
    #allocation8 [shape = 'u8[16384]{0}', space=vmem, size = 0x4000, scoped, tag = 'input window, operand 2, single buffered']
    #allocation9 [shape = 'u8[16384]{0}', space=vmem, size = 0x4000, scoped, tag = 'input window, operand 4, single buffered']
    #allocation10 [shape = 's32[1]{0}', space=sflag, size = 0x4, scoped, tag = 'scoped memory for tpu_custom_call.1']
    #allocation11 [shape = 'u8[8192]{0}', space=vmem, size = 0x2000, scoped, tag = 'input window, operand 6, single buffered']
    #allocation12 [shape = 'u8[16384]{0}', space=vmem, size = 0x4000, scoped, tag = 'input window, operand 7, single buffered']
    #allocation13 [shape = 's32[1]{0}', space=sflag, size = 0x4, scoped, tag = 'scoped memory for tpu_custom_call.1']
    #allocation14 [shape = 'u8[16384]{0}', space=vmem, size = 0x4000, scoped, tag = 'input window, operand 8, single buffered']
    #allocation15 [shape = 'u8[65536]{0}', space=vmem, size = 0x10000, scoped, tag = 'input window, operand 10, single buffered']
    #allocation16 [shape = 's32[1]{0}', space=sflag, size = 0x4, scoped, tag = 'scoped memory for tpu_custom_call.1']
    #allocation17 [shape = 'u8[32768]{0}', space=vmem, size = 0x8000, scoped, tag = 'output window, operand 0, single buffered']
    #allocation18 [shape = 'u8[32768]{0}', space=vmem, size = 0x8000, scoped, tag = 'output window, operand 1, single buffered']
    #allocation19 [shape = 's32[1]{0}', space=sflag, size = 0x4, scoped, tag = 'scoped memory for tpu_custom_call.1']
    %19 = vsyncpa [#allocation4], 0
    %20 = vsyncpa [#allocation7], 0
    %21 = vsyncpa [#allocation10], 0
    %22 = vsyncpa [#allocation13], 0
    %23 = vsyncpa [#allocation16], 0
    %24 = vsyncpa [#allocation5], 0
    %25 = vsyncpa [#allocation19], 0
    // Predicated region
    $region2: #{tpu_custom_call.1} parent=1 // pred_check
      _
    $region3: #{tpu_custom_call.1} parent=1 // pred_check_branch
      %27 = sbr.rel (0) target = $region5
    $region4: #{tpu_custom_call.1} parent=1 // pred_region
      %s29 = ssub.s32 2048, 2048
      %30 = vsyncadd [#allocation4], %s29
      %s31 = sshll.u32 [#allocation3], 4
      %s32 = int_to_ptr.vmem [resolvable:$true] %s31
      %37 = dma.hbm_to_vmem [thread:$0]  %s0, 2048, %s32, [#allocation4], 128, 128, 8
    $region5: #{tpu_custom_call.1} parent=1 // pred_fallthru
      _
    // Predicated region
    $region6: #{tpu_custom_call.1} parent=1 // pred_check
      _
    $region7: #{tpu_custom_call.1} parent=1 // pred_check_branch
      %39 = sbr.rel (0) target = $region9
    $region8: #{tpu_custom_call.1} parent=1 // pred_region
      %s41 = ssub.s32 1024, 1024
      %42 = vsyncadd [#allocation7], %s41
      %s43 = sshll.u32 [#allocation6], 4
      %s44 = int_to_ptr.vmem [resolvable:$true] %s43
      %49 = dma.hbm_to_vmem [thread:$0]  %s1, 1024, %s44, [#allocation7], 128, 128, 8
    $region9: #{tpu_custom_call.1} parent=1 // pred_fallthru
      _
    // Predicated region
    $region10: #{tpu_custom_call.1} parent=1 // pred_check
      _
    $region11: #{tpu_custom_call.1} parent=1 // pred_check_branch
      %51 = sbr.rel (0) target = $region13
    $region12: #{tpu_custom_call.1} parent=1 // pred_region
      %s53 = ssub.s32 512, 512
      %54 = vsyncadd [#allocation7], %s53
      %s55 = sshll.u32 [#allocation8], 4
      %s56 = int_to_ptr.vmem [resolvable:$true] %s55
      %61 = dma.hbm_to_vmem [thread:$0]  %s2, 512, %s56, [#allocation7], 128, 128, 8
    $region13: #{tpu_custom_call.1} parent=1 // pred_fallthru
      _
    // Predicated region
    $region14: #{tpu_custom_call.1} parent=1 // pred_check
      _
    $region15: #{tpu_custom_call.1} parent=1 // pred_check_branch
      %63 = sbr.rel (0) target = $region17
    $region16: #{tpu_custom_call.1} parent=1 // pred_region
      _
    $region17: #{tpu_custom_call.1} parent=1 // pred_fallthru
      _
    // Predicated region
    $region18: #{tpu_custom_call.1} parent=1 // pred_check
      _
    $region19: #{tpu_custom_call.1} parent=1 // pred_check_branch
      %65 = sbr.rel (0) target = $region21
    $region20: #{tpu_custom_call.1} parent=1 // pred_region
      %s67 = ssub.s32 512, 512
      %68 = vsyncadd [#allocation10], %s67
      %s69 = sshll.u32 [#allocation9], 4
      %s70 = int_to_ptr.vmem [resolvable:$true] %s69
      %75 = dma.hbm_to_vmem [thread:$0]  %s4, 512, %s70, [#allocation10], 128, 128, 8
    $region21: #{tpu_custom_call.1} parent=1 // pred_fallthru
      _
    // Predicated region
    $region22: #{tpu_custom_call.1} parent=1 // pred_check
      _
    $region23: #{tpu_custom_call.1} parent=1 // pred_check_branch
      %77 = sbr.rel (0) target = $region25
    $region24: #{tpu_custom_call.1} parent=1 // pred_region
      _
    $region25: #{tpu_custom_call.1} parent=1 // pred_fallthru
      _
    // Predicated region
    $region26: #{tpu_custom_call.1} parent=1 // pred_check
      _
    $region27: #{tpu_custom_call.1} parent=1 // pred_check_branch
      %79 = sbr.rel (0) target = $region29
    $region28: #{tpu_custom_call.1} parent=1 // pred_region
      %s81 = ssub.s32 256, 256
      %82 = vsyncadd [#allocation10], %s81
      %s83 = sshll.u32 [#allocation11], 4
      %s84 = int_to_ptr.vmem [resolvable:$true] %s83
      %89 = dma.hbm_to_vmem [thread:$0]  %s6, 256, %s84, [#allocation10], 128, 128, 8
    $region29: #{tpu_custom_call.1} parent=1 // pred_fallthru
      _
    // Predicated region
    $region30: #{tpu_custom_call.1} parent=1 // pred_check
      _
    $region31: #{tpu_custom_call.1} parent=1 // pred_check_branch
      %91 = sbr.rel (0) target = $region33
    $region32: #{tpu_custom_call.1} parent=1 // pred_region
      %s93 = ssub.s32 512, 512
      %94 = vsyncadd [#allocation13], %s93
      %s95 = sshll.u32 [#allocation12], 4
      %s96 = int_to_ptr.vmem [resolvable:$true] %s95
      %101 = dma.hbm_to_vmem [thread:$0]  %s7, 512, %s96, [#allocation13], 128, 128, 8
    $region33: #{tpu_custom_call.1} parent=1 // pred_fallthru
      _
    // Predicated region
    $region34: #{tpu_custom_call.1} parent=1 // pred_check
      _
    $region35: #{tpu_custom_call.1} parent=1 // pred_check_branch
      %103 = sbr.rel (0) target = $region37
    $region36: #{tpu_custom_call.1} parent=1 // pred_region
      %s105 = ssub.s32 512, 512
      %106 = vsyncadd [#allocation13], %s105
      %s107 = sshll.u32 [#allocation14], 4
      %s108 = int_to_ptr.vmem [resolvable:$true] %s107
      %113 = dma.hbm_to_vmem [thread:$0]  %s8, 512, %s108, [#allocation13], 128, 128, 8
    $region37: #{tpu_custom_call.1} parent=1 // pred_fallthru
      _
    // Predicated region
    $region38: #{tpu_custom_call.1} parent=1 // pred_check
      _
    $region39: #{tpu_custom_call.1} parent=1 // pred_check_branch
      %115 = sbr.rel (0) target = $region41
    $region40: #{tpu_custom_call.1} parent=1 // pred_region
      _
    $region41: #{tpu_custom_call.1} parent=1 // pred_fallthru
      _
    // Predicated region
    $region42: #{tpu_custom_call.1} parent=1 // pred_check
      _
    $region43: #{tpu_custom_call.1} parent=1 // pred_check_branch
      %117 = sbr.rel (0) target = $region45
    $region44: #{tpu_custom_call.1} parent=1 // pred_region
      %s119 = ssub.s32 2048, 2048
      %120 = vsyncadd [#allocation16], %s119
      %s121 = sshll.u32 [#allocation15], 4
      %s122 = int_to_ptr.vmem [resolvable:$true] %s121
      %127 = dma.hbm_to_vmem [thread:$0]  %s10, 2048, %s122, [#allocation16], 128, 128, 8
    $region45: #{tpu_custom_call.1} parent=1 // pred_fallthru
      _
    // Predicated region
    $region46: #{tpu_custom_call.1} parent=1 // pred_check
      _
    $region47: #{tpu_custom_call.1} parent=1 // pred_check_branch
      %129 = sbr.rel (0) target = $region49
    $region48: #{tpu_custom_call.1} parent=1 // pred_region
      _
    $region49: #{tpu_custom_call.1} parent=1 // pred_fallthru
      _
    // Predicated region
    $region50: #{tpu_custom_call.1} parent=1 // pred_check
      _
    $region51: #{tpu_custom_call.1} parent=1 // pred_check_branch
      %131 = sbr.rel (0) target = $region53
    $region52: #{tpu_custom_call.1} parent=1 // pred_region
      %132 = dma.done [#allocation4], 2048
    $region53: #{tpu_custom_call.1} parent=1 // pred_fallthru
      _
    // Predicated region
    $region54: #{tpu_custom_call.1} parent=1 // pred_check
      _
    $region55: #{tpu_custom_call.1} parent=1 // pred_check_branch
      %134 = sbr.rel (0) target = $region57
    $region56: #{tpu_custom_call.1} parent=1 // pred_region
      %135 = dma.done [#allocation7], 1024
    $region57: #{tpu_custom_call.1} parent=1 // pred_fallthru
      _
    // Predicated region
    $region58: #{tpu_custom_call.1} parent=1 // pred_check
      _
    $region59: #{tpu_custom_call.1} parent=1 // pred_check_branch
      %137 = sbr.rel (0) target = $region61
    $region60: #{tpu_custom_call.1} parent=1 // pred_region
      %138 = dma.done [#allocation7], 512
    $region61: #{tpu_custom_call.1} parent=1 // pred_fallthru
      _
    // Predicated region
    $region62: #{tpu_custom_call.1} parent=1 // pred_check
      _
    $region63: #{tpu_custom_call.1} parent=1 // pred_check_branch
      %140 = sbr.rel (0) target = $region65
    $region64: #{tpu_custom_call.1} parent=1 // pred_region
      %141 = dma.done [#allocation10], 512
    $region65: #{tpu_custom_call.1} parent=1 // pred_fallthru
      _
    // Predicated region
    $region66: #{tpu_custom_call.1} parent=1 // pred_check
      _
    $region67: #{tpu_custom_call.1} parent=1 // pred_check_branch
      %143 = sbr.rel (0) target = $region69
    $region68: #{tpu_custom_call.1} parent=1 // pred_region
      %144 = dma.done [#allocation10], 256
    $region69: #{tpu_custom_call.1} parent=1 // pred_fallthru
      _
    // Predicated region
    $region70: #{tpu_custom_call.1} parent=1 // pred_check
      _
    $region71: #{tpu_custom_call.1} parent=1 // pred_check_branch
      %146 = sbr.rel (0) target = $region73
    $region72: #{tpu_custom_call.1} parent=1 // pred_region
      %147 = dma.done [#allocation13], 512
    $region73: #{tpu_custom_call.1} parent=1 // pred_fallthru
      _
    // Predicated region
    $region74: #{tpu_custom_call.1} parent=1 // pred_check
      _
    $region75: #{tpu_custom_call.1} parent=1 // pred_check_branch
      %149 = sbr.rel (0) target = $region77
    $region76: #{tpu_custom_call.1} parent=1 // pred_region
      %150 = dma.done [#allocation13], 512
    $region77: #{tpu_custom_call.1} parent=1 // pred_fallthru
      _
    // Predicated region
    $region78: #{tpu_custom_call.1} parent=1 // pred_check
      _
    $region79: #{tpu_custom_call.1} parent=1 // pred_check_branch
      %152 = sbr.rel (0) target = $region81
    $region80: #{tpu_custom_call.1} parent=1 // pred_region
      %153 = dma.done [#allocation16], 2048
    $region81: #{tpu_custom_call.1} parent=1 // pred_fallthru
      _
    %v154 = vld [vmem:[#allocation3] sm:$0xff]
    %v155 = vld [vmem:[#allocation3 + $0x8] sm:$0xff]
    %v156 = vld [vmem:[#allocation3 + $0x10] sm:$0xff]
    %v157 = vld [vmem:[#allocation3 + $0x18] sm:$0xff]
    %v158 = vld [vmem:[#allocation3 + $0x20] sm:$0xff]
    %v159 = vld [vmem:[#allocation3 + $0x28] sm:$0xff]
    %v160 = vld [vmem:[#allocation3 + $0x30] sm:$0xff]
    %v161 = vld [vmem:[#allocation3 + $0x38] sm:$0xff]
    %v162 = vld [vmem:[#allocation3 + $0x40] sm:$0xff]
    %v163 = vld [vmem:[#allocation3 + $0x48] sm:$0xff]
    %v164 = vld [vmem:[#allocation3 + $0x50] sm:$0xff]
    %v165 = vld [vmem:[#allocation3 + $0x58] sm:$0xff]
    %v166 = vld [vmem:[#allocation3 + $0x60] sm:$0xff]
    %v167 = vld [vmem:[#allocation3 + $0x68] sm:$0xff]
    %v168 = vld [vmem:[#allocation3 + $0x70] sm:$0xff]
    %v169 = vld [vmem:[#allocation3 + $0x78] sm:$0xff]
    %v170 = vld [vmem:[#allocation6] sm:$0xff]
    %v171 = vld [vmem:[#allocation6 + $0x8] sm:$0xff]
    %v172 = vld [vmem:[#allocation6 + $0x10] sm:$0xff]
    %v173 = vld [vmem:[#allocation6 + $0x18] sm:$0xff]
    %v174 = vld [vmem:[#allocation6 + $0x20] sm:$0xff]
    %v175 = vld [vmem:[#allocation6 + $0x28] sm:$0xff]
    %v176 = vld [vmem:[#allocation6 + $0x30] sm:$0xff]
    %v177 = vld [vmem:[#allocation6 + $0x38] sm:$0xff]
    %v178 = vld [vmem:[#allocation12] sm:$0xff]
    %v179 = vld [vmem:[#allocation12 + $0x8] sm:$0xff]
    %v180 = vld [vmem:[#allocation12 + $0x10] sm:$0xff]
    %v181 = vld [vmem:[#allocation12 + $0x18] sm:$0xff]
    %v182 = vld [vmem:[#allocation14] sm:$0xff]
    %v183 = vld [vmem:[#allocation14 + $0x8] sm:$0xff]
    %v184 = vld [vmem:[#allocation14 + $0x10] sm:$0xff]
    %v185 = vld [vmem:[#allocation14 + $0x18] sm:$0xff]
    %vm186 = vcmask 261120
    %v187 = vsel %vm186, %v154, 0.0
    %v188 = vsel %vm186, %v155, 0.0
    %v189 = vadd.f32 %v187, %v188
    %v190 = vrot.slane %v189, 4
    %v191 = vadd.f32 %v189, %v190
    %v192 = vrot.slane %v191, 2
    %v193 = vadd.f32 %v191, %v192
    %v194 = vrot.slane %v193, 1
    %v195 = vadd.f32 %v193, %v194
    %v196 = vsel %vm186, %v156, 0.0
    %v197 = vsel %vm186, %v157, 0.0
    %v198 = vadd.f32 %v196, %v197
    %v199 = vrot.slane %v198, 4
    %v200 = vadd.f32 %v198, %v199
    %v201 = vrot.slane %v200, 2
    %v202 = vadd.f32 %v200, %v201
    %v203 = vrot.slane %v202, 1
    %v204 = vadd.f32 %v202, %v203
    %v205 = vsel %vm186, %v158, 0.0
    %v206 = vsel %vm186, %v159, 0.0
    %v207 = vadd.f32 %v205, %v206
    %v208 = vrot.slane %v207, 4
    %v209 = vadd.f32 %v207, %v208
    %v210 = vrot.slane %v209, 2
    %v211 = vadd.f32 %v209, %v210
    %v212 = vrot.slane %v211, 1
    %v213 = vadd.f32 %v211, %v212
    %v214 = vsel %vm186, %v160, 0.0
    %v215 = vsel %vm186, %v161, 0.0
    %v216 = vadd.f32 %v214, %v215
    %v217 = vrot.slane %v216, 4
    %v218 = vadd.f32 %v216, %v217
    %v219 = vrot.slane %v218, 2
    %v220 = vadd.f32 %v218, %v219
    %v221 = vrot.slane %v220, 1
    %v222 = vadd.f32 %v220, %v221
    %v223 = vsel %vm186, %v162, 0.0
    %v224 = vsel %vm186, %v163, 0.0
    %v225 = vadd.f32 %v223, %v224
    %v226 = vrot.slane %v225, 4
    %v227 = vadd.f32 %v225, %v226
    %v228 = vrot.slane %v227, 2
    %v229 = vadd.f32 %v227, %v228
    %v230 = vrot.slane %v229, 1
    %v231 = vadd.f32 %v229, %v230
    %v232 = vsel %vm186, %v164, 0.0
    %v233 = vsel %vm186, %v165, 0.0
    %v234 = vadd.f32 %v232, %v233
    %v235 = vrot.slane %v234, 4
    %v236 = vadd.f32 %v234, %v235
    %v237 = vrot.slane %v236, 2
    %v238 = vadd.f32 %v236, %v237
    %v239 = vrot.slane %v238, 1
    %v240 = vadd.f32 %v238, %v239
    %v241 = vsel %vm186, %v166, 0.0
    %v242 = vsel %vm186, %v167, 0.0
    %v243 = vadd.f32 %v241, %v242
    %v244 = vrot.slane %v243, 4
    %v245 = vadd.f32 %v243, %v244
    %v246 = vrot.slane %v245, 2
    %v247 = vadd.f32 %v245, %v246
    %v248 = vrot.slane %v247, 1
    %v249 = vadd.f32 %v247, %v248
    %v250 = vsel %vm186, %v168, 0.0
    %v251 = vsel %vm186, %v169, 0.0
    %v252 = vadd.f32 %v250, %v251
    %v253 = vrot.slane %v252, 4
    %v254 = vadd.f32 %v252, %v253
    %v255 = vrot.slane %v254, 2
    %v256 = vadd.f32 %v254, %v255
    %v257 = vrot.slane %v256, 1
    %v258 = vadd.f32 %v256, %v257
    %v259 = vrcp.pop 16.0
    %v260 = vmul.f32 %v195, %v259
    %v261 = vmul.f32 %v204, %v259
    %v262 = vmul.f32 %v213, %v259
    %v263 = vmul.f32 %v222, %v259
    %v264 = vmul.f32 %v231, %v259
    %v265 = vmul.f32 %v240, %v259
    %v266 = vmul.f32 %v249, %v259
    %v267 = vmul.f32 %v258, %v259
    %v268 = vld [vmem:[#allocation8] sm:$0xff]
    %v269 = vld [vmem:[#allocation8 + $0x8] sm:$0xff]
    %v270 = vld [vmem:[#allocation8 + $0x10] sm:$0xff]
    %v271 = vld [vmem:[#allocation8 + $0x18] sm:$0xff]
    %v272 = vld [vmem:[%s3] sm:$0x1]
    %v274 = vlaneseq
    %v275 = vshrl.u32 %v274, 7
    %v276 = vsub.s32 0, %v275
    %v277 = vrot.slane %v272, %v276
    %vm287 = vcmask 1041409
    %v288 = vsel %vm287, %v261, %v260
    %vm289 = vcmask 1042434
    %v290 = vsel %vm289, %v262, %v288
    %vm291 = vcmask 1043459
    %v292 = vsel %vm291, %v263, %v290
    %vm293 = vcmask 1044484
    %v294 = vsel %vm293, %v264, %v292
    %vm295 = vcmask 1045509
    %v296 = vsel %vm295, %v265, %v294
    %vm297 = vcmask 1046534
    %v298 = vsel %vm297, %v266, %v296
    %vm299 = vcmask 1047559
    %v300 = vsel %vm299, %v267, %v298
    %v301 = vsel %vm186, %v300, 0
    %303 = vmatprep.subr.mxu0 0.0
    %304 = vmatpush1.msra.mxu0 0.0
    %305 = vmatprep.subr.mxu0 0.0
    %306 = vmatpush1.msra.mxu0 0.0
    %307 = vmatprep.subr.mxu0 0.0
    %308 = vmatpush1.msra.mxu0 0.0
    %309 = vmatprep.subr.mxu0 0.0
    %310 = vmatpush1.msra.mxu0 0.0
    %311 = vmatprep.subr.mxu0 0.0
    %312 = vmatpush1.msra.mxu0 0.0
    %313 = vmatprep.subr.mxu0 0.0
    %314 = vmatpush1.msra.mxu0 0.0
    %315 = vmatprep.subr.mxu0 0.0
    %316 = vmatpush1.msra.mxu0 0.0
    %317 = vmatprep.subr.mxu0 0.0
    %318 = vmatpush1.msra.mxu0 0.0
    %319 = vmatprep.subr.mxu0 0.0
    %320 = vmatpush1.msra.mxu0 0.0
    %321 = vmatprep.subr.mxu0 0.0
    %322 = vmatpush1.msra.mxu0 0.0
    %323 = vmatprep.subr.mxu0 0.0
    %324 = vmatpush1.msra.mxu0 0.0
    %325 = vmatprep.subr.mxu0 0.0
    %326 = vmatpush1.msra.mxu0 0.0
    %327 = vmatprep.subr.mxu0 0.0
    %328 = vmatpush1.msra.mxu0 %v271
    %329 = vmatprep.subr.mxu0 0.0
    %330 = vmatpush1.msra.mxu0 %v270
    %331 = vmatprep.subr.mxu0 0.0
    %332 = vmatpush1.msra.mxu0 %v269
    %333 = vmatprep.subr.mxu0 0.0
    %334 = vmatpush1.msra.mxu0 %v268
    %335 = vmatprep.subr.mxu0 0.0
    %336 = vmatpush2.msra.mxu0 0.0
    %337 = vmatprep.subr.mxu0 0.0
    %338 = vmatpush2.msra.mxu0 0.0
    %339 = vmatprep.subr.mxu0 0.0
    %340 = vmatpush2.msra.mxu0 0.0
    %341 = vmatprep.subr.mxu0 0.0
    %342 = vmatpush2.msra.mxu0 0.0
    %343 = vmatprep.subr.mxu0 0.0
    %344 = vmatpush2.msra.mxu0 0.0
    %345 = vmatprep.subr.mxu0 0.0
    %346 = vmatpush2.msra.mxu0 0.0
    %347 = vmatprep.subr.mxu0 0.0
    %348 = vmatpush2.msra.mxu0 0.0
    %349 = vmatprep.subr.mxu0 0.0
    %350 = vmatpush2.msra.mxu0 0.0
    %351 = vmatprep.subr.mxu0 0.0
    %352 = vmatpush2.msra.mxu0 0.0
    %353 = vmatprep.subr.mxu0 0.0
    %354 = vmatpush2.msra.mxu0 0.0
    %355 = vmatprep.subr.mxu0 0.0
    %356 = vmatpush2.msra.mxu0 0.0
    %357 = vmatprep.subr.mxu0 0.0
    %358 = vmatpush2.msra.mxu0 0.0
    %359 = vmatprep.subr.mxu0 0.0
    %360 = vmatpush2.msra.mxu0 0.0
    %361 = vmatprep.subr.mxu0 0.0
    %362 = vmatpush2.msra.mxu0 0.0
    %363 = vmatprep.subr.mxu0 0.0
    %364 = vmatpush2.msra.mxu0 0.0
    %365 = vmatprep.subr.mxu0 0.0
    %366 = vmatpush2.msra.mxu0 0.0
    %367 = vmatprep.mubr.f32.mxu0 0.0
    %368 = vmatmul.mubr.f32.gmra.mxu0 %v301
    %v369 = vpop.f32.mrf.mxu0
    %v370 = vadd.f32 %v277, %v369
    %v371 = vpop.f32.mrf.mxu0
    %372 = vdwg.mxu0
    %v373 = vld [vmem:[#allocation9] sm:$0xff]
    %v374 = vld [vmem:[#allocation9 + $0x8] sm:$0xff]
    %v375 = vld [vmem:[#allocation9 + $0x10] sm:$0xff]
    %v376 = vld [vmem:[#allocation9 + $0x18] sm:$0xff]
    %v377 = vld [vmem:[%s5] sm:$0x1]
    %v379 = vlaneseq
    %v380 = vshrl.u32 %v379, 7
    %v381 = vsub.s32 0, %v380
    %v382 = vrot.slane %v377, %v381
    %v385 = vsel %vm186, %v154, 0
    %v388 = vsel %vm186, %v155, 0
    %v391 = vsel %vm186, %v156, 0
    %v394 = vsel %vm186, %v157, 0
    %v397 = vsel %vm186, %v158, 0
    %v400 = vsel %vm186, %v159, 0
    %v403 = vsel %vm186, %v160, 0
    %v406 = vsel %vm186, %v161, 0
    %v409 = vsel %vm186, %v162, 0
    %v412 = vsel %vm186, %v163, 0
    %v415 = vsel %vm186, %v164, 0
    %v418 = vsel %vm186, %v165, 0
    %v421 = vsel %vm186, %v166, 0
    %v424 = vsel %vm186, %v167, 0
    %v427 = vsel %vm186, %v168, 0
    %v430 = vsel %vm186, %v169, 0
    %432 = vmatprep.subr.mxu0 0.0
    %433 = vmatpush1.msra.mxu0 0.0
    %434 = vmatprep.subr.mxu0 0.0
    %435 = vmatpush1.msra.mxu0 0.0
    %436 = vmatprep.subr.mxu0 0.0
    %437 = vmatpush1.msra.mxu0 0.0
    %438 = vmatprep.subr.mxu0 0.0
    %439 = vmatpush1.msra.mxu0 0.0
    %440 = vmatprep.subr.mxu0 0.0
    %441 = vmatpush1.msra.mxu0 0.0
    %442 = vmatprep.subr.mxu0 0.0
    %443 = vmatpush1.msra.mxu0 0.0
    %444 = vmatprep.subr.mxu0 0.0
    %445 = vmatpush1.msra.mxu0 0.0
    %446 = vmatprep.subr.mxu0 0.0
    %447 = vmatpush1.msra.mxu0 0.0
    %448 = vmatprep.subr.mxu0 0.0
    %449 = vmatpush1.msra.mxu0 0.0
    %450 = vmatprep.subr.mxu0 0.0
    %451 = vmatpush1.msra.mxu0 0.0
    %452 = vmatprep.subr.mxu0 0.0
    %453 = vmatpush1.msra.mxu0 0.0
    %454 = vmatprep.subr.mxu0 0.0
    %455 = vmatpush1.msra.mxu0 0.0
    %456 = vmatprep.subr.mxu0 0.0
    %457 = vmatpush1.msra.mxu0 %v376
    %458 = vmatprep.subr.mxu0 0.0
    %459 = vmatpush1.msra.mxu0 %v375
    %460 = vmatprep.subr.mxu0 0.0
    %461 = vmatpush1.msra.mxu0 %v374
    %462 = vmatprep.subr.mxu0 0.0
    %463 = vmatpush1.msra.mxu0 %v373
    %464 = vmatprep.subr.mxu0 0.0
    %465 = vmatpush2.msra.mxu0 0.0
    %466 = vmatprep.subr.mxu0 0.0
    %467 = vmatpush2.msra.mxu0 0.0
    %468 = vmatprep.subr.mxu0 0.0
    %469 = vmatpush2.msra.mxu0 0.0
    %470 = vmatprep.subr.mxu0 0.0
    %471 = vmatpush2.msra.mxu0 0.0
    %472 = vmatprep.subr.mxu0 0.0
    %473 = vmatpush2.msra.mxu0 0.0
    %474 = vmatprep.subr.mxu0 0.0
    %475 = vmatpush2.msra.mxu0 0.0
    %476 = vmatprep.subr.mxu0 0.0
    %477 = vmatpush2.msra.mxu0 0.0
    %478 = vmatprep.subr.mxu0 0.0
    %479 = vmatpush2.msra.mxu0 0.0
    %480 = vmatprep.subr.mxu0 0.0
    %481 = vmatpush2.msra.mxu0 0.0
    %482 = vmatprep.subr.mxu0 0.0
    %483 = vmatpush2.msra.mxu0 0.0
    %484 = vmatprep.subr.mxu0 0.0
    %485 = vmatpush2.msra.mxu0 0.0
    %486 = vmatprep.subr.mxu0 0.0
    %487 = vmatpush2.msra.mxu0 0.0
    %488 = vmatprep.subr.mxu0 0.0
    %489 = vmatpush2.msra.mxu0 0.0
    %490 = vmatprep.subr.mxu0 0.0
    %491 = vmatpush2.msra.mxu0 0.0
    %492 = vmatprep.subr.mxu0 0.0
    %493 = vmatpush2.msra.mxu0 0.0
    %494 = vmatprep.subr.mxu0 0.0
    %495 = vmatpush2.msra.mxu0 0.0
    %496 = vmatprep.mubr.f32.mxu0 0.0
    %497 = vmatmul.mubr.f32.gmra.mxu0 %v385
    %v498 = vpop.f32.mrf.mxu0
    %v499 = vadd.f32 %v382, %v498
    %v500 = vpop.f32.mrf.mxu0
    %501 = vmatprep.mubr.f32.mxu0 0.0
    %502 = vmatmul.mubr.f32.gmra.mxu0 %v388
    %v503 = vpop.f32.mrf.mxu0
    %v504 = vadd.f32 %v382, %v503
    %v505 = vpop.f32.mrf.mxu0
    %506 = vmatprep.mubr.f32.mxu0 0.0
    %507 = vmatmul.mubr.f32.gmra.mxu0 %v391
    %v508 = vpop.f32.mrf.mxu0
    %v509 = vadd.f32 %v382, %v508
    %v510 = vpop.f32.mrf.mxu0
    %511 = vmatprep.mubr.f32.mxu0 0.0
    %512 = vmatmul.mubr.f32.gmra.mxu0 %v394
    %v513 = vpop.f32.mrf.mxu0
    %v514 = vadd.f32 %v382, %v513
    %v515 = vpop.f32.mrf.mxu0
    %516 = vmatprep.mubr.f32.mxu0 0.0
    %517 = vmatmul.mubr.f32.gmra.mxu0 %v397
    %v518 = vpop.f32.mrf.mxu0
    %v519 = vadd.f32 %v382, %v518
    %v520 = vpop.f32.mrf.mxu0
    %521 = vmatprep.mubr.f32.mxu0 0.0
    %522 = vmatmul.mubr.f32.gmra.mxu0 %v400
    %v523 = vpop.f32.mrf.mxu0
    %v524 = vadd.f32 %v382, %v523
    %v525 = vpop.f32.mrf.mxu0
    %526 = vmatprep.mubr.f32.mxu0 0.0
    %527 = vmatmul.mubr.f32.gmra.mxu0 %v403
    %v528 = vpop.f32.mrf.mxu0
    %v529 = vadd.f32 %v382, %v528
    %v530 = vpop.f32.mrf.mxu0
    %531 = vmatprep.mubr.f32.mxu0 0.0
    %532 = vmatmul.mubr.f32.gmra.mxu0 %v406
    %v533 = vpop.f32.mrf.mxu0
    %v534 = vadd.f32 %v382, %v533
    %v535 = vpop.f32.mrf.mxu0
    %536 = vmatprep.mubr.f32.mxu0 0.0
    %537 = vmatmul.mubr.f32.gmra.mxu0 %v409
    %v538 = vpop.f32.mrf.mxu0
    %v539 = vadd.f32 %v382, %v538
    %v540 = vpop.f32.mrf.mxu0
    %541 = vmatprep.mubr.f32.mxu0 0.0
    %542 = vmatmul.mubr.f32.gmra.mxu0 %v412
    %v543 = vpop.f32.mrf.mxu0
    %v544 = vadd.f32 %v382, %v543
    %v545 = vpop.f32.mrf.mxu0
    %546 = vmatprep.mubr.f32.mxu0 0.0
    %547 = vmatmul.mubr.f32.gmra.mxu0 %v415
    %v548 = vpop.f32.mrf.mxu0
    %v549 = vadd.f32 %v382, %v548
    %v550 = vpop.f32.mrf.mxu0
    %551 = vmatprep.mubr.f32.mxu0 0.0
    %552 = vmatmul.mubr.f32.gmra.mxu0 %v418
    %v553 = vpop.f32.mrf.mxu0
    %v554 = vadd.f32 %v382, %v553
    %v555 = vpop.f32.mrf.mxu0
    %556 = vmatprep.mubr.f32.mxu0 0.0
    %557 = vmatmul.mubr.f32.gmra.mxu0 %v421
    %v558 = vpop.f32.mrf.mxu0
    %v559 = vadd.f32 %v382, %v558
    %v560 = vpop.f32.mrf.mxu0
    %561 = vmatprep.mubr.f32.mxu0 0.0
    %562 = vmatmul.mubr.f32.gmra.mxu0 %v424
    %v563 = vpop.f32.mrf.mxu0
    %v564 = vadd.f32 %v382, %v563
    %v565 = vpop.f32.mrf.mxu0
    %566 = vmatprep.mubr.f32.mxu0 0.0
    %567 = vmatmul.mubr.f32.gmra.mxu0 %v427
    %v568 = vpop.f32.mrf.mxu0
    %v569 = vadd.f32 %v382, %v568
    %v570 = vpop.f32.mrf.mxu0
    %571 = vmatprep.mubr.f32.mxu0 0.0
    %572 = vmatmul.mubr.f32.gmra.mxu0 %v430
    %v573 = vpop.f32.mrf.mxu0
    %v574 = vadd.f32 %v382, %v573
    %v575 = vpop.f32.mrf.mxu0
    %576 = vdwg.mxu0
    %v577 = vld [vmem:[#allocation11] sm:$0xff]
    %v578 = vld [vmem:[#allocation11 + $0x8] sm:$0xff]
    %v579 = vld [vmem:[%s9] sm:$0x1]
    %v581 = vlaneseq
    %v582 = vshrl.u32 %v581, 7
    %v583 = vsub.s32 0, %v582
    %v584 = vrot.slane %v579, %v583
    %vm586 = vcmask 130048
    %v588 = vsel %vm586, %v170, 0
    %v591 = vsel %vm586, %v171, 0
    %v594 = vsel %vm586, %v172, 0
    %v597 = vsel %vm586, %v173, 0
    %v600 = vsel %vm586, %v174, 0
    %v603 = vsel %vm586, %v175, 0
    %v606 = vsel %vm586, %v176, 0
    %v609 = vsel %vm586, %v177, 0
    %611 = vmatprep.subr.mxu0 0.0
    %612 = vmatpush1.msra.mxu0 0.0
    %613 = vmatprep.subr.mxu0 0.0
    %614 = vmatpush1.msra.mxu0 0.0
    %615 = vmatprep.subr.mxu0 0.0
    %616 = vmatpush1.msra.mxu0 0.0
    %617 = vmatprep.subr.mxu0 0.0
    %618 = vmatpush1.msra.mxu0 0.0
    %619 = vmatprep.subr.mxu0 0.0
    %620 = vmatpush1.msra.mxu0 0.0
    %621 = vmatprep.subr.mxu0 0.0
    %622 = vmatpush1.msra.mxu0 0.0
    %623 = vmatprep.subr.mxu0 0.0
    %624 = vmatpush1.msra.mxu0 0.0
    %625 = vmatprep.subr.mxu0 0.0
    %626 = vmatpush1.msra.mxu0 0.0
    %627 = vmatprep.subr.mxu0 0.0
    %628 = vmatpush1.msra.mxu0 0.0
    %629 = vmatprep.subr.mxu0 0.0
    %630 = vmatpush1.msra.mxu0 0.0
    %631 = vmatprep.subr.mxu0 0.0
    %632 = vmatpush1.msra.mxu0 0.0
    %633 = vmatprep.subr.mxu0 0.0
    %634 = vmatpush1.msra.mxu0 0.0
    %635 = vmatprep.subr.mxu0 0.0
    %636 = vmatpush1.msra.mxu0 0.0
    %637 = vmatprep.subr.mxu0 0.0
    %638 = vmatpush1.msra.mxu0 0.0
    %639 = vmatprep.subr.mxu0 0.0
    %640 = vmatpush1.msra.mxu0 %v578
    %641 = vmatprep.subr.mxu0 0.0
    %642 = vmatpush1.msra.mxu0 %v577
    %643 = vmatprep.subr.mxu0 0.0
    %644 = vmatpush2.msra.mxu0 0.0
    %645 = vmatprep.subr.mxu0 0.0
    %646 = vmatpush2.msra.mxu0 0.0
    %647 = vmatprep.subr.mxu0 0.0
    %648 = vmatpush2.msra.mxu0 0.0
    %649 = vmatprep.subr.mxu0 0.0
    %650 = vmatpush2.msra.mxu0 0.0
    %651 = vmatprep.subr.mxu0 0.0
    %652 = vmatpush2.msra.mxu0 0.0
    %653 = vmatprep.subr.mxu0 0.0
    %654 = vmatpush2.msra.mxu0 0.0
    %655 = vmatprep.subr.mxu0 0.0
    %656 = vmatpush2.msra.mxu0 0.0
    %657 = vmatprep.subr.mxu0 0.0
    %658 = vmatpush2.msra.mxu0 0.0
    %659 = vmatprep.subr.mxu0 0.0
    %660 = vmatpush2.msra.mxu0 0.0
    %661 = vmatprep.subr.mxu0 0.0
    %662 = vmatpush2.msra.mxu0 0.0
    %663 = vmatprep.subr.mxu0 0.0
    %664 = vmatpush2.msra.mxu0 0.0
    %665 = vmatprep.subr.mxu0 0.0
    %666 = vmatpush2.msra.mxu0 0.0
    %667 = vmatprep.subr.mxu0 0.0
    %668 = vmatpush2.msra.mxu0 0.0
    %669 = vmatprep.subr.mxu0 0.0
    %670 = vmatpush2.msra.mxu0 0.0
    %671 = vmatprep.subr.mxu0 0.0
    %672 = vmatpush2.msra.mxu0 0.0
    %673 = vmatprep.subr.mxu0 0.0
    %674 = vmatpush2.msra.mxu0 0.0
    %675 = vmatprep.mubr.f32.mxu0 0.0
    %676 = vmatmul.mubr.f32.gmra.mxu0 %v588
    %v677 = vpop.f32.mrf.mxu0
    %v678 = vadd.f32 %v584, %v677
    %v679 = vpop.f32.mrf.mxu0
    %680 = vmatprep.mubr.f32.mxu0 0.0
    %681 = vmatmul.mubr.f32.gmra.mxu0 %v591
    %v682 = vpop.f32.mrf.mxu0
    %v683 = vadd.f32 %v584, %v682
    %v684 = vpop.f32.mrf.mxu0
    %685 = vmatprep.mubr.f32.mxu0 0.0
    %686 = vmatmul.mubr.f32.gmra.mxu0 %v594
    %v687 = vpop.f32.mrf.mxu0
    %v688 = vadd.f32 %v584, %v687
    %v689 = vpop.f32.mrf.mxu0
    %690 = vmatprep.mubr.f32.mxu0 0.0
    %691 = vmatmul.mubr.f32.gmra.mxu0 %v597
    %v692 = vpop.f32.mrf.mxu0
    %v693 = vadd.f32 %v584, %v692
    %v694 = vpop.f32.mrf.mxu0
    %695 = vmatprep.mubr.f32.mxu0 0.0
    %696 = vmatmul.mubr.f32.gmra.mxu0 %v600
    %v697 = vpop.f32.mrf.mxu0
    %v698 = vadd.f32 %v584, %v697
    %v699 = vpop.f32.mrf.mxu0
    %700 = vmatprep.mubr.f32.mxu0 0.0
    %701 = vmatmul.mubr.f32.gmra.mxu0 %v603
    %v702 = vpop.f32.mrf.mxu0
    %v703 = vadd.f32 %v584, %v702
    %v704 = vpop.f32.mrf.mxu0
    %705 = vmatprep.mubr.f32.mxu0 0.0
    %706 = vmatmul.mubr.f32.gmra.mxu0 %v606
    %v707 = vpop.f32.mrf.mxu0
    %v708 = vadd.f32 %v584, %v707
    %v709 = vpop.f32.mrf.mxu0
    %710 = vmatprep.mubr.f32.mxu0 0.0
    %711 = vmatmul.mubr.f32.gmra.mxu0 %v609
    %v712 = vpop.f32.mrf.mxu0
    %v713 = vadd.f32 %v584, %v712
    %v714 = vpop.f32.mrf.mxu0
    %715 = vdwg.mxu0
    %v717 = vcombine.high %v370, %v370
    %v719 = vunpack.c.l.s4 1966171168
    %v720 = vunpack.c.0.s8 %v719
    %v721 = vlaneseq
    %v722 = vshrl.u32 %v721, 7
    %v723 = vsub.s32 %v720, %v722
    %v724 = vrot.slane %v370, %v723
    %v726 = vunpack.c.l.s4 1966171168
    %v727 = vunpack.c.0.s8 %v726
    %v728 = vlaneseq
    %v729 = vshrl.u32 %v728, 7
    %v730 = vsub.s32 %v727, %v729
    %v731 = vrot.slane %v717, %v730
    %v732 = vcombine.high %v724, %v724
    %v733 = vcombine.high %v731, %v731
    %v735 = vunpack.c.l.s4 1966171168
    %v736 = vunpack.c.0.s8 %v735
    %v737 = vlaneseq
    %v738 = vshrl.u32 %v737, 7
    %v739 = vsub.s32 %v736, %v738
    %v740 = vrot.slane %v724, %v739
    %v742 = vunpack.c.l.s4 1966171168
    %v743 = vunpack.c.0.s8 %v742
    %v744 = vlaneseq
    %v745 = vshrl.u32 %v744, 7
    %v746 = vsub.s32 %v743, %v745
    %v747 = vrot.slane %v731, %v746
    %v749 = vunpack.c.l.s4 1966171168
    %v750 = vunpack.c.0.s8 %v749
    %v751 = vlaneseq
    %v752 = vshrl.u32 %v751, 7
    %v753 = vsub.s32 %v750, %v752
    %v754 = vrot.slane %v732, %v753
    %v756 = vunpack.c.l.s4 1966171168
    %v757 = vunpack.c.0.s8 %v756
    %v758 = vlaneseq
    %v759 = vshrl.u32 %v758, 7
    %v760 = vsub.s32 %v757, %v759
    %v761 = vrot.slane %v733, %v760
    %v762 = vcombine.high %v740, %v740
    %v763 = vcombine.high %v747, %v747
    %v764 = vcombine.high %v754, %v754
    %v765 = vcombine.high %v761, %v761
    %v766 = vlaneseq
    %v767 = vshrl.u32 %v766, 7
    %v768 = vsub.s32 0, %v767
    %v769 = vrot.slane %v740, %v768
    %v770 = vlaneseq
    %v771 = vshrl.u32 %v770, 7
    %v772 = vsub.s32 0, %v771
    %v773 = vrot.slane %v754, %v772
    %v774 = vlaneseq
    %v775 = vshrl.u32 %v774, 7
    %v776 = vsub.s32 0, %v775
    %v777 = vrot.slane %v762, %v776
    %v778 = vlaneseq
    %v779 = vshrl.u32 %v778, 7
    %v780 = vsub.s32 0, %v779
    %v781 = vrot.slane %v764, %v780
    %v782 = vlaneseq
    %v783 = vshrl.u32 %v782, 7
    %v784 = vsub.s32 0, %v783
    %v785 = vrot.slane %v747, %v784
    %v786 = vlaneseq
    %v787 = vshrl.u32 %v786, 7
    %v788 = vsub.s32 0, %v787
    %v789 = vrot.slane %v761, %v788
    %v790 = vlaneseq
    %v791 = vshrl.u32 %v790, 7
    %v792 = vsub.s32 0, %v791
    %v793 = vrot.slane %v763, %v792
    %v794 = vlaneseq
    %v795 = vshrl.u32 %v794, 7
    %v796 = vsub.s32 0, %v795
    %v797 = vrot.slane %v765, %v796
    %822 = vrot.lane.b32.xlu0 %v499, 32
    %v823 = vpop.permute.xlu0 %822
    %824 = vrot.lane.b32.xlu0 %v504, 32
    %v825 = vpop.permute.xlu0 %824
    %826 = vrot.lane.b32.xlu0 %v509, 32
    %v827 = vpop.permute.xlu0 %826
    %828 = vrot.lane.b32.xlu0 %v514, 32
    %v829 = vpop.permute.xlu0 %828
    %830 = vrot.lane.b32.xlu0 %v519, 32
    %v831 = vpop.permute.xlu0 %830
    %832 = vrot.lane.b32.xlu0 %v524, 32
    %v833 = vpop.permute.xlu0 %832
    %834 = vrot.lane.b32.xlu0 %v529, 32
    %v835 = vpop.permute.xlu0 %834
    %836 = vrot.lane.b32.xlu0 %v534, 32
    %v837 = vpop.permute.xlu0 %836
    %838 = vrot.lane.b32.xlu0 %v539, 32
    %v839 = vpop.permute.xlu0 %838
    %840 = vrot.lane.b32.xlu0 %v544, 32
    %v841 = vpop.permute.xlu0 %840
    %842 = vrot.lane.b32.xlu0 %v549, 32
    %v843 = vpop.permute.xlu0 %842
    %844 = vrot.lane.b32.xlu0 %v554, 32
    %v845 = vpop.permute.xlu0 %844
    %846 = vrot.lane.b32.xlu0 %v559, 32
    %v847 = vpop.permute.xlu0 %846
    %848 = vrot.lane.b32.xlu0 %v564, 32
    %v849 = vpop.permute.xlu0 %848
    %850 = vrot.lane.b32.xlu0 %v569, 32
    %v851 = vpop.permute.xlu0 %850
    %852 = vrot.lane.b32.xlu0 %v574, 32
    %v853 = vpop.permute.xlu0 %852
    %v870 = vmul.f32 %v769, %v823
    %v871 = vmul.f32 %v769, %v825
    %v872 = vmul.f32 %v773, %v827
    %v873 = vmul.f32 %v773, %v829
    %v874 = vmul.f32 %v777, %v831
    %v875 = vmul.f32 %v777, %v833
    %v876 = vmul.f32 %v781, %v835
    %v877 = vmul.f32 %v781, %v837
    %v878 = vmul.f32 %v785, %v839
    %v879 = vmul.f32 %v785, %v841
    %v880 = vmul.f32 %v789, %v843
    %v881 = vmul.f32 %v789, %v845
    %v882 = vmul.f32 %v793, %v847
    %v883 = vmul.f32 %v793, %v849
    %v884 = vmul.f32 %v797, %v851
    %v885 = vmul.f32 %v797, %v853
    %902 = vrot.lane.b32.xlu0 %v870, 96
    %v903 = vpop.permute.xlu0 %902
    %904 = vrot.lane.b32.xlu0 %v871, 96
    %v905 = vpop.permute.xlu0 %904
    %906 = vrot.lane.b32.xlu0 %v872, 96
    %v907 = vpop.permute.xlu0 %906
    %908 = vrot.lane.b32.xlu0 %v873, 96
    %v909 = vpop.permute.xlu0 %908
    %910 = vrot.lane.b32.xlu0 %v874, 96
    %v911 = vpop.permute.xlu0 %910
    %912 = vrot.lane.b32.xlu0 %v875, 96
    %v913 = vpop.permute.xlu0 %912
    %914 = vrot.lane.b32.xlu0 %v876, 96
    %v915 = vpop.permute.xlu0 %914
    %916 = vrot.lane.b32.xlu0 %v877, 96
    %v917 = vpop.permute.xlu0 %916
    %918 = vrot.lane.b32.xlu0 %v878, 96
    %v919 = vpop.permute.xlu0 %918
    %920 = vrot.lane.b32.xlu0 %v879, 96
    %v921 = vpop.permute.xlu0 %920
    %922 = vrot.lane.b32.xlu0 %v880, 96
    %v923 = vpop.permute.xlu0 %922
    %924 = vrot.lane.b32.xlu0 %v881, 96
    %v925 = vpop.permute.xlu0 %924
    %926 = vrot.lane.b32.xlu0 %v882, 96
    %v927 = vpop.permute.xlu0 %926
    %928 = vrot.lane.b32.xlu0 %v883, 96
    %v929 = vpop.permute.xlu0 %928
    %930 = vrot.lane.b32.xlu0 %v884, 96
    %v931 = vpop.permute.xlu0 %930
    %932 = vrot.lane.b32.xlu0 %v885, 96
    %v933 = vpop.permute.xlu0 %932
    %v950 = vsel %vm186, %v903, 0.0
    %951 = vadd.xlane.f32.xlu0 %v950
    %v952 = vpop.xlane.xlu0 %951
    %v953 = vsel %vm186, %v905, 0.0
    %954 = vadd.xlane.f32.xlu0 %v953
    %v955 = vpop.xlane.xlu0 %954
    %v956 = vsel %vm186, %v907, 0.0
    %957 = vadd.xlane.f32.xlu0 %v956
    %v958 = vpop.xlane.xlu0 %957
    %v959 = vsel %vm186, %v909, 0.0
    %960 = vadd.xlane.f32.xlu0 %v959
    %v961 = vpop.xlane.xlu0 %960
    %v962 = vsel %vm186, %v911, 0.0
    %963 = vadd.xlane.f32.xlu0 %v962
    %v964 = vpop.xlane.xlu0 %963
    %v965 = vsel %vm186, %v913, 0.0
    %966 = vadd.xlane.f32.xlu0 %v965
    %v967 = vpop.xlane.xlu0 %966
    %v968 = vsel %vm186, %v915, 0.0
    %969 = vadd.xlane.f32.xlu0 %v968
    %v970 = vpop.xlane.xlu0 %969
    %v971 = vsel %vm186, %v917, 0.0
    %972 = vadd.xlane.f32.xlu0 %v971
    %v973 = vpop.xlane.xlu0 %972
    %v974 = vsel %vm186, %v919, 0.0
    %975 = vadd.xlane.f32.xlu0 %v974
    %v976 = vpop.xlane.xlu0 %975
    %v977 = vsel %vm186, %v921, 0.0
    %978 = vadd.xlane.f32.xlu0 %v977
    %v979 = vpop.xlane.xlu0 %978
    %v980 = vsel %vm186, %v923, 0.0
    %981 = vadd.xlane.f32.xlu0 %v980
    %v982 = vpop.xlane.xlu0 %981
    %v983 = vsel %vm186, %v925, 0.0
    %984 = vadd.xlane.f32.xlu0 %v983
    %v985 = vpop.xlane.xlu0 %984
    %v986 = vsel %vm186, %v927, 0.0
    %987 = vadd.xlane.f32.xlu0 %v986
    %v988 = vpop.xlane.xlu0 %987
    %v989 = vsel %vm186, %v929, 0.0
    %990 = vadd.xlane.f32.xlu0 %v989
    %v991 = vpop.xlane.xlu0 %990
    %v992 = vsel %vm186, %v931, 0.0
    %993 = vadd.xlane.f32.xlu0 %v992
    %v994 = vpop.xlane.xlu0 %993
    %v995 = vsel %vm186, %v933, 0.0
    %996 = vadd.xlane.f32.xlu0 %v995
    %v997 = vpop.xlane.xlu0 %996
    %v998 = vmul.f32 %v952, 0.17677669
    %v999 = vmul.f32 %v955, 0.17677669
    %v1000 = vmul.f32 %v958, 0.17677669
    %v1001 = vmul.f32 %v961, 0.17677669
    %v1002 = vmul.f32 %v964, 0.17677669
    %v1003 = vmul.f32 %v967, 0.17677669
    %v1004 = vmul.f32 %v970, 0.17677669
    %v1005 = vmul.f32 %v973, 0.17677669
    %v1006 = vmul.f32 %v976, 0.17677669
    %v1007 = vmul.f32 %v979, 0.17677669
    %v1008 = vmul.f32 %v982, 0.17677669
    %v1009 = vmul.f32 %v985, 0.17677669
    %v1010 = vmul.f32 %v988, 0.17677669
    %v1011 = vmul.f32 %v991, 0.17677669
    %v1012 = vmul.f32 %v994, 0.17677669
    %v1013 = vmul.f32 %v997, 0.17677669
    %v1030 = vlaneseq
    %v1031 = vand.u32 %v1030, 127
    %v1032 = vlaneseq
    %v1033 = vshrl.u32 %v1032, 7
    %v1034 = vsub.s32 %v1031, %v1033
    %v1035 = vrot.slane %v998, %v1034
    %v1036 = vadd.s32 %v1031, 4294967288
    %v1037 = vlaneseq
    %v1038 = vshrl.u32 %v1037, 7
    %v1039 = vsub.s32 %v1036, %v1038
    %v1040 = vrot.slane %v999, %v1039
    %vm1041 = vcmask 130112
    %v1042 = vsel %vm1041, %v1040, %v1035
    %v1043 = vlaneseq
    %v1044 = vshrl.u32 %v1043, 7
    %v1045 = vsub.s32 %v1031, %v1044
    %v1046 = vrot.slane %v1000, %v1045
    %v1047 = vlaneseq
    %v1048 = vshrl.u32 %v1047, 7
    %v1049 = vsub.s32 %v1036, %v1048
    %v1050 = vrot.slane %v1001, %v1049
    %v1051 = vsel %vm1041, %v1050, %v1046
    %v1052 = vlaneseq
    %v1053 = vshrl.u32 %v1052, 7
    %v1054 = vsub.s32 %v1031, %v1053
    %v1055 = vrot.slane %v1002, %v1054
    %v1056 = vlaneseq
    %v1057 = vshrl.u32 %v1056, 7
    %v1058 = vsub.s32 %v1036, %v1057
    %v1059 = vrot.slane %v1003, %v1058
    %v1060 = vsel %vm1041, %v1059, %v1055
    %v1061 = vlaneseq
    %v1062 = vshrl.u32 %v1061, 7
    %v1063 = vsub.s32 %v1031, %v1062
    %v1064 = vrot.slane %v1004, %v1063
    %v1065 = vlaneseq
    %v1066 = vshrl.u32 %v1065, 7
    %v1067 = vsub.s32 %v1036, %v1066
    %v1068 = vrot.slane %v1005, %v1067
    %v1069 = vsel %vm1041, %v1068, %v1064
    %v1070 = vlaneseq
    %v1071 = vshrl.u32 %v1070, 7
    %v1072 = vsub.s32 %v1031, %v1071
    %v1073 = vrot.slane %v1006, %v1072
    %v1074 = vlaneseq
    %v1075 = vshrl.u32 %v1074, 7
    %v1076 = vsub.s32 %v1036, %v1075
    %v1077 = vrot.slane %v1007, %v1076
    %v1078 = vsel %vm1041, %v1077, %v1073
    %v1079 = vlaneseq
    %v1080 = vshrl.u32 %v1079, 7
    %v1081 = vsub.s32 %v1031, %v1080
    %v1082 = vrot.slane %v1008, %v1081
    %v1083 = vlaneseq
    %v1084 = vshrl.u32 %v1083, 7
    %v1085 = vsub.s32 %v1036, %v1084
    %v1086 = vrot.slane %v1009, %v1085
    %v1087 = vsel %vm1041, %v1086, %v1082
    %v1088 = vlaneseq
    %v1089 = vshrl.u32 %v1088, 7
    %v1090 = vsub.s32 %v1031, %v1089
    %v1091 = vrot.slane %v1010, %v1090
    %v1092 = vlaneseq
    %v1093 = vshrl.u32 %v1092, 7
    %v1094 = vsub.s32 %v1036, %v1093
    %v1095 = vrot.slane %v1011, %v1094
    %v1096 = vsel %vm1041, %v1095, %v1091
    %v1097 = vlaneseq
    %v1098 = vshrl.u32 %v1097, 7
    %v1099 = vsub.s32 %v1031, %v1098
    %v1100 = vrot.slane %v1012, %v1099
    %v1101 = vlaneseq
    %v1102 = vshrl.u32 %v1101, 7
    %v1103 = vsub.s32 %v1036, %v1102
    %v1104 = vrot.slane %v1013, %v1103
    %v1105 = vsel %vm1041, %v1104, %v1100
    %v1106 = vsel %vm287, %v1051, %v1042
    %v1107 = vsel %vm289, %v1060, %v1106
    %v1108 = vsel %vm291, %v1069, %v1107
    %v1109 = vsel %vm293, %v1078, %v1108
    %v1110 = vsel %vm295, %v1087, %v1109
    %v1111 = vsel %vm297, %v1096, %v1110
    %v1112 = vsel %vm299, %v1105, %v1111
    %v1114 = vsel %vm586, %v1112, -inf
    %1115 = vmax.xlane.f32.xlu0 %v1114
    %v1116 = vpop.xlane.xlu0 %1115
    %v1118 = vlaneseq
    %v1119 = vshrl.u32 %v1118, 7
    %v1120 = vsub.s32 0, %v1119
    %v1121 = vrot.slane %v1116, %v1120
    %v1122 = vlaneseq
    %v1123 = vshrl.u32 %v1122, 7
    %v1124 = vsub.s32 1, %v1123
    %v1125 = vrot.slane %v1116, %v1124
    %v1126 = vlaneseq
    %v1127 = vshrl.u32 %v1126, 7
    %v1128 = vsub.s32 2, %v1127
    %v1129 = vrot.slane %v1116, %v1128
    %v1130 = vlaneseq
    %v1131 = vshrl.u32 %v1130, 7
    %v1132 = vsub.s32 3, %v1131
    %v1133 = vrot.slane %v1116, %v1132
    %v1134 = vlaneseq
    %v1135 = vshrl.u32 %v1134, 7
    %v1136 = vsub.s32 4, %v1135
    %v1137 = vrot.slane %v1116, %v1136
    %v1138 = vlaneseq
    %v1139 = vshrl.u32 %v1138, 7
    %v1140 = vsub.s32 5, %v1139
    %v1141 = vrot.slane %v1116, %v1140
    %v1142 = vlaneseq
    %v1143 = vshrl.u32 %v1142, 7
    %v1144 = vsub.s32 6, %v1143
    %v1145 = vrot.slane %v1116, %v1144
    %v1146 = vlaneseq
    %v1147 = vshrl.u32 %v1146, 7
    %v1148 = vsub.s32 7, %v1147
    %v1149 = vrot.slane %v1116, %v1148
    %v1158 = vsub.f32 %v998, %v1121
    %v1159 = vsub.f32 %v999, %v1121
    %v1160 = vsub.f32 %v1000, %v1125
    %v1161 = vsub.f32 %v1001, %v1125
    %v1162 = vsub.f32 %v1002, %v1129
    %v1163 = vsub.f32 %v1003, %v1129
    %v1164 = vsub.f32 %v1004, %v1133
    %v1165 = vsub.f32 %v1005, %v1133
    %v1166 = vsub.f32 %v1006, %v1137
    %v1167 = vsub.f32 %v1007, %v1137
    %v1168 = vsub.f32 %v1008, %v1141
    %v1169 = vsub.f32 %v1009, %v1141
    %v1170 = vsub.f32 %v1010, %v1145
    %v1171 = vsub.f32 %v1011, %v1145
    %v1172 = vsub.f32 %v1012, %v1149
    %v1173 = vsub.f32 %v1013, %v1149
    %v1174 = vmul.f32 %v1158, 1.442695
    %v1175 = vpow.pop %v1174
    %v1176 = vmul.f32 %v1159, 1.442695
    %v1177 = vpow.pop %v1176
    %v1178 = vmul.f32 %v1160, 1.442695
    %v1179 = vpow.pop %v1178
    %v1180 = vmul.f32 %v1161, 1.442695
    %v1181 = vpow.pop %v1180
    %v1182 = vmul.f32 %v1162, 1.442695
    %v1183 = vpow.pop %v1182
    %v1184 = vmul.f32 %v1163, 1.442695
    %v1185 = vpow.pop %v1184
    %v1186 = vmul.f32 %v1164, 1.442695
    %v1187 = vpow.pop %v1186
    %v1188 = vmul.f32 %v1165, 1.442695
    %v1189 = vpow.pop %v1188
    %v1190 = vmul.f32 %v1166, 1.442695
    %v1191 = vpow.pop %v1190
    %v1192 = vmul.f32 %v1167, 1.442695
    %v1193 = vpow.pop %v1192
    %v1194 = vmul.f32 %v1168, 1.442695
    %v1195 = vpow.pop %v1194
    %v1196 = vmul.f32 %v1169, 1.442695
    %v1197 = vpow.pop %v1196
    %v1198 = vmul.f32 %v1170, 1.442695
    %v1199 = vpow.pop %v1198
    %v1200 = vmul.f32 %v1171, 1.442695
    %v1201 = vpow.pop %v1200
    %v1202 = vmul.f32 %v1172, 1.442695
    %v1203 = vpow.pop %v1202
    %v1204 = vmul.f32 %v1173, 1.442695
    %v1205 = vpow.pop %v1204
    %1222 = vset.pattern.permute.xlu0 0
    %1223 = vperm.xlu0 %1222, %v1175
    %v1224 = vpop.permute.xlu0 %1223
    %1225 = vset.pattern.permute.xlu0 0
    %1226 = vperm.xlu0 %1225, %v1177
    %v1227 = vpop.permute.xlu0 %1226
    %1228 = vset.pattern.permute.xlu0 0
    %1229 = vperm.xlu0 %1228, %v1179
    %v1230 = vpop.permute.xlu0 %1229
    %1231 = vset.pattern.permute.xlu0 0
    %1232 = vperm.xlu0 %1231, %v1181
    %v1233 = vpop.permute.xlu0 %1232
    %1234 = vset.pattern.permute.xlu0 0
    %1235 = vperm.xlu0 %1234, %v1183
    %v1236 = vpop.permute.xlu0 %1235
    %1237 = vset.pattern.permute.xlu0 0
    %1238 = vperm.xlu0 %1237, %v1185
    %v1239 = vpop.permute.xlu0 %1238
    %1240 = vset.pattern.permute.xlu0 0
    %1241 = vperm.xlu0 %1240, %v1187
    %v1242 = vpop.permute.xlu0 %1241
    %1243 = vset.pattern.permute.xlu0 0
    %1244 = vperm.xlu0 %1243, %v1189
    %v1245 = vpop.permute.xlu0 %1244
    %1246 = vset.pattern.permute.xlu0 0
    %1247 = vperm.xlu0 %1246, %v1191
    %v1248 = vpop.permute.xlu0 %1247
    %1249 = vset.pattern.permute.xlu0 0
    %1250 = vperm.xlu0 %1249, %v1193
    %v1251 = vpop.permute.xlu0 %1250
    %1252 = vset.pattern.permute.xlu0 0
    %1253 = vperm.xlu0 %1252, %v1195
    %v1254 = vpop.permute.xlu0 %1253
    %1255 = vset.pattern.permute.xlu0 0
    %1256 = vperm.xlu0 %1255, %v1197
    %v1257 = vpop.permute.xlu0 %1256
    %1258 = vset.pattern.permute.xlu0 0
    %1259 = vperm.xlu0 %1258, %v1199
    %v1260 = vpop.permute.xlu0 %1259
    %1261 = vset.pattern.permute.xlu0 0
    %1262 = vperm.xlu0 %1261, %v1201
    %v1263 = vpop.permute.xlu0 %1262
    %1264 = vset.pattern.permute.xlu0 0
    %1265 = vperm.xlu0 %1264, %v1203
    %v1266 = vpop.permute.xlu0 %1265
    %1267 = vset.pattern.permute.xlu0 0
    %1268 = vperm.xlu0 %1267, %v1205
    %v1269 = vpop.permute.xlu0 %1268
    %v1270 = vlaneseq
    %v1271 = vshrl.u32 %v1270, 7
    %v1272 = vsub.s32 %v1031, %v1271
    %v1273 = vrot.slane %v1224, %v1272
    %v1274 = vlaneseq
    %v1275 = vshrl.u32 %v1274, 7
    %v1276 = vsub.s32 %v1036, %v1275
    %v1277 = vrot.slane %v1227, %v1276
    %v1278 = vsel %vm1041, %v1277, %v1273
    %v1279 = vlaneseq
    %v1280 = vshrl.u32 %v1279, 7
    %v1281 = vsub.s32 %v1031, %v1280
    %v1282 = vrot.slane %v1230, %v1281
    %v1283 = vlaneseq
    %v1284 = vshrl.u32 %v1283, 7
    %v1285 = vsub.s32 %v1036, %v1284
    %v1286 = vrot.slane %v1233, %v1285
    %v1287 = vsel %vm1041, %v1286, %v1282
    %v1288 = vlaneseq
    %v1289 = vshrl.u32 %v1288, 7
    %v1290 = vsub.s32 %v1031, %v1289
    %v1291 = vrot.slane %v1236, %v1290
    %v1292 = vlaneseq
    %v1293 = vshrl.u32 %v1292, 7
    %v1294 = vsub.s32 %v1036, %v1293
    %v1295 = vrot.slane %v1239, %v1294
    %v1296 = vsel %vm1041, %v1295, %v1291
    %v1297 = vlaneseq
    %v1298 = vshrl.u32 %v1297, 7
    %v1299 = vsub.s32 %v1031, %v1298
    %v1300 = vrot.slane %v1242, %v1299
    %v1301 = vlaneseq
    %v1302 = vshrl.u32 %v1301, 7
    %v1303 = vsub.s32 %v1036, %v1302
    %v1304 = vrot.slane %v1245, %v1303
    %v1305 = vsel %vm1041, %v1304, %v1300
    %v1306 = vlaneseq
    %v1307 = vshrl.u32 %v1306, 7
    %v1308 = vsub.s32 %v1031, %v1307
    %v1309 = vrot.slane %v1248, %v1308
    %v1310 = vlaneseq
    %v1311 = vshrl.u32 %v1310, 7
    %v1312 = vsub.s32 %v1036, %v1311
    %v1313 = vrot.slane %v1251, %v1312
    %v1314 = vsel %vm1041, %v1313, %v1309
    %v1315 = vlaneseq
    %v1316 = vshrl.u32 %v1315, 7
    %v1317 = vsub.s32 %v1031, %v1316
    %v1318 = vrot.slane %v1254, %v1317
    %v1319 = vlaneseq
    %v1320 = vshrl.u32 %v1319, 7
    %v1321 = vsub.s32 %v1036, %v1320
    %v1322 = vrot.slane %v1257, %v1321
    %v1323 = vsel %vm1041, %v1322, %v1318
    %v1324 = vlaneseq
    %v1325 = vshrl.u32 %v1324, 7
    %v1326 = vsub.s32 %v1031, %v1325
    %v1327 = vrot.slane %v1260, %v1326
    %v1328 = vlaneseq
    %v1329 = vshrl.u32 %v1328, 7
    %v1330 = vsub.s32 %v1036, %v1329
    %v1331 = vrot.slane %v1263, %v1330
    %v1332 = vsel %vm1041, %v1331, %v1327
    %v1333 = vlaneseq
    %v1334 = vshrl.u32 %v1333, 7
    %v1335 = vsub.s32 %v1031, %v1334
    %v1336 = vrot.slane %v1266, %v1335
    %v1337 = vlaneseq
    %v1338 = vshrl.u32 %v1337, 7
    %v1339 = vsub.s32 %v1036, %v1338
    %v1340 = vrot.slane %v1269, %v1339
    %v1341 = vsel %vm1041, %v1340, %v1336
    %v1342 = vsel %vm287, %v1287, %v1278
    %v1343 = vsel %vm289, %v1296, %v1342
    %v1344 = vsel %vm291, %v1305, %v1343
    %v1345 = vsel %vm293, %v1314, %v1344
    %v1346 = vsel %vm295, %v1323, %v1345
    %v1347 = vsel %vm297, %v1332, %v1346
    %v1348 = vsel %vm299, %v1341, %v1347
    %v1350 = vsel %vm586, %v1348, 0.0
    %1351 = vadd.xlane.f32.xlu0 %v1350
    %v1352 = vpop.xlane.xlu0 %1351
    %v1353 = vrcp.pop %v1352
    %v1354 = vmul.f32 %v1352, %v1353
    %v1355 = vsub.f32 2.0, %v1354
    %v1356 = vmul.f32 %v1353, %v1355
    %v1358 = vlaneseq
    %v1359 = vshrl.u32 %v1358, 7
    %v1360 = vsub.s32 0, %v1359
    %v1361 = vrot.slane %v1356, %v1360
    %v1362 = vlaneseq
    %v1363 = vshrl.u32 %v1362, 7
    %v1364 = vsub.s32 1, %v1363
    %v1365 = vrot.slane %v1356, %v1364
    %v1366 = vlaneseq
    %v1367 = vshrl.u32 %v1366, 7
    %v1368 = vsub.s32 2, %v1367
    %v1369 = vrot.slane %v1356, %v1368
    %v1370 = vlaneseq
    %v1371 = vshrl.u32 %v1370, 7
    %v1372 = vsub.s32 3, %v1371
    %v1373 = vrot.slane %v1356, %v1372
    %v1374 = vlaneseq
    %v1375 = vshrl.u32 %v1374, 7
    %v1376 = vsub.s32 4, %v1375
    %v1377 = vrot.slane %v1356, %v1376
    %v1378 = vlaneseq
    %v1379 = vshrl.u32 %v1378, 7
    %v1380 = vsub.s32 5, %v1379
    %v1381 = vrot.slane %v1356, %v1380
    %v1382 = vlaneseq
    %v1383 = vshrl.u32 %v1382, 7
    %v1384 = vsub.s32 6, %v1383
    %v1385 = vrot.slane %v1356, %v1384
    %v1386 = vlaneseq
    %v1387 = vshrl.u32 %v1386, 7
    %v1388 = vsub.s32 7, %v1387
    %v1389 = vrot.slane %v1356, %v1388
    %v1398 = vmul.f32 %v1175, %v1361
    %v1399 = vmul.f32 %v1177, %v1361
    %v1400 = vmul.f32 %v1179, %v1365
    %v1401 = vmul.f32 %v1181, %v1365
    %v1402 = vmul.f32 %v1183, %v1369
    %v1403 = vmul.f32 %v1185, %v1369
    %v1404 = vmul.f32 %v1187, %v1373
    %v1405 = vmul.f32 %v1189, %v1373
    %v1406 = vmul.f32 %v1191, %v1377
    %v1407 = vmul.f32 %v1193, %v1377
    %v1408 = vmul.f32 %v1195, %v1381
    %v1409 = vmul.f32 %v1197, %v1381
    %v1410 = vmul.f32 %v1199, %v1385
    %v1411 = vmul.f32 %v1201, %v1385
    %v1412 = vmul.f32 %v1203, %v1389
    %v1413 = vmul.f32 %v1205, %v1389
    %1415 = vset.pattern.permute.xlu0 0
    %1416 = vperm.xlu0 %1415, %v1398
    %v1417 = vpop.permute.xlu0 %1416
    %1420 = vset.pattern.permute.xlu0 0
    %1421 = vperm.xlu0 %1420, %v1399
    %v1422 = vpop.permute.xlu0 %1421
    %1425 = vset.pattern.permute.xlu0 0
    %1426 = vperm.xlu0 %1425, %v1400
    %v1427 = vpop.permute.xlu0 %1426
    %1430 = vset.pattern.permute.xlu0 0
    %1431 = vperm.xlu0 %1430, %v1401
    %v1432 = vpop.permute.xlu0 %1431
    %1435 = vset.pattern.permute.xlu0 0
    %1436 = vperm.xlu0 %1435, %v1402
    %v1437 = vpop.permute.xlu0 %1436
    %1440 = vset.pattern.permute.xlu0 0
    %1441 = vperm.xlu0 %1440, %v1403
    %v1442 = vpop.permute.xlu0 %1441
    %1445 = vset.pattern.permute.xlu0 0
    %1446 = vperm.xlu0 %1445, %v1404
    %v1447 = vpop.permute.xlu0 %1446
    %1450 = vset.pattern.permute.xlu0 0
    %1451 = vperm.xlu0 %1450, %v1405
    %v1452 = vpop.permute.xlu0 %1451
    %1455 = vset.pattern.permute.xlu0 0
    %1456 = vperm.xlu0 %1455, %v1406
    %v1457 = vpop.permute.xlu0 %1456
    %1460 = vset.pattern.permute.xlu0 0
    %1461 = vperm.xlu0 %1460, %v1407
    %v1462 = vpop.permute.xlu0 %1461
    %1465 = vset.pattern.permute.xlu0 0
    %1466 = vperm.xlu0 %1465, %v1408
    %v1467 = vpop.permute.xlu0 %1466
    %1470 = vset.pattern.permute.xlu0 0
    %1471 = vperm.xlu0 %1470, %v1409
    %v1472 = vpop.permute.xlu0 %1471
    %1475 = vset.pattern.permute.xlu0 0
    %1476 = vperm.xlu0 %1475, %v1410
    %v1477 = vpop.permute.xlu0 %1476
    %1480 = vset.pattern.permute.xlu0 0
    %1481 = vperm.xlu0 %1480, %v1411
    %v1482 = vpop.permute.xlu0 %1481
    %1485 = vset.pattern.permute.xlu0 0
    %1486 = vperm.xlu0 %1485, %v1412
    %v1487 = vpop.permute.xlu0 %1486
    %1490 = vset.pattern.permute.xlu0 0
    %1491 = vperm.xlu0 %1490, %v1413
    %v1492 = vpop.permute.xlu0 %1491
    %v1494 = vmul.f32 %v1417, %v154
    %v1495 = vmul.f32 %v1422, %v155
    %v1496 = vmul.f32 %v1427, %v156
    %v1497 = vmul.f32 %v1432, %v157
    %v1498 = vmul.f32 %v1437, %v158
    %v1499 = vmul.f32 %v1442, %v159
    %v1500 = vmul.f32 %v1447, %v160
    %v1501 = vmul.f32 %v1452, %v161
    %v1502 = vmul.f32 %v1457, %v162
    %v1503 = vmul.f32 %v1462, %v163
    %v1504 = vmul.f32 %v1467, %v164
    %v1505 = vmul.f32 %v1472, %v165
    %v1506 = vmul.f32 %v1477, %v166
    %v1507 = vmul.f32 %v1482, %v167
    %v1508 = vmul.f32 %v1487, %v168
    %v1509 = vmul.f32 %v1492, %v169
    %v1510 = vsel %vm186, %v1494, 0.0
    %v1511 = vsel %vm186, %v1495, 0.0
    %v1512 = vadd.f32 %v1510, %v1511
    %v1513 = vrot.slane %v1512, 4
    %v1514 = vadd.f32 %v1512, %v1513
    %v1515 = vrot.slane %v1514, 2
    %v1516 = vadd.f32 %v1514, %v1515
    %v1517 = vrot.slane %v1516, 1
    %v1518 = vadd.f32 %v1516, %v1517
    %v1519 = vsel %vm186, %v1496, 0.0
    %v1520 = vsel %vm186, %v1497, 0.0
    %v1521 = vadd.f32 %v1519, %v1520
    %v1522 = vrot.slane %v1521, 4
    %v1523 = vadd.f32 %v1521, %v1522
    %v1524 = vrot.slane %v1523, 2
    %v1525 = vadd.f32 %v1523, %v1524
    %v1526 = vrot.slane %v1525, 1
    %v1527 = vadd.f32 %v1525, %v1526
    %v1528 = vsel %vm186, %v1498, 0.0
    %v1529 = vsel %vm186, %v1499, 0.0
    %v1530 = vadd.f32 %v1528, %v1529
    %v1531 = vrot.slane %v1530, 4
    %v1532 = vadd.f32 %v1530, %v1531
    %v1533 = vrot.slane %v1532, 2
    %v1534 = vadd.f32 %v1532, %v1533
    %v1535 = vrot.slane %v1534, 1
    %v1536 = vadd.f32 %v1534, %v1535
    %v1537 = vsel %vm186, %v1500, 0.0
    %v1538 = vsel %vm186, %v1501, 0.0
    %v1539 = vadd.f32 %v1537, %v1538
    %v1540 = vrot.slane %v1539, 4
    %v1541 = vadd.f32 %v1539, %v1540
    %v1542 = vrot.slane %v1541, 2
    %v1543 = vadd.f32 %v1541, %v1542
    %v1544 = vrot.slane %v1543, 1
    %v1545 = vadd.f32 %v1543, %v1544
    %v1546 = vsel %vm186, %v1502, 0.0
    %v1547 = vsel %vm186, %v1503, 0.0
    %v1548 = vadd.f32 %v1546, %v1547
    %v1549 = vrot.slane %v1548, 4
    %v1550 = vadd.f32 %v1548, %v1549
    %v1551 = vrot.slane %v1550, 2
    %v1552 = vadd.f32 %v1550, %v1551
    %v1553 = vrot.slane %v1552, 1
    %v1554 = vadd.f32 %v1552, %v1553
    %v1555 = vsel %vm186, %v1504, 0.0
    %v1556 = vsel %vm186, %v1505, 0.0
    %v1557 = vadd.f32 %v1555, %v1556
    %v1558 = vrot.slane %v1557, 4
    %v1559 = vadd.f32 %v1557, %v1558
    %v1560 = vrot.slane %v1559, 2
    %v1561 = vadd.f32 %v1559, %v1560
    %v1562 = vrot.slane %v1561, 1
    %v1563 = vadd.f32 %v1561, %v1562
    %v1564 = vsel %vm186, %v1506, 0.0
    %v1565 = vsel %vm186, %v1507, 0.0
    %v1566 = vadd.f32 %v1564, %v1565
    %v1567 = vrot.slane %v1566, 4
    %v1568 = vadd.f32 %v1566, %v1567
    %v1569 = vrot.slane %v1568, 2
    %v1570 = vadd.f32 %v1568, %v1569
    %v1571 = vrot.slane %v1570, 1
    %v1572 = vadd.f32 %v1570, %v1571
    %v1573 = vsel %vm186, %v1508, 0.0
    %v1574 = vsel %vm186, %v1509, 0.0
    %v1575 = vadd.f32 %v1573, %v1574
    %v1576 = vrot.slane %v1575, 4
    %v1577 = vadd.f32 %v1575, %v1576
    %v1578 = vrot.slane %v1577, 2
    %v1579 = vadd.f32 %v1577, %v1578
    %v1580 = vrot.slane %v1579, 1
    %v1581 = vadd.f32 %v1579, %v1580
    %v1590 = vsel %vm287, %v1527, %v1518
    %v1591 = vsel %vm289, %v1536, %v1590
    %v1592 = vsel %vm291, %v1545, %v1591
    %v1593 = vsel %vm293, %v1554, %v1592
    %v1594 = vsel %vm295, %v1563, %v1593
    %v1595 = vsel %vm297, %v1572, %v1594
    %v1596 = vsel %vm299, %v1581, %v1595
    %v1597 = vsel %vm186, %v1596, 0
    %1599 = vmatprep.subr.mxu0 0.0
    %1600 = vmatpush1.msra.mxu0 0.0
    %1601 = vmatprep.subr.mxu0 0.0
    %1602 = vmatpush1.msra.mxu0 0.0
    %1603 = vmatprep.subr.mxu0 0.0
    %1604 = vmatpush1.msra.mxu0 0.0
    %1605 = vmatprep.subr.mxu0 0.0
    %1606 = vmatpush1.msra.mxu0 0.0
    %1607 = vmatprep.subr.mxu0 0.0
    %1608 = vmatpush1.msra.mxu0 0.0
    %1609 = vmatprep.subr.mxu0 0.0
    %1610 = vmatpush1.msra.mxu0 0.0
    %1611 = vmatprep.subr.mxu0 0.0
    %1612 = vmatpush1.msra.mxu0 0.0
    %1613 = vmatprep.subr.mxu0 0.0
    %1614 = vmatpush1.msra.mxu0 0.0
    %1615 = vmatprep.subr.mxu0 0.0
    %1616 = vmatpush1.msra.mxu0 0.0
    %1617 = vmatprep.subr.mxu0 0.0
    %1618 = vmatpush1.msra.mxu0 0.0
    %1619 = vmatprep.subr.mxu0 0.0
    %1620 = vmatpush1.msra.mxu0 0.0
    %1621 = vmatprep.subr.mxu0 0.0
    %1622 = vmatpush1.msra.mxu0 0.0
    %1623 = vmatprep.subr.mxu0 0.0
    %1624 = vmatpush1.msra.mxu0 %v181
    %1625 = vmatprep.subr.mxu0 0.0
    %1626 = vmatpush1.msra.mxu0 %v180
    %1627 = vmatprep.subr.mxu0 0.0
    %1628 = vmatpush1.msra.mxu0 %v179
    %1629 = vmatprep.subr.mxu0 0.0
    %1630 = vmatpush1.msra.mxu0 %v178
    %1631 = vmatprep.subr.mxu0 0.0
    %1632 = vmatpush2.msra.mxu0 0.0
    %1633 = vmatprep.subr.mxu0 0.0
    %1634 = vmatpush2.msra.mxu0 0.0
    %1635 = vmatprep.subr.mxu0 0.0
    %1636 = vmatpush2.msra.mxu0 0.0
    %1637 = vmatprep.subr.mxu0 0.0
    %1638 = vmatpush2.msra.mxu0 0.0
    %1639 = vmatprep.subr.mxu0 0.0
    %1640 = vmatpush2.msra.mxu0 0.0
    %1641 = vmatprep.subr.mxu0 0.0
    %1642 = vmatpush2.msra.mxu0 0.0
    %1643 = vmatprep.subr.mxu0 0.0
    %1644 = vmatpush2.msra.mxu0 0.0
    %1645 = vmatprep.subr.mxu0 0.0
    %1646 = vmatpush2.msra.mxu0 0.0
    %1647 = vmatprep.subr.mxu0 0.0
    %1648 = vmatpush2.msra.mxu0 0.0
    %1649 = vmatprep.subr.mxu0 0.0
    %1650 = vmatpush2.msra.mxu0 0.0
    %1651 = vmatprep.subr.mxu0 0.0
    %1652 = vmatpush2.msra.mxu0 0.0
    %1653 = vmatprep.subr.mxu0 0.0
    %1654 = vmatpush2.msra.mxu0 0.0
    %1655 = vmatprep.subr.mxu0 0.0
    %1656 = vmatpush2.msra.mxu0 0.0
    %1657 = vmatprep.subr.mxu0 0.0
    %1658 = vmatpush2.msra.mxu0 0.0
    %1659 = vmatprep.subr.mxu0 0.0
    %1660 = vmatpush2.msra.mxu0 0.0
    %1661 = vmatprep.subr.mxu0 0.0
    %1662 = vmatpush2.msra.mxu0 0.0
    %1663 = vmatprep.mubr.f32.mxu0 0.0
    %1664 = vmatmul.mubr.f32.gmra.mxu0 %v1597
    %v1665 = vpop.f32.mrf.mxu0
    %v1666 = vadd.f32 0.0, %v1665
    %v1667 = vpop.f32.mrf.mxu0
    %1668 = vdwg.mxu0
    %v1670 = vrot.slane %v1666, 1
    %v1671 = vrot.slane %v1666, 2
    %v1672 = vrot.slane %v1666, 3
    %v1673 = vrot.slane %v1666, 4
    %v1674 = vrot.slane %v1666, 5
    %v1675 = vrot.slane %v1666, 6
    %v1676 = vrot.slane %v1666, 7
    %v1685 = vadd.f32 %v678, %v1666
    %v1686 = vadd.f32 %v683, %v1670
    %v1687 = vadd.f32 %v688, %v1671
    %v1688 = vadd.f32 %v693, %v1672
    %v1689 = vadd.f32 %v698, %v1673
    %v1690 = vadd.f32 %v703, %v1674
    %v1691 = vadd.f32 %v708, %v1675
    %v1692 = vadd.f32 %v713, %v1676
    %1693 = vrot.lane.b32.xlu0 %v370, 96
    %v1694 = vpop.permute.xlu0 %1693
    %v1695 = vsel %vm186, %v1694, 0
    %1697 = vmatprep.subr.mxu0 0.0
    %1698 = vmatpush1.msra.mxu0 0.0
    %1699 = vmatprep.subr.mxu0 0.0
    %1700 = vmatpush1.msra.mxu0 0.0
    %1701 = vmatprep.subr.mxu0 0.0
    %1702 = vmatpush1.msra.mxu0 0.0
    %1703 = vmatprep.subr.mxu0 0.0
    %1704 = vmatpush1.msra.mxu0 0.0
    %1705 = vmatprep.subr.mxu0 0.0
    %1706 = vmatpush1.msra.mxu0 0.0
    %1707 = vmatprep.subr.mxu0 0.0
    %1708 = vmatpush1.msra.mxu0 0.0
    %1709 = vmatprep.subr.mxu0 0.0
    %1710 = vmatpush1.msra.mxu0 0.0
    %1711 = vmatprep.subr.mxu0 0.0
    %1712 = vmatpush1.msra.mxu0 0.0
    %1713 = vmatprep.subr.mxu0 0.0
    %1714 = vmatpush1.msra.mxu0 0.0
    %1715 = vmatprep.subr.mxu0 0.0
    %1716 = vmatpush1.msra.mxu0 0.0
    %1717 = vmatprep.subr.mxu0 0.0
    %1718 = vmatpush1.msra.mxu0 0.0
    %1719 = vmatprep.subr.mxu0 0.0
    %1720 = vmatpush1.msra.mxu0 0.0
    %1721 = vmatprep.subr.mxu0 0.0
    %1722 = vmatpush1.msra.mxu0 %v185
    %1723 = vmatprep.subr.mxu0 0.0
    %1724 = vmatpush1.msra.mxu0 %v184
    %1725 = vmatprep.subr.mxu0 0.0
    %1726 = vmatpush1.msra.mxu0 %v183
    %1727 = vmatprep.subr.mxu0 0.0
    %1728 = vmatpush1.msra.mxu0 %v182
    %1729 = vmatprep.subr.mxu0 0.0
    %1730 = vmatpush2.msra.mxu0 0.0
    %1731 = vmatprep.subr.mxu0 0.0
    %1732 = vmatpush2.msra.mxu0 0.0
    %1733 = vmatprep.subr.mxu0 0.0
    %1734 = vmatpush2.msra.mxu0 0.0
    %1735 = vmatprep.subr.mxu0 0.0
    %1736 = vmatpush2.msra.mxu0 0.0
    %1737 = vmatprep.subr.mxu0 0.0
    %1738 = vmatpush2.msra.mxu0 0.0
    %1739 = vmatprep.subr.mxu0 0.0
    %1740 = vmatpush2.msra.mxu0 0.0
    %1741 = vmatprep.subr.mxu0 0.0
    %1742 = vmatpush2.msra.mxu0 0.0
    %1743 = vmatprep.subr.mxu0 0.0
    %1744 = vmatpush2.msra.mxu0 0.0
    %1745 = vmatprep.subr.mxu0 0.0
    %1746 = vmatpush2.msra.mxu0 0.0
    %1747 = vmatprep.subr.mxu0 0.0
    %1748 = vmatpush2.msra.mxu0 0.0
    %1749 = vmatprep.subr.mxu0 0.0
    %1750 = vmatpush2.msra.mxu0 0.0
    %1751 = vmatprep.subr.mxu0 0.0
    %1752 = vmatpush2.msra.mxu0 0.0
    %1753 = vmatprep.subr.mxu0 0.0
    %1754 = vmatpush2.msra.mxu0 0.0
    %1755 = vmatprep.subr.mxu0 0.0
    %1756 = vmatpush2.msra.mxu0 0.0
    %1757 = vmatprep.subr.mxu0 0.0
    %1758 = vmatpush2.msra.mxu0 0.0
    %1759 = vmatprep.subr.mxu0 0.0
    %1760 = vmatpush2.msra.mxu0 0.0
    %1761 = vmatprep.mubr.f32.mxu0 0.0
    %1762 = vmatmul.mubr.f32.gmra.mxu0 %v1695
    %v1763 = vpop.f32.mrf.mxu0
    %v1764 = vadd.f32 0.0, %v1763
    %v1765 = vpop.f32.mrf.mxu0
    %1766 = vdwg.mxu0
    %v1768 = vrot.slane %v1764, 1
    %v1769 = vrot.slane %v1764, 2
    %v1770 = vrot.slane %v1764, 3
    %v1771 = vrot.slane %v1764, 4
    %v1772 = vrot.slane %v1764, 5
    %v1773 = vrot.slane %v1764, 6
    %v1774 = vrot.slane %v1764, 7
    %v1783 = vadd.f32 %v1685, %v1764
    %v1784 = vadd.f32 %v1686, %v1768
    %v1785 = vadd.f32 %v1687, %v1769
    %v1786 = vadd.f32 %v1688, %v1770
    %v1787 = vadd.f32 %v1689, %v1771
    %v1788 = vadd.f32 %v1690, %v1772
    %v1789 = vadd.f32 %v1691, %v1773
    %v1790 = vadd.f32 %v1692, %v1774
    %v1791 = vxor.u32 %v1783, 2147483648
    %v1792 = vxor.u32 %v1784, 2147483648
    %v1793 = vxor.u32 %v1785, 2147483648
    %v1794 = vxor.u32 %v1786, 2147483648
    %v1795 = vxor.u32 %v1787, 2147483648
    %v1796 = vxor.u32 %v1788, 2147483648
    %v1797 = vxor.u32 %v1789, 2147483648
    %v1798 = vxor.u32 %v1790, 2147483648
    %v1799 = vmul.f32 %v1791, 1.442695
    %v1800 = vpow.pop %v1799
    %v1801 = vmul.f32 %v1792, 1.442695
    %v1802 = vpow.pop %v1801
    %v1803 = vmul.f32 %v1793, 1.442695
    %v1804 = vpow.pop %v1803
    %v1805 = vmul.f32 %v1794, 1.442695
    %v1806 = vpow.pop %v1805
    %v1807 = vmul.f32 %v1795, 1.442695
    %v1808 = vpow.pop %v1807
    %v1809 = vmul.f32 %v1796, 1.442695
    %v1810 = vpow.pop %v1809
    %v1811 = vmul.f32 %v1797, 1.442695
    %v1812 = vpow.pop %v1811
    %v1813 = vmul.f32 %v1798, 1.442695
    %v1814 = vpow.pop %v1813
    %v1815 = vadd.f32 %v1800, 1.0
    %v1816 = vadd.f32 %v1802, 1.0
    %v1817 = vadd.f32 %v1804, 1.0
    %v1818 = vadd.f32 %v1806, 1.0
    %v1819 = vadd.f32 %v1808, 1.0
    %v1820 = vadd.f32 %v1810, 1.0
    %v1821 = vadd.f32 %v1812, 1.0
    %v1822 = vadd.f32 %v1814, 1.0
    %v1823 = vrcp.pop %v1815
    %v1824 = vmul.f32 1.0, %v1823
    %v1825 = vrcp.pop %v1816
    %v1826 = vmul.f32 1.0, %v1825
    %v1827 = vrcp.pop %v1817
    %v1828 = vmul.f32 1.0, %v1827
    %v1829 = vrcp.pop %v1818
    %v1830 = vmul.f32 1.0, %v1829
    %v1831 = vrcp.pop %v1819
    %v1832 = vmul.f32 1.0, %v1831
    %v1833 = vrcp.pop %v1820
    %v1834 = vmul.f32 1.0, %v1833
    %v1835 = vrcp.pop %v1821
    %v1836 = vmul.f32 1.0, %v1835
    %v1837 = vrcp.pop %v1822
    %v1838 = vmul.f32 1.0, %v1837
    %v1839 = vtanh.pop %v1783
    %v1840 = vtanh.pop %v1784
    %v1841 = vtanh.pop %v1785
    %v1842 = vtanh.pop %v1786
    %v1843 = vtanh.pop %v1787
    %v1844 = vtanh.pop %v1788
    %v1845 = vtanh.pop %v1789
    %v1846 = vtanh.pop %v1790
    %v1847 = vrot.slane %v370, 1
    %v1848 = vrot.slane %v370, 2
    %v1849 = vrot.slane %v370, 3
    %v1850 = vrot.slane %v370, 4
    %v1851 = vrot.slane %v370, 5
    %v1852 = vrot.slane %v370, 6
    %v1853 = vrot.slane %v370, 7
    %1854 = vrot.lane.b32.xlu0 %v370, 32
    %v1855 = vpop.permute.xlu0 %1854
    %1856 = vrot.lane.b32.xlu0 %v1847, 32
    %v1857 = vpop.permute.xlu0 %1856
    %1858 = vrot.lane.b32.xlu0 %v1848, 32
    %v1859 = vpop.permute.xlu0 %1858
    %1860 = vrot.lane.b32.xlu0 %v1849, 32
    %v1861 = vpop.permute.xlu0 %1860
    %1862 = vrot.lane.b32.xlu0 %v1850, 32
    %v1863 = vpop.permute.xlu0 %1862
    %1864 = vrot.lane.b32.xlu0 %v1851, 32
    %v1865 = vpop.permute.xlu0 %1864
    %1866 = vrot.lane.b32.xlu0 %v1852, 32
    %v1867 = vpop.permute.xlu0 %1866
    %1868 = vrot.lane.b32.xlu0 %v1853, 32
    %v1869 = vpop.permute.xlu0 %1868
    %v1878 = vmul.f32 %v1824, %v1855
    %v1879 = vmul.f32 %v1826, %v1857
    %v1880 = vmul.f32 %v1828, %v1859
    %v1881 = vmul.f32 %v1830, %v1861
    %v1882 = vmul.f32 %v1832, %v1863
    %v1883 = vmul.f32 %v1834, %v1865
    %v1884 = vmul.f32 %v1836, %v1867
    %v1885 = vmul.f32 %v1838, %v1869
    %1894 = vrot.lane.b32.xlu0 %v1839, 64
    %v1895 = vpop.permute.xlu0 %1894
    %1896 = vrot.lane.b32.xlu0 %v1840, 64
    %v1897 = vpop.permute.xlu0 %1896
    %1898 = vrot.lane.b32.xlu0 %v1841, 64
    %v1899 = vpop.permute.xlu0 %1898
    %1900 = vrot.lane.b32.xlu0 %v1842, 64
    %v1901 = vpop.permute.xlu0 %1900
    %1902 = vrot.lane.b32.xlu0 %v1843, 64
    %v1903 = vpop.permute.xlu0 %1902
    %1904 = vrot.lane.b32.xlu0 %v1844, 64
    %v1905 = vpop.permute.xlu0 %1904
    %1906 = vrot.lane.b32.xlu0 %v1845, 64
    %v1907 = vpop.permute.xlu0 %1906
    %1908 = vrot.lane.b32.xlu0 %v1846, 64
    %v1909 = vpop.permute.xlu0 %1908
    %v1918 = vmul.f32 %v1824, %v1895
    %v1919 = vmul.f32 %v1826, %v1897
    %v1920 = vmul.f32 %v1828, %v1899
    %v1921 = vmul.f32 %v1830, %v1901
    %v1922 = vmul.f32 %v1832, %v1903
    %v1923 = vmul.f32 %v1834, %v1905
    %v1924 = vmul.f32 %v1836, %v1907
    %v1925 = vmul.f32 %v1838, %v1909
    %1934 = vrot.lane.b32.xlu0 %v1918, 32
    %v1935 = vpop.permute.xlu0 %1934
    %1936 = vrot.lane.b32.xlu0 %v1919, 32
    %v1937 = vpop.permute.xlu0 %1936
    %1938 = vrot.lane.b32.xlu0 %v1920, 32
    %v1939 = vpop.permute.xlu0 %1938
    %1940 = vrot.lane.b32.xlu0 %v1921, 32
    %v1941 = vpop.permute.xlu0 %1940
    %1942 = vrot.lane.b32.xlu0 %v1922, 32
    %v1943 = vpop.permute.xlu0 %1942
    %1944 = vrot.lane.b32.xlu0 %v1923, 32
    %v1945 = vpop.permute.xlu0 %1944
    %1946 = vrot.lane.b32.xlu0 %v1924, 32
    %v1947 = vpop.permute.xlu0 %1946
    %1948 = vrot.lane.b32.xlu0 %v1925, 32
    %v1949 = vpop.permute.xlu0 %1948
    %v1958 = vadd.f32 %v1878, %v1935
    %v1959 = vadd.f32 %v1879, %v1937
    %v1960 = vadd.f32 %v1880, %v1939
    %v1961 = vadd.f32 %v1881, %v1941
    %v1962 = vadd.f32 %v1882, %v1943
    %v1963 = vadd.f32 %v1883, %v1945
    %v1964 = vadd.f32 %v1884, %v1947
    %v1965 = vadd.f32 %v1885, %v1949
    %v1966 = vtanh.pop %v1958
    %v1967 = vtanh.pop %v1959
    %v1968 = vtanh.pop %v1960
    %v1969 = vtanh.pop %v1961
    %v1970 = vtanh.pop %v1962
    %v1971 = vtanh.pop %v1963
    %v1972 = vtanh.pop %v1964
    %v1973 = vtanh.pop %v1965
    %1982 = vrot.lane.b32.xlu0 %v1966, 64
    %v1983 = vpop.permute.xlu0 %1982
    %1984 = vrot.lane.b32.xlu0 %v1967, 64
    %v1985 = vpop.permute.xlu0 %1984
    %1986 = vrot.lane.b32.xlu0 %v1968, 64
    %v1987 = vpop.permute.xlu0 %1986
    %1988 = vrot.lane.b32.xlu0 %v1969, 64
    %v1989 = vpop.permute.xlu0 %1988
    %1990 = vrot.lane.b32.xlu0 %v1970, 64
    %v1991 = vpop.permute.xlu0 %1990
    %1992 = vrot.lane.b32.xlu0 %v1971, 64
    %v1993 = vpop.permute.xlu0 %1992
    %1994 = vrot.lane.b32.xlu0 %v1972, 64
    %v1995 = vpop.permute.xlu0 %1994
    %1996 = vrot.lane.b32.xlu0 %v1973, 64
    %v1997 = vpop.permute.xlu0 %1996
    %v2006 = vmul.f32 %v1824, %v1983
    %v2007 = vmul.f32 %v1826, %v1985
    %v2008 = vmul.f32 %v1828, %v1987
    %v2009 = vmul.f32 %v1830, %v1989
    %v2010 = vmul.f32 %v1832, %v1991
    %v2011 = vmul.f32 %v1834, %v1993
    %v2012 = vmul.f32 %v1836, %v1995
    %v2013 = vmul.f32 %v1838, %v1997
    %v2022 = vrot.slane %v2007, 7
    %v2023 = vsel %vm287, %v2022, %v2006
    %v2024 = vrot.slane %v2008, 6
    %v2025 = vsel %vm289, %v2024, %v2023
    %v2026 = vrot.slane %v2009, 5
    %v2027 = vsel %vm291, %v2026, %v2025
    %v2028 = vrot.slane %v2010, 4
    %v2029 = vsel %vm293, %v2028, %v2027
    %v2030 = vrot.slane %v2011, 3
    %v2031 = vsel %vm295, %v2030, %v2029
    %v2032 = vrot.slane %v2012, 2
    %v2033 = vsel %vm297, %v2032, %v2031
    %v2034 = vrot.slane %v2013, 1
    %v2035 = vsel %vm299, %v2034, %v2033
    %2036 = vrot.lane.b32.xlu0 %v2035, 32
    %v2037 = vpop.permute.xlu0 %2036
    %2039 = vrot.lane.b32.xlu0 %v1596, 32
    %v2040 = vpop.permute.xlu0 %2039
    %v2042 = vrot.slane %v171, 7
    %v2043 = vsel %vm287, %v2042, %v170
    %v2044 = vrot.slane %v172, 6
    %v2045 = vsel %vm289, %v2044, %v2043
    %v2046 = vrot.slane %v173, 5
    %v2047 = vsel %vm291, %v2046, %v2045
    %v2048 = vrot.slane %v174, 4
    %v2049 = vsel %vm293, %v2048, %v2047
    %v2050 = vrot.slane %v175, 3
    %v2051 = vsel %vm295, %v2050, %v2049
    %v2052 = vrot.slane %v176, 2
    %v2053 = vsel %vm297, %v2052, %v2051
    %v2054 = vrot.slane %v177, 1
    %v2055 = vsel %vm299, %v2054, %v2053
    %2056 = vrot.lane.b32.xlu0 %v2055, 64
    %v2057 = vpop.permute.xlu0 %2056
    %v2059 = vsel %vm186, %v2037, %v2040
    %vm2060 = vcmask 523264
    %v2061 = vsel %vm2060, %v2059, %v2057
    %vm2062 = vcmask 654336
    %v2063 = vsel %vm2062, %v2061, 0.0
    %v2065 = vcombine.high %v2063, %v2063
    %v2067 = vunpack.c.l.s4 1966171168
    %v2068 = vunpack.c.0.s8 %v2067
    %v2069 = vlaneseq
    %v2070 = vshrl.u32 %v2069, 7
    %v2071 = vsub.s32 %v2068, %v2070
    %v2072 = vrot.slane %v2063, %v2071
    %v2074 = vunpack.c.l.s4 1966171168
    %v2075 = vunpack.c.0.s8 %v2074
    %v2076 = vlaneseq
    %v2077 = vshrl.u32 %v2076, 7
    %v2078 = vsub.s32 %v2075, %v2077
    %v2079 = vrot.slane %v2065, %v2078
    %v2080 = vcombine.high %v2072, %v2072
    %v2081 = vcombine.high %v2079, %v2079
    %v2083 = vunpack.c.l.s4 1966171168
    %v2084 = vunpack.c.0.s8 %v2083
    %v2085 = vlaneseq
    %v2086 = vshrl.u32 %v2085, 7
    %v2087 = vsub.s32 %v2084, %v2086
    %v2088 = vrot.slane %v2072, %v2087
    %v2090 = vunpack.c.l.s4 1966171168
    %v2091 = vunpack.c.0.s8 %v2090
    %v2092 = vlaneseq
    %v2093 = vshrl.u32 %v2092, 7
    %v2094 = vsub.s32 %v2091, %v2093
    %v2095 = vrot.slane %v2079, %v2094
    %v2097 = vunpack.c.l.s4 1966171168
    %v2098 = vunpack.c.0.s8 %v2097
    %v2099 = vlaneseq
    %v2100 = vshrl.u32 %v2099, 7
    %v2101 = vsub.s32 %v2098, %v2100
    %v2102 = vrot.slane %v2080, %v2101
    %v2104 = vunpack.c.l.s4 1966171168
    %v2105 = vunpack.c.0.s8 %v2104
    %v2106 = vlaneseq
    %v2107 = vshrl.u32 %v2106, 7
    %v2108 = vsub.s32 %v2105, %v2107
    %v2109 = vrot.slane %v2081, %v2108
    %v2110 = vcombine.high %v2088, %v2088
    %v2111 = vcombine.high %v2095, %v2095
    %v2112 = vcombine.high %v2102, %v2102
    %v2113 = vcombine.high %v2109, %v2109
    %2122 = vst [vmem:[#allocation2] sm:$0x1] %v2088
    %2123 = vst [vmem:[#allocation2 + $0x8] sm:$0x1] %v2102
    %2124 = vst [vmem:[#allocation2 + $0x10] sm:$0x1] %v2110
    %2125 = vst [vmem:[#allocation2 + $0x18] sm:$0x1] %v2112
    %2126 = vst [vmem:[#allocation2 + $0x20] sm:$0x1] %v2095
    %2127 = vst [vmem:[#allocation2 + $0x28] sm:$0x1] %v2109
    %2128 = vst [vmem:[#allocation2 + $0x30] sm:$0x1] %v2111
    %2129 = vst [vmem:[#allocation2 + $0x38] sm:$0x1] %v2113
    %v2130 = vlaneseq
    %v2131 = vshrl.u32 %v2130, 7
    %v2132 = vsub.s32 %v1031, %v2131
    %v2133 = vrot.slane %v1417, %v2132
    %v2134 = vlaneseq
    %v2135 = vshrl.u32 %v2134, 7
    %v2136 = vsub.s32 %v1036, %v2135
    %v2137 = vrot.slane %v1422, %v2136
    %v2138 = vsel %vm1041, %v2137, %v2133
    %v2139 = vlaneseq
    %v2140 = vshrl.u32 %v2139, 7
    %v2141 = vsub.s32 %v1031, %v2140
    %v2142 = vrot.slane %v1427, %v2141
    %v2143 = vlaneseq
    %v2144 = vshrl.u32 %v2143, 7
    %v2145 = vsub.s32 %v1036, %v2144
    %v2146 = vrot.slane %v1432, %v2145
    %v2147 = vsel %vm1041, %v2146, %v2142
    %v2148 = vlaneseq
    %v2149 = vshrl.u32 %v2148, 7
    %v2150 = vsub.s32 %v1031, %v2149
    %v2151 = vrot.slane %v1437, %v2150
    %v2152 = vlaneseq
    %v2153 = vshrl.u32 %v2152, 7
    %v2154 = vsub.s32 %v1036, %v2153
    %v2155 = vrot.slane %v1442, %v2154
    %v2156 = vsel %vm1041, %v2155, %v2151
    %v2157 = vlaneseq
    %v2158 = vshrl.u32 %v2157, 7
    %v2159 = vsub.s32 %v1031, %v2158
    %v2160 = vrot.slane %v1447, %v2159
    %v2161 = vlaneseq
    %v2162 = vshrl.u32 %v2161, 7
    %v2163 = vsub.s32 %v1036, %v2162
    %v2164 = vrot.slane %v1452, %v2163
    %v2165 = vsel %vm1041, %v2164, %v2160
    %v2166 = vlaneseq
    %v2167 = vshrl.u32 %v2166, 7
    %v2168 = vsub.s32 %v1031, %v2167
    %v2169 = vrot.slane %v1457, %v2168
    %v2170 = vlaneseq
    %v2171 = vshrl.u32 %v2170, 7
    %v2172 = vsub.s32 %v1036, %v2171
    %v2173 = vrot.slane %v1462, %v2172
    %v2174 = vsel %vm1041, %v2173, %v2169
    %v2175 = vlaneseq
    %v2176 = vshrl.u32 %v2175, 7
    %v2177 = vsub.s32 %v1031, %v2176
    %v2178 = vrot.slane %v1467, %v2177
    %v2179 = vlaneseq
    %v2180 = vshrl.u32 %v2179, 7
    %v2181 = vsub.s32 %v1036, %v2180
    %v2182 = vrot.slane %v1472, %v2181
    %v2183 = vsel %vm1041, %v2182, %v2178
    %v2184 = vlaneseq
    %v2185 = vshrl.u32 %v2184, 7
    %v2186 = vsub.s32 %v1031, %v2185
    %v2187 = vrot.slane %v1477, %v2186
    %v2188 = vlaneseq
    %v2189 = vshrl.u32 %v2188, 7
    %v2190 = vsub.s32 %v1036, %v2189
    %v2191 = vrot.slane %v1482, %v2190
    %v2192 = vsel %vm1041, %v2191, %v2187
    %v2193 = vlaneseq
    %v2194 = vshrl.u32 %v2193, 7
    %v2195 = vsub.s32 %v1031, %v2194
    %v2196 = vrot.slane %v1487, %v2195
    %v2197 = vlaneseq
    %v2198 = vshrl.u32 %v2197, 7
    %v2199 = vsub.s32 %v1036, %v2198
    %v2200 = vrot.slane %v1492, %v2199
    %v2201 = vsel %vm1041, %v2200, %v2196
    %vm2210 = vcmask 122880
    %2211 = vst.msk [vmem:[#allocation18] sm:$0x1] %vm2210, %v2138
    %2212 = vst.msk [vmem:[#allocation18 + $0x8] sm:$0x1] %vm2210, %v2147
    %2213 = vst.msk [vmem:[#allocation18 + $0x10] sm:$0x1] %vm2210, %v2156
    %2214 = vst.msk [vmem:[#allocation18 + $0x18] sm:$0x1] %vm2210, %v2165
    %2215 = vst.msk [vmem:[#allocation18 + $0x20] sm:$0x1] %vm2210, %v2174
    %2216 = vst.msk [vmem:[#allocation18 + $0x28] sm:$0x1] %vm2210, %v2183
    %2217 = vst.msk [vmem:[#allocation18 + $0x30] sm:$0x1] %vm2210, %v2192
    %2218 = vst.msk [vmem:[#allocation18 + $0x38] sm:$0x1] %vm2210, %v2201
    %v2219 = vlaneseq
    %v2220 = vshrl.u32 %v2219, 7
    %v2221 = vsub.s32 0, %v2220
    %v2222 = vrot.slane %v2006, %v2221
    %v2223 = vlaneseq
    %v2224 = vshrl.u32 %v2223, 7
    %v2225 = vsub.s32 0, %v2224
    %v2226 = vrot.slane %v2007, %v2225
    %v2227 = vlaneseq
    %v2228 = vshrl.u32 %v2227, 7
    %v2229 = vsub.s32 0, %v2228
    %v2230 = vrot.slane %v2008, %v2229
    %v2231 = vlaneseq
    %v2232 = vshrl.u32 %v2231, 7
    %v2233 = vsub.s32 0, %v2232
    %v2234 = vrot.slane %v2009, %v2233
    %v2235 = vlaneseq
    %v2236 = vshrl.u32 %v2235, 7
    %v2237 = vsub.s32 0, %v2236
    %v2238 = vrot.slane %v2010, %v2237
    %v2239 = vlaneseq
    %v2240 = vshrl.u32 %v2239, 7
    %v2241 = vsub.s32 0, %v2240
    %v2242 = vrot.slane %v2011, %v2241
    %v2243 = vlaneseq
    %v2244 = vshrl.u32 %v2243, 7
    %v2245 = vsub.s32 0, %v2244
    %v2246 = vrot.slane %v2012, %v2245
    %v2247 = vlaneseq
    %v2248 = vshrl.u32 %v2247, 7
    %v2249 = vsub.s32 0, %v2248
    %v2250 = vrot.slane %v2013, %v2249
    %2251 = vrot.lane.b32.xlu0 %v499, 96
    %v2252 = vpop.permute.xlu0 %2251
    %2253 = vrot.lane.b32.xlu0 %v504, 96
    %v2254 = vpop.permute.xlu0 %2253
    %2255 = vrot.lane.b32.xlu0 %v509, 96
    %v2256 = vpop.permute.xlu0 %2255
    %2257 = vrot.lane.b32.xlu0 %v514, 96
    %v2258 = vpop.permute.xlu0 %2257
    %2259 = vrot.lane.b32.xlu0 %v519, 96
    %v2260 = vpop.permute.xlu0 %2259
    %2261 = vrot.lane.b32.xlu0 %v524, 96
    %v2262 = vpop.permute.xlu0 %2261
    %2263 = vrot.lane.b32.xlu0 %v529, 96
    %v2264 = vpop.permute.xlu0 %2263
    %2265 = vrot.lane.b32.xlu0 %v534, 96
    %v2266 = vpop.permute.xlu0 %2265
    %2267 = vrot.lane.b32.xlu0 %v539, 96
    %v2268 = vpop.permute.xlu0 %2267
    %2269 = vrot.lane.b32.xlu0 %v544, 96
    %v2270 = vpop.permute.xlu0 %2269
    %2271 = vrot.lane.b32.xlu0 %v549, 96
    %v2272 = vpop.permute.xlu0 %2271
    %2273 = vrot.lane.b32.xlu0 %v554, 96
    %v2274 = vpop.permute.xlu0 %2273
    %2275 = vrot.lane.b32.xlu0 %v559, 96
    %v2276 = vpop.permute.xlu0 %2275
    %2277 = vrot.lane.b32.xlu0 %v564, 96
    %v2278 = vpop.permute.xlu0 %2277
    %2279 = vrot.lane.b32.xlu0 %v569, 96
    %v2280 = vpop.permute.xlu0 %2279
    %2281 = vrot.lane.b32.xlu0 %v574, 96
    %v2282 = vpop.permute.xlu0 %2281
    %v2299 = vmul.f32 %v2222, %v2252
    %v2300 = vmul.f32 %v2222, %v2254
    %v2301 = vmul.f32 %v2226, %v2256
    %v2302 = vmul.f32 %v2226, %v2258
    %v2303 = vmul.f32 %v2230, %v2260
    %v2304 = vmul.f32 %v2230, %v2262
    %v2305 = vmul.f32 %v2234, %v2264
    %v2306 = vmul.f32 %v2234, %v2266
    %v2307 = vmul.f32 %v2238, %v2268
    %v2308 = vmul.f32 %v2238, %v2270
    %v2309 = vmul.f32 %v2242, %v2272
    %v2310 = vmul.f32 %v2242, %v2274
    %v2311 = vmul.f32 %v2246, %v2276
    %v2312 = vmul.f32 %v2246, %v2278
    %v2313 = vmul.f32 %v2250, %v2280
    %v2314 = vmul.f32 %v2250, %v2282
    %2331 = vrot.lane.b32.xlu0 %v2299, 32
    %v2332 = vpop.permute.xlu0 %2331
    %2333 = vrot.lane.b32.xlu0 %v2300, 32
    %v2334 = vpop.permute.xlu0 %2333
    %2335 = vrot.lane.b32.xlu0 %v2301, 32
    %v2336 = vpop.permute.xlu0 %2335
    %2337 = vrot.lane.b32.xlu0 %v2302, 32
    %v2338 = vpop.permute.xlu0 %2337
    %2339 = vrot.lane.b32.xlu0 %v2303, 32
    %v2340 = vpop.permute.xlu0 %2339
    %2341 = vrot.lane.b32.xlu0 %v2304, 32
    %v2342 = vpop.permute.xlu0 %2341
    %2343 = vrot.lane.b32.xlu0 %v2305, 32
    %v2344 = vpop.permute.xlu0 %2343
    %2345 = vrot.lane.b32.xlu0 %v2306, 32
    %v2346 = vpop.permute.xlu0 %2345
    %2347 = vrot.lane.b32.xlu0 %v2307, 32
    %v2348 = vpop.permute.xlu0 %2347
    %2349 = vrot.lane.b32.xlu0 %v2308, 32
    %v2350 = vpop.permute.xlu0 %2349
    %2351 = vrot.lane.b32.xlu0 %v2309, 32
    %v2352 = vpop.permute.xlu0 %2351
    %2353 = vrot.lane.b32.xlu0 %v2310, 32
    %v2354 = vpop.permute.xlu0 %2353
    %2355 = vrot.lane.b32.xlu0 %v2311, 32
    %v2356 = vpop.permute.xlu0 %2355
    %2357 = vrot.lane.b32.xlu0 %v2312, 32
    %v2358 = vpop.permute.xlu0 %2357
    %2359 = vrot.lane.b32.xlu0 %v2313, 32
    %v2360 = vpop.permute.xlu0 %2359
    %2361 = vrot.lane.b32.xlu0 %v2314, 32
    %v2362 = vpop.permute.xlu0 %2361
    %v2379 = vsel %vm186, %v2332, 0.0
    %2380 = vadd.xlane.f32.xlu0 %v2379
    %v2381 = vpop.xlane.xlu0 %2380
    %v2382 = vsel %vm186, %v2334, 0.0
    %2383 = vadd.xlane.f32.xlu0 %v2382
    %v2384 = vpop.xlane.xlu0 %2383
    %v2385 = vsel %vm186, %v2336, 0.0
    %2386 = vadd.xlane.f32.xlu0 %v2385
    %v2387 = vpop.xlane.xlu0 %2386
    %v2388 = vsel %vm186, %v2338, 0.0
    %2389 = vadd.xlane.f32.xlu0 %v2388
    %v2390 = vpop.xlane.xlu0 %2389
    %v2391 = vsel %vm186, %v2340, 0.0
    %2392 = vadd.xlane.f32.xlu0 %v2391
    %v2393 = vpop.xlane.xlu0 %2392
    %v2394 = vsel %vm186, %v2342, 0.0
    %2395 = vadd.xlane.f32.xlu0 %v2394
    %v2396 = vpop.xlane.xlu0 %2395
    %v2397 = vsel %vm186, %v2344, 0.0
    %2398 = vadd.xlane.f32.xlu0 %v2397
    %v2399 = vpop.xlane.xlu0 %2398
    %v2400 = vsel %vm186, %v2346, 0.0
    %2401 = vadd.xlane.f32.xlu0 %v2400
    %v2402 = vpop.xlane.xlu0 %2401
    %v2403 = vsel %vm186, %v2348, 0.0
    %2404 = vadd.xlane.f32.xlu0 %v2403
    %v2405 = vpop.xlane.xlu0 %2404
    %v2406 = vsel %vm186, %v2350, 0.0
    %2407 = vadd.xlane.f32.xlu0 %v2406
    %v2408 = vpop.xlane.xlu0 %2407
    %v2409 = vsel %vm186, %v2352, 0.0
    %2410 = vadd.xlane.f32.xlu0 %v2409
    %v2411 = vpop.xlane.xlu0 %2410
    %v2412 = vsel %vm186, %v2354, 0.0
    %2413 = vadd.xlane.f32.xlu0 %v2412
    %v2414 = vpop.xlane.xlu0 %2413
    %v2415 = vsel %vm186, %v2356, 0.0
    %2416 = vadd.xlane.f32.xlu0 %v2415
    %v2417 = vpop.xlane.xlu0 %2416
    %v2418 = vsel %vm186, %v2358, 0.0
    %2419 = vadd.xlane.f32.xlu0 %v2418
    %v2420 = vpop.xlane.xlu0 %2419
    %v2421 = vsel %vm186, %v2360, 0.0
    %2422 = vadd.xlane.f32.xlu0 %v2421
    %v2423 = vpop.xlane.xlu0 %2422
    %v2424 = vsel %vm186, %v2362, 0.0
    %2425 = vadd.xlane.f32.xlu0 %v2424
    %v2426 = vpop.xlane.xlu0 %2425
    %v2427 = vmul.f32 %v2381, 0.17677669
    %v2428 = vmul.f32 %v2384, 0.17677669
    %v2429 = vmul.f32 %v2387, 0.17677669
    %v2430 = vmul.f32 %v2390, 0.17677669
    %v2431 = vmul.f32 %v2393, 0.17677669
    %v2432 = vmul.f32 %v2396, 0.17677669
    %v2433 = vmul.f32 %v2399, 0.17677669
    %v2434 = vmul.f32 %v2402, 0.17677669
    %v2435 = vmul.f32 %v2405, 0.17677669
    %v2436 = vmul.f32 %v2408, 0.17677669
    %v2437 = vmul.f32 %v2411, 0.17677669
    %v2438 = vmul.f32 %v2414, 0.17677669
    %v2439 = vmul.f32 %v2417, 0.17677669
    %v2440 = vmul.f32 %v2420, 0.17677669
    %v2441 = vmul.f32 %v2423, 0.17677669
    %v2442 = vmul.f32 %v2426, 0.17677669
    %v2459 = vlaneseq
    %v2460 = vshrl.u32 %v2459, 7
    %v2461 = vsub.s32 %v1031, %v2460
    %v2462 = vrot.slane %v2427, %v2461
    %v2463 = vlaneseq
    %v2464 = vshrl.u32 %v2463, 7
    %v2465 = vsub.s32 %v1036, %v2464
    %v2466 = vrot.slane %v2428, %v2465
    %v2467 = vsel %vm1041, %v2466, %v2462
    %v2468 = vlaneseq
    %v2469 = vshrl.u32 %v2468, 7
    %v2470 = vsub.s32 %v1031, %v2469
    %v2471 = vrot.slane %v2429, %v2470
    %v2472 = vlaneseq
    %v2473 = vshrl.u32 %v2472, 7
    %v2474 = vsub.s32 %v1036, %v2473
    %v2475 = vrot.slane %v2430, %v2474
    %v2476 = vsel %vm1041, %v2475, %v2471
    %v2477 = vlaneseq
    %v2478 = vshrl.u32 %v2477, 7
    %v2479 = vsub.s32 %v1031, %v2478
    %v2480 = vrot.slane %v2431, %v2479
    %v2481 = vlaneseq
    %v2482 = vshrl.u32 %v2481, 7
    %v2483 = vsub.s32 %v1036, %v2482
    %v2484 = vrot.slane %v2432, %v2483
    %v2485 = vsel %vm1041, %v2484, %v2480
    %v2486 = vlaneseq
    %v2487 = vshrl.u32 %v2486, 7
    %v2488 = vsub.s32 %v1031, %v2487
    %v2489 = vrot.slane %v2433, %v2488
    %v2490 = vlaneseq
    %v2491 = vshrl.u32 %v2490, 7
    %v2492 = vsub.s32 %v1036, %v2491
    %v2493 = vrot.slane %v2434, %v2492
    %v2494 = vsel %vm1041, %v2493, %v2489
    %v2495 = vlaneseq
    %v2496 = vshrl.u32 %v2495, 7
    %v2497 = vsub.s32 %v1031, %v2496
    %v2498 = vrot.slane %v2435, %v2497
    %v2499 = vlaneseq
    %v2500 = vshrl.u32 %v2499, 7
    %v2501 = vsub.s32 %v1036, %v2500
    %v2502 = vrot.slane %v2436, %v2501
    %v2503 = vsel %vm1041, %v2502, %v2498
    %v2504 = vlaneseq
    %v2505 = vshrl.u32 %v2504, 7
    %v2506 = vsub.s32 %v1031, %v2505
    %v2507 = vrot.slane %v2437, %v2506
    %v2508 = vlaneseq
    %v2509 = vshrl.u32 %v2508, 7
    %v2510 = vsub.s32 %v1036, %v2509
    %v2511 = vrot.slane %v2438, %v2510
    %v2512 = vsel %vm1041, %v2511, %v2507
    %v2513 = vlaneseq
    %v2514 = vshrl.u32 %v2513, 7
    %v2515 = vsub.s32 %v1031, %v2514
    %v2516 = vrot.slane %v2439, %v2515
    %v2517 = vlaneseq
    %v2518 = vshrl.u32 %v2517, 7
    %v2519 = vsub.s32 %v1036, %v2518
    %v2520 = vrot.slane %v2440, %v2519
    %v2521 = vsel %vm1041, %v2520, %v2516
    %v2522 = vlaneseq
    %v2523 = vshrl.u32 %v2522, 7
    %v2524 = vsub.s32 %v1031, %v2523
    %v2525 = vrot.slane %v2441, %v2524
    %v2526 = vlaneseq
    %v2527 = vshrl.u32 %v2526, 7
    %v2528 = vsub.s32 %v1036, %v2527
    %v2529 = vrot.slane %v2442, %v2528
    %v2530 = vsel %vm1041, %v2529, %v2525
    %v2531 = vsel %vm287, %v2476, %v2467
    %v2532 = vsel %vm289, %v2485, %v2531
    %v2533 = vsel %vm291, %v2494, %v2532
    %v2534 = vsel %vm293, %v2503, %v2533
    %v2535 = vsel %vm295, %v2512, %v2534
    %v2536 = vsel %vm297, %v2521, %v2535
    %v2537 = vsel %vm299, %v2530, %v2536
    %v2539 = vsel %vm586, %v2537, -inf
    %2540 = vmax.xlane.f32.xlu0 %v2539
    %v2541 = vpop.xlane.xlu0 %2540
    %v2543 = vlaneseq
    %v2544 = vshrl.u32 %v2543, 7
    %v2545 = vsub.s32 0, %v2544
    %v2546 = vrot.slane %v2541, %v2545
    %v2547 = vlaneseq
    %v2548 = vshrl.u32 %v2547, 7
    %v2549 = vsub.s32 1, %v2548
    %v2550 = vrot.slane %v2541, %v2549
    %v2551 = vlaneseq
    %v2552 = vshrl.u32 %v2551, 7
    %v2553 = vsub.s32 2, %v2552
    %v2554 = vrot.slane %v2541, %v2553
    %v2555 = vlaneseq
    %v2556 = vshrl.u32 %v2555, 7
    %v2557 = vsub.s32 3, %v2556
    %v2558 = vrot.slane %v2541, %v2557
    %v2559 = vlaneseq
    %v2560 = vshrl.u32 %v2559, 7
    %v2561 = vsub.s32 4, %v2560
    %v2562 = vrot.slane %v2541, %v2561
    %v2563 = vlaneseq
    %v2564 = vshrl.u32 %v2563, 7
    %v2565 = vsub.s32 5, %v2564
    %v2566 = vrot.slane %v2541, %v2565
    %v2567 = vlaneseq
    %v2568 = vshrl.u32 %v2567, 7
    %v2569 = vsub.s32 6, %v2568
    %v2570 = vrot.slane %v2541, %v2569
    %v2571 = vlaneseq
    %v2572 = vshrl.u32 %v2571, 7
    %v2573 = vsub.s32 7, %v2572
    %v2574 = vrot.slane %v2541, %v2573
    %v2583 = vsub.f32 %v2427, %v2546
    %v2584 = vsub.f32 %v2428, %v2546
    %v2585 = vsub.f32 %v2429, %v2550
    %v2586 = vsub.f32 %v2430, %v2550
    %v2587 = vsub.f32 %v2431, %v2554
    %v2588 = vsub.f32 %v2432, %v2554
    %v2589 = vsub.f32 %v2433, %v2558
    %v2590 = vsub.f32 %v2434, %v2558
    %v2591 = vsub.f32 %v2435, %v2562
    %v2592 = vsub.f32 %v2436, %v2562
    %v2593 = vsub.f32 %v2437, %v2566
    %v2594 = vsub.f32 %v2438, %v2566
    %v2595 = vsub.f32 %v2439, %v2570
    %v2596 = vsub.f32 %v2440, %v2570
    %v2597 = vsub.f32 %v2441, %v2574
    %v2598 = vsub.f32 %v2442, %v2574
    %v2599 = vmul.f32 %v2583, 1.442695
    %v2600 = vpow.pop %v2599
    %v2601 = vmul.f32 %v2584, 1.442695
    %v2602 = vpow.pop %v2601
    %v2603 = vmul.f32 %v2585, 1.442695
    %v2604 = vpow.pop %v2603
    %v2605 = vmul.f32 %v2586, 1.442695
    %v2606 = vpow.pop %v2605
    %v2607 = vmul.f32 %v2587, 1.442695
    %v2608 = vpow.pop %v2607
    %v2609 = vmul.f32 %v2588, 1.442695
    %v2610 = vpow.pop %v2609
    %v2611 = vmul.f32 %v2589, 1.442695
    %v2612 = vpow.pop %v2611
    %v2613 = vmul.f32 %v2590, 1.442695
    %v2614 = vpow.pop %v2613
    %v2615 = vmul.f32 %v2591, 1.442695
    %v2616 = vpow.pop %v2615
    %v2617 = vmul.f32 %v2592, 1.442695
    %v2618 = vpow.pop %v2617
    %v2619 = vmul.f32 %v2593, 1.442695
    %v2620 = vpow.pop %v2619
    %v2621 = vmul.f32 %v2594, 1.442695
    %v2622 = vpow.pop %v2621
    %v2623 = vmul.f32 %v2595, 1.442695
    %v2624 = vpow.pop %v2623
    %v2625 = vmul.f32 %v2596, 1.442695
    %v2626 = vpow.pop %v2625
    %v2627 = vmul.f32 %v2597, 1.442695
    %v2628 = vpow.pop %v2627
    %v2629 = vmul.f32 %v2598, 1.442695
    %v2630 = vpow.pop %v2629
    %2647 = vset.pattern.permute.xlu0 0
    %2648 = vperm.xlu0 %2647, %v2600
    %v2649 = vpop.permute.xlu0 %2648
    %2650 = vset.pattern.permute.xlu0 0
    %2651 = vperm.xlu0 %2650, %v2602
    %v2652 = vpop.permute.xlu0 %2651
    %2653 = vset.pattern.permute.xlu0 0
    %2654 = vperm.xlu0 %2653, %v2604
    %v2655 = vpop.permute.xlu0 %2654
    %2656 = vset.pattern.permute.xlu0 0
    %2657 = vperm.xlu0 %2656, %v2606
    %v2658 = vpop.permute.xlu0 %2657
    %2659 = vset.pattern.permute.xlu0 0
    %2660 = vperm.xlu0 %2659, %v2608
    %v2661 = vpop.permute.xlu0 %2660
    %2662 = vset.pattern.permute.xlu0 0
    %2663 = vperm.xlu0 %2662, %v2610
    %v2664 = vpop.permute.xlu0 %2663
    %2665 = vset.pattern.permute.xlu0 0
    %2666 = vperm.xlu0 %2665, %v2612
    %v2667 = vpop.permute.xlu0 %2666
    %2668 = vset.pattern.permute.xlu0 0
    %2669 = vperm.xlu0 %2668, %v2614
    %v2670 = vpop.permute.xlu0 %2669
    %2671 = vset.pattern.permute.xlu0 0
    %2672 = vperm.xlu0 %2671, %v2616
    %v2673 = vpop.permute.xlu0 %2672
    %2674 = vset.pattern.permute.xlu0 0
    %2675 = vperm.xlu0 %2674, %v2618
    %v2676 = vpop.permute.xlu0 %2675
    %2677 = vset.pattern.permute.xlu0 0
    %2678 = vperm.xlu0 %2677, %v2620
    %v2679 = vpop.permute.xlu0 %2678
    %2680 = vset.pattern.permute.xlu0 0
    %2681 = vperm.xlu0 %2680, %v2622
    %v2682 = vpop.permute.xlu0 %2681
    %2683 = vset.pattern.permute.xlu0 0
    %2684 = vperm.xlu0 %2683, %v2624
    %v2685 = vpop.permute.xlu0 %2684
    %2686 = vset.pattern.permute.xlu0 0
    %2687 = vperm.xlu0 %2686, %v2626
    %v2688 = vpop.permute.xlu0 %2687
    %2689 = vset.pattern.permute.xlu0 0
    %2690 = vperm.xlu0 %2689, %v2628
    %v2691 = vpop.permute.xlu0 %2690
    %2692 = vset.pattern.permute.xlu0 0
    %2693 = vperm.xlu0 %2692, %v2630
    %v2694 = vpop.permute.xlu0 %2693
    %v2695 = vlaneseq
    %v2696 = vshrl.u32 %v2695, 7
    %v2697 = vsub.s32 %v1031, %v2696
    %v2698 = vrot.slane %v2649, %v2697
    %v2699 = vlaneseq
    %v2700 = vshrl.u32 %v2699, 7
    %v2701 = vsub.s32 %v1036, %v2700
    %v2702 = vrot.slane %v2652, %v2701
    %v2703 = vsel %vm1041, %v2702, %v2698
    %v2704 = vlaneseq
    %v2705 = vshrl.u32 %v2704, 7
    %v2706 = vsub.s32 %v1031, %v2705
    %v2707 = vrot.slane %v2655, %v2706
    %v2708 = vlaneseq
    %v2709 = vshrl.u32 %v2708, 7
    %v2710 = vsub.s32 %v1036, %v2709
    %v2711 = vrot.slane %v2658, %v2710
    %v2712 = vsel %vm1041, %v2711, %v2707
    %v2713 = vlaneseq
    %v2714 = vshrl.u32 %v2713, 7
    %v2715 = vsub.s32 %v1031, %v2714
    %v2716 = vrot.slane %v2661, %v2715
    %v2717 = vlaneseq
    %v2718 = vshrl.u32 %v2717, 7
    %v2719 = vsub.s32 %v1036, %v2718
    %v2720 = vrot.slane %v2664, %v2719
    %v2721 = vsel %vm1041, %v2720, %v2716
    %v2722 = vlaneseq
    %v2723 = vshrl.u32 %v2722, 7
    %v2724 = vsub.s32 %v1031, %v2723
    %v2725 = vrot.slane %v2667, %v2724
    %v2726 = vlaneseq
    %v2727 = vshrl.u32 %v2726, 7
    %v2728 = vsub.s32 %v1036, %v2727
    %v2729 = vrot.slane %v2670, %v2728
    %v2730 = vsel %vm1041, %v2729, %v2725
    %v2731 = vlaneseq
    %v2732 = vshrl.u32 %v2731, 7
    %v2733 = vsub.s32 %v1031, %v2732
    %v2734 = vrot.slane %v2673, %v2733
    %v2735 = vlaneseq
    %v2736 = vshrl.u32 %v2735, 7
    %v2737 = vsub.s32 %v1036, %v2736
    %v2738 = vrot.slane %v2676, %v2737
    %v2739 = vsel %vm1041, %v2738, %v2734
    %v2740 = vlaneseq
    %v2741 = vshrl.u32 %v2740, 7
    %v2742 = vsub.s32 %v1031, %v2741
    %v2743 = vrot.slane %v2679, %v2742
    %v2744 = vlaneseq
    %v2745 = vshrl.u32 %v2744, 7
    %v2746 = vsub.s32 %v1036, %v2745
    %v2747 = vrot.slane %v2682, %v2746
    %v2748 = vsel %vm1041, %v2747, %v2743
    %v2749 = vlaneseq
    %v2750 = vshrl.u32 %v2749, 7
    %v2751 = vsub.s32 %v1031, %v2750
    %v2752 = vrot.slane %v2685, %v2751
    %v2753 = vlaneseq
    %v2754 = vshrl.u32 %v2753, 7
    %v2755 = vsub.s32 %v1036, %v2754
    %v2756 = vrot.slane %v2688, %v2755
    %v2757 = vsel %vm1041, %v2756, %v2752
    %v2758 = vlaneseq
    %v2759 = vshrl.u32 %v2758, 7
    %v2760 = vsub.s32 %v1031, %v2759
    %v2761 = vrot.slane %v2691, %v2760
    %v2762 = vlaneseq
    %v2763 = vshrl.u32 %v2762, 7
    %v2764 = vsub.s32 %v1036, %v2763
    %v2765 = vrot.slane %v2694, %v2764
    %v2766 = vsel %vm1041, %v2765, %v2761
    %v2767 = vsel %vm287, %v2712, %v2703
    %v2768 = vsel %vm289, %v2721, %v2767
    %v2769 = vsel %vm291, %v2730, %v2768
    %v2770 = vsel %vm293, %v2739, %v2769
    %v2771 = vsel %vm295, %v2748, %v2770
    %v2772 = vsel %vm297, %v2757, %v2771
    %v2773 = vsel %vm299, %v2766, %v2772
    %v2775 = vsel %vm586, %v2773, 0.0
    %2776 = vadd.xlane.f32.xlu0 %v2775
    %v2777 = vpop.xlane.xlu0 %2776
    %v2778 = vrcp.pop %v2777
    %v2779 = vmul.f32 %v2777, %v2778
    %v2780 = vsub.f32 2.0, %v2779
    %v2781 = vmul.f32 %v2778, %v2780
    %v2783 = vlaneseq
    %v2784 = vshrl.u32 %v2783, 7
    %v2785 = vsub.s32 0, %v2784
    %v2786 = vrot.slane %v2781, %v2785
    %v2787 = vlaneseq
    %v2788 = vshrl.u32 %v2787, 7
    %v2789 = vsub.s32 1, %v2788
    %v2790 = vrot.slane %v2781, %v2789
    %v2791 = vlaneseq
    %v2792 = vshrl.u32 %v2791, 7
    %v2793 = vsub.s32 2, %v2792
    %v2794 = vrot.slane %v2781, %v2793
    %v2795 = vlaneseq
    %v2796 = vshrl.u32 %v2795, 7
    %v2797 = vsub.s32 3, %v2796
    %v2798 = vrot.slane %v2781, %v2797
    %v2799 = vlaneseq
    %v2800 = vshrl.u32 %v2799, 7
    %v2801 = vsub.s32 4, %v2800
    %v2802 = vrot.slane %v2781, %v2801
    %v2803 = vlaneseq
    %v2804 = vshrl.u32 %v2803, 7
    %v2805 = vsub.s32 5, %v2804
    %v2806 = vrot.slane %v2781, %v2805
    %v2807 = vlaneseq
    %v2808 = vshrl.u32 %v2807, 7
    %v2809 = vsub.s32 6, %v2808
    %v2810 = vrot.slane %v2781, %v2809
    %v2811 = vlaneseq
    %v2812 = vshrl.u32 %v2811, 7
    %v2813 = vsub.s32 7, %v2812
    %v2814 = vrot.slane %v2781, %v2813
    %v2823 = vmul.f32 %v2600, %v2786
    %v2824 = vmul.f32 %v2602, %v2786
    %v2825 = vmul.f32 %v2604, %v2790
    %v2826 = vmul.f32 %v2606, %v2790
    %v2827 = vmul.f32 %v2608, %v2794
    %v2828 = vmul.f32 %v2610, %v2794
    %v2829 = vmul.f32 %v2612, %v2798
    %v2830 = vmul.f32 %v2614, %v2798
    %v2831 = vmul.f32 %v2616, %v2802
    %v2832 = vmul.f32 %v2618, %v2802
    %v2833 = vmul.f32 %v2620, %v2806
    %v2834 = vmul.f32 %v2622, %v2806
    %v2835 = vmul.f32 %v2624, %v2810
    %v2836 = vmul.f32 %v2626, %v2810
    %v2837 = vmul.f32 %v2628, %v2814
    %v2838 = vmul.f32 %v2630, %v2814
    %2840 = vset.pattern.permute.xlu0 0
    %2841 = vperm.xlu0 %2840, %v2823
    %v2842 = vpop.permute.xlu0 %2841
    %2845 = vset.pattern.permute.xlu0 0
    %2846 = vperm.xlu0 %2845, %v2824
    %v2847 = vpop.permute.xlu0 %2846
    %2850 = vset.pattern.permute.xlu0 0
    %2851 = vperm.xlu0 %2850, %v2825
    %v2852 = vpop.permute.xlu0 %2851
    %2855 = vset.pattern.permute.xlu0 0
    %2856 = vperm.xlu0 %2855, %v2826
    %v2857 = vpop.permute.xlu0 %2856
    %2860 = vset.pattern.permute.xlu0 0
    %2861 = vperm.xlu0 %2860, %v2827
    %v2862 = vpop.permute.xlu0 %2861
    %2865 = vset.pattern.permute.xlu0 0
    %2866 = vperm.xlu0 %2865, %v2828
    %v2867 = vpop.permute.xlu0 %2866
    %2870 = vset.pattern.permute.xlu0 0
    %2871 = vperm.xlu0 %2870, %v2829
    %v2872 = vpop.permute.xlu0 %2871
    %2875 = vset.pattern.permute.xlu0 0
    %2876 = vperm.xlu0 %2875, %v2830
    %v2877 = vpop.permute.xlu0 %2876
    %2880 = vset.pattern.permute.xlu0 0
    %2881 = vperm.xlu0 %2880, %v2831
    %v2882 = vpop.permute.xlu0 %2881
    %2885 = vset.pattern.permute.xlu0 0
    %2886 = vperm.xlu0 %2885, %v2832
    %v2887 = vpop.permute.xlu0 %2886
    %2890 = vset.pattern.permute.xlu0 0
    %2891 = vperm.xlu0 %2890, %v2833
    %v2892 = vpop.permute.xlu0 %2891
    %2895 = vset.pattern.permute.xlu0 0
    %2896 = vperm.xlu0 %2895, %v2834
    %v2897 = vpop.permute.xlu0 %2896
    %2900 = vset.pattern.permute.xlu0 0
    %2901 = vperm.xlu0 %2900, %v2835
    %v2902 = vpop.permute.xlu0 %2901
    %2905 = vset.pattern.permute.xlu0 0
    %2906 = vperm.xlu0 %2905, %v2836
    %v2907 = vpop.permute.xlu0 %2906
    %2910 = vset.pattern.permute.xlu0 0
    %2911 = vperm.xlu0 %2910, %v2837
    %v2912 = vpop.permute.xlu0 %2911
    %2915 = vset.pattern.permute.xlu0 0
    %2916 = vperm.xlu0 %2915, %v2838
    %v2917 = vpop.permute.xlu0 %2916
    %v2919 = vmul.f32 %v2842, %v154
    %v2920 = vmul.f32 %v2847, %v155
    %v2921 = vmul.f32 %v2852, %v156
    %v2922 = vmul.f32 %v2857, %v157
    %v2923 = vmul.f32 %v2862, %v158
    %v2924 = vmul.f32 %v2867, %v159
    %v2925 = vmul.f32 %v2872, %v160
    %v2926 = vmul.f32 %v2877, %v161
    %v2927 = vmul.f32 %v2882, %v162
    %v2928 = vmul.f32 %v2887, %v163
    %v2929 = vmul.f32 %v2892, %v164
    %v2930 = vmul.f32 %v2897, %v165
    %v2931 = vmul.f32 %v2902, %v166
    %v2932 = vmul.f32 %v2907, %v167
    %v2933 = vmul.f32 %v2912, %v168
    %v2934 = vmul.f32 %v2917, %v169
    %v2935 = vsel %vm186, %v2919, 0.0
    %v2936 = vsel %vm186, %v2920, 0.0
    %v2937 = vadd.f32 %v2935, %v2936
    %v2938 = vrot.slane %v2937, 4
    %v2939 = vadd.f32 %v2937, %v2938
    %v2940 = vrot.slane %v2939, 2
    %v2941 = vadd.f32 %v2939, %v2940
    %v2942 = vrot.slane %v2941, 1
    %v2943 = vadd.f32 %v2941, %v2942
    %v2944 = vsel %vm186, %v2921, 0.0
    %v2945 = vsel %vm186, %v2922, 0.0
    %v2946 = vadd.f32 %v2944, %v2945
    %v2947 = vrot.slane %v2946, 4
    %v2948 = vadd.f32 %v2946, %v2947
    %v2949 = vrot.slane %v2948, 2
    %v2950 = vadd.f32 %v2948, %v2949
    %v2951 = vrot.slane %v2950, 1
    %v2952 = vadd.f32 %v2950, %v2951
    %v2953 = vsel %vm186, %v2923, 0.0
    %v2954 = vsel %vm186, %v2924, 0.0
    %v2955 = vadd.f32 %v2953, %v2954
    %v2956 = vrot.slane %v2955, 4
    %v2957 = vadd.f32 %v2955, %v2956
    %v2958 = vrot.slane %v2957, 2
    %v2959 = vadd.f32 %v2957, %v2958
    %v2960 = vrot.slane %v2959, 1
    %v2961 = vadd.f32 %v2959, %v2960
    %v2962 = vsel %vm186, %v2925, 0.0
    %v2963 = vsel %vm186, %v2926, 0.0
    %v2964 = vadd.f32 %v2962, %v2963
    %v2965 = vrot.slane %v2964, 4
    %v2966 = vadd.f32 %v2964, %v2965
    %v2967 = vrot.slane %v2966, 2
    %v2968 = vadd.f32 %v2966, %v2967
    %v2969 = vrot.slane %v2968, 1
    %v2970 = vadd.f32 %v2968, %v2969
    %v2971 = vsel %vm186, %v2927, 0.0
    %v2972 = vsel %vm186, %v2928, 0.0
    %v2973 = vadd.f32 %v2971, %v2972
    %v2974 = vrot.slane %v2973, 4
    %v2975 = vadd.f32 %v2973, %v2974
    %v2976 = vrot.slane %v2975, 2
    %v2977 = vadd.f32 %v2975, %v2976
    %v2978 = vrot.slane %v2977, 1
    %v2979 = vadd.f32 %v2977, %v2978
    %v2980 = vsel %vm186, %v2929, 0.0
    %v2981 = vsel %vm186, %v2930, 0.0
    %v2982 = vadd.f32 %v2980, %v2981
    %v2983 = vrot.slane %v2982, 4
    %v2984 = vadd.f32 %v2982, %v2983
    %v2985 = vrot.slane %v2984, 2
    %v2986 = vadd.f32 %v2984, %v2985
    %v2987 = vrot.slane %v2986, 1
    %v2988 = vadd.f32 %v2986, %v2987
    %v2989 = vsel %vm186, %v2931, 0.0
    %v2990 = vsel %vm186, %v2932, 0.0
    %v2991 = vadd.f32 %v2989, %v2990
    %v2992 = vrot.slane %v2991, 4
    %v2993 = vadd.f32 %v2991, %v2992
    %v2994 = vrot.slane %v2993, 2
    %v2995 = vadd.f32 %v2993, %v2994
    %v2996 = vrot.slane %v2995, 1
    %v2997 = vadd.f32 %v2995, %v2996
    %v2998 = vsel %vm186, %v2933, 0.0
    %v2999 = vsel %vm186, %v2934, 0.0
    %v3000 = vadd.f32 %v2998, %v2999
    %v3001 = vrot.slane %v3000, 4
    %v3002 = vadd.f32 %v3000, %v3001
    %v3003 = vrot.slane %v3002, 2
    %v3004 = vadd.f32 %v3002, %v3003
    %v3005 = vrot.slane %v3004, 1
    %v3006 = vadd.f32 %v3004, %v3005
    %v3015 = vsel %vm287, %v2952, %v2943
    %v3016 = vsel %vm289, %v2961, %v3015
    %v3017 = vsel %vm291, %v2970, %v3016
    %v3018 = vsel %vm293, %v2979, %v3017
    %v3019 = vsel %vm295, %v2988, %v3018
    %v3020 = vsel %vm297, %v2997, %v3019
    %v3021 = vsel %vm299, %v3006, %v3020
    %v3022 = vsel %vm186, %v3021, 0
    %3024 = vmatprep.subr.mxu0 0.0
    %3025 = vmatpush1.msra.mxu0 0.0
    %3026 = vmatprep.subr.mxu0 0.0
    %3027 = vmatpush1.msra.mxu0 0.0
    %3028 = vmatprep.subr.mxu0 0.0
    %3029 = vmatpush1.msra.mxu0 0.0
    %3030 = vmatprep.subr.mxu0 0.0
    %3031 = vmatpush1.msra.mxu0 0.0
    %3032 = vmatprep.subr.mxu0 0.0
    %3033 = vmatpush1.msra.mxu0 0.0
    %3034 = vmatprep.subr.mxu0 0.0
    %3035 = vmatpush1.msra.mxu0 0.0
    %3036 = vmatprep.subr.mxu0 0.0
    %3037 = vmatpush1.msra.mxu0 0.0
    %3038 = vmatprep.subr.mxu0 0.0
    %3039 = vmatpush1.msra.mxu0 0.0
    %3040 = vmatprep.subr.mxu0 0.0
    %3041 = vmatpush1.msra.mxu0 0.0
    %3042 = vmatprep.subr.mxu0 0.0
    %3043 = vmatpush1.msra.mxu0 0.0
    %3044 = vmatprep.subr.mxu0 0.0
    %3045 = vmatpush1.msra.mxu0 0.0
    %3046 = vmatprep.subr.mxu0 0.0
    %3047 = vmatpush1.msra.mxu0 0.0
    %3048 = vmatprep.subr.mxu0 0.0
    %3049 = vmatpush1.msra.mxu0 %v181
    %3050 = vmatprep.subr.mxu0 0.0
    %3051 = vmatpush1.msra.mxu0 %v180
    %3052 = vmatprep.subr.mxu0 0.0
    %3053 = vmatpush1.msra.mxu0 %v179
    %3054 = vmatprep.subr.mxu0 0.0
    %3055 = vmatpush1.msra.mxu0 %v178
    %3056 = vmatprep.subr.mxu0 0.0
    %3057 = vmatpush2.msra.mxu0 0.0
    %3058 = vmatprep.subr.mxu0 0.0
    %3059 = vmatpush2.msra.mxu0 0.0
    %3060 = vmatprep.subr.mxu0 0.0
    %3061 = vmatpush2.msra.mxu0 0.0
    %3062 = vmatprep.subr.mxu0 0.0
    %3063 = vmatpush2.msra.mxu0 0.0
    %3064 = vmatprep.subr.mxu0 0.0
    %3065 = vmatpush2.msra.mxu0 0.0
    %3066 = vmatprep.subr.mxu0 0.0
    %3067 = vmatpush2.msra.mxu0 0.0
    %3068 = vmatprep.subr.mxu0 0.0
    %3069 = vmatpush2.msra.mxu0 0.0
    %3070 = vmatprep.subr.mxu0 0.0
    %3071 = vmatpush2.msra.mxu0 0.0
    %3072 = vmatprep.subr.mxu0 0.0
    %3073 = vmatpush2.msra.mxu0 0.0
    %3074 = vmatprep.subr.mxu0 0.0
    %3075 = vmatpush2.msra.mxu0 0.0
    %3076 = vmatprep.subr.mxu0 0.0
    %3077 = vmatpush2.msra.mxu0 0.0
    %3078 = vmatprep.subr.mxu0 0.0
    %3079 = vmatpush2.msra.mxu0 0.0
    %3080 = vmatprep.subr.mxu0 0.0
    %3081 = vmatpush2.msra.mxu0 0.0
    %3082 = vmatprep.subr.mxu0 0.0
    %3083 = vmatpush2.msra.mxu0 0.0
    %3084 = vmatprep.subr.mxu0 0.0
    %3085 = vmatpush2.msra.mxu0 0.0
    %3086 = vmatprep.subr.mxu0 0.0
    %3087 = vmatpush2.msra.mxu0 0.0
    %3088 = vmatprep.mubr.f32.mxu0 0.0
    %3089 = vmatmul.mubr.f32.gmra.mxu0 %v3022
    %v3090 = vpop.f32.mrf.mxu0
    %v3091 = vadd.f32 0.0, %v3090
    %v3092 = vpop.f32.mrf.mxu0
    %3093 = vdwg.mxu0
    %v3095 = vrot.slane %v3091, 7
    %v3096 = vrot.slane %v3091, 1
    %v3097 = vrot.slane %v3091, 2
    %v3098 = vrot.slane %v3091, 3
    %v3099 = vrot.slane %v3091, 4
    %v3100 = vrot.slane %v3091, 5
    %v3101 = vrot.slane %v3091, 6
    %v3110 = vadd.f32 %v678, %v3095
    %v3111 = vadd.f32 %v683, %v3091
    %v3112 = vadd.f32 %v688, %v3096
    %v3113 = vadd.f32 %v693, %v3097
    %v3114 = vadd.f32 %v698, %v3098
    %v3115 = vadd.f32 %v703, %v3099
    %v3116 = vadd.f32 %v708, %v3100
    %v3117 = vadd.f32 %v713, %v3101
    %v3118 = vsel %vm186, %v2037, 0
    %3120 = vmatprep.subr.mxu0 0.0
    %3121 = vmatpush1.msra.mxu0 0.0
    %3122 = vmatprep.subr.mxu0 0.0
    %3123 = vmatpush1.msra.mxu0 0.0
    %3124 = vmatprep.subr.mxu0 0.0
    %3125 = vmatpush1.msra.mxu0 0.0
    %3126 = vmatprep.subr.mxu0 0.0
    %3127 = vmatpush1.msra.mxu0 0.0
    %3128 = vmatprep.subr.mxu0 0.0
    %3129 = vmatpush1.msra.mxu0 0.0
    %3130 = vmatprep.subr.mxu0 0.0
    %3131 = vmatpush1.msra.mxu0 0.0
    %3132 = vmatprep.subr.mxu0 0.0
    %3133 = vmatpush1.msra.mxu0 0.0
    %3134 = vmatprep.subr.mxu0 0.0
    %3135 = vmatpush1.msra.mxu0 0.0
    %3136 = vmatprep.subr.mxu0 0.0
    %3137 = vmatpush1.msra.mxu0 0.0
    %3138 = vmatprep.subr.mxu0 0.0
    %3139 = vmatpush1.msra.mxu0 0.0
    %3140 = vmatprep.subr.mxu0 0.0
    %3141 = vmatpush1.msra.mxu0 0.0
    %3142 = vmatprep.subr.mxu0 0.0
    %3143 = vmatpush1.msra.mxu0 0.0
    %3144 = vmatprep.subr.mxu0 0.0
    %3145 = vmatpush1.msra.mxu0 %v185
    %3146 = vmatprep.subr.mxu0 0.0
    %3147 = vmatpush1.msra.mxu0 %v184
    %3148 = vmatprep.subr.mxu0 0.0
    %3149 = vmatpush1.msra.mxu0 %v183
    %3150 = vmatprep.subr.mxu0 0.0
    %3151 = vmatpush1.msra.mxu0 %v182
    %3152 = vmatprep.subr.mxu0 0.0
    %3153 = vmatpush2.msra.mxu0 0.0
    %3154 = vmatprep.subr.mxu0 0.0
    %3155 = vmatpush2.msra.mxu0 0.0
    %3156 = vmatprep.subr.mxu0 0.0
    %3157 = vmatpush2.msra.mxu0 0.0
    %3158 = vmatprep.subr.mxu0 0.0
    %3159 = vmatpush2.msra.mxu0 0.0
    %3160 = vmatprep.subr.mxu0 0.0
    %3161 = vmatpush2.msra.mxu0 0.0
    %3162 = vmatprep.subr.mxu0 0.0
    %3163 = vmatpush2.msra.mxu0 0.0
    %3164 = vmatprep.subr.mxu0 0.0
    %3165 = vmatpush2.msra.mxu0 0.0
    %3166 = vmatprep.subr.mxu0 0.0
    %3167 = vmatpush2.msra.mxu0 0.0
    %3168 = vmatprep.subr.mxu0 0.0
    %3169 = vmatpush2.msra.mxu0 0.0
    %3170 = vmatprep.subr.mxu0 0.0
    %3171 = vmatpush2.msra.mxu0 0.0
    %3172 = vmatprep.subr.mxu0 0.0
    %3173 = vmatpush2.msra.mxu0 0.0
    %3174 = vmatprep.subr.mxu0 0.0
    %3175 = vmatpush2.msra.mxu0 0.0
    %3176 = vmatprep.subr.mxu0 0.0
    %3177 = vmatpush2.msra.mxu0 0.0
    %3178 = vmatprep.subr.mxu0 0.0
    %3179 = vmatpush2.msra.mxu0 0.0
    %3180 = vmatprep.subr.mxu0 0.0
    %3181 = vmatpush2.msra.mxu0 0.0
    %3182 = vmatprep.subr.mxu0 0.0
    %3183 = vmatpush2.msra.mxu0 0.0
    %3184 = vmatprep.mubr.f32.mxu0 0.0
    %3185 = vmatmul.mubr.f32.gmra.mxu0 %v3118
    %v3186 = vpop.f32.mrf.mxu0
    %v3187 = vadd.f32 0.0, %v3186
    %v3188 = vpop.f32.mrf.mxu0
    %3189 = vdwg.mxu0
    %v3191 = vrot.slane %v3187, 7
    %v3192 = vrot.slane %v3187, 1
    %v3193 = vrot.slane %v3187, 2
    %v3194 = vrot.slane %v3187, 3
    %v3195 = vrot.slane %v3187, 4
    %v3196 = vrot.slane %v3187, 5
    %v3197 = vrot.slane %v3187, 6
    %v3206 = vadd.f32 %v3110, %v3191
    %v3207 = vadd.f32 %v3111, %v3187
    %v3208 = vadd.f32 %v3112, %v3192
    %v3209 = vadd.f32 %v3113, %v3193
    %v3210 = vadd.f32 %v3114, %v3194
    %v3211 = vadd.f32 %v3115, %v3195
    %v3212 = vadd.f32 %v3116, %v3196
    %v3213 = vadd.f32 %v3117, %v3197
    %v3214 = vxor.u32 %v3206, 2147483648
    %v3215 = vxor.u32 %v3207, 2147483648
    %v3216 = vxor.u32 %v3208, 2147483648
    %v3217 = vxor.u32 %v3209, 2147483648
    %v3218 = vxor.u32 %v3210, 2147483648
    %v3219 = vxor.u32 %v3211, 2147483648
    %v3220 = vxor.u32 %v3212, 2147483648
    %v3221 = vxor.u32 %v3213, 2147483648
    %v3222 = vmul.f32 %v3214, 1.442695
    %v3223 = vpow.pop %v3222
    %v3224 = vmul.f32 %v3215, 1.442695
    %v3225 = vpow.pop %v3224
    %v3226 = vmul.f32 %v3216, 1.442695
    %v3227 = vpow.pop %v3226
    %v3228 = vmul.f32 %v3217, 1.442695
    %v3229 = vpow.pop %v3228
    %v3230 = vmul.f32 %v3218, 1.442695
    %v3231 = vpow.pop %v3230
    %v3232 = vmul.f32 %v3219, 1.442695
    %v3233 = vpow.pop %v3232
    %v3234 = vmul.f32 %v3220, 1.442695
    %v3235 = vpow.pop %v3234
    %v3236 = vmul.f32 %v3221, 1.442695
    %v3237 = vpow.pop %v3236
    %v3238 = vadd.f32 %v3223, 1.0
    %v3239 = vadd.f32 %v3225, 1.0
    %v3240 = vadd.f32 %v3227, 1.0
    %v3241 = vadd.f32 %v3229, 1.0
    %v3242 = vadd.f32 %v3231, 1.0
    %v3243 = vadd.f32 %v3233, 1.0
    %v3244 = vadd.f32 %v3235, 1.0
    %v3245 = vadd.f32 %v3237, 1.0
    %v3246 = vrcp.pop %v3238
    %v3247 = vmul.f32 1.0, %v3246
    %v3248 = vrcp.pop %v3239
    %v3249 = vmul.f32 1.0, %v3248
    %v3250 = vrcp.pop %v3240
    %v3251 = vmul.f32 1.0, %v3250
    %v3252 = vrcp.pop %v3241
    %v3253 = vmul.f32 1.0, %v3252
    %v3254 = vrcp.pop %v3242
    %v3255 = vmul.f32 1.0, %v3254
    %v3256 = vrcp.pop %v3243
    %v3257 = vmul.f32 1.0, %v3256
    %v3258 = vrcp.pop %v3244
    %v3259 = vmul.f32 1.0, %v3258
    %v3260 = vrcp.pop %v3245
    %v3261 = vmul.f32 1.0, %v3260
    %v3262 = vtanh.pop %v3206
    %v3263 = vtanh.pop %v3207
    %v3264 = vtanh.pop %v3208
    %v3265 = vtanh.pop %v3209
    %v3266 = vtanh.pop %v3210
    %v3267 = vtanh.pop %v3211
    %v3268 = vtanh.pop %v3212
    %v3269 = vtanh.pop %v3213
    %v3278 = vrot.slane %v1958, 7
    %v3279 = vrot.slane %v1959, 7
    %v3280 = vrot.slane %v1960, 7
    %v3281 = vrot.slane %v1961, 7
    %v3282 = vrot.slane %v1962, 7
    %v3283 = vrot.slane %v1963, 7
    %v3284 = vrot.slane %v1964, 7
    %v3285 = vrot.slane %v1965, 7
    %v3294 = vmul.f32 %v3247, %v3278
    %v3295 = vmul.f32 %v3249, %v3279
    %v3296 = vmul.f32 %v3251, %v3280
    %v3297 = vmul.f32 %v3253, %v3281
    %v3298 = vmul.f32 %v3255, %v3282
    %v3299 = vmul.f32 %v3257, %v3283
    %v3300 = vmul.f32 %v3259, %v3284
    %v3301 = vmul.f32 %v3261, %v3285
    %3310 = vrot.lane.b32.xlu0 %v3262, 64
    %v3311 = vpop.permute.xlu0 %3310
    %3312 = vrot.lane.b32.xlu0 %v3263, 64
    %v3313 = vpop.permute.xlu0 %3312
    %3314 = vrot.lane.b32.xlu0 %v3264, 64
    %v3315 = vpop.permute.xlu0 %3314
    %3316 = vrot.lane.b32.xlu0 %v3265, 64
    %v3317 = vpop.permute.xlu0 %3316
    %3318 = vrot.lane.b32.xlu0 %v3266, 64
    %v3319 = vpop.permute.xlu0 %3318
    %3320 = vrot.lane.b32.xlu0 %v3267, 64
    %v3321 = vpop.permute.xlu0 %3320
    %3322 = vrot.lane.b32.xlu0 %v3268, 64
    %v3323 = vpop.permute.xlu0 %3322
    %3324 = vrot.lane.b32.xlu0 %v3269, 64
    %v3325 = vpop.permute.xlu0 %3324
    %v3334 = vmul.f32 %v3247, %v3311
    %v3335 = vmul.f32 %v3249, %v3313
    %v3336 = vmul.f32 %v3251, %v3315
    %v3337 = vmul.f32 %v3253, %v3317
    %v3338 = vmul.f32 %v3255, %v3319
    %v3339 = vmul.f32 %v3257, %v3321
    %v3340 = vmul.f32 %v3259, %v3323
    %v3341 = vmul.f32 %v3261, %v3325
    %3350 = vrot.lane.b32.xlu0 %v3334, 32
    %v3351 = vpop.permute.xlu0 %3350
    %3352 = vrot.lane.b32.xlu0 %v3335, 32
    %v3353 = vpop.permute.xlu0 %3352
    %3354 = vrot.lane.b32.xlu0 %v3336, 32
    %v3355 = vpop.permute.xlu0 %3354
    %3356 = vrot.lane.b32.xlu0 %v3337, 32
    %v3357 = vpop.permute.xlu0 %3356
    %3358 = vrot.lane.b32.xlu0 %v3338, 32
    %v3359 = vpop.permute.xlu0 %3358
    %3360 = vrot.lane.b32.xlu0 %v3339, 32
    %v3361 = vpop.permute.xlu0 %3360
    %3362 = vrot.lane.b32.xlu0 %v3340, 32
    %v3363 = vpop.permute.xlu0 %3362
    %3364 = vrot.lane.b32.xlu0 %v3341, 32
    %v3365 = vpop.permute.xlu0 %3364
    %v3374 = vadd.f32 %v3294, %v3351
    %v3375 = vadd.f32 %v3295, %v3353
    %v3376 = vadd.f32 %v3296, %v3355
    %v3377 = vadd.f32 %v3297, %v3357
    %v3378 = vadd.f32 %v3298, %v3359
    %v3379 = vadd.f32 %v3299, %v3361
    %v3380 = vadd.f32 %v3300, %v3363
    %v3381 = vadd.f32 %v3301, %v3365
    %v3382 = vtanh.pop %v3374
    %v3383 = vtanh.pop %v3375
    %v3384 = vtanh.pop %v3376
    %v3385 = vtanh.pop %v3377
    %v3386 = vtanh.pop %v3378
    %v3387 = vtanh.pop %v3379
    %v3388 = vtanh.pop %v3380
    %v3389 = vtanh.pop %v3381
    %3398 = vrot.lane.b32.xlu0 %v3382, 64
    %v3399 = vpop.permute.xlu0 %3398
    %3400 = vrot.lane.b32.xlu0 %v3383, 64
    %v3401 = vpop.permute.xlu0 %3400
    %3402 = vrot.lane.b32.xlu0 %v3384, 64
    %v3403 = vpop.permute.xlu0 %3402
    %3404 = vrot.lane.b32.xlu0 %v3385, 64
    %v3405 = vpop.permute.xlu0 %3404
    %3406 = vrot.lane.b32.xlu0 %v3386, 64
    %v3407 = vpop.permute.xlu0 %3406
    %3408 = vrot.lane.b32.xlu0 %v3387, 64
    %v3409 = vpop.permute.xlu0 %3408
    %3410 = vrot.lane.b32.xlu0 %v3388, 64
    %v3411 = vpop.permute.xlu0 %3410
    %3412 = vrot.lane.b32.xlu0 %v3389, 64
    %v3413 = vpop.permute.xlu0 %3412
    %v3422 = vmul.f32 %v3247, %v3399
    %v3423 = vmul.f32 %v3249, %v3401
    %v3424 = vmul.f32 %v3251, %v3403
    %v3425 = vmul.f32 %v3253, %v3405
    %v3426 = vmul.f32 %v3255, %v3407
    %v3427 = vmul.f32 %v3257, %v3409
    %v3428 = vmul.f32 %v3259, %v3411
    %v3429 = vmul.f32 %v3261, %v3413
    %v3438 = vrot.slane %v3423, 7
    %v3439 = vsel %vm289, %v3438, %v3422
    %v3440 = vrot.slane %v3424, 6
    %v3441 = vsel %vm291, %v3440, %v3439
    %v3442 = vrot.slane %v3425, 5
    %v3443 = vsel %vm293, %v3442, %v3441
    %v3444 = vrot.slane %v3426, 4
    %v3445 = vsel %vm295, %v3444, %v3443
    %v3446 = vrot.slane %v3427, 3
    %v3447 = vsel %vm297, %v3446, %v3445
    %v3448 = vrot.slane %v3428, 2
    %v3449 = vsel %vm299, %v3448, %v3447
    %v3450 = vrot.slane %v3429, 1
    %3451 = vrot.lane.b32.xlu0 %v3449, 32
    %v3452 = vpop.permute.xlu0 %3451
    %3453 = vrot.lane.b32.xlu0 %v3450, 32
    %v3454 = vpop.permute.xlu0 %3453
    %v3457 = vsel %vm289, %v2952, %v2943
    %v3458 = vsel %vm291, %v2961, %v3457
    %v3459 = vsel %vm293, %v2970, %v3458
    %v3460 = vsel %vm295, %v2979, %v3459
    %v3461 = vsel %vm297, %v2988, %v3460
    %v3462 = vsel %vm299, %v2997, %v3461
    %3463 = vrot.lane.b32.xlu0 %v3462, 32
    %v3464 = vpop.permute.xlu0 %3463
    %3465 = vrot.lane.b32.xlu0 %v3006, 32
    %v3466 = vpop.permute.xlu0 %3465
    %v3469 = vsel %vm289, %v2042, %v170
    %v3470 = vsel %vm291, %v2044, %v3469
    %v3471 = vsel %vm293, %v2046, %v3470
    %v3472 = vsel %vm295, %v2048, %v3471
    %v3473 = vsel %vm297, %v2050, %v3472
    %v3474 = vsel %vm299, %v2052, %v3473
    %3475 = vrot.lane.b32.xlu0 %v3474, 64
    %v3476 = vpop.permute.xlu0 %3475
    %3477 = vrot.lane.b32.xlu0 %v2054, 64
    %v3478 = vpop.permute.xlu0 %3477
    %v3481 = vsel %vm186, %v3452, %v3464
    %v3482 = vsel %vm186, %v3454, %v3466
    %v3483 = vsel %vm2060, %v3481, %v3476
    %v3484 = vsel %vm2060, %v3482, %v3478
    %v3485 = vsel %vm2062, %v3483, 0.0
    %v3486 = vsel %vm2062, %v3484, 0.0
    %v3489 = vcombine.high %v3485, %v3485
    %v3491 = vunpack.c.l.s4 1966171168
    %v3492 = vunpack.c.0.s8 %v3491
    %v3493 = vlaneseq
    %v3494 = vshrl.u32 %v3493, 7
    %v3495 = vsub.s32 %v3492, %v3494
    %v3496 = vrot.slane %v3485, %v3495
    %v3498 = vunpack.c.l.s4 1966171168
    %v3499 = vunpack.c.0.s8 %v3498
    %v3500 = vlaneseq
    %v3501 = vshrl.u32 %v3500, 7
    %v3502 = vsub.s32 %v3499, %v3501
    %v3503 = vrot.slane %v3489, %v3502
    %v3504 = vcombine.high %v3496, %v3496
    %v3505 = vcombine.high %v3503, %v3503
    %v3507 = vunpack.c.l.s4 1966171168
    %v3508 = vunpack.c.0.s8 %v3507
    %v3509 = vlaneseq
    %v3510 = vshrl.u32 %v3509, 7
    %v3511 = vsub.s32 %v3508, %v3510
    %v3512 = vrot.slane %v3496, %v3511
    %v3514 = vunpack.c.l.s4 1966171168
    %v3515 = vunpack.c.0.s8 %v3514
    %v3516 = vlaneseq
    %v3517 = vshrl.u32 %v3516, 7
    %v3518 = vsub.s32 %v3515, %v3517
    %v3519 = vrot.slane %v3503, %v3518
    %v3521 = vunpack.c.l.s4 1966171168
    %v3522 = vunpack.c.0.s8 %v3521
    %v3523 = vlaneseq
    %v3524 = vshrl.u32 %v3523, 7
    %v3525 = vsub.s32 %v3522, %v3524
    %v3526 = vrot.slane %v3504, %v3525
    %v3528 = vunpack.c.l.s4 1966171168
    %v3529 = vunpack.c.0.s8 %v3528
    %v3530 = vlaneseq
    %v3531 = vshrl.u32 %v3530, 7
    %v3532 = vsub.s32 %v3529, %v3531
    %v3533 = vrot.slane %v3505, %v3532
    %v3534 = vcombine.high %v3512, %v3512
    %v3535 = vcombine.high %v3519, %v3519
    %v3536 = vcombine.high %v3526, %v3526
    %v3537 = vcombine.high %v3533, %v3533
    %v3539 = vunpack.c.l.s4 1966171168
    %v3540 = vunpack.c.0.s8 %v3539
    %v3541 = vlaneseq
    %v3542 = vshrl.u32 %v3541, 7
    %v3543 = vsub.s32 %v3540, %v3542
    %v3544 = vrot.slane %v3486, %v3543
    %v3546 = vunpack.c.l.s4 1966171168
    %v3547 = vunpack.c.0.s8 %v3546
    %v3548 = vlaneseq
    %v3549 = vshrl.u32 %v3548, 7
    %v3550 = vsub.s32 %v3547, %v3549
    %v3551 = vrot.slane %v3544, %v3550
    %3560 = vst [vmem:[#allocation2 + $0x1] sm:$0x1] %v3526
    %3561 = vst [vmem:[#allocation2 + $0x9] sm:$0x1] %v3534
    %3562 = vst [vmem:[#allocation2 + $0x11] sm:$0x1] %v3536
    %3563 = vst [vmem:[#allocation2 + $0x19] sm:$0x1] %v3519
    %3564 = vst [vmem:[#allocation2 + $0x21] sm:$0x1] %v3533
    %3565 = vst [vmem:[#allocation2 + $0x29] sm:$0x1] %v3535
    %3566 = vst [vmem:[#allocation2 + $0x31] sm:$0x1] %v3537
    %3567 = vst [vmem:[#allocation2 + $0x39] sm:$0x1] %v3551
    %v3568 = vlaneseq
    %v3569 = vshrl.u32 %v3568, 7
    %v3570 = vsub.s32 %v1031, %v3569
    %v3571 = vrot.slane %v2842, %v3570
    %v3572 = vlaneseq
    %v3573 = vshrl.u32 %v3572, 7
    %v3574 = vsub.s32 %v1036, %v3573
    %v3575 = vrot.slane %v2847, %v3574
    %v3576 = vsel %vm1041, %v3575, %v3571
    %v3577 = vlaneseq
    %v3578 = vshrl.u32 %v3577, 7
    %v3579 = vsub.s32 %v1031, %v3578
    %v3580 = vrot.slane %v2852, %v3579
    %v3581 = vlaneseq
    %v3582 = vshrl.u32 %v3581, 7
    %v3583 = vsub.s32 %v1036, %v3582
    %v3584 = vrot.slane %v2857, %v3583
    %v3585 = vsel %vm1041, %v3584, %v3580
    %v3586 = vlaneseq
    %v3587 = vshrl.u32 %v3586, 7
    %v3588 = vsub.s32 %v1031, %v3587
    %v3589 = vrot.slane %v2862, %v3588
    %v3590 = vlaneseq
    %v3591 = vshrl.u32 %v3590, 7
    %v3592 = vsub.s32 %v1036, %v3591
    %v3593 = vrot.slane %v2867, %v3592
    %v3594 = vsel %vm1041, %v3593, %v3589
    %v3595 = vlaneseq
    %v3596 = vshrl.u32 %v3595, 7
    %v3597 = vsub.s32 %v1031, %v3596
    %v3598 = vrot.slane %v2872, %v3597
    %v3599 = vlaneseq
    %v3600 = vshrl.u32 %v3599, 7
    %v3601 = vsub.s32 %v1036, %v3600
    %v3602 = vrot.slane %v2877, %v3601
    %v3603 = vsel %vm1041, %v3602, %v3598
    %v3604 = vlaneseq
    %v3605 = vshrl.u32 %v3604, 7
    %v3606 = vsub.s32 %v1031, %v3605
    %v3607 = vrot.slane %v2882, %v3606
    %v3608 = vlaneseq
    %v3609 = vshrl.u32 %v3608, 7
    %v3610 = vsub.s32 %v1036, %v3609
    %v3611 = vrot.slane %v2887, %v3610
    %v3612 = vsel %vm1041, %v3611, %v3607
    %v3613 = vlaneseq
    %v3614 = vshrl.u32 %v3613, 7
    %v3615 = vsub.s32 %v1031, %v3614
    %v3616 = vrot.slane %v2892, %v3615
    %v3617 = vlaneseq
    %v3618 = vshrl.u32 %v3617, 7
    %v3619 = vsub.s32 %v1036, %v3618
    %v3620 = vrot.slane %v2897, %v3619
    %v3621 = vsel %vm1041, %v3620, %v3616
    %v3622 = vlaneseq
    %v3623 = vshrl.u32 %v3622, 7
    %v3624 = vsub.s32 %v1031, %v3623
    %v3625 = vrot.slane %v2902, %v3624
    %v3626 = vlaneseq
    %v3627 = vshrl.u32 %v3626, 7
    %v3628 = vsub.s32 %v1036, %v3627
    %v3629 = vrot.slane %v2907, %v3628
    %v3630 = vsel %vm1041, %v3629, %v3625
    %v3631 = vlaneseq
    %v3632 = vshrl.u32 %v3631, 7
    %v3633 = vsub.s32 %v1031, %v3632
    %v3634 = vrot.slane %v2912, %v3633
    %v3635 = vlaneseq
    %v3636 = vshrl.u32 %v3635, 7
    %v3637 = vsub.s32 %v1036, %v3636
    %v3638 = vrot.slane %v2917, %v3637
    %v3639 = vsel %vm1041, %v3638, %v3634
    %3648 = vst.msk [vmem:[#allocation18 + $0x1] sm:$0x1] %vm2210, %v3576
    %3649 = vst.msk [vmem:[#allocation18 + $0x9] sm:$0x1] %vm2210, %v3585
    %3650 = vst.msk [vmem:[#allocation18 + $0x11] sm:$0x1] %vm2210, %v3594
    %3651 = vst.msk [vmem:[#allocation18 + $0x19] sm:$0x1] %vm2210, %v3603
    %3652 = vst.msk [vmem:[#allocation18 + $0x21] sm:$0x1] %vm2210, %v3612
    %3653 = vst.msk [vmem:[#allocation18 + $0x29] sm:$0x1] %vm2210, %v3621
    %3654 = vst.msk [vmem:[#allocation18 + $0x31] sm:$0x1] %vm2210, %v3630
    %3655 = vst.msk [vmem:[#allocation18 + $0x39] sm:$0x1] %vm2210, %v3639
    %v3656 = vlaneseq
    %v3657 = vshrl.u32 %v3656, 7
    %v3658 = vsub.s32 1, %v3657
    %v3659 = vrot.slane %v3422, %v3658
    %v3660 = vlaneseq
    %v3661 = vshrl.u32 %v3660, 7
    %v3662 = vsub.s32 1, %v3661
    %v3663 = vrot.slane %v3423, %v3662
    %v3664 = vlaneseq
    %v3665 = vshrl.u32 %v3664, 7
    %v3666 = vsub.s32 1, %v3665
    %v3667 = vrot.slane %v3424, %v3666
    %v3668 = vlaneseq
    %v3669 = vshrl.u32 %v3668, 7
    %v3670 = vsub.s32 1, %v3669
    %v3671 = vrot.slane %v3425, %v3670
    %v3672 = vlaneseq
    %v3673 = vshrl.u32 %v3672, 7
    %v3674 = vsub.s32 1, %v3673
    %v3675 = vrot.slane %v3426, %v3674
    %v3676 = vlaneseq
    %v3677 = vshrl.u32 %v3676, 7
    %v3678 = vsub.s32 1, %v3677
    %v3679 = vrot.slane %v3427, %v3678
    %v3680 = vlaneseq
    %v3681 = vshrl.u32 %v3680, 7
    %v3682 = vsub.s32 1, %v3681
    %v3683 = vrot.slane %v3428, %v3682
    %v3684 = vlaneseq
    %v3685 = vshrl.u32 %v3684, 7
    %v3686 = vsub.s32 1, %v3685
    %v3687 = vrot.slane %v3429, %v3686
    %v3688 = vmul.f32 %v3659, %v2252
    %v3689 = vmul.f32 %v3659, %v2254
    %v3690 = vmul.f32 %v3663, %v2256
    %v3691 = vmul.f32 %v3663, %v2258
    %v3692 = vmul.f32 %v3667, %v2260
    %v3693 = vmul.f32 %v3667, %v2262
    %v3694 = vmul.f32 %v3671, %v2264
    %v3695 = vmul.f32 %v3671, %v2266
    %v3696 = vmul.f32 %v3675, %v2268
    %v3697 = vmul.f32 %v3675, %v2270
    %v3698 = vmul.f32 %v3679, %v2272
    %v3699 = vmul.f32 %v3679, %v2274
    %v3700 = vmul.f32 %v3683, %v2276
    %v3701 = vmul.f32 %v3683, %v2278
    %v3702 = vmul.f32 %v3687, %v2280
    %v3703 = vmul.f32 %v3687, %v2282
    %3720 = vrot.lane.b32.xlu0 %v3688, 32
    %v3721 = vpop.permute.xlu0 %3720
    %3722 = vrot.lane.b32.xlu0 %v3689, 32
    %v3723 = vpop.permute.xlu0 %3722
    %3724 = vrot.lane.b32.xlu0 %v3690, 32
    %v3725 = vpop.permute.xlu0 %3724
    %3726 = vrot.lane.b32.xlu0 %v3691, 32
    %v3727 = vpop.permute.xlu0 %3726
    %3728 = vrot.lane.b32.xlu0 %v3692, 32
    %v3729 = vpop.permute.xlu0 %3728
    %3730 = vrot.lane.b32.xlu0 %v3693, 32
    %v3731 = vpop.permute.xlu0 %3730
    %3732 = vrot.lane.b32.xlu0 %v3694, 32
    %v3733 = vpop.permute.xlu0 %3732
    %3734 = vrot.lane.b32.xlu0 %v3695, 32
    %v3735 = vpop.permute.xlu0 %3734
    %3736 = vrot.lane.b32.xlu0 %v3696, 32
    %v3737 = vpop.permute.xlu0 %3736
    %3738 = vrot.lane.b32.xlu0 %v3697, 32
    %v3739 = vpop.permute.xlu0 %3738
    %3740 = vrot.lane.b32.xlu0 %v3698, 32
    %v3741 = vpop.permute.xlu0 %3740
    %3742 = vrot.lane.b32.xlu0 %v3699, 32
    %v3743 = vpop.permute.xlu0 %3742
    %3744 = vrot.lane.b32.xlu0 %v3700, 32
    %v3745 = vpop.permute.xlu0 %3744
    %3746 = vrot.lane.b32.xlu0 %v3701, 32
    %v3747 = vpop.permute.xlu0 %3746
    %3748 = vrot.lane.b32.xlu0 %v3702, 32
    %v3749 = vpop.permute.xlu0 %3748
    %3750 = vrot.lane.b32.xlu0 %v3703, 32
    %v3751 = vpop.permute.xlu0 %3750
    %v3768 = vsel %vm186, %v3721, 0.0
    %3769 = vadd.xlane.f32.xlu0 %v3768
    %v3770 = vpop.xlane.xlu0 %3769
    %v3771 = vsel %vm186, %v3723, 0.0
    %3772 = vadd.xlane.f32.xlu0 %v3771
    %v3773 = vpop.xlane.xlu0 %3772
    %v3774 = vsel %vm186, %v3725, 0.0
    %3775 = vadd.xlane.f32.xlu0 %v3774
    %v3776 = vpop.xlane.xlu0 %3775
    %v3777 = vsel %vm186, %v3727, 0.0
    %3778 = vadd.xlane.f32.xlu0 %v3777
    %v3779 = vpop.xlane.xlu0 %3778
    %v3780 = vsel %vm186, %v3729, 0.0
    %3781 = vadd.xlane.f32.xlu0 %v3780
    %v3782 = vpop.xlane.xlu0 %3781
    %v3783 = vsel %vm186, %v3731, 0.0
    %3784 = vadd.xlane.f32.xlu0 %v3783
    %v3785 = vpop.xlane.xlu0 %3784
    %v3786 = vsel %vm186, %v3733, 0.0
    %3787 = vadd.xlane.f32.xlu0 %v3786
    %v3788 = vpop.xlane.xlu0 %3787
    %v3789 = vsel %vm186, %v3735, 0.0
    %3790 = vadd.xlane.f32.xlu0 %v3789
    %v3791 = vpop.xlane.xlu0 %3790
    %v3792 = vsel %vm186, %v3737, 0.0
    %3793 = vadd.xlane.f32.xlu0 %v3792
    %v3794 = vpop.xlane.xlu0 %3793
    %v3795 = vsel %vm186, %v3739, 0.0
    %3796 = vadd.xlane.f32.xlu0 %v3795
    %v3797 = vpop.xlane.xlu0 %3796
    %v3798 = vsel %vm186, %v3741, 0.0
    %3799 = vadd.xlane.f32.xlu0 %v3798
    %v3800 = vpop.xlane.xlu0 %3799
    %v3801 = vsel %vm186, %v3743, 0.0
    %3802 = vadd.xlane.f32.xlu0 %v3801
    %v3803 = vpop.xlane.xlu0 %3802
    %v3804 = vsel %vm186, %v3745, 0.0
    %3805 = vadd.xlane.f32.xlu0 %v3804
    %v3806 = vpop.xlane.xlu0 %3805
    %v3807 = vsel %vm186, %v3747, 0.0
    %3808 = vadd.xlane.f32.xlu0 %v3807
    %v3809 = vpop.xlane.xlu0 %3808
    %v3810 = vsel %vm186, %v3749, 0.0
    %3811 = vadd.xlane.f32.xlu0 %v3810
    %v3812 = vpop.xlane.xlu0 %3811
    %v3813 = vsel %vm186, %v3751, 0.0
    %3814 = vadd.xlane.f32.xlu0 %v3813
    %v3815 = vpop.xlane.xlu0 %3814
    %v3816 = vmul.f32 %v3770, 0.17677669
    %v3817 = vmul.f32 %v3773, 0.17677669
    %v3818 = vmul.f32 %v3776, 0.17677669
    %v3819 = vmul.f32 %v3779, 0.17677669
    %v3820 = vmul.f32 %v3782, 0.17677669
    %v3821 = vmul.f32 %v3785, 0.17677669
    %v3822 = vmul.f32 %v3788, 0.17677669
    %v3823 = vmul.f32 %v3791, 0.17677669
    %v3824 = vmul.f32 %v3794, 0.17677669
    %v3825 = vmul.f32 %v3797, 0.17677669
    %v3826 = vmul.f32 %v3800, 0.17677669
    %v3827 = vmul.f32 %v3803, 0.17677669
    %v3828 = vmul.f32 %v3806, 0.17677669
    %v3829 = vmul.f32 %v3809, 0.17677669
    %v3830 = vmul.f32 %v3812, 0.17677669
    %v3831 = vmul.f32 %v3815, 0.17677669
    %v3848 = vlaneseq
    %v3849 = vshrl.u32 %v3848, 7
    %v3850 = vsub.s32 %v1031, %v3849
    %v3851 = vrot.slane %v3816, %v3850
    %v3852 = vlaneseq
    %v3853 = vshrl.u32 %v3852, 7
    %v3854 = vsub.s32 %v1036, %v3853
    %v3855 = vrot.slane %v3817, %v3854
    %v3856 = vsel %vm1041, %v3855, %v3851
    %v3857 = vlaneseq
    %v3858 = vshrl.u32 %v3857, 7
    %v3859 = vsub.s32 %v1031, %v3858
    %v3860 = vrot.slane %v3818, %v3859
    %v3861 = vlaneseq
    %v3862 = vshrl.u32 %v3861, 7
    %v3863 = vsub.s32 %v1036, %v3862
    %v3864 = vrot.slane %v3819, %v3863
    %v3865 = vsel %vm1041, %v3864, %v3860
    %v3866 = vlaneseq
    %v3867 = vshrl.u32 %v3866, 7
    %v3868 = vsub.s32 %v1031, %v3867
    %v3869 = vrot.slane %v3820, %v3868
    %v3870 = vlaneseq
    %v3871 = vshrl.u32 %v3870, 7
    %v3872 = vsub.s32 %v1036, %v3871
    %v3873 = vrot.slane %v3821, %v3872
    %v3874 = vsel %vm1041, %v3873, %v3869
    %v3875 = vlaneseq
    %v3876 = vshrl.u32 %v3875, 7
    %v3877 = vsub.s32 %v1031, %v3876
    %v3878 = vrot.slane %v3822, %v3877
    %v3879 = vlaneseq
    %v3880 = vshrl.u32 %v3879, 7
    %v3881 = vsub.s32 %v1036, %v3880
    %v3882 = vrot.slane %v3823, %v3881
    %v3883 = vsel %vm1041, %v3882, %v3878
    %v3884 = vlaneseq
    %v3885 = vshrl.u32 %v3884, 7
    %v3886 = vsub.s32 %v1031, %v3885
    %v3887 = vrot.slane %v3824, %v3886
    %v3888 = vlaneseq
    %v3889 = vshrl.u32 %v3888, 7
    %v3890 = vsub.s32 %v1036, %v3889
    %v3891 = vrot.slane %v3825, %v3890
    %v3892 = vsel %vm1041, %v3891, %v3887
    %v3893 = vlaneseq
    %v3894 = vshrl.u32 %v3893, 7
    %v3895 = vsub.s32 %v1031, %v3894
    %v3896 = vrot.slane %v3826, %v3895
    %v3897 = vlaneseq
    %v3898 = vshrl.u32 %v3897, 7
    %v3899 = vsub.s32 %v1036, %v3898
    %v3900 = vrot.slane %v3827, %v3899
    %v3901 = vsel %vm1041, %v3900, %v3896
    %v3902 = vlaneseq
    %v3903 = vshrl.u32 %v3902, 7
    %v3904 = vsub.s32 %v1031, %v3903
    %v3905 = vrot.slane %v3828, %v3904
    %v3906 = vlaneseq
    %v3907 = vshrl.u32 %v3906, 7
    %v3908 = vsub.s32 %v1036, %v3907
    %v3909 = vrot.slane %v3829, %v3908
    %v3910 = vsel %vm1041, %v3909, %v3905
    %v3911 = vlaneseq
    %v3912 = vshrl.u32 %v3911, 7
    %v3913 = vsub.s32 %v1031, %v3912
    %v3914 = vrot.slane %v3830, %v3913
    %v3915 = vlaneseq
    %v3916 = vshrl.u32 %v3915, 7
    %v3917 = vsub.s32 %v1036, %v3916
    %v3918 = vrot.slane %v3831, %v3917
    %v3919 = vsel %vm1041, %v3918, %v3914
    %v3920 = vsel %vm287, %v3865, %v3856
    %v3921 = vsel %vm289, %v3874, %v3920
    %v3922 = vsel %vm291, %v3883, %v3921
    %v3923 = vsel %vm293, %v3892, %v3922
    %v3924 = vsel %vm295, %v3901, %v3923
    %v3925 = vsel %vm297, %v3910, %v3924
    %v3926 = vsel %vm299, %v3919, %v3925
    %v3928 = vsel %vm586, %v3926, -inf
    %3929 = vmax.xlane.f32.xlu0 %v3928
    %v3930 = vpop.xlane.xlu0 %3929
    %v3932 = vlaneseq
    %v3933 = vshrl.u32 %v3932, 7
    %v3934 = vsub.s32 0, %v3933
    %v3935 = vrot.slane %v3930, %v3934
    %v3936 = vlaneseq
    %v3937 = vshrl.u32 %v3936, 7
    %v3938 = vsub.s32 1, %v3937
    %v3939 = vrot.slane %v3930, %v3938
    %v3940 = vlaneseq
    %v3941 = vshrl.u32 %v3940, 7
    %v3942 = vsub.s32 2, %v3941
    %v3943 = vrot.slane %v3930, %v3942
    %v3944 = vlaneseq
    %v3945 = vshrl.u32 %v3944, 7
    %v3946 = vsub.s32 3, %v3945
    %v3947 = vrot.slane %v3930, %v3946
    %v3948 = vlaneseq
    %v3949 = vshrl.u32 %v3948, 7
    %v3950 = vsub.s32 4, %v3949
    %v3951 = vrot.slane %v3930, %v3950
    %v3952 = vlaneseq
    %v3953 = vshrl.u32 %v3952, 7
    %v3954 = vsub.s32 5, %v3953
    %v3955 = vrot.slane %v3930, %v3954
    %v3956 = vlaneseq
    %v3957 = vshrl.u32 %v3956, 7
    %v3958 = vsub.s32 6, %v3957
    %v3959 = vrot.slane %v3930, %v3958
    %v3960 = vlaneseq
    %v3961 = vshrl.u32 %v3960, 7
    %v3962 = vsub.s32 7, %v3961
    %v3963 = vrot.slane %v3930, %v3962
    %v3972 = vsub.f32 %v3816, %v3935
    %v3973 = vsub.f32 %v3817, %v3935
    %v3974 = vsub.f32 %v3818, %v3939
    %v3975 = vsub.f32 %v3819, %v3939
    %v3976 = vsub.f32 %v3820, %v3943
    %v3977 = vsub.f32 %v3821, %v3943
    %v3978 = vsub.f32 %v3822, %v3947
    %v3979 = vsub.f32 %v3823, %v3947
    %v3980 = vsub.f32 %v3824, %v3951
    %v3981 = vsub.f32 %v3825, %v3951
    %v3982 = vsub.f32 %v3826, %v3955
    %v3983 = vsub.f32 %v3827, %v3955
    %v3984 = vsub.f32 %v3828, %v3959
    %v3985 = vsub.f32 %v3829, %v3959
    %v3986 = vsub.f32 %v3830, %v3963
    %v3987 = vsub.f32 %v3831, %v3963
    %v3988 = vmul.f32 %v3972, 1.442695
    %v3989 = vpow.pop %v3988
    %v3990 = vmul.f32 %v3973, 1.442695
    %v3991 = vpow.pop %v3990
    %v3992 = vmul.f32 %v3974, 1.442695
    %v3993 = vpow.pop %v3992
    %v3994 = vmul.f32 %v3975, 1.442695
    %v3995 = vpow.pop %v3994
    %v3996 = vmul.f32 %v3976, 1.442695
    %v3997 = vpow.pop %v3996
    %v3998 = vmul.f32 %v3977, 1.442695
    %v3999 = vpow.pop %v3998
    %v4000 = vmul.f32 %v3978, 1.442695
    %v4001 = vpow.pop %v4000
    %v4002 = vmul.f32 %v3979, 1.442695
    %v4003 = vpow.pop %v4002
    %v4004 = vmul.f32 %v3980, 1.442695
    %v4005 = vpow.pop %v4004
    %v4006 = vmul.f32 %v3981, 1.442695
    %v4007 = vpow.pop %v4006
    %v4008 = vmul.f32 %v3982, 1.442695
    %v4009 = vpow.pop %v4008
    %v4010 = vmul.f32 %v3983, 1.442695
    %v4011 = vpow.pop %v4010
    %v4012 = vmul.f32 %v3984, 1.442695
    %v4013 = vpow.pop %v4012
    %v4014 = vmul.f32 %v3985, 1.442695
    %v4015 = vpow.pop %v4014
    %v4016 = vmul.f32 %v3986, 1.442695
    %v4017 = vpow.pop %v4016
    %v4018 = vmul.f32 %v3987, 1.442695
    %v4019 = vpow.pop %v4018
    %4036 = vset.pattern.permute.xlu0 0
    %4037 = vperm.xlu0 %4036, %v3989
    %v4038 = vpop.permute.xlu0 %4037
    %4039 = vset.pattern.permute.xlu0 0
    %4040 = vperm.xlu0 %4039, %v3991
    %v4041 = vpop.permute.xlu0 %4040
    %4042 = vset.pattern.permute.xlu0 0
    %4043 = vperm.xlu0 %4042, %v3993
    %v4044 = vpop.permute.xlu0 %4043
    %4045 = vset.pattern.permute.xlu0 0
    %4046 = vperm.xlu0 %4045, %v3995
    %v4047 = vpop.permute.xlu0 %4046
    %4048 = vset.pattern.permute.xlu0 0
    %4049 = vperm.xlu0 %4048, %v3997
    %v4050 = vpop.permute.xlu0 %4049
    %4051 = vset.pattern.permute.xlu0 0
    %4052 = vperm.xlu0 %4051, %v3999
    %v4053 = vpop.permute.xlu0 %4052
    %4054 = vset.pattern.permute.xlu0 0
    %4055 = vperm.xlu0 %4054, %v4001
    %v4056 = vpop.permute.xlu0 %4055
    %4057 = vset.pattern.permute.xlu0 0
    %4058 = vperm.xlu0 %4057, %v4003
    %v4059 = vpop.permute.xlu0 %4058
    %4060 = vset.pattern.permute.xlu0 0
    %4061 = vperm.xlu0 %4060, %v4005
    %v4062 = vpop.permute.xlu0 %4061
    %4063 = vset.pattern.permute.xlu0 0
    %4064 = vperm.xlu0 %4063, %v4007
    %v4065 = vpop.permute.xlu0 %4064
    %4066 = vset.pattern.permute.xlu0 0
    %4067 = vperm.xlu0 %4066, %v4009
    %v4068 = vpop.permute.xlu0 %4067
    %4069 = vset.pattern.permute.xlu0 0
    %4070 = vperm.xlu0 %4069, %v4011
    %v4071 = vpop.permute.xlu0 %4070
    %4072 = vset.pattern.permute.xlu0 0
    %4073 = vperm.xlu0 %4072, %v4013
    %v4074 = vpop.permute.xlu0 %4073
    %4075 = vset.pattern.permute.xlu0 0
    %4076 = vperm.xlu0 %4075, %v4015
    %v4077 = vpop.permute.xlu0 %4076
    %4078 = vset.pattern.permute.xlu0 0
    %4079 = vperm.xlu0 %4078, %v4017
    %v4080 = vpop.permute.xlu0 %4079
    %4081 = vset.pattern.permute.xlu0 0
    %4082 = vperm.xlu0 %4081, %v4019
    %v4083 = vpop.permute.xlu0 %4082
    %v4084 = vlaneseq
    %v4085 = vshrl.u32 %v4084, 7
    %v4086 = vsub.s32 %v1031, %v4085
    %v4087 = vrot.slane %v4038, %v4086
    %v4088 = vlaneseq
    %v4089 = vshrl.u32 %v4088, 7
    %v4090 = vsub.s32 %v1036, %v4089
    %v4091 = vrot.slane %v4041, %v4090
    %v4092 = vsel %vm1041, %v4091, %v4087
    %v4093 = vlaneseq
    %v4094 = vshrl.u32 %v4093, 7
    %v4095 = vsub.s32 %v1031, %v4094
    %v4096 = vrot.slane %v4044, %v4095
    %v4097 = vlaneseq
    %v4098 = vshrl.u32 %v4097, 7
    %v4099 = vsub.s32 %v1036, %v4098
    %v4100 = vrot.slane %v4047, %v4099
    %v4101 = vsel %vm1041, %v4100, %v4096
    %v4102 = vlaneseq
    %v4103 = vshrl.u32 %v4102, 7
    %v4104 = vsub.s32 %v1031, %v4103
    %v4105 = vrot.slane %v4050, %v4104
    %v4106 = vlaneseq
    %v4107 = vshrl.u32 %v4106, 7
    %v4108 = vsub.s32 %v1036, %v4107
    %v4109 = vrot.slane %v4053, %v4108
    %v4110 = vsel %vm1041, %v4109, %v4105
    %v4111 = vlaneseq
    %v4112 = vshrl.u32 %v4111, 7
    %v4113 = vsub.s32 %v1031, %v4112
    %v4114 = vrot.slane %v4056, %v4113
    %v4115 = vlaneseq
    %v4116 = vshrl.u32 %v4115, 7
    %v4117 = vsub.s32 %v1036, %v4116
    %v4118 = vrot.slane %v4059, %v4117
    %v4119 = vsel %vm1041, %v4118, %v4114
    %v4120 = vlaneseq
    %v4121 = vshrl.u32 %v4120, 7
    %v4122 = vsub.s32 %v1031, %v4121
    %v4123 = vrot.slane %v4062, %v4122
    %v4124 = vlaneseq
    %v4125 = vshrl.u32 %v4124, 7
    %v4126 = vsub.s32 %v1036, %v4125
    %v4127 = vrot.slane %v4065, %v4126
    %v4128 = vsel %vm1041, %v4127, %v4123
    %v4129 = vlaneseq
    %v4130 = vshrl.u32 %v4129, 7
    %v4131 = vsub.s32 %v1031, %v4130
    %v4132 = vrot.slane %v4068, %v4131
    %v4133 = vlaneseq
    %v4134 = vshrl.u32 %v4133, 7
    %v4135 = vsub.s32 %v1036, %v4134
    %v4136 = vrot.slane %v4071, %v4135
    %v4137 = vsel %vm1041, %v4136, %v4132
    %v4138 = vlaneseq
    %v4139 = vshrl.u32 %v4138, 7
    %v4140 = vsub.s32 %v1031, %v4139
    %v4141 = vrot.slane %v4074, %v4140
    %v4142 = vlaneseq
    %v4143 = vshrl.u32 %v4142, 7
    %v4144 = vsub.s32 %v1036, %v4143
    %v4145 = vrot.slane %v4077, %v4144
    %v4146 = vsel %vm1041, %v4145, %v4141
    %v4147 = vlaneseq
    %v4148 = vshrl.u32 %v4147, 7
    %v4149 = vsub.s32 %v1031, %v4148
    %v4150 = vrot.slane %v4080, %v4149
    %v4151 = vlaneseq
    %v4152 = vshrl.u32 %v4151, 7
    %v4153 = vsub.s32 %v1036, %v4152
    %v4154 = vrot.slane %v4083, %v4153
    %v4155 = vsel %vm1041, %v4154, %v4150
    %v4156 = vsel %vm287, %v4101, %v4092
    %v4157 = vsel %vm289, %v4110, %v4156
    %v4158 = vsel %vm291, %v4119, %v4157
    %v4159 = vsel %vm293, %v4128, %v4158
    %v4160 = vsel %vm295, %v4137, %v4159
    %v4161 = vsel %vm297, %v4146, %v4160
    %v4162 = vsel %vm299, %v4155, %v4161
    %v4164 = vsel %vm586, %v4162, 0.0
    %4165 = vadd.xlane.f32.xlu0 %v4164
    %v4166 = vpop.xlane.xlu0 %4165
    %v4167 = vrcp.pop %v4166
    %v4168 = vmul.f32 %v4166, %v4167
    %v4169 = vsub.f32 2.0, %v4168
    %v4170 = vmul.f32 %v4167, %v4169
    %v4172 = vlaneseq
    %v4173 = vshrl.u32 %v4172, 7
    %v4174 = vsub.s32 0, %v4173
    %v4175 = vrot.slane %v4170, %v4174
    %v4176 = vlaneseq
    %v4177 = vshrl.u32 %v4176, 7
    %v4178 = vsub.s32 1, %v4177
    %v4179 = vrot.slane %v4170, %v4178
    %v4180 = vlaneseq
    %v4181 = vshrl.u32 %v4180, 7
    %v4182 = vsub.s32 2, %v4181
    %v4183 = vrot.slane %v4170, %v4182
    %v4184 = vlaneseq
    %v4185 = vshrl.u32 %v4184, 7
    %v4186 = vsub.s32 3, %v4185
    %v4187 = vrot.slane %v4170, %v4186
    %v4188 = vlaneseq
    %v4189 = vshrl.u32 %v4188, 7
    %v4190 = vsub.s32 4, %v4189
    %v4191 = vrot.slane %v4170, %v4190
    %v4192 = vlaneseq
    %v4193 = vshrl.u32 %v4192, 7
    %v4194 = vsub.s32 5, %v4193
    %v4195 = vrot.slane %v4170, %v4194
    %v4196 = vlaneseq
    %v4197 = vshrl.u32 %v4196, 7
    %v4198 = vsub.s32 6, %v4197
    %v4199 = vrot.slane %v4170, %v4198
    %v4200 = vlaneseq
    %v4201 = vshrl.u32 %v4200, 7
    %v4202 = vsub.s32 7, %v4201
    %v4203 = vrot.slane %v4170, %v4202
    %v4212 = vmul.f32 %v3989, %v4175
    %v4213 = vmul.f32 %v3991, %v4175
    %v4214 = vmul.f32 %v3993, %v4179
    %v4215 = vmul.f32 %v3995, %v4179
    %v4216 = vmul.f32 %v3997, %v4183
    %v4217 = vmul.f32 %v3999, %v4183
    %v4218 = vmul.f32 %v4001, %v4187
    %v4219 = vmul.f32 %v4003, %v4187
    %v4220 = vmul.f32 %v4005, %v4191
    %v4221 = vmul.f32 %v4007, %v4191
    %v4222 = vmul.f32 %v4009, %v4195
    %v4223 = vmul.f32 %v4011, %v4195
    %v4224 = vmul.f32 %v4013, %v4199
    %v4225 = vmul.f32 %v4015, %v4199
    %v4226 = vmul.f32 %v4017, %v4203
    %v4227 = vmul.f32 %v4019, %v4203
    %4229 = vset.pattern.permute.xlu0 0
    %4230 = vperm.xlu0 %4229, %v4212
    %v4231 = vpop.permute.xlu0 %4230
    %4234 = vset.pattern.permute.xlu0 0
    %4235 = vperm.xlu0 %4234, %v4213
    %v4236 = vpop.permute.xlu0 %4235
    %4239 = vset.pattern.permute.xlu0 0
    %4240 = vperm.xlu0 %4239, %v4214
    %v4241 = vpop.permute.xlu0 %4240
    %4244 = vset.pattern.permute.xlu0 0
    %4245 = vperm.xlu0 %4244, %v4215
    %v4246 = vpop.permute.xlu0 %4245
    %4249 = vset.pattern.permute.xlu0 0
    %4250 = vperm.xlu0 %4249, %v4216
    %v4251 = vpop.permute.xlu0 %4250
    %4254 = vset.pattern.permute.xlu0 0
    %4255 = vperm.xlu0 %4254, %v4217
    %v4256 = vpop.permute.xlu0 %4255
    %4259 = vset.pattern.permute.xlu0 0
    %4260 = vperm.xlu0 %4259, %v4218
    %v4261 = vpop.permute.xlu0 %4260
    %4264 = vset.pattern.permute.xlu0 0
    %4265 = vperm.xlu0 %4264, %v4219
    %v4266 = vpop.permute.xlu0 %4265
    %4269 = vset.pattern.permute.xlu0 0
    %4270 = vperm.xlu0 %4269, %v4220
    %v4271 = vpop.permute.xlu0 %4270
    %4274 = vset.pattern.permute.xlu0 0
    %4275 = vperm.xlu0 %4274, %v4221
    %v4276 = vpop.permute.xlu0 %4275
    %4279 = vset.pattern.permute.xlu0 0
    %4280 = vperm.xlu0 %4279, %v4222
    %v4281 = vpop.permute.xlu0 %4280
    %4284 = vset.pattern.permute.xlu0 0
    %4285 = vperm.xlu0 %4284, %v4223
    %v4286 = vpop.permute.xlu0 %4285
    %4289 = vset.pattern.permute.xlu0 0
    %4290 = vperm.xlu0 %4289, %v4224
    %v4291 = vpop.permute.xlu0 %4290
    %4294 = vset.pattern.permute.xlu0 0
    %4295 = vperm.xlu0 %4294, %v4225
    %v4296 = vpop.permute.xlu0 %4295
    %4299 = vset.pattern.permute.xlu0 0
    %4300 = vperm.xlu0 %4299, %v4226
    %v4301 = vpop.permute.xlu0 %4300
    %4304 = vset.pattern.permute.xlu0 0
    %4305 = vperm.xlu0 %4304, %v4227
    %v4306 = vpop.permute.xlu0 %4305
    %v4308 = vmul.f32 %v4231, %v154
    %v4309 = vmul.f32 %v4236, %v155
    %v4310 = vmul.f32 %v4241, %v156
    %v4311 = vmul.f32 %v4246, %v157
    %v4312 = vmul.f32 %v4251, %v158
    %v4313 = vmul.f32 %v4256, %v159
    %v4314 = vmul.f32 %v4261, %v160
    %v4315 = vmul.f32 %v4266, %v161
    %v4316 = vmul.f32 %v4271, %v162
    %v4317 = vmul.f32 %v4276, %v163
    %v4318 = vmul.f32 %v4281, %v164
    %v4319 = vmul.f32 %v4286, %v165
    %v4320 = vmul.f32 %v4291, %v166
    %v4321 = vmul.f32 %v4296, %v167
    %v4322 = vmul.f32 %v4301, %v168
    %v4323 = vmul.f32 %v4306, %v169
    %v4324 = vsel %vm186, %v4308, 0.0
    %v4325 = vsel %vm186, %v4309, 0.0
    %v4326 = vadd.f32 %v4324, %v4325
    %v4327 = vrot.slane %v4326, 4
    %v4328 = vadd.f32 %v4326, %v4327
    %v4329 = vrot.slane %v4328, 2
    %v4330 = vadd.f32 %v4328, %v4329
    %v4331 = vrot.slane %v4330, 1
    %v4332 = vadd.f32 %v4330, %v4331
    %v4333 = vsel %vm186, %v4310, 0.0
    %v4334 = vsel %vm186, %v4311, 0.0
    %v4335 = vadd.f32 %v4333, %v4334
    %v4336 = vrot.slane %v4335, 4
    %v4337 = vadd.f32 %v4335, %v4336
    %v4338 = vrot.slane %v4337, 2
    %v4339 = vadd.f32 %v4337, %v4338
    %v4340 = vrot.slane %v4339, 1
    %v4341 = vadd.f32 %v4339, %v4340
    %v4342 = vsel %vm186, %v4312, 0.0
    %v4343 = vsel %vm186, %v4313, 0.0
    %v4344 = vadd.f32 %v4342, %v4343
    %v4345 = vrot.slane %v4344, 4
    %v4346 = vadd.f32 %v4344, %v4345
    %v4347 = vrot.slane %v4346, 2
    %v4348 = vadd.f32 %v4346, %v4347
    %v4349 = vrot.slane %v4348, 1
    %v4350 = vadd.f32 %v4348, %v4349
    %v4351 = vsel %vm186, %v4314, 0.0
    %v4352 = vsel %vm186, %v4315, 0.0
    %v4353 = vadd.f32 %v4351, %v4352
    %v4354 = vrot.slane %v4353, 4
    %v4355 = vadd.f32 %v4353, %v4354
    %v4356 = vrot.slane %v4355, 2
    %v4357 = vadd.f32 %v4355, %v4356
    %v4358 = vrot.slane %v4357, 1
    %v4359 = vadd.f32 %v4357, %v4358
    %v4360 = vsel %vm186, %v4316, 0.0
    %v4361 = vsel %vm186, %v4317, 0.0
    %v4362 = vadd.f32 %v4360, %v4361
    %v4363 = vrot.slane %v4362, 4
    %v4364 = vadd.f32 %v4362, %v4363
    %v4365 = vrot.slane %v4364, 2
    %v4366 = vadd.f32 %v4364, %v4365
    %v4367 = vrot.slane %v4366, 1
    %v4368 = vadd.f32 %v4366, %v4367
    %v4369 = vsel %vm186, %v4318, 0.0
    %v4370 = vsel %vm186, %v4319, 0.0
    %v4371 = vadd.f32 %v4369, %v4370
    %v4372 = vrot.slane %v4371, 4
    %v4373 = vadd.f32 %v4371, %v4372
    %v4374 = vrot.slane %v4373, 2
    %v4375 = vadd.f32 %v4373, %v4374
    %v4376 = vrot.slane %v4375, 1
    %v4377 = vadd.f32 %v4375, %v4376
    %v4378 = vsel %vm186, %v4320, 0.0
    %v4379 = vsel %vm186, %v4321, 0.0
    %v4380 = vadd.f32 %v4378, %v4379
    %v4381 = vrot.slane %v4380, 4
    %v4382 = vadd.f32 %v4380, %v4381
    %v4383 = vrot.slane %v4382, 2
    %v4384 = vadd.f32 %v4382, %v4383
    %v4385 = vrot.slane %v4384, 1
    %v4386 = vadd.f32 %v4384, %v4385
    %v4387 = vsel %vm186, %v4322, 0.0
    %v4388 = vsel %vm186, %v4323, 0.0
    %v4389 = vadd.f32 %v4387, %v4388
    %v4390 = vrot.slane %v4389, 4
    %v4391 = vadd.f32 %v4389, %v4390
    %v4392 = vrot.slane %v4391, 2
    %v4393 = vadd.f32 %v4391, %v4392
    %v4394 = vrot.slane %v4393, 1
    %v4395 = vadd.f32 %v4393, %v4394
    %v4404 = vsel %vm287, %v4341, %v4332
    %v4405 = vsel %vm289, %v4350, %v4404
    %v4406 = vsel %vm291, %v4359, %v4405
    %v4407 = vsel %vm293, %v4368, %v4406
    %v4408 = vsel %vm295, %v4377, %v4407
    %v4409 = vsel %vm297, %v4386, %v4408
    %v4410 = vsel %vm299, %v4395, %v4409
    %v4411 = vsel %vm186, %v4410, 0
    %4413 = vmatprep.subr.mxu0 0.0
    %4414 = vmatpush1.msra.mxu0 0.0
    %4415 = vmatprep.subr.mxu0 0.0
    %4416 = vmatpush1.msra.mxu0 0.0
    %4417 = vmatprep.subr.mxu0 0.0
    %4418 = vmatpush1.msra.mxu0 0.0
    %4419 = vmatprep.subr.mxu0 0.0
    %4420 = vmatpush1.msra.mxu0 0.0
    %4421 = vmatprep.subr.mxu0 0.0
    %4422 = vmatpush1.msra.mxu0 0.0
    %4423 = vmatprep.subr.mxu0 0.0
    %4424 = vmatpush1.msra.mxu0 0.0
    %4425 = vmatprep.subr.mxu0 0.0
    %4426 = vmatpush1.msra.mxu0 0.0
    %4427 = vmatprep.subr.mxu0 0.0
    %4428 = vmatpush1.msra.mxu0 0.0
    %4429 = vmatprep.subr.mxu0 0.0
    %4430 = vmatpush1.msra.mxu0 0.0
    %4431 = vmatprep.subr.mxu0 0.0
    %4432 = vmatpush1.msra.mxu0 0.0
    %4433 = vmatprep.subr.mxu0 0.0
    %4434 = vmatpush1.msra.mxu0 0.0
    %4435 = vmatprep.subr.mxu0 0.0
    %4436 = vmatpush1.msra.mxu0 0.0
    %4437 = vmatprep.subr.mxu0 0.0
    %4438 = vmatpush1.msra.mxu0 %v181
    %4439 = vmatprep.subr.mxu0 0.0
    %4440 = vmatpush1.msra.mxu0 %v180
    %4441 = vmatprep.subr.mxu0 0.0
    %4442 = vmatpush1.msra.mxu0 %v179
    %4443 = vmatprep.subr.mxu0 0.0
    %4444 = vmatpush1.msra.mxu0 %v178
    %4445 = vmatprep.subr.mxu0 0.0
    %4446 = vmatpush2.msra.mxu0 0.0
    %4447 = vmatprep.subr.mxu0 0.0
    %4448 = vmatpush2.msra.mxu0 0.0
    %4449 = vmatprep.subr.mxu0 0.0
    %4450 = vmatpush2.msra.mxu0 0.0
    %4451 = vmatprep.subr.mxu0 0.0
    %4452 = vmatpush2.msra.mxu0 0.0
    %4453 = vmatprep.subr.mxu0 0.0
    %4454 = vmatpush2.msra.mxu0 0.0
    %4455 = vmatprep.subr.mxu0 0.0
    %4456 = vmatpush2.msra.mxu0 0.0
    %4457 = vmatprep.subr.mxu0 0.0
    %4458 = vmatpush2.msra.mxu0 0.0
    %4459 = vmatprep.subr.mxu0 0.0
    %4460 = vmatpush2.msra.mxu0 0.0
    %4461 = vmatprep.subr.mxu0 0.0
    %4462 = vmatpush2.msra.mxu0 0.0
    %4463 = vmatprep.subr.mxu0 0.0
    %4464 = vmatpush2.msra.mxu0 0.0
    %4465 = vmatprep.subr.mxu0 0.0
    %4466 = vmatpush2.msra.mxu0 0.0
    %4467 = vmatprep.subr.mxu0 0.0
    %4468 = vmatpush2.msra.mxu0 0.0
    %4469 = vmatprep.subr.mxu0 0.0
    %4470 = vmatpush2.msra.mxu0 0.0
    %4471 = vmatprep.subr.mxu0 0.0
    %4472 = vmatpush2.msra.mxu0 0.0
    %4473 = vmatprep.subr.mxu0 0.0
    %4474 = vmatpush2.msra.mxu0 0.0
    %4475 = vmatprep.subr.mxu0 0.0
    %4476 = vmatpush2.msra.mxu0 0.0
    %4477 = vmatprep.mubr.f32.mxu0 0.0
    %4478 = vmatmul.mubr.f32.gmra.mxu0 %v4411
    %v4479 = vpop.f32.mrf.mxu0
    %v4480 = vadd.f32 0.0, %v4479
    %v4481 = vpop.f32.mrf.mxu0
    %4482 = vdwg.mxu0
    %v4484 = vrot.slane %v4480, 6
    %v4485 = vrot.slane %v4480, 7
    %v4486 = vrot.slane %v4480, 1
    %v4487 = vrot.slane %v4480, 2
    %v4488 = vrot.slane %v4480, 3
    %v4489 = vrot.slane %v4480, 4
    %v4490 = vrot.slane %v4480, 5
    %v4499 = vadd.f32 %v678, %v4484
    %v4500 = vadd.f32 %v683, %v4485
    %v4501 = vadd.f32 %v688, %v4480
    %v4502 = vadd.f32 %v693, %v4486
    %v4503 = vadd.f32 %v698, %v4487
    %v4504 = vadd.f32 %v703, %v4488
    %v4505 = vadd.f32 %v708, %v4489
    %v4506 = vadd.f32 %v713, %v4490
    %v4507 = vrot.slane %v3422, 1
    %v4508 = vsel %vm287, %v3423, %v4507
    %v4509 = vrot.slane %v3424, 7
    %v4510 = vsel %vm289, %v4509, %v4508
    %v4511 = vrot.slane %v3425, 6
    %v4512 = vsel %vm291, %v4511, %v4510
    %v4513 = vrot.slane %v3426, 5
    %v4514 = vsel %vm293, %v4513, %v4512
    %v4515 = vrot.slane %v3427, 4
    %v4516 = vsel %vm295, %v4515, %v4514
    %v4517 = vrot.slane %v3428, 3
    %v4518 = vsel %vm297, %v4517, %v4516
    %v4519 = vrot.slane %v3429, 2
    %v4520 = vsel %vm299, %v4519, %v4518
    %4521 = vrot.lane.b32.xlu0 %v4520, 32
    %v4522 = vpop.permute.xlu0 %4521
    %v4523 = vsel %vm186, %v4522, 0
    %4525 = vmatprep.subr.mxu0 0.0
    %4526 = vmatpush1.msra.mxu0 0.0
    %4527 = vmatprep.subr.mxu0 0.0
    %4528 = vmatpush1.msra.mxu0 0.0
    %4529 = vmatprep.subr.mxu0 0.0
    %4530 = vmatpush1.msra.mxu0 0.0
    %4531 = vmatprep.subr.mxu0 0.0
    %4532 = vmatpush1.msra.mxu0 0.0
    %4533 = vmatprep.subr.mxu0 0.0
    %4534 = vmatpush1.msra.mxu0 0.0
    %4535 = vmatprep.subr.mxu0 0.0
    %4536 = vmatpush1.msra.mxu0 0.0
    %4537 = vmatprep.subr.mxu0 0.0
    %4538 = vmatpush1.msra.mxu0 0.0
    %4539 = vmatprep.subr.mxu0 0.0
    %4540 = vmatpush1.msra.mxu0 0.0
    %4541 = vmatprep.subr.mxu0 0.0
    %4542 = vmatpush1.msra.mxu0 0.0
    %4543 = vmatprep.subr.mxu0 0.0
    %4544 = vmatpush1.msra.mxu0 0.0
    %4545 = vmatprep.subr.mxu0 0.0
    %4546 = vmatpush1.msra.mxu0 0.0
    %4547 = vmatprep.subr.mxu0 0.0
    %4548 = vmatpush1.msra.mxu0 0.0
    %4549 = vmatprep.subr.mxu0 0.0
    %4550 = vmatpush1.msra.mxu0 %v185
    %4551 = vmatprep.subr.mxu0 0.0
    %4552 = vmatpush1.msra.mxu0 %v184
    %4553 = vmatprep.subr.mxu0 0.0
    %4554 = vmatpush1.msra.mxu0 %v183
    %4555 = vmatprep.subr.mxu0 0.0
    %4556 = vmatpush1.msra.mxu0 %v182
    %4557 = vmatprep.subr.mxu0 0.0
    %4558 = vmatpush2.msra.mxu0 0.0
    %4559 = vmatprep.subr.mxu0 0.0
    %4560 = vmatpush2.msra.mxu0 0.0
    %4561 = vmatprep.subr.mxu0 0.0
    %4562 = vmatpush2.msra.mxu0 0.0
    %4563 = vmatprep.subr.mxu0 0.0
    %4564 = vmatpush2.msra.mxu0 0.0
    %4565 = vmatprep.subr.mxu0 0.0
    %4566 = vmatpush2.msra.mxu0 0.0
    %4567 = vmatprep.subr.mxu0 0.0
    %4568 = vmatpush2.msra.mxu0 0.0
    %4569 = vmatprep.subr.mxu0 0.0
    %4570 = vmatpush2.msra.mxu0 0.0
    %4571 = vmatprep.subr.mxu0 0.0
    %4572 = vmatpush2.msra.mxu0 0.0
    %4573 = vmatprep.subr.mxu0 0.0
    %4574 = vmatpush2.msra.mxu0 0.0
    %4575 = vmatprep.subr.mxu0 0.0
    %4576 = vmatpush2.msra.mxu0 0.0
    %4577 = vmatprep.subr.mxu0 0.0
    %4578 = vmatpush2.msra.mxu0 0.0
    %4579 = vmatprep.subr.mxu0 0.0
    %4580 = vmatpush2.msra.mxu0 0.0
    %4581 = vmatprep.subr.mxu0 0.0
    %4582 = vmatpush2.msra.mxu0 0.0
    %4583 = vmatprep.subr.mxu0 0.0
    %4584 = vmatpush2.msra.mxu0 0.0
    %4585 = vmatprep.subr.mxu0 0.0
    %4586 = vmatpush2.msra.mxu0 0.0
    %4587 = vmatprep.subr.mxu0 0.0
    %4588 = vmatpush2.msra.mxu0 0.0
    %4589 = vmatprep.mubr.f32.mxu0 0.0
    %4590 = vmatmul.mubr.f32.gmra.mxu0 %v4523
    %v4591 = vpop.f32.mrf.mxu0
    %v4592 = vadd.f32 0.0, %v4591
    %v4593 = vpop.f32.mrf.mxu0
    %4594 = vdwg.mxu0
    %v4596 = vrot.slane %v4592, 6
    %v4597 = vrot.slane %v4592, 7
    %v4598 = vrot.slane %v4592, 1
    %v4599 = vrot.slane %v4592, 2
    %v4600 = vrot.slane %v4592, 3
    %v4601 = vrot.slane %v4592, 4
    %v4602 = vrot.slane %v4592, 5
    %v4611 = vadd.f32 %v4499, %v4596
    %v4612 = vadd.f32 %v4500, %v4597
    %v4613 = vadd.f32 %v4501, %v4592
    %v4614 = vadd.f32 %v4502, %v4598
    %v4615 = vadd.f32 %v4503, %v4599
    %v4616 = vadd.f32 %v4504, %v4600
    %v4617 = vadd.f32 %v4505, %v4601
    %v4618 = vadd.f32 %v4506, %v4602
    %v4619 = vxor.u32 %v4611, 2147483648
    %v4620 = vxor.u32 %v4612, 2147483648
    %v4621 = vxor.u32 %v4613, 2147483648
    %v4622 = vxor.u32 %v4614, 2147483648
    %v4623 = vxor.u32 %v4615, 2147483648
    %v4624 = vxor.u32 %v4616, 2147483648
    %v4625 = vxor.u32 %v4617, 2147483648
    %v4626 = vxor.u32 %v4618, 2147483648
    %v4627 = vmul.f32 %v4619, 1.442695
    %v4628 = vpow.pop %v4627
    %v4629 = vmul.f32 %v4620, 1.442695
    %v4630 = vpow.pop %v4629
    %v4631 = vmul.f32 %v4621, 1.442695
    %v4632 = vpow.pop %v4631
    %v4633 = vmul.f32 %v4622, 1.442695
    %v4634 = vpow.pop %v4633
    %v4635 = vmul.f32 %v4623, 1.442695
    %v4636 = vpow.pop %v4635
    %v4637 = vmul.f32 %v4624, 1.442695
    %v4638 = vpow.pop %v4637
    %v4639 = vmul.f32 %v4625, 1.442695
    %v4640 = vpow.pop %v4639
    %v4641 = vmul.f32 %v4626, 1.442695
    %v4642 = vpow.pop %v4641
    %v4643 = vadd.f32 %v4628, 1.0
    %v4644 = vadd.f32 %v4630, 1.0
    %v4645 = vadd.f32 %v4632, 1.0
    %v4646 = vadd.f32 %v4634, 1.0
    %v4647 = vadd.f32 %v4636, 1.0
    %v4648 = vadd.f32 %v4638, 1.0
    %v4649 = vadd.f32 %v4640, 1.0
    %v4650 = vadd.f32 %v4642, 1.0
    %v4651 = vrcp.pop %v4643
    %v4652 = vmul.f32 1.0, %v4651
    %v4653 = vrcp.pop %v4644
    %v4654 = vmul.f32 1.0, %v4653
    %v4655 = vrcp.pop %v4645
    %v4656 = vmul.f32 1.0, %v4655
    %v4657 = vrcp.pop %v4646
    %v4658 = vmul.f32 1.0, %v4657
    %v4659 = vrcp.pop %v4647
    %v4660 = vmul.f32 1.0, %v4659
    %v4661 = vrcp.pop %v4648
    %v4662 = vmul.f32 1.0, %v4661
    %v4663 = vrcp.pop %v4649
    %v4664 = vmul.f32 1.0, %v4663
    %v4665 = vrcp.pop %v4650
    %v4666 = vmul.f32 1.0, %v4665
    %v4667 = vtanh.pop %v4611
    %v4668 = vtanh.pop %v4612
    %v4669 = vtanh.pop %v4613
    %v4670 = vtanh.pop %v4614
    %v4671 = vtanh.pop %v4615
    %v4672 = vtanh.pop %v4616
    %v4673 = vtanh.pop %v4617
    %v4674 = vtanh.pop %v4618
    %v4683 = vrot.slane %v3374, 7
    %v4684 = vrot.slane %v3375, 7
    %v4685 = vrot.slane %v3376, 7
    %v4686 = vrot.slane %v3377, 7
    %v4687 = vrot.slane %v3378, 7
    %v4688 = vrot.slane %v3379, 7
    %v4689 = vrot.slane %v3380, 7
    %v4690 = vrot.slane %v3381, 7
    %v4699 = vmul.f32 %v4652, %v4683
    %v4700 = vmul.f32 %v4654, %v4684
    %v4701 = vmul.f32 %v4656, %v4685
    %v4702 = vmul.f32 %v4658, %v4686
    %v4703 = vmul.f32 %v4660, %v4687
    %v4704 = vmul.f32 %v4662, %v4688
    %v4705 = vmul.f32 %v4664, %v4689
    %v4706 = vmul.f32 %v4666, %v4690
    %4715 = vrot.lane.b32.xlu0 %v4667, 64
    %v4716 = vpop.permute.xlu0 %4715
    %4717 = vrot.lane.b32.xlu0 %v4668, 64
    %v4718 = vpop.permute.xlu0 %4717
    %4719 = vrot.lane.b32.xlu0 %v4669, 64
    %v4720 = vpop.permute.xlu0 %4719
    %4721 = vrot.lane.b32.xlu0 %v4670, 64
    %v4722 = vpop.permute.xlu0 %4721
    %4723 = vrot.lane.b32.xlu0 %v4671, 64
    %v4724 = vpop.permute.xlu0 %4723
    %4725 = vrot.lane.b32.xlu0 %v4672, 64
    %v4726 = vpop.permute.xlu0 %4725
    %4727 = vrot.lane.b32.xlu0 %v4673, 64
    %v4728 = vpop.permute.xlu0 %4727
    %4729 = vrot.lane.b32.xlu0 %v4674, 64
    %v4730 = vpop.permute.xlu0 %4729
    %v4739 = vmul.f32 %v4652, %v4716
    %v4740 = vmul.f32 %v4654, %v4718
    %v4741 = vmul.f32 %v4656, %v4720
    %v4742 = vmul.f32 %v4658, %v4722
    %v4743 = vmul.f32 %v4660, %v4724
    %v4744 = vmul.f32 %v4662, %v4726
    %v4745 = vmul.f32 %v4664, %v4728
    %v4746 = vmul.f32 %v4666, %v4730
    %4755 = vrot.lane.b32.xlu0 %v4739, 32
    %v4756 = vpop.permute.xlu0 %4755
    %4757 = vrot.lane.b32.xlu0 %v4740, 32
    %v4758 = vpop.permute.xlu0 %4757
    %4759 = vrot.lane.b32.xlu0 %v4741, 32
    %v4760 = vpop.permute.xlu0 %4759
    %4761 = vrot.lane.b32.xlu0 %v4742, 32
    %v4762 = vpop.permute.xlu0 %4761
    %4763 = vrot.lane.b32.xlu0 %v4743, 32
    %v4764 = vpop.permute.xlu0 %4763
    %4765 = vrot.lane.b32.xlu0 %v4744, 32
    %v4766 = vpop.permute.xlu0 %4765
    %4767 = vrot.lane.b32.xlu0 %v4745, 32
    %v4768 = vpop.permute.xlu0 %4767
    %4769 = vrot.lane.b32.xlu0 %v4746, 32
    %v4770 = vpop.permute.xlu0 %4769
    %v4779 = vadd.f32 %v4699, %v4756
    %v4780 = vadd.f32 %v4700, %v4758
    %v4781 = vadd.f32 %v4701, %v4760
    %v4782 = vadd.f32 %v4702, %v4762
    %v4783 = vadd.f32 %v4703, %v4764
    %v4784 = vadd.f32 %v4704, %v4766
    %v4785 = vadd.f32 %v4705, %v4768
    %v4786 = vadd.f32 %v4706, %v4770
    %v4787 = vtanh.pop %v4779
    %v4788 = vtanh.pop %v4780
    %v4789 = vtanh.pop %v4781
    %v4790 = vtanh.pop %v4782
    %v4791 = vtanh.pop %v4783
    %v4792 = vtanh.pop %v4784
    %v4793 = vtanh.pop %v4785
    %v4794 = vtanh.pop %v4786
    %4803 = vrot.lane.b32.xlu0 %v4787, 64
    %v4804 = vpop.permute.xlu0 %4803
    %4805 = vrot.lane.b32.xlu0 %v4788, 64
    %v4806 = vpop.permute.xlu0 %4805
    %4807 = vrot.lane.b32.xlu0 %v4789, 64
    %v4808 = vpop.permute.xlu0 %4807
    %4809 = vrot.lane.b32.xlu0 %v4790, 64
    %v4810 = vpop.permute.xlu0 %4809
    %4811 = vrot.lane.b32.xlu0 %v4791, 64
    %v4812 = vpop.permute.xlu0 %4811
    %4813 = vrot.lane.b32.xlu0 %v4792, 64
    %v4814 = vpop.permute.xlu0 %4813
    %4815 = vrot.lane.b32.xlu0 %v4793, 64
    %v4816 = vpop.permute.xlu0 %4815
    %4817 = vrot.lane.b32.xlu0 %v4794, 64
    %v4818 = vpop.permute.xlu0 %4817
    %v4827 = vmul.f32 %v4652, %v4804
    %v4828 = vmul.f32 %v4654, %v4806
    %v4829 = vmul.f32 %v4656, %v4808
    %v4830 = vmul.f32 %v4658, %v4810
    %v4831 = vmul.f32 %v4660, %v4812
    %v4832 = vmul.f32 %v4662, %v4814
    %v4833 = vmul.f32 %v4664, %v4816
    %v4834 = vmul.f32 %v4666, %v4818
    %v4843 = vrot.slane %v4828, 7
    %v4844 = vsel %vm291, %v4843, %v4827
    %v4845 = vrot.slane %v4829, 6
    %v4846 = vsel %vm293, %v4845, %v4844
    %v4847 = vrot.slane %v4830, 5
    %v4848 = vsel %vm295, %v4847, %v4846
    %v4849 = vrot.slane %v4831, 4
    %v4850 = vsel %vm297, %v4849, %v4848
    %v4851 = vrot.slane %v4832, 3
    %v4852 = vsel %vm299, %v4851, %v4850
    %v4853 = vrot.slane %v4833, 2
    %v4854 = vrot.slane %v4834, 1
    %v4855 = vsel %vm287, %v4854, %v4853
    %4856 = vrot.lane.b32.xlu0 %v4852, 32
    %v4857 = vpop.permute.xlu0 %4856
    %4858 = vrot.lane.b32.xlu0 %v4855, 32
    %v4859 = vpop.permute.xlu0 %4858
    %v4862 = vsel %vm291, %v4341, %v4332
    %v4863 = vsel %vm293, %v4350, %v4862
    %v4864 = vsel %vm295, %v4359, %v4863
    %v4865 = vsel %vm297, %v4368, %v4864
    %v4866 = vsel %vm299, %v4377, %v4865
    %v4867 = vsel %vm287, %v4395, %v4386
    %4868 = vrot.lane.b32.xlu0 %v4866, 32
    %v4869 = vpop.permute.xlu0 %4868
    %4870 = vrot.lane.b32.xlu0 %v4867, 32
    %v4871 = vpop.permute.xlu0 %4870
    %v4874 = vsel %vm291, %v2042, %v170
    %v4875 = vsel %vm293, %v2044, %v4874
    %v4876 = vsel %vm295, %v2046, %v4875
    %v4877 = vsel %vm297, %v2048, %v4876
    %v4878 = vsel %vm299, %v2050, %v4877
    %v4879 = vsel %vm287, %v2054, %v2052
    %4880 = vrot.lane.b32.xlu0 %v4878, 64
    %v4881 = vpop.permute.xlu0 %4880
    %4882 = vrot.lane.b32.xlu0 %v4879, 64
    %v4883 = vpop.permute.xlu0 %4882
    %v4886 = vsel %vm186, %v4857, %v4869
    %v4887 = vsel %vm186, %v4859, %v4871
    %v4888 = vsel %vm2060, %v4886, %v4881
    %v4889 = vsel %vm2060, %v4887, %v4883
    %v4890 = vsel %vm2062, %v4888, 0.0
    %v4891 = vsel %vm2062, %v4889, 0.0
    %v4894 = vcombine.high %v4890, %v4890
    %v4896 = vunpack.c.l.s4 1966171168
    %v4897 = vunpack.c.0.s8 %v4896
    %v4898 = vlaneseq
    %v4899 = vshrl.u32 %v4898, 7
    %v4900 = vsub.s32 %v4897, %v4899
    %v4901 = vrot.slane %v4890, %v4900
    %v4903 = vunpack.c.l.s4 1966171168
    %v4904 = vunpack.c.0.s8 %v4903
    %v4905 = vlaneseq
    %v4906 = vshrl.u32 %v4905, 7
    %v4907 = vsub.s32 %v4904, %v4906
    %v4908 = vrot.slane %v4894, %v4907
    %v4909 = vcombine.high %v4901, %v4901
    %v4910 = vcombine.high %v4908, %v4908
    %v4912 = vunpack.c.l.s4 1966171168
    %v4913 = vunpack.c.0.s8 %v4912
    %v4914 = vlaneseq
    %v4915 = vshrl.u32 %v4914, 7
    %v4916 = vsub.s32 %v4913, %v4915
    %v4917 = vrot.slane %v4901, %v4916
    %v4919 = vunpack.c.l.s4 1966171168
    %v4920 = vunpack.c.0.s8 %v4919
    %v4921 = vlaneseq
    %v4922 = vshrl.u32 %v4921, 7
    %v4923 = vsub.s32 %v4920, %v4922
    %v4924 = vrot.slane %v4908, %v4923
    %v4926 = vunpack.c.l.s4 1966171168
    %v4927 = vunpack.c.0.s8 %v4926
    %v4928 = vlaneseq
    %v4929 = vshrl.u32 %v4928, 7
    %v4930 = vsub.s32 %v4927, %v4929
    %v4931 = vrot.slane %v4909, %v4930
    %v4933 = vunpack.c.l.s4 1966171168
    %v4934 = vunpack.c.0.s8 %v4933
    %v4935 = vlaneseq
    %v4936 = vshrl.u32 %v4935, 7
    %v4937 = vsub.s32 %v4934, %v4936
    %v4938 = vrot.slane %v4910, %v4937
    %v4939 = vcombine.high %v4917, %v4917
    %v4940 = vcombine.high %v4924, %v4924
    %v4941 = vcombine.high %v4931, %v4931
    %v4942 = vcombine.high %v4938, %v4938
    %v4944 = vunpack.c.l.s4 1966171168
    %v4945 = vunpack.c.0.s8 %v4944
    %v4946 = vlaneseq
    %v4947 = vshrl.u32 %v4946, 7
    %v4948 = vsub.s32 %v4945, %v4947
    %v4949 = vrot.slane %v4891, %v4948
    %v4950 = vcombine.high %v4949, %v4949
    %v4952 = vunpack.c.l.s4 1966171168
    %v4953 = vunpack.c.0.s8 %v4952
    %v4954 = vlaneseq
    %v4955 = vshrl.u32 %v4954, 7
    %v4956 = vsub.s32 %v4953, %v4955
    %v4957 = vrot.slane %v4949, %v4956
    %v4959 = vunpack.c.l.s4 1966171168
    %v4960 = vunpack.c.0.s8 %v4959
    %v4961 = vlaneseq
    %v4962 = vshrl.u32 %v4961, 7
    %v4963 = vsub.s32 %v4960, %v4962
    %v4964 = vrot.slane %v4950, %v4963
    %4973 = vst [vmem:[#allocation2 + $0x2] sm:$0x1] %v4939
    %4974 = vst [vmem:[#allocation2 + $0xa] sm:$0x1] %v4941
    %4975 = vst [vmem:[#allocation2 + $0x12] sm:$0x1] %v4924
    %4976 = vst [vmem:[#allocation2 + $0x1a] sm:$0x1] %v4938
    %4977 = vst [vmem:[#allocation2 + $0x22] sm:$0x1] %v4940
    %4978 = vst [vmem:[#allocation2 + $0x2a] sm:$0x1] %v4942
    %4979 = vst [vmem:[#allocation2 + $0x32] sm:$0x1] %v4957
    %4980 = vst [vmem:[#allocation2 + $0x3a] sm:$0x1] %v4964
    %v4981 = vlaneseq
    %v4982 = vshrl.u32 %v4981, 7
    %v4983 = vsub.s32 %v1031, %v4982
    %v4984 = vrot.slane %v4231, %v4983
    %v4985 = vlaneseq
    %v4986 = vshrl.u32 %v4985, 7
    %v4987 = vsub.s32 %v1036, %v4986
    %v4988 = vrot.slane %v4236, %v4987
    %v4989 = vsel %vm1041, %v4988, %v4984
    %v4990 = vlaneseq
    %v4991 = vshrl.u32 %v4990, 7
    %v4992 = vsub.s32 %v1031, %v4991
    %v4993 = vrot.slane %v4241, %v4992
    %v4994 = vlaneseq
    %v4995 = vshrl.u32 %v4994, 7
    %v4996 = vsub.s32 %v1036, %v4995
    %v4997 = vrot.slane %v4246, %v4996
    %v4998 = vsel %vm1041, %v4997, %v4993
    %v4999 = vlaneseq
    %v5000 = vshrl.u32 %v4999, 7
    %v5001 = vsub.s32 %v1031, %v5000
    %v5002 = vrot.slane %v4251, %v5001
    %v5003 = vlaneseq
    %v5004 = vshrl.u32 %v5003, 7
    %v5005 = vsub.s32 %v1036, %v5004
    %v5006 = vrot.slane %v4256, %v5005
    %v5007 = vsel %vm1041, %v5006, %v5002
    %v5008 = vlaneseq
    %v5009 = vshrl.u32 %v5008, 7
    %v5010 = vsub.s32 %v1031, %v5009
    %v5011 = vrot.slane %v4261, %v5010
    %v5012 = vlaneseq
    %v5013 = vshrl.u32 %v5012, 7
    %v5014 = vsub.s32 %v1036, %v5013
    %v5015 = vrot.slane %v4266, %v5014
    %v5016 = vsel %vm1041, %v5015, %v5011
    %v5017 = vlaneseq
    %v5018 = vshrl.u32 %v5017, 7
    %v5019 = vsub.s32 %v1031, %v5018
    %v5020 = vrot.slane %v4271, %v5019
    %v5021 = vlaneseq
    %v5022 = vshrl.u32 %v5021, 7
    %v5023 = vsub.s32 %v1036, %v5022
    %v5024 = vrot.slane %v4276, %v5023
    %v5025 = vsel %vm1041, %v5024, %v5020
    %v5026 = vlaneseq
    %v5027 = vshrl.u32 %v5026, 7
    %v5028 = vsub.s32 %v1031, %v5027
    %v5029 = vrot.slane %v4281, %v5028
    %v5030 = vlaneseq
    %v5031 = vshrl.u32 %v5030, 7
    %v5032 = vsub.s32 %v1036, %v5031
    %v5033 = vrot.slane %v4286, %v5032
    %v5034 = vsel %vm1041, %v5033, %v5029
    %v5035 = vlaneseq
    %v5036 = vshrl.u32 %v5035, 7
    %v5037 = vsub.s32 %v1031, %v5036
    %v5038 = vrot.slane %v4291, %v5037
    %v5039 = vlaneseq
    %v5040 = vshrl.u32 %v5039, 7
    %v5041 = vsub.s32 %v1036, %v5040
    %v5042 = vrot.slane %v4296, %v5041
    %v5043 = vsel %vm1041, %v5042, %v5038
    %v5044 = vlaneseq
    %v5045 = vshrl.u32 %v5044, 7
    %v5046 = vsub.s32 %v1031, %v5045
    %v5047 = vrot.slane %v4301, %v5046
    %v5048 = vlaneseq
    %v5049 = vshrl.u32 %v5048, 7
    %v5050 = vsub.s32 %v1036, %v5049
    %v5051 = vrot.slane %v4306, %v5050
    %v5052 = vsel %vm1041, %v5051, %v5047
    %5061 = vst.msk [vmem:[#allocation18 + $0x2] sm:$0x1] %vm2210, %v4989
    %5062 = vst.msk [vmem:[#allocation18 + $0xa] sm:$0x1] %vm2210, %v4998
    %5063 = vst.msk [vmem:[#allocation18 + $0x12] sm:$0x1] %vm2210, %v5007
    %5064 = vst.msk [vmem:[#allocation18 + $0x1a] sm:$0x1] %vm2210, %v5016
    %5065 = vst.msk [vmem:[#allocation18 + $0x22] sm:$0x1] %vm2210, %v5025
    %5066 = vst.msk [vmem:[#allocation18 + $0x2a] sm:$0x1] %vm2210, %v5034
    %5067 = vst.msk [vmem:[#allocation18 + $0x32] sm:$0x1] %vm2210, %v5043
    %5068 = vst.msk [vmem:[#allocation18 + $0x3a] sm:$0x1] %vm2210, %v5052
    %v5069 = vlaneseq
    %v5070 = vshrl.u32 %v5069, 7
    %v5071 = vsub.s32 2, %v5070
    %v5072 = vrot.slane %v4827, %v5071
    %v5073 = vlaneseq
    %v5074 = vshrl.u32 %v5073, 7
    %v5075 = vsub.s32 2, %v5074
    %v5076 = vrot.slane %v4828, %v5075
    %v5077 = vlaneseq
    %v5078 = vshrl.u32 %v5077, 7
    %v5079 = vsub.s32 2, %v5078
    %v5080 = vrot.slane %v4829, %v5079
    %v5081 = vlaneseq
    %v5082 = vshrl.u32 %v5081, 7
    %v5083 = vsub.s32 2, %v5082
    %v5084 = vrot.slane %v4830, %v5083
    %v5085 = vlaneseq
    %v5086 = vshrl.u32 %v5085, 7
    %v5087 = vsub.s32 2, %v5086
    %v5088 = vrot.slane %v4831, %v5087
    %v5089 = vlaneseq
    %v5090 = vshrl.u32 %v5089, 7
    %v5091 = vsub.s32 2, %v5090
    %v5092 = vrot.slane %v4832, %v5091
    %v5093 = vlaneseq
    %v5094 = vshrl.u32 %v5093, 7
    %v5095 = vsub.s32 2, %v5094
    %v5096 = vrot.slane %v4833, %v5095
    %v5097 = vlaneseq
    %v5098 = vshrl.u32 %v5097, 7
    %v5099 = vsub.s32 2, %v5098
    %v5100 = vrot.slane %v4834, %v5099
    %v5101 = vmul.f32 %v5072, %v2252
    %v5102 = vmul.f32 %v5072, %v2254
    %v5103 = vmul.f32 %v5076, %v2256
    %v5104 = vmul.f32 %v5076, %v2258
    %v5105 = vmul.f32 %v5080, %v2260
    %v5106 = vmul.f32 %v5080, %v2262
    %v5107 = vmul.f32 %v5084, %v2264
    %v5108 = vmul.f32 %v5084, %v2266
    %v5109 = vmul.f32 %v5088, %v2268
    %v5110 = vmul.f32 %v5088, %v2270
    %v5111 = vmul.f32 %v5092, %v2272
    %v5112 = vmul.f32 %v5092, %v2274
    %v5113 = vmul.f32 %v5096, %v2276
    %v5114 = vmul.f32 %v5096, %v2278
    %v5115 = vmul.f32 %v5100, %v2280
    %v5116 = vmul.f32 %v5100, %v2282
    %5133 = vrot.lane.b32.xlu0 %v5101, 32
    %v5134 = vpop.permute.xlu0 %5133
    %5135 = vrot.lane.b32.xlu0 %v5102, 32
    %v5136 = vpop.permute.xlu0 %5135
    %5137 = vrot.lane.b32.xlu0 %v5103, 32
    %v5138 = vpop.permute.xlu0 %5137
    %5139 = vrot.lane.b32.xlu0 %v5104, 32
    %v5140 = vpop.permute.xlu0 %5139
    %5141 = vrot.lane.b32.xlu0 %v5105, 32
    %v5142 = vpop.permute.xlu0 %5141
    %5143 = vrot.lane.b32.xlu0 %v5106, 32
    %v5144 = vpop.permute.xlu0 %5143
    %5145 = vrot.lane.b32.xlu0 %v5107, 32
    %v5146 = vpop.permute.xlu0 %5145
    %5147 = vrot.lane.b32.xlu0 %v5108, 32
    %v5148 = vpop.permute.xlu0 %5147
    %5149 = vrot.lane.b32.xlu0 %v5109, 32
    %v5150 = vpop.permute.xlu0 %5149
    %5151 = vrot.lane.b32.xlu0 %v5110, 32
    %v5152 = vpop.permute.xlu0 %5151
    %5153 = vrot.lane.b32.xlu0 %v5111, 32
    %v5154 = vpop.permute.xlu0 %5153
    %5155 = vrot.lane.b32.xlu0 %v5112, 32
    %v5156 = vpop.permute.xlu0 %5155
    %5157 = vrot.lane.b32.xlu0 %v5113, 32
    %v5158 = vpop.permute.xlu0 %5157
    %5159 = vrot.lane.b32.xlu0 %v5114, 32
    %v5160 = vpop.permute.xlu0 %5159
    %5161 = vrot.lane.b32.xlu0 %v5115, 32
    %v5162 = vpop.permute.xlu0 %5161
    %5163 = vrot.lane.b32.xlu0 %v5116, 32
    %v5164 = vpop.permute.xlu0 %5163
    %v5181 = vsel %vm186, %v5134, 0.0
    %5182 = vadd.xlane.f32.xlu0 %v5181
    %v5183 = vpop.xlane.xlu0 %5182
    %v5184 = vsel %vm186, %v5136, 0.0
    %5185 = vadd.xlane.f32.xlu0 %v5184
    %v5186 = vpop.xlane.xlu0 %5185
    %v5187 = vsel %vm186, %v5138, 0.0
    %5188 = vadd.xlane.f32.xlu0 %v5187
    %v5189 = vpop.xlane.xlu0 %5188
    %v5190 = vsel %vm186, %v5140, 0.0
    %5191 = vadd.xlane.f32.xlu0 %v5190
    %v5192 = vpop.xlane.xlu0 %5191
    %v5193 = vsel %vm186, %v5142, 0.0
    %5194 = vadd.xlane.f32.xlu0 %v5193
    %v5195 = vpop.xlane.xlu0 %5194
    %v5196 = vsel %vm186, %v5144, 0.0
    %5197 = vadd.xlane.f32.xlu0 %v5196
    %v5198 = vpop.xlane.xlu0 %5197
    %v5199 = vsel %vm186, %v5146, 0.0
    %5200 = vadd.xlane.f32.xlu0 %v5199
    %v5201 = vpop.xlane.xlu0 %5200
    %v5202 = vsel %vm186, %v5148, 0.0
    %5203 = vadd.xlane.f32.xlu0 %v5202
    %v5204 = vpop.xlane.xlu0 %5203
    %v5205 = vsel %vm186, %v5150, 0.0
    %5206 = vadd.xlane.f32.xlu0 %v5205
    %v5207 = vpop.xlane.xlu0 %5206
    %v5208 = vsel %vm186, %v5152, 0.0
    %5209 = vadd.xlane.f32.xlu0 %v5208
    %v5210 = vpop.xlane.xlu0 %5209
    %v5211 = vsel %vm186, %v5154, 0.0
    %5212 = vadd.xlane.f32.xlu0 %v5211
    %v5213 = vpop.xlane.xlu0 %5212
    %v5214 = vsel %vm186, %v5156, 0.0
    %5215 = vadd.xlane.f32.xlu0 %v5214
    %v5216 = vpop.xlane.xlu0 %5215
    %v5217 = vsel %vm186, %v5158, 0.0
    %5218 = vadd.xlane.f32.xlu0 %v5217
    %v5219 = vpop.xlane.xlu0 %5218
    %v5220 = vsel %vm186, %v5160, 0.0
    %5221 = vadd.xlane.f32.xlu0 %v5220
    %v5222 = vpop.xlane.xlu0 %5221
    %v5223 = vsel %vm186, %v5162, 0.0
    %5224 = vadd.xlane.f32.xlu0 %v5223
    %v5225 = vpop.xlane.xlu0 %5224
    %v5226 = vsel %vm186, %v5164, 0.0
    %5227 = vadd.xlane.f32.xlu0 %v5226
    %v5228 = vpop.xlane.xlu0 %5227
    %v5229 = vmul.f32 %v5183, 0.17677669
    %v5230 = vmul.f32 %v5186, 0.17677669
    %v5231 = vmul.f32 %v5189, 0.17677669
    %v5232 = vmul.f32 %v5192, 0.17677669
    %v5233 = vmul.f32 %v5195, 0.17677669
    %v5234 = vmul.f32 %v5198, 0.17677669
    %v5235 = vmul.f32 %v5201, 0.17677669
    %v5236 = vmul.f32 %v5204, 0.17677669
    %v5237 = vmul.f32 %v5207, 0.17677669
    %v5238 = vmul.f32 %v5210, 0.17677669
    %v5239 = vmul.f32 %v5213, 0.17677669
    %v5240 = vmul.f32 %v5216, 0.17677669
    %v5241 = vmul.f32 %v5219, 0.17677669
    %v5242 = vmul.f32 %v5222, 0.17677669
    %v5243 = vmul.f32 %v5225, 0.17677669
    %v5244 = vmul.f32 %v5228, 0.17677669
    %v5261 = vlaneseq
    %v5262 = vshrl.u32 %v5261, 7
    %v5263 = vsub.s32 %v1031, %v5262
    %v5264 = vrot.slane %v5229, %v5263
    %v5265 = vlaneseq
    %v5266 = vshrl.u32 %v5265, 7
    %v5267 = vsub.s32 %v1036, %v5266
    %v5268 = vrot.slane %v5230, %v5267
    %v5269 = vsel %vm1041, %v5268, %v5264
    %v5270 = vlaneseq
    %v5271 = vshrl.u32 %v5270, 7
    %v5272 = vsub.s32 %v1031, %v5271
    %v5273 = vrot.slane %v5231, %v5272
    %v5274 = vlaneseq
    %v5275 = vshrl.u32 %v5274, 7
    %v5276 = vsub.s32 %v1036, %v5275
    %v5277 = vrot.slane %v5232, %v5276
    %v5278 = vsel %vm1041, %v5277, %v5273
    %v5279 = vlaneseq
    %v5280 = vshrl.u32 %v5279, 7
    %v5281 = vsub.s32 %v1031, %v5280
    %v5282 = vrot.slane %v5233, %v5281
    %v5283 = vlaneseq
    %v5284 = vshrl.u32 %v5283, 7
    %v5285 = vsub.s32 %v1036, %v5284
    %v5286 = vrot.slane %v5234, %v5285
    %v5287 = vsel %vm1041, %v5286, %v5282
    %v5288 = vlaneseq
    %v5289 = vshrl.u32 %v5288, 7
    %v5290 = vsub.s32 %v1031, %v5289
    %v5291 = vrot.slane %v5235, %v5290
    %v5292 = vlaneseq
    %v5293 = vshrl.u32 %v5292, 7
    %v5294 = vsub.s32 %v1036, %v5293
    %v5295 = vrot.slane %v5236, %v5294
    %v5296 = vsel %vm1041, %v5295, %v5291
    %v5297 = vlaneseq
    %v5298 = vshrl.u32 %v5297, 7
    %v5299 = vsub.s32 %v1031, %v5298
    %v5300 = vrot.slane %v5237, %v5299
    %v5301 = vlaneseq
    %v5302 = vshrl.u32 %v5301, 7
    %v5303 = vsub.s32 %v1036, %v5302
    %v5304 = vrot.slane %v5238, %v5303
    %v5305 = vsel %vm1041, %v5304, %v5300
    %v5306 = vlaneseq
    %v5307 = vshrl.u32 %v5306, 7
    %v5308 = vsub.s32 %v1031, %v5307
    %v5309 = vrot.slane %v5239, %v5308
    %v5310 = vlaneseq
    %v5311 = vshrl.u32 %v5310, 7
    %v5312 = vsub.s32 %v1036, %v5311
    %v5313 = vrot.slane %v5240, %v5312
    %v5314 = vsel %vm1041, %v5313, %v5309
    %v5315 = vlaneseq
    %v5316 = vshrl.u32 %v5315, 7
    %v5317 = vsub.s32 %v1031, %v5316
    %v5318 = vrot.slane %v5241, %v5317
    %v5319 = vlaneseq
    %v5320 = vshrl.u32 %v5319, 7
    %v5321 = vsub.s32 %v1036, %v5320
    %v5322 = vrot.slane %v5242, %v5321
    %v5323 = vsel %vm1041, %v5322, %v5318
    %v5324 = vlaneseq
    %v5325 = vshrl.u32 %v5324, 7
    %v5326 = vsub.s32 %v1031, %v5325
    %v5327 = vrot.slane %v5243, %v5326
    %v5328 = vlaneseq
    %v5329 = vshrl.u32 %v5328, 7
    %v5330 = vsub.s32 %v1036, %v5329
    %v5331 = vrot.slane %v5244, %v5330
    %v5332 = vsel %vm1041, %v5331, %v5327
    %v5333 = vsel %vm287, %v5278, %v5269
    %v5334 = vsel %vm289, %v5287, %v5333
    %v5335 = vsel %vm291, %v5296, %v5334
    %v5336 = vsel %vm293, %v5305, %v5335
    %v5337 = vsel %vm295, %v5314, %v5336
    %v5338 = vsel %vm297, %v5323, %v5337
    %v5339 = vsel %vm299, %v5332, %v5338
    %v5341 = vsel %vm586, %v5339, -inf
    %5342 = vmax.xlane.f32.xlu0 %v5341
    %v5343 = vpop.xlane.xlu0 %5342
    %v5345 = vlaneseq
    %v5346 = vshrl.u32 %v5345, 7
    %v5347 = vsub.s32 0, %v5346
    %v5348 = vrot.slane %v5343, %v5347
    %v5349 = vlaneseq
    %v5350 = vshrl.u32 %v5349, 7
    %v5351 = vsub.s32 1, %v5350
    %v5352 = vrot.slane %v5343, %v5351
    %v5353 = vlaneseq
    %v5354 = vshrl.u32 %v5353, 7
    %v5355 = vsub.s32 2, %v5354
    %v5356 = vrot.slane %v5343, %v5355
    %v5357 = vlaneseq
    %v5358 = vshrl.u32 %v5357, 7
    %v5359 = vsub.s32 3, %v5358
    %v5360 = vrot.slane %v5343, %v5359
    %v5361 = vlaneseq
    %v5362 = vshrl.u32 %v5361, 7
    %v5363 = vsub.s32 4, %v5362
    %v5364 = vrot.slane %v5343, %v5363
    %v5365 = vlaneseq
    %v5366 = vshrl.u32 %v5365, 7
    %v5367 = vsub.s32 5, %v5366
    %v5368 = vrot.slane %v5343, %v5367
    %v5369 = vlaneseq
    %v5370 = vshrl.u32 %v5369, 7
    %v5371 = vsub.s32 6, %v5370
    %v5372 = vrot.slane %v5343, %v5371
    %v5373 = vlaneseq
    %v5374 = vshrl.u32 %v5373, 7
    %v5375 = vsub.s32 7, %v5374
    %v5376 = vrot.slane %v5343, %v5375
    %v5385 = vsub.f32 %v5229, %v5348
    %v5386 = vsub.f32 %v5230, %v5348
    %v5387 = vsub.f32 %v5231, %v5352
    %v5388 = vsub.f32 %v5232, %v5352
    %v5389 = vsub.f32 %v5233, %v5356
    %v5390 = vsub.f32 %v5234, %v5356
    %v5391 = vsub.f32 %v5235, %v5360
    %v5392 = vsub.f32 %v5236, %v5360
    %v5393 = vsub.f32 %v5237, %v5364
    %v5394 = vsub.f32 %v5238, %v5364
    %v5395 = vsub.f32 %v5239, %v5368
    %v5396 = vsub.f32 %v5240, %v5368
    %v5397 = vsub.f32 %v5241, %v5372
    %v5398 = vsub.f32 %v5242, %v5372
    %v5399 = vsub.f32 %v5243, %v5376
    %v5400 = vsub.f32 %v5244, %v5376
    %v5401 = vmul.f32 %v5385, 1.442695
    %v5402 = vpow.pop %v5401
    %v5403 = vmul.f32 %v5386, 1.442695
    %v5404 = vpow.pop %v5403
    %v5405 = vmul.f32 %v5387, 1.442695
    %v5406 = vpow.pop %v5405
    %v5407 = vmul.f32 %v5388, 1.442695
    %v5408 = vpow.pop %v5407
    %v5409 = vmul.f32 %v5389, 1.442695
    %v5410 = vpow.pop %v5409
    %v5411 = vmul.f32 %v5390, 1.442695
    %v5412 = vpow.pop %v5411
    %v5413 = vmul.f32 %v5391, 1.442695
    %v5414 = vpow.pop %v5413
    %v5415 = vmul.f32 %v5392, 1.442695
    %v5416 = vpow.pop %v5415
    %v5417 = vmul.f32 %v5393, 1.442695
    %v5418 = vpow.pop %v5417
    %v5419 = vmul.f32 %v5394, 1.442695
    %v5420 = vpow.pop %v5419
    %v5421 = vmul.f32 %v5395, 1.442695
    %v5422 = vpow.pop %v5421
    %v5423 = vmul.f32 %v5396, 1.442695
    %v5424 = vpow.pop %v5423
    %v5425 = vmul.f32 %v5397, 1.442695
    %v5426 = vpow.pop %v5425
    %v5427 = vmul.f32 %v5398, 1.442695
    %v5428 = vpow.pop %v5427
    %v5429 = vmul.f32 %v5399, 1.442695
    %v5430 = vpow.pop %v5429
    %v5431 = vmul.f32 %v5400, 1.442695
    %v5432 = vpow.pop %v5431
    %5449 = vset.pattern.permute.xlu0 0
    %5450 = vperm.xlu0 %5449, %v5402
    %v5451 = vpop.permute.xlu0 %5450
    %5452 = vset.pattern.permute.xlu0 0
    %5453 = vperm.xlu0 %5452, %v5404
    %v5454 = vpop.permute.xlu0 %5453
    %5455 = vset.pattern.permute.xlu0 0
    %5456 = vperm.xlu0 %5455, %v5406
    %v5457 = vpop.permute.xlu0 %5456
    %5458 = vset.pattern.permute.xlu0 0
    %5459 = vperm.xlu0 %5458, %v5408
    %v5460 = vpop.permute.xlu0 %5459
    %5461 = vset.pattern.permute.xlu0 0
    %5462 = vperm.xlu0 %5461, %v5410
    %v5463 = vpop.permute.xlu0 %5462
    %5464 = vset.pattern.permute.xlu0 0
    %5465 = vperm.xlu0 %5464, %v5412
    %v5466 = vpop.permute.xlu0 %5465
    %5467 = vset.pattern.permute.xlu0 0
    %5468 = vperm.xlu0 %5467, %v5414
    %v5469 = vpop.permute.xlu0 %5468
    %5470 = vset.pattern.permute.xlu0 0
    %5471 = vperm.xlu0 %5470, %v5416
    %v5472 = vpop.permute.xlu0 %5471
    %5473 = vset.pattern.permute.xlu0 0
    %5474 = vperm.xlu0 %5473, %v5418
    %v5475 = vpop.permute.xlu0 %5474
    %5476 = vset.pattern.permute.xlu0 0
    %5477 = vperm.xlu0 %5476, %v5420
    %v5478 = vpop.permute.xlu0 %5477
    %5479 = vset.pattern.permute.xlu0 0
    %5480 = vperm.xlu0 %5479, %v5422
    %v5481 = vpop.permute.xlu0 %5480
    %5482 = vset.pattern.permute.xlu0 0
    %5483 = vperm.xlu0 %5482, %v5424
    %v5484 = vpop.permute.xlu0 %5483
    %5485 = vset.pattern.permute.xlu0 0
    %5486 = vperm.xlu0 %5485, %v5426
    %v5487 = vpop.permute.xlu0 %5486
    %5488 = vset.pattern.permute.xlu0 0
    %5489 = vperm.xlu0 %5488, %v5428
    %v5490 = vpop.permute.xlu0 %5489
    %5491 = vset.pattern.permute.xlu0 0
    %5492 = vperm.xlu0 %5491, %v5430
    %v5493 = vpop.permute.xlu0 %5492
    %5494 = vset.pattern.permute.xlu0 0
    %5495 = vperm.xlu0 %5494, %v5432
    %v5496 = vpop.permute.xlu0 %5495
    %v5497 = vlaneseq
    %v5498 = vshrl.u32 %v5497, 7
    %v5499 = vsub.s32 %v1031, %v5498
    %v5500 = vrot.slane %v5451, %v5499
    %v5501 = vlaneseq
    %v5502 = vshrl.u32 %v5501, 7
    %v5503 = vsub.s32 %v1036, %v5502
    %v5504 = vrot.slane %v5454, %v5503
    %v5505 = vsel %vm1041, %v5504, %v5500
    %v5506 = vlaneseq
    %v5507 = vshrl.u32 %v5506, 7
    %v5508 = vsub.s32 %v1031, %v5507
    %v5509 = vrot.slane %v5457, %v5508
    %v5510 = vlaneseq
    %v5511 = vshrl.u32 %v5510, 7
    %v5512 = vsub.s32 %v1036, %v5511
    %v5513 = vrot.slane %v5460, %v5512
    %v5514 = vsel %vm1041, %v5513, %v5509
    %v5515 = vlaneseq
    %v5516 = vshrl.u32 %v5515, 7
    %v5517 = vsub.s32 %v1031, %v5516
    %v5518 = vrot.slane %v5463, %v5517
    %v5519 = vlaneseq
    %v5520 = vshrl.u32 %v5519, 7
    %v5521 = vsub.s32 %v1036, %v5520
    %v5522 = vrot.slane %v5466, %v5521
    %v5523 = vsel %vm1041, %v5522, %v5518
    %v5524 = vlaneseq
    %v5525 = vshrl.u32 %v5524, 7
    %v5526 = vsub.s32 %v1031, %v5525
    %v5527 = vrot.slane %v5469, %v5526
    %v5528 = vlaneseq
    %v5529 = vshrl.u32 %v5528, 7
    %v5530 = vsub.s32 %v1036, %v5529
    %v5531 = vrot.slane %v5472, %v5530
    %v5532 = vsel %vm1041, %v5531, %v5527
    %v5533 = vlaneseq
    %v5534 = vshrl.u32 %v5533, 7
    %v5535 = vsub.s32 %v1031, %v5534
    %v5536 = vrot.slane %v5475, %v5535
    %v5537 = vlaneseq
    %v5538 = vshrl.u32 %v5537, 7
    %v5539 = vsub.s32 %v1036, %v5538
    %v5540 = vrot.slane %v5478, %v5539
    %v5541 = vsel %vm1041, %v5540, %v5536
    %v5542 = vlaneseq
    %v5543 = vshrl.u32 %v5542, 7
    %v5544 = vsub.s32 %v1031, %v5543
    %v5545 = vrot.slane %v5481, %v5544
    %v5546 = vlaneseq
    %v5547 = vshrl.u32 %v5546, 7
    %v5548 = vsub.s32 %v1036, %v5547
    %v5549 = vrot.slane %v5484, %v5548
    %v5550 = vsel %vm1041, %v5549, %v5545
    %v5551 = vlaneseq
    %v5552 = vshrl.u32 %v5551, 7
    %v5553 = vsub.s32 %v1031, %v5552
    %v5554 = vrot.slane %v5487, %v5553
    %v5555 = vlaneseq
    %v5556 = vshrl.u32 %v5555, 7
    %v5557 = vsub.s32 %v1036, %v5556
    %v5558 = vrot.slane %v5490, %v5557
    %v5559 = vsel %vm1041, %v5558, %v5554
    %v5560 = vlaneseq
    %v5561 = vshrl.u32 %v5560, 7
    %v5562 = vsub.s32 %v1031, %v5561
    %v5563 = vrot.slane %v5493, %v5562
    %v5564 = vlaneseq
    %v5565 = vshrl.u32 %v5564, 7
    %v5566 = vsub.s32 %v1036, %v5565
    %v5567 = vrot.slane %v5496, %v5566
    %v5568 = vsel %vm1041, %v5567, %v5563
    %v5569 = vsel %vm287, %v5514, %v5505
    %v5570 = vsel %vm289, %v5523, %v5569
    %v5571 = vsel %vm291, %v5532, %v5570
    %v5572 = vsel %vm293, %v5541, %v5571
    %v5573 = vsel %vm295, %v5550, %v5572
    %v5574 = vsel %vm297, %v5559, %v5573
    %v5575 = vsel %vm299, %v5568, %v5574
    %v5577 = vsel %vm586, %v5575, 0.0
    %5578 = vadd.xlane.f32.xlu0 %v5577
    %v5579 = vpop.xlane.xlu0 %5578
    %v5580 = vrcp.pop %v5579
    %v5581 = vmul.f32 %v5579, %v5580
    %v5582 = vsub.f32 2.0, %v5581
    %v5583 = vmul.f32 %v5580, %v5582
    %v5585 = vlaneseq
    %v5586 = vshrl.u32 %v5585, 7
    %v5587 = vsub.s32 0, %v5586
    %v5588 = vrot.slane %v5583, %v5587
    %v5589 = vlaneseq
    %v5590 = vshrl.u32 %v5589, 7
    %v5591 = vsub.s32 1, %v5590
    %v5592 = vrot.slane %v5583, %v5591
    %v5593 = vlaneseq
    %v5594 = vshrl.u32 %v5593, 7
    %v5595 = vsub.s32 2, %v5594
    %v5596 = vrot.slane %v5583, %v5595
    %v5597 = vlaneseq
    %v5598 = vshrl.u32 %v5597, 7
    %v5599 = vsub.s32 3, %v5598
    %v5600 = vrot.slane %v5583, %v5599
    %v5601 = vlaneseq
    %v5602 = vshrl.u32 %v5601, 7
    %v5603 = vsub.s32 4, %v5602
    %v5604 = vrot.slane %v5583, %v5603
    %v5605 = vlaneseq
    %v5606 = vshrl.u32 %v5605, 7
    %v5607 = vsub.s32 5, %v5606
    %v5608 = vrot.slane %v5583, %v5607
    %v5609 = vlaneseq
    %v5610 = vshrl.u32 %v5609, 7
    %v5611 = vsub.s32 6, %v5610
    %v5612 = vrot.slane %v5583, %v5611
    %v5613 = vlaneseq
    %v5614 = vshrl.u32 %v5613, 7
    %v5615 = vsub.s32 7, %v5614
    %v5616 = vrot.slane %v5583, %v5615
    %v5625 = vmul.f32 %v5402, %v5588
    %v5626 = vmul.f32 %v5404, %v5588
    %v5627 = vmul.f32 %v5406, %v5592
    %v5628 = vmul.f32 %v5408, %v5592
    %v5629 = vmul.f32 %v5410, %v5596
    %v5630 = vmul.f32 %v5412, %v5596
    %v5631 = vmul.f32 %v5414, %v5600
    %v5632 = vmul.f32 %v5416, %v5600
    %v5633 = vmul.f32 %v5418, %v5604
    %v5634 = vmul.f32 %v5420, %v5604
    %v5635 = vmul.f32 %v5422, %v5608
    %v5636 = vmul.f32 %v5424, %v5608
    %v5637 = vmul.f32 %v5426, %v5612
    %v5638 = vmul.f32 %v5428, %v5612
    %v5639 = vmul.f32 %v5430, %v5616
    %v5640 = vmul.f32 %v5432, %v5616
    %5642 = vset.pattern.permute.xlu0 0
    %5643 = vperm.xlu0 %5642, %v5625
    %v5644 = vpop.permute.xlu0 %5643
    %5647 = vset.pattern.permute.xlu0 0
    %5648 = vperm.xlu0 %5647, %v5626
    %v5649 = vpop.permute.xlu0 %5648
    %5652 = vset.pattern.permute.xlu0 0
    %5653 = vperm.xlu0 %5652, %v5627
    %v5654 = vpop.permute.xlu0 %5653
    %5657 = vset.pattern.permute.xlu0 0
    %5658 = vperm.xlu0 %5657, %v5628
    %v5659 = vpop.permute.xlu0 %5658
    %5662 = vset.pattern.permute.xlu0 0
    %5663 = vperm.xlu0 %5662, %v5629
    %v5664 = vpop.permute.xlu0 %5663
    %5667 = vset.pattern.permute.xlu0 0
    %5668 = vperm.xlu0 %5667, %v5630
    %v5669 = vpop.permute.xlu0 %5668
    %5672 = vset.pattern.permute.xlu0 0
    %5673 = vperm.xlu0 %5672, %v5631
    %v5674 = vpop.permute.xlu0 %5673
    %5677 = vset.pattern.permute.xlu0 0
    %5678 = vperm.xlu0 %5677, %v5632
    %v5679 = vpop.permute.xlu0 %5678
    %5682 = vset.pattern.permute.xlu0 0
    %5683 = vperm.xlu0 %5682, %v5633
    %v5684 = vpop.permute.xlu0 %5683
    %5687 = vset.pattern.permute.xlu0 0
    %5688 = vperm.xlu0 %5687, %v5634
    %v5689 = vpop.permute.xlu0 %5688
    %5692 = vset.pattern.permute.xlu0 0
    %5693 = vperm.xlu0 %5692, %v5635
    %v5694 = vpop.permute.xlu0 %5693
    %5697 = vset.pattern.permute.xlu0 0
    %5698 = vperm.xlu0 %5697, %v5636
    %v5699 = vpop.permute.xlu0 %5698
    %5702 = vset.pattern.permute.xlu0 0
    %5703 = vperm.xlu0 %5702, %v5637
    %v5704 = vpop.permute.xlu0 %5703
    %5707 = vset.pattern.permute.xlu0 0
    %5708 = vperm.xlu0 %5707, %v5638
    %v5709 = vpop.permute.xlu0 %5708
    %5712 = vset.pattern.permute.xlu0 0
    %5713 = vperm.xlu0 %5712, %v5639
    %v5714 = vpop.permute.xlu0 %5713
    %5717 = vset.pattern.permute.xlu0 0
    %5718 = vperm.xlu0 %5717, %v5640
    %v5719 = vpop.permute.xlu0 %5718
    %v5721 = vmul.f32 %v5644, %v154
    %v5722 = vmul.f32 %v5649, %v155
    %v5723 = vmul.f32 %v5654, %v156
    %v5724 = vmul.f32 %v5659, %v157
    %v5725 = vmul.f32 %v5664, %v158
    %v5726 = vmul.f32 %v5669, %v159
    %v5727 = vmul.f32 %v5674, %v160
    %v5728 = vmul.f32 %v5679, %v161
    %v5729 = vmul.f32 %v5684, %v162
    %v5730 = vmul.f32 %v5689, %v163
    %v5731 = vmul.f32 %v5694, %v164
    %v5732 = vmul.f32 %v5699, %v165
    %v5733 = vmul.f32 %v5704, %v166
    %v5734 = vmul.f32 %v5709, %v167
    %v5735 = vmul.f32 %v5714, %v168
    %v5736 = vmul.f32 %v5719, %v169
    %v5737 = vsel %vm186, %v5721, 0.0
    %v5738 = vsel %vm186, %v5722, 0.0
    %v5739 = vadd.f32 %v5737, %v5738
    %v5740 = vrot.slane %v5739, 4
    %v5741 = vadd.f32 %v5739, %v5740
    %v5742 = vrot.slane %v5741, 2
    %v5743 = vadd.f32 %v5741, %v5742
    %v5744 = vrot.slane %v5743, 1
    %v5745 = vadd.f32 %v5743, %v5744
    %v5746 = vsel %vm186, %v5723, 0.0
    %v5747 = vsel %vm186, %v5724, 0.0
    %v5748 = vadd.f32 %v5746, %v5747
    %v5749 = vrot.slane %v5748, 4
    %v5750 = vadd.f32 %v5748, %v5749
    %v5751 = vrot.slane %v5750, 2
    %v5752 = vadd.f32 %v5750, %v5751
    %v5753 = vrot.slane %v5752, 1
    %v5754 = vadd.f32 %v5752, %v5753
    %v5755 = vsel %vm186, %v5725, 0.0
    %v5756 = vsel %vm186, %v5726, 0.0
    %v5757 = vadd.f32 %v5755, %v5756
    %v5758 = vrot.slane %v5757, 4
    %v5759 = vadd.f32 %v5757, %v5758
    %v5760 = vrot.slane %v5759, 2
    %v5761 = vadd.f32 %v5759, %v5760
    %v5762 = vrot.slane %v5761, 1
    %v5763 = vadd.f32 %v5761, %v5762
    %v5764 = vsel %vm186, %v5727, 0.0
    %v5765 = vsel %vm186, %v5728, 0.0
    %v5766 = vadd.f32 %v5764, %v5765
    %v5767 = vrot.slane %v5766, 4
    %v5768 = vadd.f32 %v5766, %v5767
    %v5769 = vrot.slane %v5768, 2
    %v5770 = vadd.f32 %v5768, %v5769
    %v5771 = vrot.slane %v5770, 1
    %v5772 = vadd.f32 %v5770, %v5771
    %v5773 = vsel %vm186, %v5729, 0.0
    %v5774 = vsel %vm186, %v5730, 0.0
    %v5775 = vadd.f32 %v5773, %v5774
    %v5776 = vrot.slane %v5775, 4
    %v5777 = vadd.f32 %v5775, %v5776
    %v5778 = vrot.slane %v5777, 2
    %v5779 = vadd.f32 %v5777, %v5778
    %v5780 = vrot.slane %v5779, 1
    %v5781 = vadd.f32 %v5779, %v5780
    %v5782 = vsel %vm186, %v5731, 0.0
    %v5783 = vsel %vm186, %v5732, 0.0
    %v5784 = vadd.f32 %v5782, %v5783
    %v5785 = vrot.slane %v5784, 4
    %v5786 = vadd.f32 %v5784, %v5785
    %v5787 = vrot.slane %v5786, 2
    %v5788 = vadd.f32 %v5786, %v5787
    %v5789 = vrot.slane %v5788, 1
    %v5790 = vadd.f32 %v5788, %v5789
    %v5791 = vsel %vm186, %v5733, 0.0
    %v5792 = vsel %vm186, %v5734, 0.0
    %v5793 = vadd.f32 %v5791, %v5792
    %v5794 = vrot.slane %v5793, 4
    %v5795 = vadd.f32 %v5793, %v5794
    %v5796 = vrot.slane %v5795, 2
    %v5797 = vadd.f32 %v5795, %v5796
    %v5798 = vrot.slane %v5797, 1
    %v5799 = vadd.f32 %v5797, %v5798
    %v5800 = vsel %vm186, %v5735, 0.0
    %v5801 = vsel %vm186, %v5736, 0.0
    %v5802 = vadd.f32 %v5800, %v5801
    %v5803 = vrot.slane %v5802, 4
    %v5804 = vadd.f32 %v5802, %v5803
    %v5805 = vrot.slane %v5804, 2
    %v5806 = vadd.f32 %v5804, %v5805
    %v5807 = vrot.slane %v5806, 1
    %v5808 = vadd.f32 %v5806, %v5807
    %v5817 = vsel %vm287, %v5754, %v5745
    %v5818 = vsel %vm289, %v5763, %v5817
    %v5819 = vsel %vm291, %v5772, %v5818
    %v5820 = vsel %vm293, %v5781, %v5819
    %v5821 = vsel %vm295, %v5790, %v5820
    %v5822 = vsel %vm297, %v5799, %v5821
    %v5823 = vsel %vm299, %v5808, %v5822
    %v5824 = vsel %vm186, %v5823, 0
    %5826 = vmatprep.subr.mxu0 0.0
    %5827 = vmatpush1.msra.mxu0 0.0
    %5828 = vmatprep.subr.mxu0 0.0
    %5829 = vmatpush1.msra.mxu0 0.0
    %5830 = vmatprep.subr.mxu0 0.0
    %5831 = vmatpush1.msra.mxu0 0.0
    %5832 = vmatprep.subr.mxu0 0.0
    %5833 = vmatpush1.msra.mxu0 0.0
    %5834 = vmatprep.subr.mxu0 0.0
    %5835 = vmatpush1.msra.mxu0 0.0
    %5836 = vmatprep.subr.mxu0 0.0
    %5837 = vmatpush1.msra.mxu0 0.0
    %5838 = vmatprep.subr.mxu0 0.0
    %5839 = vmatpush1.msra.mxu0 0.0
    %5840 = vmatprep.subr.mxu0 0.0
    %5841 = vmatpush1.msra.mxu0 0.0
    %5842 = vmatprep.subr.mxu0 0.0
    %5843 = vmatpush1.msra.mxu0 0.0
    %5844 = vmatprep.subr.mxu0 0.0
    %5845 = vmatpush1.msra.mxu0 0.0
    %5846 = vmatprep.subr.mxu0 0.0
    %5847 = vmatpush1.msra.mxu0 0.0
    %5848 = vmatprep.subr.mxu0 0.0
    %5849 = vmatpush1.msra.mxu0 0.0
    %5850 = vmatprep.subr.mxu0 0.0
    %5851 = vmatpush1.msra.mxu0 %v181
    %5852 = vmatprep.subr.mxu0 0.0
    %5853 = vmatpush1.msra.mxu0 %v180
    %5854 = vmatprep.subr.mxu0 0.0
    %5855 = vmatpush1.msra.mxu0 %v179
    %5856 = vmatprep.subr.mxu0 0.0
    %5857 = vmatpush1.msra.mxu0 %v178
    %5858 = vmatprep.subr.mxu0 0.0
    %5859 = vmatpush2.msra.mxu0 0.0
    %5860 = vmatprep.subr.mxu0 0.0
    %5861 = vmatpush2.msra.mxu0 0.0
    %5862 = vmatprep.subr.mxu0 0.0
    %5863 = vmatpush2.msra.mxu0 0.0
    %5864 = vmatprep.subr.mxu0 0.0
    %5865 = vmatpush2.msra.mxu0 0.0
    %5866 = vmatprep.subr.mxu0 0.0
    %5867 = vmatpush2.msra.mxu0 0.0
    %5868 = vmatprep.subr.mxu0 0.0
    %5869 = vmatpush2.msra.mxu0 0.0
    %5870 = vmatprep.subr.mxu0 0.0
    %5871 = vmatpush2.msra.mxu0 0.0
    %5872 = vmatprep.subr.mxu0 0.0
    %5873 = vmatpush2.msra.mxu0 0.0
    %5874 = vmatprep.subr.mxu0 0.0
    %5875 = vmatpush2.msra.mxu0 0.0
    %5876 = vmatprep.subr.mxu0 0.0
    %5877 = vmatpush2.msra.mxu0 0.0
    %5878 = vmatprep.subr.mxu0 0.0
    %5879 = vmatpush2.msra.mxu0 0.0
    %5880 = vmatprep.subr.mxu0 0.0
    %5881 = vmatpush2.msra.mxu0 0.0
    %5882 = vmatprep.subr.mxu0 0.0
    %5883 = vmatpush2.msra.mxu0 0.0
    %5884 = vmatprep.subr.mxu0 0.0
    %5885 = vmatpush2.msra.mxu0 0.0
    %5886 = vmatprep.subr.mxu0 0.0
    %5887 = vmatpush2.msra.mxu0 0.0
    %5888 = vmatprep.subr.mxu0 0.0
    %5889 = vmatpush2.msra.mxu0 0.0
    %5890 = vmatprep.mubr.f32.mxu0 0.0
    %5891 = vmatmul.mubr.f32.gmra.mxu0 %v5824
    %v5892 = vpop.f32.mrf.mxu0
    %v5893 = vadd.f32 0.0, %v5892
    %v5894 = vpop.f32.mrf.mxu0
    %5895 = vdwg.mxu0
    %v5897 = vrot.slane %v5893, 5
    %v5898 = vrot.slane %v5893, 6
    %v5899 = vrot.slane %v5893, 7
    %v5900 = vrot.slane %v5893, 1
    %v5901 = vrot.slane %v5893, 2
    %v5902 = vrot.slane %v5893, 3
    %v5903 = vrot.slane %v5893, 4
    %v5912 = vadd.f32 %v678, %v5897
    %v5913 = vadd.f32 %v683, %v5898
    %v5914 = vadd.f32 %v688, %v5899
    %v5915 = vadd.f32 %v693, %v5893
    %v5916 = vadd.f32 %v698, %v5900
    %v5917 = vadd.f32 %v703, %v5901
    %v5918 = vadd.f32 %v708, %v5902
    %v5919 = vadd.f32 %v713, %v5903
    %v5920 = vrot.slane %v4827, 2
    %v5921 = vrot.slane %v4828, 1
    %v5922 = vsel %vm287, %v5921, %v5920
    %v5923 = vsel %vm289, %v4829, %v5922
    %v5924 = vrot.slane %v4830, 7
    %v5925 = vsel %vm291, %v5924, %v5923
    %v5926 = vrot.slane %v4831, 6
    %v5927 = vsel %vm293, %v5926, %v5925
    %v5928 = vrot.slane %v4832, 5
    %v5929 = vsel %vm295, %v5928, %v5927
    %v5930 = vrot.slane %v4833, 4
    %v5931 = vsel %vm297, %v5930, %v5929
    %v5932 = vrot.slane %v4834, 3
    %v5933 = vsel %vm299, %v5932, %v5931
    %5934 = vrot.lane.b32.xlu0 %v5933, 32
    %v5935 = vpop.permute.xlu0 %5934
    %v5936 = vsel %vm186, %v5935, 0
    %5938 = vmatprep.subr.mxu0 0.0
    %5939 = vmatpush1.msra.mxu0 0.0
    %5940 = vmatprep.subr.mxu0 0.0
    %5941 = vmatpush1.msra.mxu0 0.0
    %5942 = vmatprep.subr.mxu0 0.0
    %5943 = vmatpush1.msra.mxu0 0.0
    %5944 = vmatprep.subr.mxu0 0.0
    %5945 = vmatpush1.msra.mxu0 0.0
    %5946 = vmatprep.subr.mxu0 0.0
    %5947 = vmatpush1.msra.mxu0 0.0
    %5948 = vmatprep.subr.mxu0 0.0
    %5949 = vmatpush1.msra.mxu0 0.0
    %5950 = vmatprep.subr.mxu0 0.0
    %5951 = vmatpush1.msra.mxu0 0.0
    %5952 = vmatprep.subr.mxu0 0.0
    %5953 = vmatpush1.msra.mxu0 0.0
    %5954 = vmatprep.subr.mxu0 0.0
    %5955 = vmatpush1.msra.mxu0 0.0
    %5956 = vmatprep.subr.mxu0 0.0
    %5957 = vmatpush1.msra.mxu0 0.0
    %5958 = vmatprep.subr.mxu0 0.0
    %5959 = vmatpush1.msra.mxu0 0.0
    %5960 = vmatprep.subr.mxu0 0.0
    %5961 = vmatpush1.msra.mxu0 0.0
    %5962 = vmatprep.subr.mxu0 0.0
    %5963 = vmatpush1.msra.mxu0 %v185
    %5964 = vmatprep.subr.mxu0 0.0
    %5965 = vmatpush1.msra.mxu0 %v184
    %5966 = vmatprep.subr.mxu0 0.0
    %5967 = vmatpush1.msra.mxu0 %v183
    %5968 = vmatprep.subr.mxu0 0.0
    %5969 = vmatpush1.msra.mxu0 %v182
    %5970 = vmatprep.subr.mxu0 0.0
    %5971 = vmatpush2.msra.mxu0 0.0
    %5972 = vmatprep.subr.mxu0 0.0
    %5973 = vmatpush2.msra.mxu0 0.0
    %5974 = vmatprep.subr.mxu0 0.0
    %5975 = vmatpush2.msra.mxu0 0.0
    %5976 = vmatprep.subr.mxu0 0.0
    %5977 = vmatpush2.msra.mxu0 0.0
    %5978 = vmatprep.subr.mxu0 0.0
    %5979 = vmatpush2.msra.mxu0 0.0
    %5980 = vmatprep.subr.mxu0 0.0
    %5981 = vmatpush2.msra.mxu0 0.0
    %5982 = vmatprep.subr.mxu0 0.0
    %5983 = vmatpush2.msra.mxu0 0.0
    %5984 = vmatprep.subr.mxu0 0.0
    %5985 = vmatpush2.msra.mxu0 0.0
    %5986 = vmatprep.subr.mxu0 0.0
    %5987 = vmatpush2.msra.mxu0 0.0
    %5988 = vmatprep.subr.mxu0 0.0
    %5989 = vmatpush2.msra.mxu0 0.0
    %5990 = vmatprep.subr.mxu0 0.0
    %5991 = vmatpush2.msra.mxu0 0.0
    %5992 = vmatprep.subr.mxu0 0.0
    %5993 = vmatpush2.msra.mxu0 0.0
    %5994 = vmatprep.subr.mxu0 0.0
    %5995 = vmatpush2.msra.mxu0 0.0
    %5996 = vmatprep.subr.mxu0 0.0
    %5997 = vmatpush2.msra.mxu0 0.0
    %5998 = vmatprep.subr.mxu0 0.0
    %5999 = vmatpush2.msra.mxu0 0.0
    %6000 = vmatprep.subr.mxu0 0.0
    %6001 = vmatpush2.msra.mxu0 0.0
    %6002 = vmatprep.mubr.f32.mxu0 0.0
    %6003 = vmatmul.mubr.f32.gmra.mxu0 %v5936
    %v6004 = vpop.f32.mrf.mxu0
    %v6005 = vadd.f32 0.0, %v6004
    %v6006 = vpop.f32.mrf.mxu0
    %6007 = vdwg.mxu0
    %v6009 = vrot.slane %v6005, 5
    %v6010 = vrot.slane %v6005, 6
    %v6011 = vrot.slane %v6005, 7
    %v6012 = vrot.slane %v6005, 1
    %v6013 = vrot.slane %v6005, 2
    %v6014 = vrot.slane %v6005, 3
    %v6015 = vrot.slane %v6005, 4
    %v6024 = vadd.f32 %v5912, %v6009
    %v6025 = vadd.f32 %v5913, %v6010
    %v6026 = vadd.f32 %v5914, %v6011
    %v6027 = vadd.f32 %v5915, %v6005
    %v6028 = vadd.f32 %v5916, %v6012
    %v6029 = vadd.f32 %v5917, %v6013
    %v6030 = vadd.f32 %v5918, %v6014
    %v6031 = vadd.f32 %v5919, %v6015
    %v6032 = vxor.u32 %v6024, 2147483648
    %v6033 = vxor.u32 %v6025, 2147483648
    %v6034 = vxor.u32 %v6026, 2147483648
    %v6035 = vxor.u32 %v6027, 2147483648
    %v6036 = vxor.u32 %v6028, 2147483648
    %v6037 = vxor.u32 %v6029, 2147483648
    %v6038 = vxor.u32 %v6030, 2147483648
    %v6039 = vxor.u32 %v6031, 2147483648
    %v6040 = vmul.f32 %v6032, 1.442695
    %v6041 = vpow.pop %v6040
    %v6042 = vmul.f32 %v6033, 1.442695
    %v6043 = vpow.pop %v6042
    %v6044 = vmul.f32 %v6034, 1.442695
    %v6045 = vpow.pop %v6044
    %v6046 = vmul.f32 %v6035, 1.442695
    %v6047 = vpow.pop %v6046
    %v6048 = vmul.f32 %v6036, 1.442695
    %v6049 = vpow.pop %v6048
    %v6050 = vmul.f32 %v6037, 1.442695
    %v6051 = vpow.pop %v6050
    %v6052 = vmul.f32 %v6038, 1.442695
    %v6053 = vpow.pop %v6052
    %v6054 = vmul.f32 %v6039, 1.442695
    %v6055 = vpow.pop %v6054
    %v6056 = vadd.f32 %v6041, 1.0
    %v6057 = vadd.f32 %v6043, 1.0
    %v6058 = vadd.f32 %v6045, 1.0
    %v6059 = vadd.f32 %v6047, 1.0
    %v6060 = vadd.f32 %v6049, 1.0
    %v6061 = vadd.f32 %v6051, 1.0
    %v6062 = vadd.f32 %v6053, 1.0
    %v6063 = vadd.f32 %v6055, 1.0
    %v6064 = vrcp.pop %v6056
    %v6065 = vmul.f32 1.0, %v6064
    %v6066 = vrcp.pop %v6057
    %v6067 = vmul.f32 1.0, %v6066
    %v6068 = vrcp.pop %v6058
    %v6069 = vmul.f32 1.0, %v6068
    %v6070 = vrcp.pop %v6059
    %v6071 = vmul.f32 1.0, %v6070
    %v6072 = vrcp.pop %v6060
    %v6073 = vmul.f32 1.0, %v6072
    %v6074 = vrcp.pop %v6061
    %v6075 = vmul.f32 1.0, %v6074
    %v6076 = vrcp.pop %v6062
    %v6077 = vmul.f32 1.0, %v6076
    %v6078 = vrcp.pop %v6063
    %v6079 = vmul.f32 1.0, %v6078
    %v6080 = vtanh.pop %v6024
    %v6081 = vtanh.pop %v6025
    %v6082 = vtanh.pop %v6026
    %v6083 = vtanh.pop %v6027
    %v6084 = vtanh.pop %v6028
    %v6085 = vtanh.pop %v6029
    %v6086 = vtanh.pop %v6030
    %v6087 = vtanh.pop %v6031
    %v6096 = vrot.slane %v4779, 7
    %v6097 = vrot.slane %v4780, 7
    %v6098 = vrot.slane %v4781, 7
    %v6099 = vrot.slane %v4782, 7
    %v6100 = vrot.slane %v4783, 7
    %v6101 = vrot.slane %v4784, 7
    %v6102 = vrot.slane %v4785, 7
    %v6103 = vrot.slane %v4786, 7
    %v6112 = vmul.f32 %v6065, %v6096
    %v6113 = vmul.f32 %v6067, %v6097
    %v6114 = vmul.f32 %v6069, %v6098
    %v6115 = vmul.f32 %v6071, %v6099
    %v6116 = vmul.f32 %v6073, %v6100
    %v6117 = vmul.f32 %v6075, %v6101
    %v6118 = vmul.f32 %v6077, %v6102
    %v6119 = vmul.f32 %v6079, %v6103
    %6128 = vrot.lane.b32.xlu0 %v6080, 64
    %v6129 = vpop.permute.xlu0 %6128
    %6130 = vrot.lane.b32.xlu0 %v6081, 64
    %v6131 = vpop.permute.xlu0 %6130
    %6132 = vrot.lane.b32.xlu0 %v6082, 64
    %v6133 = vpop.permute.xlu0 %6132
    %6134 = vrot.lane.b32.xlu0 %v6083, 64
    %v6135 = vpop.permute.xlu0 %6134
    %6136 = vrot.lane.b32.xlu0 %v6084, 64
    %v6137 = vpop.permute.xlu0 %6136
    %6138 = vrot.lane.b32.xlu0 %v6085, 64
    %v6139 = vpop.permute.xlu0 %6138
    %6140 = vrot.lane.b32.xlu0 %v6086, 64
    %v6141 = vpop.permute.xlu0 %6140
    %6142 = vrot.lane.b32.xlu0 %v6087, 64
    %v6143 = vpop.permute.xlu0 %6142
    %v6152 = vmul.f32 %v6065, %v6129
    %v6153 = vmul.f32 %v6067, %v6131
    %v6154 = vmul.f32 %v6069, %v6133
    %v6155 = vmul.f32 %v6071, %v6135
    %v6156 = vmul.f32 %v6073, %v6137
    %v6157 = vmul.f32 %v6075, %v6139
    %v6158 = vmul.f32 %v6077, %v6141
    %v6159 = vmul.f32 %v6079, %v6143
    %6168 = vrot.lane.b32.xlu0 %v6152, 32
    %v6169 = vpop.permute.xlu0 %6168
    %6170 = vrot.lane.b32.xlu0 %v6153, 32
    %v6171 = vpop.permute.xlu0 %6170
    %6172 = vrot.lane.b32.xlu0 %v6154, 32
    %v6173 = vpop.permute.xlu0 %6172
    %6174 = vrot.lane.b32.xlu0 %v6155, 32
    %v6175 = vpop.permute.xlu0 %6174
    %6176 = vrot.lane.b32.xlu0 %v6156, 32
    %v6177 = vpop.permute.xlu0 %6176
    %6178 = vrot.lane.b32.xlu0 %v6157, 32
    %v6179 = vpop.permute.xlu0 %6178
    %6180 = vrot.lane.b32.xlu0 %v6158, 32
    %v6181 = vpop.permute.xlu0 %6180
    %6182 = vrot.lane.b32.xlu0 %v6159, 32
    %v6183 = vpop.permute.xlu0 %6182
    %v6192 = vadd.f32 %v6112, %v6169
    %v6193 = vadd.f32 %v6113, %v6171
    %v6194 = vadd.f32 %v6114, %v6173
    %v6195 = vadd.f32 %v6115, %v6175
    %v6196 = vadd.f32 %v6116, %v6177
    %v6197 = vadd.f32 %v6117, %v6179
    %v6198 = vadd.f32 %v6118, %v6181
    %v6199 = vadd.f32 %v6119, %v6183
    %v6200 = vtanh.pop %v6192
    %v6201 = vtanh.pop %v6193
    %v6202 = vtanh.pop %v6194
    %v6203 = vtanh.pop %v6195
    %v6204 = vtanh.pop %v6196
    %v6205 = vtanh.pop %v6197
    %v6206 = vtanh.pop %v6198
    %v6207 = vtanh.pop %v6199
    %6216 = vrot.lane.b32.xlu0 %v6200, 64
    %v6217 = vpop.permute.xlu0 %6216
    %6218 = vrot.lane.b32.xlu0 %v6201, 64
    %v6219 = vpop.permute.xlu0 %6218
    %6220 = vrot.lane.b32.xlu0 %v6202, 64
    %v6221 = vpop.permute.xlu0 %6220
    %6222 = vrot.lane.b32.xlu0 %v6203, 64
    %v6223 = vpop.permute.xlu0 %6222
    %6224 = vrot.lane.b32.xlu0 %v6204, 64
    %v6225 = vpop.permute.xlu0 %6224
    %6226 = vrot.lane.b32.xlu0 %v6205, 64
    %v6227 = vpop.permute.xlu0 %6226
    %6228 = vrot.lane.b32.xlu0 %v6206, 64
    %v6229 = vpop.permute.xlu0 %6228
    %6230 = vrot.lane.b32.xlu0 %v6207, 64
    %v6231 = vpop.permute.xlu0 %6230
    %v6240 = vmul.f32 %v6065, %v6217
    %v6241 = vmul.f32 %v6067, %v6219
    %v6242 = vmul.f32 %v6069, %v6221
    %v6243 = vmul.f32 %v6071, %v6223
    %v6244 = vmul.f32 %v6073, %v6225
    %v6245 = vmul.f32 %v6075, %v6227
    %v6246 = vmul.f32 %v6077, %v6229
    %v6247 = vmul.f32 %v6079, %v6231
    %v6256 = vrot.slane %v6241, 7
    %v6257 = vsel %vm293, %v6256, %v6240
    %v6258 = vrot.slane %v6242, 6
    %v6259 = vsel %vm295, %v6258, %v6257
    %v6260 = vrot.slane %v6243, 5
    %v6261 = vsel %vm297, %v6260, %v6259
    %v6262 = vrot.slane %v6244, 4
    %v6263 = vsel %vm299, %v6262, %v6261
    %v6264 = vrot.slane %v6245, 3
    %v6265 = vrot.slane %v6246, 2
    %v6266 = vsel %vm287, %v6265, %v6264
    %v6267 = vrot.slane %v6247, 1
    %v6268 = vsel %vm289, %v6267, %v6266
    %6269 = vrot.lane.b32.xlu0 %v6263, 32
    %v6270 = vpop.permute.xlu0 %6269
    %6271 = vrot.lane.b32.xlu0 %v6268, 32
    %v6272 = vpop.permute.xlu0 %6271
    %v6275 = vsel %vm293, %v5754, %v5745
    %v6276 = vsel %vm295, %v5763, %v6275
    %v6277 = vsel %vm297, %v5772, %v6276
    %v6278 = vsel %vm299, %v5781, %v6277
    %v6279 = vsel %vm287, %v5799, %v5790
    %v6280 = vsel %vm289, %v5808, %v6279
    %6281 = vrot.lane.b32.xlu0 %v6278, 32
    %v6282 = vpop.permute.xlu0 %6281
    %6283 = vrot.lane.b32.xlu0 %v6280, 32
    %v6284 = vpop.permute.xlu0 %6283
    %v6287 = vsel %vm293, %v2042, %v170
    %v6288 = vsel %vm295, %v2044, %v6287
    %v6289 = vsel %vm297, %v2046, %v6288
    %v6290 = vsel %vm299, %v2048, %v6289
    %v6291 = vsel %vm287, %v2052, %v2050
    %v6292 = vsel %vm289, %v2054, %v6291
    %6293 = vrot.lane.b32.xlu0 %v6290, 64
    %v6294 = vpop.permute.xlu0 %6293
    %6295 = vrot.lane.b32.xlu0 %v6292, 64
    %v6296 = vpop.permute.xlu0 %6295
    %v6299 = vsel %vm186, %v6270, %v6282
    %v6300 = vsel %vm186, %v6272, %v6284
    %v6301 = vsel %vm2060, %v6299, %v6294
    %v6302 = vsel %vm2060, %v6300, %v6296
    %v6303 = vsel %vm2062, %v6301, 0.0
    %v6304 = vsel %vm2062, %v6302, 0.0
    %v6307 = vcombine.high %v6303, %v6303
    %v6309 = vunpack.c.l.s4 1966171168
    %v6310 = vunpack.c.0.s8 %v6309
    %v6311 = vlaneseq
    %v6312 = vshrl.u32 %v6311, 7
    %v6313 = vsub.s32 %v6310, %v6312
    %v6314 = vrot.slane %v6303, %v6313
    %v6316 = vunpack.c.l.s4 1966171168
    %v6317 = vunpack.c.0.s8 %v6316
    %v6318 = vlaneseq
    %v6319 = vshrl.u32 %v6318, 7
    %v6320 = vsub.s32 %v6317, %v6319
    %v6321 = vrot.slane %v6307, %v6320
    %v6322 = vcombine.high %v6314, %v6314
    %v6323 = vcombine.high %v6321, %v6321
    %v6325 = vunpack.c.l.s4 1966171168
    %v6326 = vunpack.c.0.s8 %v6325
    %v6327 = vlaneseq
    %v6328 = vshrl.u32 %v6327, 7
    %v6329 = vsub.s32 %v6326, %v6328
    %v6330 = vrot.slane %v6321, %v6329
    %v6332 = vunpack.c.l.s4 1966171168
    %v6333 = vunpack.c.0.s8 %v6332
    %v6334 = vlaneseq
    %v6335 = vshrl.u32 %v6334, 7
    %v6336 = vsub.s32 %v6333, %v6335
    %v6337 = vrot.slane %v6322, %v6336
    %v6339 = vunpack.c.l.s4 1966171168
    %v6340 = vunpack.c.0.s8 %v6339
    %v6341 = vlaneseq
    %v6342 = vshrl.u32 %v6341, 7
    %v6343 = vsub.s32 %v6340, %v6342
    %v6344 = vrot.slane %v6323, %v6343
    %v6345 = vcombine.high %v6330, %v6330
    %v6346 = vcombine.high %v6337, %v6337
    %v6347 = vcombine.high %v6344, %v6344
    %v6349 = vunpack.c.l.s4 1966171168
    %v6350 = vunpack.c.0.s8 %v6349
    %v6351 = vlaneseq
    %v6352 = vshrl.u32 %v6351, 7
    %v6353 = vsub.s32 %v6350, %v6352
    %v6354 = vrot.slane %v6304, %v6353
    %v6355 = vcombine.high %v6354, %v6354
    %v6357 = vunpack.c.l.s4 1966171168
    %v6358 = vunpack.c.0.s8 %v6357
    %v6359 = vlaneseq
    %v6360 = vshrl.u32 %v6359, 7
    %v6361 = vsub.s32 %v6358, %v6360
    %v6362 = vrot.slane %v6354, %v6361
    %v6364 = vunpack.c.l.s4 1966171168
    %v6365 = vunpack.c.0.s8 %v6364
    %v6366 = vlaneseq
    %v6367 = vshrl.u32 %v6366, 7
    %v6368 = vsub.s32 %v6365, %v6367
    %v6369 = vrot.slane %v6355, %v6368
    %v6370 = vcombine.high %v6362, %v6362
    %6379 = vst [vmem:[#allocation2 + $0x3] sm:$0x1] %v6346
    %6380 = vst [vmem:[#allocation2 + $0xb] sm:$0x1] %v6330
    %6381 = vst [vmem:[#allocation2 + $0x13] sm:$0x1] %v6344
    %6382 = vst [vmem:[#allocation2 + $0x1b] sm:$0x1] %v6345
    %6383 = vst [vmem:[#allocation2 + $0x23] sm:$0x1] %v6347
    %6384 = vst [vmem:[#allocation2 + $0x2b] sm:$0x1] %v6362
    %6385 = vst [vmem:[#allocation2 + $0x33] sm:$0x1] %v6369
    %6386 = vst [vmem:[#allocation2 + $0x3b] sm:$0x1] %v6370
    %v6387 = vlaneseq
    %v6388 = vshrl.u32 %v6387, 7
    %v6389 = vsub.s32 %v1031, %v6388
    %v6390 = vrot.slane %v5644, %v6389
    %v6391 = vlaneseq
    %v6392 = vshrl.u32 %v6391, 7
    %v6393 = vsub.s32 %v1036, %v6392
    %v6394 = vrot.slane %v5649, %v6393
    %v6395 = vsel %vm1041, %v6394, %v6390
    %v6396 = vlaneseq
    %v6397 = vshrl.u32 %v6396, 7
    %v6398 = vsub.s32 %v1031, %v6397
    %v6399 = vrot.slane %v5654, %v6398
    %v6400 = vlaneseq
    %v6401 = vshrl.u32 %v6400, 7
    %v6402 = vsub.s32 %v1036, %v6401
    %v6403 = vrot.slane %v5659, %v6402
    %v6404 = vsel %vm1041, %v6403, %v6399
    %v6405 = vlaneseq
    %v6406 = vshrl.u32 %v6405, 7
    %v6407 = vsub.s32 %v1031, %v6406
    %v6408 = vrot.slane %v5664, %v6407
    %v6409 = vlaneseq
    %v6410 = vshrl.u32 %v6409, 7
    %v6411 = vsub.s32 %v1036, %v6410
    %v6412 = vrot.slane %v5669, %v6411
    %v6413 = vsel %vm1041, %v6412, %v6408
    %v6414 = vlaneseq
    %v6415 = vshrl.u32 %v6414, 7
    %v6416 = vsub.s32 %v1031, %v6415
    %v6417 = vrot.slane %v5674, %v6416
    %v6418 = vlaneseq
    %v6419 = vshrl.u32 %v6418, 7
    %v6420 = vsub.s32 %v1036, %v6419
    %v6421 = vrot.slane %v5679, %v6420
    %v6422 = vsel %vm1041, %v6421, %v6417
    %v6423 = vlaneseq
    %v6424 = vshrl.u32 %v6423, 7
    %v6425 = vsub.s32 %v1031, %v6424
    %v6426 = vrot.slane %v5684, %v6425
    %v6427 = vlaneseq
    %v6428 = vshrl.u32 %v6427, 7
    %v6429 = vsub.s32 %v1036, %v6428
    %v6430 = vrot.slane %v5689, %v6429
    %v6431 = vsel %vm1041, %v6430, %v6426
    %v6432 = vlaneseq
    %v6433 = vshrl.u32 %v6432, 7
    %v6434 = vsub.s32 %v1031, %v6433
    %v6435 = vrot.slane %v5694, %v6434
    %v6436 = vlaneseq
    %v6437 = vshrl.u32 %v6436, 7
    %v6438 = vsub.s32 %v1036, %v6437
    %v6439 = vrot.slane %v5699, %v6438
    %v6440 = vsel %vm1041, %v6439, %v6435
    %v6441 = vlaneseq
    %v6442 = vshrl.u32 %v6441, 7
    %v6443 = vsub.s32 %v1031, %v6442
    %v6444 = vrot.slane %v5704, %v6443
    %v6445 = vlaneseq
    %v6446 = vshrl.u32 %v6445, 7
    %v6447 = vsub.s32 %v1036, %v6446
    %v6448 = vrot.slane %v5709, %v6447
    %v6449 = vsel %vm1041, %v6448, %v6444
    %v6450 = vlaneseq
    %v6451 = vshrl.u32 %v6450, 7
    %v6452 = vsub.s32 %v1031, %v6451
    %v6453 = vrot.slane %v5714, %v6452
    %v6454 = vlaneseq
    %v6455 = vshrl.u32 %v6454, 7
    %v6456 = vsub.s32 %v1036, %v6455
    %v6457 = vrot.slane %v5719, %v6456
    %v6458 = vsel %vm1041, %v6457, %v6453
    %6467 = vst.msk [vmem:[#allocation18 + $0x3] sm:$0x1] %vm2210, %v6395
    %6468 = vst.msk [vmem:[#allocation18 + $0xb] sm:$0x1] %vm2210, %v6404
    %6469 = vst.msk [vmem:[#allocation18 + $0x13] sm:$0x1] %vm2210, %v6413
    %6470 = vst.msk [vmem:[#allocation18 + $0x1b] sm:$0x1] %vm2210, %v6422
    %6471 = vst.msk [vmem:[#allocation18 + $0x23] sm:$0x1] %vm2210, %v6431
    %6472 = vst.msk [vmem:[#allocation18 + $0x2b] sm:$0x1] %vm2210, %v6440
    %6473 = vst.msk [vmem:[#allocation18 + $0x33] sm:$0x1] %vm2210, %v6449
    %6474 = vst.msk [vmem:[#allocation18 + $0x3b] sm:$0x1] %vm2210, %v6458
    %v6475 = vlaneseq
    %v6476 = vshrl.u32 %v6475, 7
    %v6477 = vsub.s32 3, %v6476
    %v6478 = vrot.slane %v6240, %v6477
    %v6479 = vlaneseq
    %v6480 = vshrl.u32 %v6479, 7
    %v6481 = vsub.s32 3, %v6480
    %v6482 = vrot.slane %v6241, %v6481
    %v6483 = vlaneseq
    %v6484 = vshrl.u32 %v6483, 7
    %v6485 = vsub.s32 3, %v6484
    %v6486 = vrot.slane %v6242, %v6485
    %v6487 = vlaneseq
    %v6488 = vshrl.u32 %v6487, 7
    %v6489 = vsub.s32 3, %v6488
    %v6490 = vrot.slane %v6243, %v6489
    %v6491 = vlaneseq
    %v6492 = vshrl.u32 %v6491, 7
    %v6493 = vsub.s32 3, %v6492
    %v6494 = vrot.slane %v6244, %v6493
    %v6495 = vlaneseq
    %v6496 = vshrl.u32 %v6495, 7
    %v6497 = vsub.s32 3, %v6496
    %v6498 = vrot.slane %v6245, %v6497
    %v6499 = vlaneseq
    %v6500 = vshrl.u32 %v6499, 7
    %v6501 = vsub.s32 3, %v6500
    %v6502 = vrot.slane %v6246, %v6501
    %v6503 = vlaneseq
    %v6504 = vshrl.u32 %v6503, 7
    %v6505 = vsub.s32 3, %v6504
    %v6506 = vrot.slane %v6247, %v6505
    %v6507 = vmul.f32 %v6478, %v2252
    %v6508 = vmul.f32 %v6478, %v2254
    %v6509 = vmul.f32 %v6482, %v2256
    %v6510 = vmul.f32 %v6482, %v2258
    %v6511 = vmul.f32 %v6486, %v2260
    %v6512 = vmul.f32 %v6486, %v2262
    %v6513 = vmul.f32 %v6490, %v2264
    %v6514 = vmul.f32 %v6490, %v2266
    %v6515 = vmul.f32 %v6494, %v2268
    %v6516 = vmul.f32 %v6494, %v2270
    %v6517 = vmul.f32 %v6498, %v2272
    %v6518 = vmul.f32 %v6498, %v2274
    %v6519 = vmul.f32 %v6502, %v2276
    %v6520 = vmul.f32 %v6502, %v2278
    %v6521 = vmul.f32 %v6506, %v2280
    %v6522 = vmul.f32 %v6506, %v2282
    %6539 = vrot.lane.b32.xlu0 %v6507, 32
    %v6540 = vpop.permute.xlu0 %6539
    %6541 = vrot.lane.b32.xlu0 %v6508, 32
    %v6542 = vpop.permute.xlu0 %6541
    %6543 = vrot.lane.b32.xlu0 %v6509, 32
    %v6544 = vpop.permute.xlu0 %6543
    %6545 = vrot.lane.b32.xlu0 %v6510, 32
    %v6546 = vpop.permute.xlu0 %6545
    %6547 = vrot.lane.b32.xlu0 %v6511, 32
    %v6548 = vpop.permute.xlu0 %6547
    %6549 = vrot.lane.b32.xlu0 %v6512, 32
    %v6550 = vpop.permute.xlu0 %6549
    %6551 = vrot.lane.b32.xlu0 %v6513, 32
    %v6552 = vpop.permute.xlu0 %6551
    %6553 = vrot.lane.b32.xlu0 %v6514, 32
    %v6554 = vpop.permute.xlu0 %6553
    %6555 = vrot.lane.b32.xlu0 %v6515, 32
    %v6556 = vpop.permute.xlu0 %6555
    %6557 = vrot.lane.b32.xlu0 %v6516, 32
    %v6558 = vpop.permute.xlu0 %6557
    %6559 = vrot.lane.b32.xlu0 %v6517, 32
    %v6560 = vpop.permute.xlu0 %6559
    %6561 = vrot.lane.b32.xlu0 %v6518, 32
    %v6562 = vpop.permute.xlu0 %6561
    %6563 = vrot.lane.b32.xlu0 %v6519, 32
    %v6564 = vpop.permute.xlu0 %6563
    %6565 = vrot.lane.b32.xlu0 %v6520, 32
    %v6566 = vpop.permute.xlu0 %6565
    %6567 = vrot.lane.b32.xlu0 %v6521, 32
    %v6568 = vpop.permute.xlu0 %6567
    %6569 = vrot.lane.b32.xlu0 %v6522, 32
    %v6570 = vpop.permute.xlu0 %6569
    %v6587 = vsel %vm186, %v6540, 0.0
    %6588 = vadd.xlane.f32.xlu0 %v6587
    %v6589 = vpop.xlane.xlu0 %6588
    %v6590 = vsel %vm186, %v6542, 0.0
    %6591 = vadd.xlane.f32.xlu0 %v6590
    %v6592 = vpop.xlane.xlu0 %6591
    %v6593 = vsel %vm186, %v6544, 0.0
    %6594 = vadd.xlane.f32.xlu0 %v6593
    %v6595 = vpop.xlane.xlu0 %6594
    %v6596 = vsel %vm186, %v6546, 0.0
    %6597 = vadd.xlane.f32.xlu0 %v6596
    %v6598 = vpop.xlane.xlu0 %6597
    %v6599 = vsel %vm186, %v6548, 0.0
    %6600 = vadd.xlane.f32.xlu0 %v6599
    %v6601 = vpop.xlane.xlu0 %6600
    %v6602 = vsel %vm186, %v6550, 0.0
    %6603 = vadd.xlane.f32.xlu0 %v6602
    %v6604 = vpop.xlane.xlu0 %6603
    %v6605 = vsel %vm186, %v6552, 0.0
    %6606 = vadd.xlane.f32.xlu0 %v6605
    %v6607 = vpop.xlane.xlu0 %6606
    %v6608 = vsel %vm186, %v6554, 0.0
    %6609 = vadd.xlane.f32.xlu0 %v6608
    %v6610 = vpop.xlane.xlu0 %6609
    %v6611 = vsel %vm186, %v6556, 0.0
    %6612 = vadd.xlane.f32.xlu0 %v6611
    %v6613 = vpop.xlane.xlu0 %6612
    %v6614 = vsel %vm186, %v6558, 0.0
    %6615 = vadd.xlane.f32.xlu0 %v6614
    %v6616 = vpop.xlane.xlu0 %6615
    %v6617 = vsel %vm186, %v6560, 0.0
    %6618 = vadd.xlane.f32.xlu0 %v6617
    %v6619 = vpop.xlane.xlu0 %6618
    %v6620 = vsel %vm186, %v6562, 0.0
    %6621 = vadd.xlane.f32.xlu0 %v6620
    %v6622 = vpop.xlane.xlu0 %6621
    %v6623 = vsel %vm186, %v6564, 0.0
    %6624 = vadd.xlane.f32.xlu0 %v6623
    %v6625 = vpop.xlane.xlu0 %6624
    %v6626 = vsel %vm186, %v6566, 0.0
    %6627 = vadd.xlane.f32.xlu0 %v6626
    %v6628 = vpop.xlane.xlu0 %6627
    %v6629 = vsel %vm186, %v6568, 0.0
    %6630 = vadd.xlane.f32.xlu0 %v6629
    %v6631 = vpop.xlane.xlu0 %6630
    %v6632 = vsel %vm186, %v6570, 0.0
    %6633 = vadd.xlane.f32.xlu0 %v6632
    %v6634 = vpop.xlane.xlu0 %6633
    %v6635 = vmul.f32 %v6589, 0.17677669
    %v6636 = vmul.f32 %v6592, 0.17677669
    %v6637 = vmul.f32 %v6595, 0.17677669
    %v6638 = vmul.f32 %v6598, 0.17677669
    %v6639 = vmul.f32 %v6601, 0.17677669
    %v6640 = vmul.f32 %v6604, 0.17677669
    %v6641 = vmul.f32 %v6607, 0.17677669
    %v6642 = vmul.f32 %v6610, 0.17677669
    %v6643 = vmul.f32 %v6613, 0.17677669
    %v6644 = vmul.f32 %v6616, 0.17677669
    %v6645 = vmul.f32 %v6619, 0.17677669
    %v6646 = vmul.f32 %v6622, 0.17677669
    %v6647 = vmul.f32 %v6625, 0.17677669
    %v6648 = vmul.f32 %v6628, 0.17677669
    %v6649 = vmul.f32 %v6631, 0.17677669
    %v6650 = vmul.f32 %v6634, 0.17677669
    %v6667 = vlaneseq
    %v6668 = vshrl.u32 %v6667, 7
    %v6669 = vsub.s32 %v1031, %v6668
    %v6670 = vrot.slane %v6635, %v6669
    %v6671 = vlaneseq
    %v6672 = vshrl.u32 %v6671, 7
    %v6673 = vsub.s32 %v1036, %v6672
    %v6674 = vrot.slane %v6636, %v6673
    %v6675 = vsel %vm1041, %v6674, %v6670
    %v6676 = vlaneseq
    %v6677 = vshrl.u32 %v6676, 7
    %v6678 = vsub.s32 %v1031, %v6677
    %v6679 = vrot.slane %v6637, %v6678
    %v6680 = vlaneseq
    %v6681 = vshrl.u32 %v6680, 7
    %v6682 = vsub.s32 %v1036, %v6681
    %v6683 = vrot.slane %v6638, %v6682
    %v6684 = vsel %vm1041, %v6683, %v6679
    %v6685 = vlaneseq
    %v6686 = vshrl.u32 %v6685, 7
    %v6687 = vsub.s32 %v1031, %v6686
    %v6688 = vrot.slane %v6639, %v6687
    %v6689 = vlaneseq
    %v6690 = vshrl.u32 %v6689, 7
    %v6691 = vsub.s32 %v1036, %v6690
    %v6692 = vrot.slane %v6640, %v6691
    %v6693 = vsel %vm1041, %v6692, %v6688
    %v6694 = vlaneseq
    %v6695 = vshrl.u32 %v6694, 7
    %v6696 = vsub.s32 %v1031, %v6695
    %v6697 = vrot.slane %v6641, %v6696
    %v6698 = vlaneseq
    %v6699 = vshrl.u32 %v6698, 7
    %v6700 = vsub.s32 %v1036, %v6699
    %v6701 = vrot.slane %v6642, %v6700
    %v6702 = vsel %vm1041, %v6701, %v6697
    %v6703 = vlaneseq
    %v6704 = vshrl.u32 %v6703, 7
    %v6705 = vsub.s32 %v1031, %v6704
    %v6706 = vrot.slane %v6643, %v6705
    %v6707 = vlaneseq
    %v6708 = vshrl.u32 %v6707, 7
    %v6709 = vsub.s32 %v1036, %v6708
    %v6710 = vrot.slane %v6644, %v6709
    %v6711 = vsel %vm1041, %v6710, %v6706
    %v6712 = vlaneseq
    %v6713 = vshrl.u32 %v6712, 7
    %v6714 = vsub.s32 %v1031, %v6713
    %v6715 = vrot.slane %v6645, %v6714
    %v6716 = vlaneseq
    %v6717 = vshrl.u32 %v6716, 7
    %v6718 = vsub.s32 %v1036, %v6717
    %v6719 = vrot.slane %v6646, %v6718
    %v6720 = vsel %vm1041, %v6719, %v6715
    %v6721 = vlaneseq
    %v6722 = vshrl.u32 %v6721, 7
    %v6723 = vsub.s32 %v1031, %v6722
    %v6724 = vrot.slane %v6647, %v6723
    %v6725 = vlaneseq
    %v6726 = vshrl.u32 %v6725, 7
    %v6727 = vsub.s32 %v1036, %v6726
    %v6728 = vrot.slane %v6648, %v6727
    %v6729 = vsel %vm1041, %v6728, %v6724
    %v6730 = vlaneseq
    %v6731 = vshrl.u32 %v6730, 7
    %v6732 = vsub.s32 %v1031, %v6731
    %v6733 = vrot.slane %v6649, %v6732
    %v6734 = vlaneseq
    %v6735 = vshrl.u32 %v6734, 7
    %v6736 = vsub.s32 %v1036, %v6735
    %v6737 = vrot.slane %v6650, %v6736
    %v6738 = vsel %vm1041, %v6737, %v6733
    %v6739 = vsel %vm287, %v6684, %v6675
    %v6740 = vsel %vm289, %v6693, %v6739
    %v6741 = vsel %vm291, %v6702, %v6740
    %v6742 = vsel %vm293, %v6711, %v6741
    %v6743 = vsel %vm295, %v6720, %v6742
    %v6744 = vsel %vm297, %v6729, %v6743
    %v6745 = vsel %vm299, %v6738, %v6744
    %v6747 = vsel %vm586, %v6745, -inf
    %6748 = vmax.xlane.f32.xlu0 %v6747
    %v6749 = vpop.xlane.xlu0 %6748
    %v6751 = vlaneseq
    %v6752 = vshrl.u32 %v6751, 7
    %v6753 = vsub.s32 0, %v6752
    %v6754 = vrot.slane %v6749, %v6753
    %v6755 = vlaneseq
    %v6756 = vshrl.u32 %v6755, 7
    %v6757 = vsub.s32 1, %v6756
    %v6758 = vrot.slane %v6749, %v6757
    %v6759 = vlaneseq
    %v6760 = vshrl.u32 %v6759, 7
    %v6761 = vsub.s32 2, %v6760
    %v6762 = vrot.slane %v6749, %v6761
    %v6763 = vlaneseq
    %v6764 = vshrl.u32 %v6763, 7
    %v6765 = vsub.s32 3, %v6764
    %v6766 = vrot.slane %v6749, %v6765
    %v6767 = vlaneseq
    %v6768 = vshrl.u32 %v6767, 7
    %v6769 = vsub.s32 4, %v6768
    %v6770 = vrot.slane %v6749, %v6769
    %v6771 = vlaneseq
    %v6772 = vshrl.u32 %v6771, 7
    %v6773 = vsub.s32 5, %v6772
    %v6774 = vrot.slane %v6749, %v6773
    %v6775 = vlaneseq
    %v6776 = vshrl.u32 %v6775, 7
    %v6777 = vsub.s32 6, %v6776
    %v6778 = vrot.slane %v6749, %v6777
    %v6779 = vlaneseq
    %v6780 = vshrl.u32 %v6779, 7
    %v6781 = vsub.s32 7, %v6780
    %v6782 = vrot.slane %v6749, %v6781
    %v6791 = vsub.f32 %v6635, %v6754
    %v6792 = vsub.f32 %v6636, %v6754
    %v6793 = vsub.f32 %v6637, %v6758
    %v6794 = vsub.f32 %v6638, %v6758
    %v6795 = vsub.f32 %v6639, %v6762
    %v6796 = vsub.f32 %v6640, %v6762
    %v6797 = vsub.f32 %v6641, %v6766
    %v6798 = vsub.f32 %v6642, %v6766
    %v6799 = vsub.f32 %v6643, %v6770
    %v6800 = vsub.f32 %v6644, %v6770
    %v6801 = vsub.f32 %v6645, %v6774
    %v6802 = vsub.f32 %v6646, %v6774
    %v6803 = vsub.f32 %v6647, %v6778
    %v6804 = vsub.f32 %v6648, %v6778
    %v6805 = vsub.f32 %v6649, %v6782
    %v6806 = vsub.f32 %v6650, %v6782
    %v6807 = vmul.f32 %v6791, 1.442695
    %v6808 = vpow.pop %v6807
    %v6809 = vmul.f32 %v6792, 1.442695
    %v6810 = vpow.pop %v6809
    %v6811 = vmul.f32 %v6793, 1.442695
    %v6812 = vpow.pop %v6811
    %v6813 = vmul.f32 %v6794, 1.442695
    %v6814 = vpow.pop %v6813
    %v6815 = vmul.f32 %v6795, 1.442695
    %v6816 = vpow.pop %v6815
    %v6817 = vmul.f32 %v6796, 1.442695
    %v6818 = vpow.pop %v6817
    %v6819 = vmul.f32 %v6797, 1.442695
    %v6820 = vpow.pop %v6819
    %v6821 = vmul.f32 %v6798, 1.442695
    %v6822 = vpow.pop %v6821
    %v6823 = vmul.f32 %v6799, 1.442695
    %v6824 = vpow.pop %v6823
    %v6825 = vmul.f32 %v6800, 1.442695
    %v6826 = vpow.pop %v6825
    %v6827 = vmul.f32 %v6801, 1.442695
    %v6828 = vpow.pop %v6827
    %v6829 = vmul.f32 %v6802, 1.442695
    %v6830 = vpow.pop %v6829
    %v6831 = vmul.f32 %v6803, 1.442695
    %v6832 = vpow.pop %v6831
    %v6833 = vmul.f32 %v6804, 1.442695
    %v6834 = vpow.pop %v6833
    %v6835 = vmul.f32 %v6805, 1.442695
    %v6836 = vpow.pop %v6835
    %v6837 = vmul.f32 %v6806, 1.442695
    %v6838 = vpow.pop %v6837
    %6855 = vset.pattern.permute.xlu0 0
    %6856 = vperm.xlu0 %6855, %v6808
    %v6857 = vpop.permute.xlu0 %6856
    %6858 = vset.pattern.permute.xlu0 0
    %6859 = vperm.xlu0 %6858, %v6810
    %v6860 = vpop.permute.xlu0 %6859
    %6861 = vset.pattern.permute.xlu0 0
    %6862 = vperm.xlu0 %6861, %v6812
    %v6863 = vpop.permute.xlu0 %6862
    %6864 = vset.pattern.permute.xlu0 0
    %6865 = vperm.xlu0 %6864, %v6814
    %v6866 = vpop.permute.xlu0 %6865
    %6867 = vset.pattern.permute.xlu0 0
    %6868 = vperm.xlu0 %6867, %v6816
    %v6869 = vpop.permute.xlu0 %6868
    %6870 = vset.pattern.permute.xlu0 0
    %6871 = vperm.xlu0 %6870, %v6818
    %v6872 = vpop.permute.xlu0 %6871
    %6873 = vset.pattern.permute.xlu0 0
    %6874 = vperm.xlu0 %6873, %v6820
    %v6875 = vpop.permute.xlu0 %6874
    %6876 = vset.pattern.permute.xlu0 0
    %6877 = vperm.xlu0 %6876, %v6822
    %v6878 = vpop.permute.xlu0 %6877
    %6879 = vset.pattern.permute.xlu0 0
    %6880 = vperm.xlu0 %6879, %v6824
    %v6881 = vpop.permute.xlu0 %6880
    %6882 = vset.pattern.permute.xlu0 0
    %6883 = vperm.xlu0 %6882, %v6826
    %v6884 = vpop.permute.xlu0 %6883
    %6885 = vset.pattern.permute.xlu0 0
    %6886 = vperm.xlu0 %6885, %v6828
    %v6887 = vpop.permute.xlu0 %6886
    %6888 = vset.pattern.permute.xlu0 0
    %6889 = vperm.xlu0 %6888, %v6830
    %v6890 = vpop.permute.xlu0 %6889
    %6891 = vset.pattern.permute.xlu0 0
    %6892 = vperm.xlu0 %6891, %v6832
    %v6893 = vpop.permute.xlu0 %6892
    %6894 = vset.pattern.permute.xlu0 0
    %6895 = vperm.xlu0 %6894, %v6834
    %v6896 = vpop.permute.xlu0 %6895
    %6897 = vset.pattern.permute.xlu0 0
    %6898 = vperm.xlu0 %6897, %v6836
    %v6899 = vpop.permute.xlu0 %6898
    %6900 = vset.pattern.permute.xlu0 0
    %6901 = vperm.xlu0 %6900, %v6838
    %v6902 = vpop.permute.xlu0 %6901
    %v6903 = vlaneseq
    %v6904 = vshrl.u32 %v6903, 7
    %v6905 = vsub.s32 %v1031, %v6904
    %v6906 = vrot.slane %v6857, %v6905
    %v6907 = vlaneseq
    %v6908 = vshrl.u32 %v6907, 7
    %v6909 = vsub.s32 %v1036, %v6908
    %v6910 = vrot.slane %v6860, %v6909
    %v6911 = vsel %vm1041, %v6910, %v6906
    %v6912 = vlaneseq
    %v6913 = vshrl.u32 %v6912, 7
    %v6914 = vsub.s32 %v1031, %v6913
    %v6915 = vrot.slane %v6863, %v6914
    %v6916 = vlaneseq
    %v6917 = vshrl.u32 %v6916, 7
    %v6918 = vsub.s32 %v1036, %v6917
    %v6919 = vrot.slane %v6866, %v6918
    %v6920 = vsel %vm1041, %v6919, %v6915
    %v6921 = vlaneseq
    %v6922 = vshrl.u32 %v6921, 7
    %v6923 = vsub.s32 %v1031, %v6922
    %v6924 = vrot.slane %v6869, %v6923
    %v6925 = vlaneseq
    %v6926 = vshrl.u32 %v6925, 7
    %v6927 = vsub.s32 %v1036, %v6926
    %v6928 = vrot.slane %v6872, %v6927
    %v6929 = vsel %vm1041, %v6928, %v6924
    %v6930 = vlaneseq
    %v6931 = vshrl.u32 %v6930, 7
    %v6932 = vsub.s32 %v1031, %v6931
    %v6933 = vrot.slane %v6875, %v6932
    %v6934 = vlaneseq
    %v6935 = vshrl.u32 %v6934, 7
    %v6936 = vsub.s32 %v1036, %v6935
    %v6937 = vrot.slane %v6878, %v6936
    %v6938 = vsel %vm1041, %v6937, %v6933
    %v6939 = vlaneseq
    %v6940 = vshrl.u32 %v6939, 7
    %v6941 = vsub.s32 %v1031, %v6940
    %v6942 = vrot.slane %v6881, %v6941
    %v6943 = vlaneseq
    %v6944 = vshrl.u32 %v6943, 7
    %v6945 = vsub.s32 %v1036, %v6944
    %v6946 = vrot.slane %v6884, %v6945
    %v6947 = vsel %vm1041, %v6946, %v6942
    %v6948 = vlaneseq
    %v6949 = vshrl.u32 %v6948, 7
    %v6950 = vsub.s32 %v1031, %v6949
    %v6951 = vrot.slane %v6887, %v6950
    %v6952 = vlaneseq
    %v6953 = vshrl.u32 %v6952, 7
    %v6954 = vsub.s32 %v1036, %v6953
    %v6955 = vrot.slane %v6890, %v6954
    %v6956 = vsel %vm1041, %v6955, %v6951
    %v6957 = vlaneseq
    %v6958 = vshrl.u32 %v6957, 7
    %v6959 = vsub.s32 %v1031, %v6958
    %v6960 = vrot.slane %v6893, %v6959
    %v6961 = vlaneseq
    %v6962 = vshrl.u32 %v6961, 7
    %v6963 = vsub.s32 %v1036, %v6962
    %v6964 = vrot.slane %v6896, %v6963
    %v6965 = vsel %vm1041, %v6964, %v6960
    %v6966 = vlaneseq
    %v6967 = vshrl.u32 %v6966, 7
    %v6968 = vsub.s32 %v1031, %v6967
    %v6969 = vrot.slane %v6899, %v6968
    %v6970 = vlaneseq
    %v6971 = vshrl.u32 %v6970, 7
    %v6972 = vsub.s32 %v1036, %v6971
    %v6973 = vrot.slane %v6902, %v6972
    %v6974 = vsel %vm1041, %v6973, %v6969
    %v6975 = vsel %vm287, %v6920, %v6911
    %v6976 = vsel %vm289, %v6929, %v6975
    %v6977 = vsel %vm291, %v6938, %v6976
    %v6978 = vsel %vm293, %v6947, %v6977
    %v6979 = vsel %vm295, %v6956, %v6978
    %v6980 = vsel %vm297, %v6965, %v6979
    %v6981 = vsel %vm299, %v6974, %v6980
    %v6983 = vsel %vm586, %v6981, 0.0
    %6984 = vadd.xlane.f32.xlu0 %v6983
    %v6985 = vpop.xlane.xlu0 %6984
    %v6986 = vrcp.pop %v6985
    %v6987 = vmul.f32 %v6985, %v6986
    %v6988 = vsub.f32 2.0, %v6987
    %v6989 = vmul.f32 %v6986, %v6988
    %v6991 = vlaneseq
    %v6992 = vshrl.u32 %v6991, 7
    %v6993 = vsub.s32 0, %v6992
    %v6994 = vrot.slane %v6989, %v6993
    %v6995 = vlaneseq
    %v6996 = vshrl.u32 %v6995, 7
    %v6997 = vsub.s32 1, %v6996
    %v6998 = vrot.slane %v6989, %v6997
    %v6999 = vlaneseq
    %v7000 = vshrl.u32 %v6999, 7
    %v7001 = vsub.s32 2, %v7000
    %v7002 = vrot.slane %v6989, %v7001
    %v7003 = vlaneseq
    %v7004 = vshrl.u32 %v7003, 7
    %v7005 = vsub.s32 3, %v7004
    %v7006 = vrot.slane %v6989, %v7005
    %v7007 = vlaneseq
    %v7008 = vshrl.u32 %v7007, 7
    %v7009 = vsub.s32 4, %v7008
    %v7010 = vrot.slane %v6989, %v7009
    %v7011 = vlaneseq
    %v7012 = vshrl.u32 %v7011, 7
    %v7013 = vsub.s32 5, %v7012
    %v7014 = vrot.slane %v6989, %v7013
    %v7015 = vlaneseq
    %v7016 = vshrl.u32 %v7015, 7
    %v7017 = vsub.s32 6, %v7016
    %v7018 = vrot.slane %v6989, %v7017
    %v7019 = vlaneseq
    %v7020 = vshrl.u32 %v7019, 7
    %v7021 = vsub.s32 7, %v7020
    %v7022 = vrot.slane %v6989, %v7021
    %v7031 = vmul.f32 %v6808, %v6994
    %v7032 = vmul.f32 %v6810, %v6994
    %v7033 = vmul.f32 %v6812, %v6998
    %v7034 = vmul.f32 %v6814, %v6998
    %v7035 = vmul.f32 %v6816, %v7002
    %v7036 = vmul.f32 %v6818, %v7002
    %v7037 = vmul.f32 %v6820, %v7006
    %v7038 = vmul.f32 %v6822, %v7006
    %v7039 = vmul.f32 %v6824, %v7010
    %v7040 = vmul.f32 %v6826, %v7010
    %v7041 = vmul.f32 %v6828, %v7014
    %v7042 = vmul.f32 %v6830, %v7014
    %v7043 = vmul.f32 %v6832, %v7018
    %v7044 = vmul.f32 %v6834, %v7018
    %v7045 = vmul.f32 %v6836, %v7022
    %v7046 = vmul.f32 %v6838, %v7022
    %7048 = vset.pattern.permute.xlu0 0
    %7049 = vperm.xlu0 %7048, %v7031
    %v7050 = vpop.permute.xlu0 %7049
    %7053 = vset.pattern.permute.xlu0 0
    %7054 = vperm.xlu0 %7053, %v7032
    %v7055 = vpop.permute.xlu0 %7054
    %7058 = vset.pattern.permute.xlu0 0
    %7059 = vperm.xlu0 %7058, %v7033
    %v7060 = vpop.permute.xlu0 %7059
    %7063 = vset.pattern.permute.xlu0 0
    %7064 = vperm.xlu0 %7063, %v7034
    %v7065 = vpop.permute.xlu0 %7064
    %7068 = vset.pattern.permute.xlu0 0
    %7069 = vperm.xlu0 %7068, %v7035
    %v7070 = vpop.permute.xlu0 %7069
    %7073 = vset.pattern.permute.xlu0 0
    %7074 = vperm.xlu0 %7073, %v7036
    %v7075 = vpop.permute.xlu0 %7074
    %7078 = vset.pattern.permute.xlu0 0
    %7079 = vperm.xlu0 %7078, %v7037
    %v7080 = vpop.permute.xlu0 %7079
    %7083 = vset.pattern.permute.xlu0 0
    %7084 = vperm.xlu0 %7083, %v7038
    %v7085 = vpop.permute.xlu0 %7084
    %7088 = vset.pattern.permute.xlu0 0
    %7089 = vperm.xlu0 %7088, %v7039
    %v7090 = vpop.permute.xlu0 %7089
    %7093 = vset.pattern.permute.xlu0 0
    %7094 = vperm.xlu0 %7093, %v7040
    %v7095 = vpop.permute.xlu0 %7094
    %7098 = vset.pattern.permute.xlu0 0
    %7099 = vperm.xlu0 %7098, %v7041
    %v7100 = vpop.permute.xlu0 %7099
    %7103 = vset.pattern.permute.xlu0 0
    %7104 = vperm.xlu0 %7103, %v7042
    %v7105 = vpop.permute.xlu0 %7104
    %7108 = vset.pattern.permute.xlu0 0
    %7109 = vperm.xlu0 %7108, %v7043
    %v7110 = vpop.permute.xlu0 %7109
    %7113 = vset.pattern.permute.xlu0 0
    %7114 = vperm.xlu0 %7113, %v7044
    %v7115 = vpop.permute.xlu0 %7114
    %7118 = vset.pattern.permute.xlu0 0
    %7119 = vperm.xlu0 %7118, %v7045
    %v7120 = vpop.permute.xlu0 %7119
    %7123 = vset.pattern.permute.xlu0 0
    %7124 = vperm.xlu0 %7123, %v7046
    %v7125 = vpop.permute.xlu0 %7124
    %v7127 = vmul.f32 %v7050, %v154
    %v7128 = vmul.f32 %v7055, %v155
    %v7129 = vmul.f32 %v7060, %v156
    %v7130 = vmul.f32 %v7065, %v157
    %v7131 = vmul.f32 %v7070, %v158
    %v7132 = vmul.f32 %v7075, %v159
    %v7133 = vmul.f32 %v7080, %v160
    %v7134 = vmul.f32 %v7085, %v161
    %v7135 = vmul.f32 %v7090, %v162
    %v7136 = vmul.f32 %v7095, %v163
    %v7137 = vmul.f32 %v7100, %v164
    %v7138 = vmul.f32 %v7105, %v165
    %v7139 = vmul.f32 %v7110, %v166
    %v7140 = vmul.f32 %v7115, %v167
    %v7141 = vmul.f32 %v7120, %v168
    %v7142 = vmul.f32 %v7125, %v169
    %v7143 = vsel %vm186, %v7127, 0.0
    %v7144 = vsel %vm186, %v7128, 0.0
    %v7145 = vadd.f32 %v7143, %v7144
    %v7146 = vrot.slane %v7145, 4
    %v7147 = vadd.f32 %v7145, %v7146
    %v7148 = vrot.slane %v7147, 2
    %v7149 = vadd.f32 %v7147, %v7148
    %v7150 = vrot.slane %v7149, 1
    %v7151 = vadd.f32 %v7149, %v7150
    %v7152 = vsel %vm186, %v7129, 0.0
    %v7153 = vsel %vm186, %v7130, 0.0
    %v7154 = vadd.f32 %v7152, %v7153
    %v7155 = vrot.slane %v7154, 4
    %v7156 = vadd.f32 %v7154, %v7155
    %v7157 = vrot.slane %v7156, 2
    %v7158 = vadd.f32 %v7156, %v7157
    %v7159 = vrot.slane %v7158, 1
    %v7160 = vadd.f32 %v7158, %v7159
    %v7161 = vsel %vm186, %v7131, 0.0
    %v7162 = vsel %vm186, %v7132, 0.0
    %v7163 = vadd.f32 %v7161, %v7162
    %v7164 = vrot.slane %v7163, 4
    %v7165 = vadd.f32 %v7163, %v7164
    %v7166 = vrot.slane %v7165, 2
    %v7167 = vadd.f32 %v7165, %v7166
    %v7168 = vrot.slane %v7167, 1
    %v7169 = vadd.f32 %v7167, %v7168
    %v7170 = vsel %vm186, %v7133, 0.0
    %v7171 = vsel %vm186, %v7134, 0.0
    %v7172 = vadd.f32 %v7170, %v7171
    %v7173 = vrot.slane %v7172, 4
    %v7174 = vadd.f32 %v7172, %v7173
    %v7175 = vrot.slane %v7174, 2
    %v7176 = vadd.f32 %v7174, %v7175
    %v7177 = vrot.slane %v7176, 1
    %v7178 = vadd.f32 %v7176, %v7177
    %v7179 = vsel %vm186, %v7135, 0.0
    %v7180 = vsel %vm186, %v7136, 0.0
    %v7181 = vadd.f32 %v7179, %v7180
    %v7182 = vrot.slane %v7181, 4
    %v7183 = vadd.f32 %v7181, %v7182
    %v7184 = vrot.slane %v7183, 2
    %v7185 = vadd.f32 %v7183, %v7184
    %v7186 = vrot.slane %v7185, 1
    %v7187 = vadd.f32 %v7185, %v7186
    %v7188 = vsel %vm186, %v7137, 0.0
    %v7189 = vsel %vm186, %v7138, 0.0
    %v7190 = vadd.f32 %v7188, %v7189
    %v7191 = vrot.slane %v7190, 4
    %v7192 = vadd.f32 %v7190, %v7191
    %v7193 = vrot.slane %v7192, 2
    %v7194 = vadd.f32 %v7192, %v7193
    %v7195 = vrot.slane %v7194, 1
    %v7196 = vadd.f32 %v7194, %v7195
    %v7197 = vsel %vm186, %v7139, 0.0
    %v7198 = vsel %vm186, %v7140, 0.0
    %v7199 = vadd.f32 %v7197, %v7198
    %v7200 = vrot.slane %v7199, 4
    %v7201 = vadd.f32 %v7199, %v7200
    %v7202 = vrot.slane %v7201, 2
    %v7203 = vadd.f32 %v7201, %v7202
    %v7204 = vrot.slane %v7203, 1
    %v7205 = vadd.f32 %v7203, %v7204
    %v7206 = vsel %vm186, %v7141, 0.0
    %v7207 = vsel %vm186, %v7142, 0.0
    %v7208 = vadd.f32 %v7206, %v7207
    %v7209 = vrot.slane %v7208, 4
    %v7210 = vadd.f32 %v7208, %v7209
    %v7211 = vrot.slane %v7210, 2
    %v7212 = vadd.f32 %v7210, %v7211
    %v7213 = vrot.slane %v7212, 1
    %v7214 = vadd.f32 %v7212, %v7213
    %v7223 = vsel %vm287, %v7160, %v7151
    %v7224 = vsel %vm289, %v7169, %v7223
    %v7225 = vsel %vm291, %v7178, %v7224
    %v7226 = vsel %vm293, %v7187, %v7225
    %v7227 = vsel %vm295, %v7196, %v7226
    %v7228 = vsel %vm297, %v7205, %v7227
    %v7229 = vsel %vm299, %v7214, %v7228
    %v7230 = vsel %vm186, %v7229, 0
    %7232 = vmatprep.subr.mxu0 0.0
    %7233 = vmatpush1.msra.mxu0 0.0
    %7234 = vmatprep.subr.mxu0 0.0
    %7235 = vmatpush1.msra.mxu0 0.0
    %7236 = vmatprep.subr.mxu0 0.0
    %7237 = vmatpush1.msra.mxu0 0.0
    %7238 = vmatprep.subr.mxu0 0.0
    %7239 = vmatpush1.msra.mxu0 0.0
    %7240 = vmatprep.subr.mxu0 0.0
    %7241 = vmatpush1.msra.mxu0 0.0
    %7242 = vmatprep.subr.mxu0 0.0
    %7243 = vmatpush1.msra.mxu0 0.0
    %7244 = vmatprep.subr.mxu0 0.0
    %7245 = vmatpush1.msra.mxu0 0.0
    %7246 = vmatprep.subr.mxu0 0.0
    %7247 = vmatpush1.msra.mxu0 0.0
    %7248 = vmatprep.subr.mxu0 0.0
    %7249 = vmatpush1.msra.mxu0 0.0
    %7250 = vmatprep.subr.mxu0 0.0
    %7251 = vmatpush1.msra.mxu0 0.0
    %7252 = vmatprep.subr.mxu0 0.0
    %7253 = vmatpush1.msra.mxu0 0.0
    %7254 = vmatprep.subr.mxu0 0.0
    %7255 = vmatpush1.msra.mxu0 0.0
    %7256 = vmatprep.subr.mxu0 0.0
    %7257 = vmatpush1.msra.mxu0 %v181
    %7258 = vmatprep.subr.mxu0 0.0
    %7259 = vmatpush1.msra.mxu0 %v180
    %7260 = vmatprep.subr.mxu0 0.0
    %7261 = vmatpush1.msra.mxu0 %v179
    %7262 = vmatprep.subr.mxu0 0.0
    %7263 = vmatpush1.msra.mxu0 %v178
    %7264 = vmatprep.subr.mxu0 0.0
    %7265 = vmatpush2.msra.mxu0 0.0
    %7266 = vmatprep.subr.mxu0 0.0
    %7267 = vmatpush2.msra.mxu0 0.0
    %7268 = vmatprep.subr.mxu0 0.0
    %7269 = vmatpush2.msra.mxu0 0.0
    %7270 = vmatprep.subr.mxu0 0.0
    %7271 = vmatpush2.msra.mxu0 0.0
    %7272 = vmatprep.subr.mxu0 0.0
    %7273 = vmatpush2.msra.mxu0 0.0
    %7274 = vmatprep.subr.mxu0 0.0
    %7275 = vmatpush2.msra.mxu0 0.0
    %7276 = vmatprep.subr.mxu0 0.0
    %7277 = vmatpush2.msra.mxu0 0.0
    %7278 = vmatprep.subr.mxu0 0.0
    %7279 = vmatpush2.msra.mxu0 0.0
    %7280 = vmatprep.subr.mxu0 0.0
    %7281 = vmatpush2.msra.mxu0 0.0
    %7282 = vmatprep.subr.mxu0 0.0
    %7283 = vmatpush2.msra.mxu0 0.0
    %7284 = vmatprep.subr.mxu0 0.0
    %7285 = vmatpush2.msra.mxu0 0.0
    %7286 = vmatprep.subr.mxu0 0.0
    %7287 = vmatpush2.msra.mxu0 0.0
    %7288 = vmatprep.subr.mxu0 0.0
    %7289 = vmatpush2.msra.mxu0 0.0
    %7290 = vmatprep.subr.mxu0 0.0
    %7291 = vmatpush2.msra.mxu0 0.0
    %7292 = vmatprep.subr.mxu0 0.0
    %7293 = vmatpush2.msra.mxu0 0.0
    %7294 = vmatprep.subr.mxu0 0.0
    %7295 = vmatpush2.msra.mxu0 0.0
    %7296 = vmatprep.mubr.f32.mxu0 0.0
    %7297 = vmatmul.mubr.f32.gmra.mxu0 %v7230
    %v7298 = vpop.f32.mrf.mxu0
    %v7299 = vadd.f32 0.0, %v7298
    %v7300 = vpop.f32.mrf.mxu0
    %7301 = vdwg.mxu0
    %v7303 = vrot.slane %v7299, 4
    %v7304 = vrot.slane %v7299, 5
    %v7305 = vrot.slane %v7299, 6
    %v7306 = vrot.slane %v7299, 7
    %v7307 = vrot.slane %v7299, 1
    %v7308 = vrot.slane %v7299, 2
    %v7309 = vrot.slane %v7299, 3
    %v7318 = vadd.f32 %v678, %v7303
    %v7319 = vadd.f32 %v683, %v7304
    %v7320 = vadd.f32 %v688, %v7305
    %v7321 = vadd.f32 %v693, %v7306
    %v7322 = vadd.f32 %v698, %v7299
    %v7323 = vadd.f32 %v703, %v7307
    %v7324 = vadd.f32 %v708, %v7308
    %v7325 = vadd.f32 %v713, %v7309
    %v7326 = vrot.slane %v6240, 3
    %v7327 = vrot.slane %v6241, 2
    %v7328 = vsel %vm287, %v7327, %v7326
    %v7329 = vrot.slane %v6242, 1
    %v7330 = vsel %vm289, %v7329, %v7328
    %v7331 = vsel %vm291, %v6243, %v7330
    %v7332 = vrot.slane %v6244, 7
    %v7333 = vsel %vm293, %v7332, %v7331
    %v7334 = vrot.slane %v6245, 6
    %v7335 = vsel %vm295, %v7334, %v7333
    %v7336 = vrot.slane %v6246, 5
    %v7337 = vsel %vm297, %v7336, %v7335
    %v7338 = vrot.slane %v6247, 4
    %v7339 = vsel %vm299, %v7338, %v7337
    %7340 = vrot.lane.b32.xlu0 %v7339, 32
    %v7341 = vpop.permute.xlu0 %7340
    %v7342 = vsel %vm186, %v7341, 0
    %7344 = vmatprep.subr.mxu0 0.0
    %7345 = vmatpush1.msra.mxu0 0.0
    %7346 = vmatprep.subr.mxu0 0.0
    %7347 = vmatpush1.msra.mxu0 0.0
    %7348 = vmatprep.subr.mxu0 0.0
    %7349 = vmatpush1.msra.mxu0 0.0
    %7350 = vmatprep.subr.mxu0 0.0
    %7351 = vmatpush1.msra.mxu0 0.0
    %7352 = vmatprep.subr.mxu0 0.0
    %7353 = vmatpush1.msra.mxu0 0.0
    %7354 = vmatprep.subr.mxu0 0.0
    %7355 = vmatpush1.msra.mxu0 0.0
    %7356 = vmatprep.subr.mxu0 0.0
    %7357 = vmatpush1.msra.mxu0 0.0
    %7358 = vmatprep.subr.mxu0 0.0
    %7359 = vmatpush1.msra.mxu0 0.0
    %7360 = vmatprep.subr.mxu0 0.0
    %7361 = vmatpush1.msra.mxu0 0.0
    %7362 = vmatprep.subr.mxu0 0.0
    %7363 = vmatpush1.msra.mxu0 0.0
    %7364 = vmatprep.subr.mxu0 0.0
    %7365 = vmatpush1.msra.mxu0 0.0
    %7366 = vmatprep.subr.mxu0 0.0
    %7367 = vmatpush1.msra.mxu0 0.0
    %7368 = vmatprep.subr.mxu0 0.0
    %7369 = vmatpush1.msra.mxu0 %v185
    %7370 = vmatprep.subr.mxu0 0.0
    %7371 = vmatpush1.msra.mxu0 %v184
    %7372 = vmatprep.subr.mxu0 0.0
    %7373 = vmatpush1.msra.mxu0 %v183
    %7374 = vmatprep.subr.mxu0 0.0
    %7375 = vmatpush1.msra.mxu0 %v182
    %7376 = vmatprep.subr.mxu0 0.0
    %7377 = vmatpush2.msra.mxu0 0.0
    %7378 = vmatprep.subr.mxu0 0.0
    %7379 = vmatpush2.msra.mxu0 0.0
    %7380 = vmatprep.subr.mxu0 0.0
    %7381 = vmatpush2.msra.mxu0 0.0
    %7382 = vmatprep.subr.mxu0 0.0
    %7383 = vmatpush2.msra.mxu0 0.0
    %7384 = vmatprep.subr.mxu0 0.0
    %7385 = vmatpush2.msra.mxu0 0.0
    %7386 = vmatprep.subr.mxu0 0.0
    %7387 = vmatpush2.msra.mxu0 0.0
    %7388 = vmatprep.subr.mxu0 0.0
    %7389 = vmatpush2.msra.mxu0 0.0
    %7390 = vmatprep.subr.mxu0 0.0
    %7391 = vmatpush2.msra.mxu0 0.0
    %7392 = vmatprep.subr.mxu0 0.0
    %7393 = vmatpush2.msra.mxu0 0.0
    %7394 = vmatprep.subr.mxu0 0.0
    %7395 = vmatpush2.msra.mxu0 0.0
    %7396 = vmatprep.subr.mxu0 0.0
    %7397 = vmatpush2.msra.mxu0 0.0
    %7398 = vmatprep.subr.mxu0 0.0
    %7399 = vmatpush2.msra.mxu0 0.0
    %7400 = vmatprep.subr.mxu0 0.0
    %7401 = vmatpush2.msra.mxu0 0.0
    %7402 = vmatprep.subr.mxu0 0.0
    %7403 = vmatpush2.msra.mxu0 0.0
    %7404 = vmatprep.subr.mxu0 0.0
    %7405 = vmatpush2.msra.mxu0 0.0
    %7406 = vmatprep.subr.mxu0 0.0
    %7407 = vmatpush2.msra.mxu0 0.0
    %7408 = vmatprep.mubr.f32.mxu0 0.0
    %7409 = vmatmul.mubr.f32.gmra.mxu0 %v7342
    %v7410 = vpop.f32.mrf.mxu0
    %v7411 = vadd.f32 0.0, %v7410
    %v7412 = vpop.f32.mrf.mxu0
    %7413 = vdwg.mxu0
    %v7415 = vrot.slane %v7411, 4
    %v7416 = vrot.slane %v7411, 5
    %v7417 = vrot.slane %v7411, 6
    %v7418 = vrot.slane %v7411, 7
    %v7419 = vrot.slane %v7411, 1
    %v7420 = vrot.slane %v7411, 2
    %v7421 = vrot.slane %v7411, 3
    %v7430 = vadd.f32 %v7318, %v7415
    %v7431 = vadd.f32 %v7319, %v7416
    %v7432 = vadd.f32 %v7320, %v7417
    %v7433 = vadd.f32 %v7321, %v7418
    %v7434 = vadd.f32 %v7322, %v7411
    %v7435 = vadd.f32 %v7323, %v7419
    %v7436 = vadd.f32 %v7324, %v7420
    %v7437 = vadd.f32 %v7325, %v7421
    %v7438 = vxor.u32 %v7430, 2147483648
    %v7439 = vxor.u32 %v7431, 2147483648
    %v7440 = vxor.u32 %v7432, 2147483648
    %v7441 = vxor.u32 %v7433, 2147483648
    %v7442 = vxor.u32 %v7434, 2147483648
    %v7443 = vxor.u32 %v7435, 2147483648
    %v7444 = vxor.u32 %v7436, 2147483648
    %v7445 = vxor.u32 %v7437, 2147483648
    %v7446 = vmul.f32 %v7438, 1.442695
    %v7447 = vpow.pop %v7446
    %v7448 = vmul.f32 %v7439, 1.442695
    %v7449 = vpow.pop %v7448
    %v7450 = vmul.f32 %v7440, 1.442695
    %v7451 = vpow.pop %v7450
    %v7452 = vmul.f32 %v7441, 1.442695
    %v7453 = vpow.pop %v7452
    %v7454 = vmul.f32 %v7442, 1.442695
    %v7455 = vpow.pop %v7454
    %v7456 = vmul.f32 %v7443, 1.442695
    %v7457 = vpow.pop %v7456
    %v7458 = vmul.f32 %v7444, 1.442695
    %v7459 = vpow.pop %v7458
    %v7460 = vmul.f32 %v7445, 1.442695
    %v7461 = vpow.pop %v7460
    %v7462 = vadd.f32 %v7447, 1.0
    %v7463 = vadd.f32 %v7449, 1.0
    %v7464 = vadd.f32 %v7451, 1.0
    %v7465 = vadd.f32 %v7453, 1.0
    %v7466 = vadd.f32 %v7455, 1.0
    %v7467 = vadd.f32 %v7457, 1.0
    %v7468 = vadd.f32 %v7459, 1.0
    %v7469 = vadd.f32 %v7461, 1.0
    %v7470 = vrcp.pop %v7462
    %v7471 = vmul.f32 1.0, %v7470
    %v7472 = vrcp.pop %v7463
    %v7473 = vmul.f32 1.0, %v7472
    %v7474 = vrcp.pop %v7464
    %v7475 = vmul.f32 1.0, %v7474
    %v7476 = vrcp.pop %v7465
    %v7477 = vmul.f32 1.0, %v7476
    %v7478 = vrcp.pop %v7466
    %v7479 = vmul.f32 1.0, %v7478
    %v7480 = vrcp.pop %v7467
    %v7481 = vmul.f32 1.0, %v7480
    %v7482 = vrcp.pop %v7468
    %v7483 = vmul.f32 1.0, %v7482
    %v7484 = vrcp.pop %v7469
    %v7485 = vmul.f32 1.0, %v7484
    %v7486 = vtanh.pop %v7430
    %v7487 = vtanh.pop %v7431
    %v7488 = vtanh.pop %v7432
    %v7489 = vtanh.pop %v7433
    %v7490 = vtanh.pop %v7434
    %v7491 = vtanh.pop %v7435
    %v7492 = vtanh.pop %v7436
    %v7493 = vtanh.pop %v7437
    %v7502 = vrot.slane %v6192, 7
    %v7503 = vrot.slane %v6193, 7
    %v7504 = vrot.slane %v6194, 7
    %v7505 = vrot.slane %v6195, 7
    %v7506 = vrot.slane %v6196, 7
    %v7507 = vrot.slane %v6197, 7
    %v7508 = vrot.slane %v6198, 7
    %v7509 = vrot.slane %v6199, 7
    %v7518 = vmul.f32 %v7471, %v7502
    %v7519 = vmul.f32 %v7473, %v7503
    %v7520 = vmul.f32 %v7475, %v7504
    %v7521 = vmul.f32 %v7477, %v7505
    %v7522 = vmul.f32 %v7479, %v7506
    %v7523 = vmul.f32 %v7481, %v7507
    %v7524 = vmul.f32 %v7483, %v7508
    %v7525 = vmul.f32 %v7485, %v7509
    %7534 = vrot.lane.b32.xlu0 %v7486, 64
    %v7535 = vpop.permute.xlu0 %7534
    %7536 = vrot.lane.b32.xlu0 %v7487, 64
    %v7537 = vpop.permute.xlu0 %7536
    %7538 = vrot.lane.b32.xlu0 %v7488, 64
    %v7539 = vpop.permute.xlu0 %7538
    %7540 = vrot.lane.b32.xlu0 %v7489, 64
    %v7541 = vpop.permute.xlu0 %7540
    %7542 = vrot.lane.b32.xlu0 %v7490, 64
    %v7543 = vpop.permute.xlu0 %7542
    %7544 = vrot.lane.b32.xlu0 %v7491, 64
    %v7545 = vpop.permute.xlu0 %7544
    %7546 = vrot.lane.b32.xlu0 %v7492, 64
    %v7547 = vpop.permute.xlu0 %7546
    %7548 = vrot.lane.b32.xlu0 %v7493, 64
    %v7549 = vpop.permute.xlu0 %7548
    %v7558 = vmul.f32 %v7471, %v7535
    %v7559 = vmul.f32 %v7473, %v7537
    %v7560 = vmul.f32 %v7475, %v7539
    %v7561 = vmul.f32 %v7477, %v7541
    %v7562 = vmul.f32 %v7479, %v7543
    %v7563 = vmul.f32 %v7481, %v7545
    %v7564 = vmul.f32 %v7483, %v7547
    %v7565 = vmul.f32 %v7485, %v7549
    %7574 = vrot.lane.b32.xlu0 %v7558, 32
    %v7575 = vpop.permute.xlu0 %7574
    %7576 = vrot.lane.b32.xlu0 %v7559, 32
    %v7577 = vpop.permute.xlu0 %7576
    %7578 = vrot.lane.b32.xlu0 %v7560, 32
    %v7579 = vpop.permute.xlu0 %7578
    %7580 = vrot.lane.b32.xlu0 %v7561, 32
    %v7581 = vpop.permute.xlu0 %7580
    %7582 = vrot.lane.b32.xlu0 %v7562, 32
    %v7583 = vpop.permute.xlu0 %7582
    %7584 = vrot.lane.b32.xlu0 %v7563, 32
    %v7585 = vpop.permute.xlu0 %7584
    %7586 = vrot.lane.b32.xlu0 %v7564, 32
    %v7587 = vpop.permute.xlu0 %7586
    %7588 = vrot.lane.b32.xlu0 %v7565, 32
    %v7589 = vpop.permute.xlu0 %7588
    %v7598 = vadd.f32 %v7518, %v7575
    %v7599 = vadd.f32 %v7519, %v7577
    %v7600 = vadd.f32 %v7520, %v7579
    %v7601 = vadd.f32 %v7521, %v7581
    %v7602 = vadd.f32 %v7522, %v7583
    %v7603 = vadd.f32 %v7523, %v7585
    %v7604 = vadd.f32 %v7524, %v7587
    %v7605 = vadd.f32 %v7525, %v7589
    %v7606 = vtanh.pop %v7598
    %v7607 = vtanh.pop %v7599
    %v7608 = vtanh.pop %v7600
    %v7609 = vtanh.pop %v7601
    %v7610 = vtanh.pop %v7602
    %v7611 = vtanh.pop %v7603
    %v7612 = vtanh.pop %v7604
    %v7613 = vtanh.pop %v7605
    %7622 = vrot.lane.b32.xlu0 %v7606, 64
    %v7623 = vpop.permute.xlu0 %7622
    %7624 = vrot.lane.b32.xlu0 %v7607, 64
    %v7625 = vpop.permute.xlu0 %7624
    %7626 = vrot.lane.b32.xlu0 %v7608, 64
    %v7627 = vpop.permute.xlu0 %7626
    %7628 = vrot.lane.b32.xlu0 %v7609, 64
    %v7629 = vpop.permute.xlu0 %7628
    %7630 = vrot.lane.b32.xlu0 %v7610, 64
    %v7631 = vpop.permute.xlu0 %7630
    %7632 = vrot.lane.b32.xlu0 %v7611, 64
    %v7633 = vpop.permute.xlu0 %7632
    %7634 = vrot.lane.b32.xlu0 %v7612, 64
    %v7635 = vpop.permute.xlu0 %7634
    %7636 = vrot.lane.b32.xlu0 %v7613, 64
    %v7637 = vpop.permute.xlu0 %7636
    %v7646 = vmul.f32 %v7471, %v7623
    %v7647 = vmul.f32 %v7473, %v7625
    %v7648 = vmul.f32 %v7475, %v7627
    %v7649 = vmul.f32 %v7477, %v7629
    %v7650 = vmul.f32 %v7479, %v7631
    %v7651 = vmul.f32 %v7481, %v7633
    %v7652 = vmul.f32 %v7483, %v7635
    %v7653 = vmul.f32 %v7485, %v7637
    %v7662 = vrot.slane %v7647, 7
    %v7663 = vsel %vm295, %v7662, %v7646
    %v7664 = vrot.slane %v7648, 6
    %v7665 = vsel %vm297, %v7664, %v7663
    %v7666 = vrot.slane %v7649, 5
    %v7667 = vsel %vm299, %v7666, %v7665
    %v7668 = vrot.slane %v7650, 4
    %v7669 = vrot.slane %v7651, 3
    %v7670 = vsel %vm287, %v7669, %v7668
    %v7671 = vrot.slane %v7652, 2
    %v7672 = vsel %vm289, %v7671, %v7670
    %v7673 = vrot.slane %v7653, 1
    %v7674 = vsel %vm291, %v7673, %v7672
    %7675 = vrot.lane.b32.xlu0 %v7667, 32
    %v7676 = vpop.permute.xlu0 %7675
    %7677 = vrot.lane.b32.xlu0 %v7674, 32
    %v7678 = vpop.permute.xlu0 %7677
    %v7681 = vsel %vm295, %v7160, %v7151
    %v7682 = vsel %vm297, %v7169, %v7681
    %v7683 = vsel %vm299, %v7178, %v7682
    %v7684 = vsel %vm287, %v7196, %v7187
    %v7685 = vsel %vm289, %v7205, %v7684
    %v7686 = vsel %vm291, %v7214, %v7685
    %7687 = vrot.lane.b32.xlu0 %v7683, 32
    %v7688 = vpop.permute.xlu0 %7687
    %7689 = vrot.lane.b32.xlu0 %v7686, 32
    %v7690 = vpop.permute.xlu0 %7689
    %v7693 = vsel %vm295, %v2042, %v170
    %v7694 = vsel %vm297, %v2044, %v7693
    %v7695 = vsel %vm299, %v2046, %v7694
    %v7696 = vsel %vm287, %v2050, %v2048
    %v7697 = vsel %vm289, %v2052, %v7696
    %v7698 = vsel %vm291, %v2054, %v7697
    %7699 = vrot.lane.b32.xlu0 %v7695, 64
    %v7700 = vpop.permute.xlu0 %7699
    %7701 = vrot.lane.b32.xlu0 %v7698, 64
    %v7702 = vpop.permute.xlu0 %7701
    %v7705 = vsel %vm186, %v7676, %v7688
    %v7706 = vsel %vm186, %v7678, %v7690
    %v7707 = vsel %vm2060, %v7705, %v7700
    %v7708 = vsel %vm2060, %v7706, %v7702
    %v7709 = vsel %vm2062, %v7707, 0.0
    %v7710 = vsel %vm2062, %v7708, 0.0
    %v7713 = vcombine.high %v7709, %v7709
    %v7715 = vunpack.c.l.s4 1966171168
    %v7716 = vunpack.c.0.s8 %v7715
    %v7717 = vlaneseq
    %v7718 = vshrl.u32 %v7717, 7
    %v7719 = vsub.s32 %v7716, %v7718
    %v7720 = vrot.slane %v7713, %v7719
    %v7721 = vcombine.high %v7720, %v7720
    %v7723 = vunpack.c.l.s4 1966171168
    %v7724 = vunpack.c.0.s8 %v7723
    %v7725 = vlaneseq
    %v7726 = vshrl.u32 %v7725, 7
    %v7727 = vsub.s32 %v7724, %v7726
    %v7728 = vrot.slane %v7720, %v7727
    %v7730 = vunpack.c.l.s4 1966171168
    %v7731 = vunpack.c.0.s8 %v7730
    %v7732 = vlaneseq
    %v7733 = vshrl.u32 %v7732, 7
    %v7734 = vsub.s32 %v7731, %v7733
    %v7735 = vrot.slane %v7721, %v7734
    %v7736 = vcombine.high %v7728, %v7728
    %v7737 = vcombine.high %v7735, %v7735
    %v7739 = vunpack.c.l.s4 1966171168
    %v7740 = vunpack.c.0.s8 %v7739
    %v7741 = vlaneseq
    %v7742 = vshrl.u32 %v7741, 7
    %v7743 = vsub.s32 %v7740, %v7742
    %v7744 = vrot.slane %v7710, %v7743
    %v7745 = vcombine.high %v7744, %v7744
    %v7747 = vunpack.c.l.s4 1966171168
    %v7748 = vunpack.c.0.s8 %v7747
    %v7749 = vlaneseq
    %v7750 = vshrl.u32 %v7749, 7
    %v7751 = vsub.s32 %v7748, %v7750
    %v7752 = vrot.slane %v7744, %v7751
    %v7754 = vunpack.c.l.s4 1966171168
    %v7755 = vunpack.c.0.s8 %v7754
    %v7756 = vlaneseq
    %v7757 = vshrl.u32 %v7756, 7
    %v7758 = vsub.s32 %v7755, %v7757
    %v7759 = vrot.slane %v7745, %v7758
    %v7760 = vcombine.high %v7752, %v7752
    %v7761 = vcombine.high %v7759, %v7759
    %7770 = vst [vmem:[#allocation2 + $0x4] sm:$0x1] %v7728
    %7771 = vst [vmem:[#allocation2 + $0xc] sm:$0x1] %v7735
    %7772 = vst [vmem:[#allocation2 + $0x14] sm:$0x1] %v7736
    %7773 = vst [vmem:[#allocation2 + $0x1c] sm:$0x1] %v7737
    %7774 = vst [vmem:[#allocation2 + $0x24] sm:$0x1] %v7752
    %7775 = vst [vmem:[#allocation2 + $0x2c] sm:$0x1] %v7759
    %7776 = vst [vmem:[#allocation2 + $0x34] sm:$0x1] %v7760
    %7777 = vst [vmem:[#allocation2 + $0x3c] sm:$0x1] %v7761
    %v7778 = vlaneseq
    %v7779 = vshrl.u32 %v7778, 7
    %v7780 = vsub.s32 %v1031, %v7779
    %v7781 = vrot.slane %v7050, %v7780
    %v7782 = vlaneseq
    %v7783 = vshrl.u32 %v7782, 7
    %v7784 = vsub.s32 %v1036, %v7783
    %v7785 = vrot.slane %v7055, %v7784
    %v7786 = vsel %vm1041, %v7785, %v7781
    %v7787 = vlaneseq
    %v7788 = vshrl.u32 %v7787, 7
    %v7789 = vsub.s32 %v1031, %v7788
    %v7790 = vrot.slane %v7060, %v7789
    %v7791 = vlaneseq
    %v7792 = vshrl.u32 %v7791, 7
    %v7793 = vsub.s32 %v1036, %v7792
    %v7794 = vrot.slane %v7065, %v7793
    %v7795 = vsel %vm1041, %v7794, %v7790
    %v7796 = vlaneseq
    %v7797 = vshrl.u32 %v7796, 7
    %v7798 = vsub.s32 %v1031, %v7797
    %v7799 = vrot.slane %v7070, %v7798
    %v7800 = vlaneseq
    %v7801 = vshrl.u32 %v7800, 7
    %v7802 = vsub.s32 %v1036, %v7801
    %v7803 = vrot.slane %v7075, %v7802
    %v7804 = vsel %vm1041, %v7803, %v7799
    %v7805 = vlaneseq
    %v7806 = vshrl.u32 %v7805, 7
    %v7807 = vsub.s32 %v1031, %v7806
    %v7808 = vrot.slane %v7080, %v7807
    %v7809 = vlaneseq
    %v7810 = vshrl.u32 %v7809, 7
    %v7811 = vsub.s32 %v1036, %v7810
    %v7812 = vrot.slane %v7085, %v7811
    %v7813 = vsel %vm1041, %v7812, %v7808
    %v7814 = vlaneseq
    %v7815 = vshrl.u32 %v7814, 7
    %v7816 = vsub.s32 %v1031, %v7815
    %v7817 = vrot.slane %v7090, %v7816
    %v7818 = vlaneseq
    %v7819 = vshrl.u32 %v7818, 7
    %v7820 = vsub.s32 %v1036, %v7819
    %v7821 = vrot.slane %v7095, %v7820
    %v7822 = vsel %vm1041, %v7821, %v7817
    %v7823 = vlaneseq
    %v7824 = vshrl.u32 %v7823, 7
    %v7825 = vsub.s32 %v1031, %v7824
    %v7826 = vrot.slane %v7100, %v7825
    %v7827 = vlaneseq
    %v7828 = vshrl.u32 %v7827, 7
    %v7829 = vsub.s32 %v1036, %v7828
    %v7830 = vrot.slane %v7105, %v7829
    %v7831 = vsel %vm1041, %v7830, %v7826
    %v7832 = vlaneseq
    %v7833 = vshrl.u32 %v7832, 7
    %v7834 = vsub.s32 %v1031, %v7833
    %v7835 = vrot.slane %v7110, %v7834
    %v7836 = vlaneseq
    %v7837 = vshrl.u32 %v7836, 7
    %v7838 = vsub.s32 %v1036, %v7837
    %v7839 = vrot.slane %v7115, %v7838
    %v7840 = vsel %vm1041, %v7839, %v7835
    %v7841 = vlaneseq
    %v7842 = vshrl.u32 %v7841, 7
    %v7843 = vsub.s32 %v1031, %v7842
    %v7844 = vrot.slane %v7120, %v7843
    %v7845 = vlaneseq
    %v7846 = vshrl.u32 %v7845, 7
    %v7847 = vsub.s32 %v1036, %v7846
    %v7848 = vrot.slane %v7125, %v7847
    %v7849 = vsel %vm1041, %v7848, %v7844
    %7858 = vst.msk [vmem:[#allocation18 + $0x4] sm:$0x1] %vm2210, %v7786
    %7859 = vst.msk [vmem:[#allocation18 + $0xc] sm:$0x1] %vm2210, %v7795
    %7860 = vst.msk [vmem:[#allocation18 + $0x14] sm:$0x1] %vm2210, %v7804
    %7861 = vst.msk [vmem:[#allocation18 + $0x1c] sm:$0x1] %vm2210, %v7813
    %7862 = vst.msk [vmem:[#allocation18 + $0x24] sm:$0x1] %vm2210, %v7822
    %7863 = vst.msk [vmem:[#allocation18 + $0x2c] sm:$0x1] %vm2210, %v7831
    %7864 = vst.msk [vmem:[#allocation18 + $0x34] sm:$0x1] %vm2210, %v7840
    %7865 = vst.msk [vmem:[#allocation18 + $0x3c] sm:$0x1] %vm2210, %v7849
    %v7866 = vlaneseq
    %v7867 = vshrl.u32 %v7866, 7
    %v7868 = vsub.s32 4, %v7867
    %v7869 = vrot.slane %v7646, %v7868
    %v7870 = vlaneseq
    %v7871 = vshrl.u32 %v7870, 7
    %v7872 = vsub.s32 4, %v7871
    %v7873 = vrot.slane %v7647, %v7872
    %v7874 = vlaneseq
    %v7875 = vshrl.u32 %v7874, 7
    %v7876 = vsub.s32 4, %v7875
    %v7877 = vrot.slane %v7648, %v7876
    %v7878 = vlaneseq
    %v7879 = vshrl.u32 %v7878, 7
    %v7880 = vsub.s32 4, %v7879
    %v7881 = vrot.slane %v7649, %v7880
    %v7882 = vlaneseq
    %v7883 = vshrl.u32 %v7882, 7
    %v7884 = vsub.s32 4, %v7883
    %v7885 = vrot.slane %v7650, %v7884
    %v7886 = vlaneseq
    %v7887 = vshrl.u32 %v7886, 7
    %v7888 = vsub.s32 4, %v7887
    %v7889 = vrot.slane %v7651, %v7888
    %v7890 = vlaneseq
    %v7891 = vshrl.u32 %v7890, 7
    %v7892 = vsub.s32 4, %v7891
    %v7893 = vrot.slane %v7652, %v7892
    %v7894 = vlaneseq
    %v7895 = vshrl.u32 %v7894, 7
    %v7896 = vsub.s32 4, %v7895
    %v7897 = vrot.slane %v7653, %v7896
    %v7898 = vmul.f32 %v7869, %v2252
    %v7899 = vmul.f32 %v7869, %v2254
    %v7900 = vmul.f32 %v7873, %v2256
    %v7901 = vmul.f32 %v7873, %v2258
    %v7902 = vmul.f32 %v7877, %v2260
    %v7903 = vmul.f32 %v7877, %v2262
    %v7904 = vmul.f32 %v7881, %v2264
    %v7905 = vmul.f32 %v7881, %v2266
    %v7906 = vmul.f32 %v7885, %v2268
    %v7907 = vmul.f32 %v7885, %v2270
    %v7908 = vmul.f32 %v7889, %v2272
    %v7909 = vmul.f32 %v7889, %v2274
    %v7910 = vmul.f32 %v7893, %v2276
    %v7911 = vmul.f32 %v7893, %v2278
    %v7912 = vmul.f32 %v7897, %v2280
    %v7913 = vmul.f32 %v7897, %v2282
    %7930 = vrot.lane.b32.xlu0 %v7898, 32
    %v7931 = vpop.permute.xlu0 %7930
    %7932 = vrot.lane.b32.xlu0 %v7899, 32
    %v7933 = vpop.permute.xlu0 %7932
    %7934 = vrot.lane.b32.xlu0 %v7900, 32
    %v7935 = vpop.permute.xlu0 %7934
    %7936 = vrot.lane.b32.xlu0 %v7901, 32
    %v7937 = vpop.permute.xlu0 %7936
    %7938 = vrot.lane.b32.xlu0 %v7902, 32
    %v7939 = vpop.permute.xlu0 %7938
    %7940 = vrot.lane.b32.xlu0 %v7903, 32
    %v7941 = vpop.permute.xlu0 %7940
    %7942 = vrot.lane.b32.xlu0 %v7904, 32
    %v7943 = vpop.permute.xlu0 %7942
    %7944 = vrot.lane.b32.xlu0 %v7905, 32
    %v7945 = vpop.permute.xlu0 %7944
    %7946 = vrot.lane.b32.xlu0 %v7906, 32
    %v7947 = vpop.permute.xlu0 %7946
    %7948 = vrot.lane.b32.xlu0 %v7907, 32
    %v7949 = vpop.permute.xlu0 %7948
    %7950 = vrot.lane.b32.xlu0 %v7908, 32
    %v7951 = vpop.permute.xlu0 %7950
    %7952 = vrot.lane.b32.xlu0 %v7909, 32
    %v7953 = vpop.permute.xlu0 %7952
    %7954 = vrot.lane.b32.xlu0 %v7910, 32
    %v7955 = vpop.permute.xlu0 %7954
    %7956 = vrot.lane.b32.xlu0 %v7911, 32
    %v7957 = vpop.permute.xlu0 %7956
    %7958 = vrot.lane.b32.xlu0 %v7912, 32
    %v7959 = vpop.permute.xlu0 %7958
    %7960 = vrot.lane.b32.xlu0 %v7913, 32
    %v7961 = vpop.permute.xlu0 %7960
    %v7978 = vsel %vm186, %v7931, 0.0
    %7979 = vadd.xlane.f32.xlu0 %v7978
    %v7980 = vpop.xlane.xlu0 %7979
    %v7981 = vsel %vm186, %v7933, 0.0
    %7982 = vadd.xlane.f32.xlu0 %v7981
    %v7983 = vpop.xlane.xlu0 %7982
    %v7984 = vsel %vm186, %v7935, 0.0
    %7985 = vadd.xlane.f32.xlu0 %v7984
    %v7986 = vpop.xlane.xlu0 %7985
    %v7987 = vsel %vm186, %v7937, 0.0
    %7988 = vadd.xlane.f32.xlu0 %v7987
    %v7989 = vpop.xlane.xlu0 %7988
    %v7990 = vsel %vm186, %v7939, 0.0
    %7991 = vadd.xlane.f32.xlu0 %v7990
    %v7992 = vpop.xlane.xlu0 %7991
    %v7993 = vsel %vm186, %v7941, 0.0
    %7994 = vadd.xlane.f32.xlu0 %v7993
    %v7995 = vpop.xlane.xlu0 %7994
    %v7996 = vsel %vm186, %v7943, 0.0
    %7997 = vadd.xlane.f32.xlu0 %v7996
    %v7998 = vpop.xlane.xlu0 %7997
    %v7999 = vsel %vm186, %v7945, 0.0
    %8000 = vadd.xlane.f32.xlu0 %v7999
    %v8001 = vpop.xlane.xlu0 %8000
    %v8002 = vsel %vm186, %v7947, 0.0
    %8003 = vadd.xlane.f32.xlu0 %v8002
    %v8004 = vpop.xlane.xlu0 %8003
    %v8005 = vsel %vm186, %v7949, 0.0
    %8006 = vadd.xlane.f32.xlu0 %v8005
    %v8007 = vpop.xlane.xlu0 %8006
    %v8008 = vsel %vm186, %v7951, 0.0
    %8009 = vadd.xlane.f32.xlu0 %v8008
    %v8010 = vpop.xlane.xlu0 %8009
    %v8011 = vsel %vm186, %v7953, 0.0
    %8012 = vadd.xlane.f32.xlu0 %v8011
    %v8013 = vpop.xlane.xlu0 %8012
    %v8014 = vsel %vm186, %v7955, 0.0
    %8015 = vadd.xlane.f32.xlu0 %v8014
    %v8016 = vpop.xlane.xlu0 %8015
    %v8017 = vsel %vm186, %v7957, 0.0
    %8018 = vadd.xlane.f32.xlu0 %v8017
    %v8019 = vpop.xlane.xlu0 %8018
    %v8020 = vsel %vm186, %v7959, 0.0
    %8021 = vadd.xlane.f32.xlu0 %v8020
    %v8022 = vpop.xlane.xlu0 %8021
    %v8023 = vsel %vm186, %v7961, 0.0
    %8024 = vadd.xlane.f32.xlu0 %v8023
    %v8025 = vpop.xlane.xlu0 %8024
    %v8026 = vmul.f32 %v7980, 0.17677669
    %v8027 = vmul.f32 %v7983, 0.17677669
    %v8028 = vmul.f32 %v7986, 0.17677669
    %v8029 = vmul.f32 %v7989, 0.17677669
    %v8030 = vmul.f32 %v7992, 0.17677669
    %v8031 = vmul.f32 %v7995, 0.17677669
    %v8032 = vmul.f32 %v7998, 0.17677669
    %v8033 = vmul.f32 %v8001, 0.17677669
    %v8034 = vmul.f32 %v8004, 0.17677669
    %v8035 = vmul.f32 %v8007, 0.17677669
    %v8036 = vmul.f32 %v8010, 0.17677669
    %v8037 = vmul.f32 %v8013, 0.17677669
    %v8038 = vmul.f32 %v8016, 0.17677669
    %v8039 = vmul.f32 %v8019, 0.17677669
    %v8040 = vmul.f32 %v8022, 0.17677669
    %v8041 = vmul.f32 %v8025, 0.17677669
    %v8058 = vlaneseq
    %v8059 = vshrl.u32 %v8058, 7
    %v8060 = vsub.s32 %v1031, %v8059
    %v8061 = vrot.slane %v8026, %v8060
    %v8062 = vlaneseq
    %v8063 = vshrl.u32 %v8062, 7
    %v8064 = vsub.s32 %v1036, %v8063
    %v8065 = vrot.slane %v8027, %v8064
    %v8066 = vsel %vm1041, %v8065, %v8061
    %v8067 = vlaneseq
    %v8068 = vshrl.u32 %v8067, 7
    %v8069 = vsub.s32 %v1031, %v8068
    %v8070 = vrot.slane %v8028, %v8069
    %v8071 = vlaneseq
    %v8072 = vshrl.u32 %v8071, 7
    %v8073 = vsub.s32 %v1036, %v8072
    %v8074 = vrot.slane %v8029, %v8073
    %v8075 = vsel %vm1041, %v8074, %v8070
    %v8076 = vlaneseq
    %v8077 = vshrl.u32 %v8076, 7
    %v8078 = vsub.s32 %v1031, %v8077
    %v8079 = vrot.slane %v8030, %v8078
    %v8080 = vlaneseq
    %v8081 = vshrl.u32 %v8080, 7
    %v8082 = vsub.s32 %v1036, %v8081
    %v8083 = vrot.slane %v8031, %v8082
    %v8084 = vsel %vm1041, %v8083, %v8079
    %v8085 = vlaneseq
    %v8086 = vshrl.u32 %v8085, 7
    %v8087 = vsub.s32 %v1031, %v8086
    %v8088 = vrot.slane %v8032, %v8087
    %v8089 = vlaneseq
    %v8090 = vshrl.u32 %v8089, 7
    %v8091 = vsub.s32 %v1036, %v8090
    %v8092 = vrot.slane %v8033, %v8091
    %v8093 = vsel %vm1041, %v8092, %v8088
    %v8094 = vlaneseq
    %v8095 = vshrl.u32 %v8094, 7
    %v8096 = vsub.s32 %v1031, %v8095
    %v8097 = vrot.slane %v8034, %v8096
    %v8098 = vlaneseq
    %v8099 = vshrl.u32 %v8098, 7
    %v8100 = vsub.s32 %v1036, %v8099
    %v8101 = vrot.slane %v8035, %v8100
    %v8102 = vsel %vm1041, %v8101, %v8097
    %v8103 = vlaneseq
    %v8104 = vshrl.u32 %v8103, 7
    %v8105 = vsub.s32 %v1031, %v8104
    %v8106 = vrot.slane %v8036, %v8105
    %v8107 = vlaneseq
    %v8108 = vshrl.u32 %v8107, 7
    %v8109 = vsub.s32 %v1036, %v8108
    %v8110 = vrot.slane %v8037, %v8109
    %v8111 = vsel %vm1041, %v8110, %v8106
    %v8112 = vlaneseq
    %v8113 = vshrl.u32 %v8112, 7
    %v8114 = vsub.s32 %v1031, %v8113
    %v8115 = vrot.slane %v8038, %v8114
    %v8116 = vlaneseq
    %v8117 = vshrl.u32 %v8116, 7
    %v8118 = vsub.s32 %v1036, %v8117
    %v8119 = vrot.slane %v8039, %v8118
    %v8120 = vsel %vm1041, %v8119, %v8115
    %v8121 = vlaneseq
    %v8122 = vshrl.u32 %v8121, 7
    %v8123 = vsub.s32 %v1031, %v8122
    %v8124 = vrot.slane %v8040, %v8123
    %v8125 = vlaneseq
    %v8126 = vshrl.u32 %v8125, 7
    %v8127 = vsub.s32 %v1036, %v8126
    %v8128 = vrot.slane %v8041, %v8127
    %v8129 = vsel %vm1041, %v8128, %v8124
    %v8130 = vsel %vm287, %v8075, %v8066
    %v8131 = vsel %vm289, %v8084, %v8130
    %v8132 = vsel %vm291, %v8093, %v8131
    %v8133 = vsel %vm293, %v8102, %v8132
    %v8134 = vsel %vm295, %v8111, %v8133
    %v8135 = vsel %vm297, %v8120, %v8134
    %v8136 = vsel %vm299, %v8129, %v8135
    %v8138 = vsel %vm586, %v8136, -inf
    %8139 = vmax.xlane.f32.xlu0 %v8138
    %v8140 = vpop.xlane.xlu0 %8139
    %v8142 = vlaneseq
    %v8143 = vshrl.u32 %v8142, 7
    %v8144 = vsub.s32 0, %v8143
    %v8145 = vrot.slane %v8140, %v8144
    %v8146 = vlaneseq
    %v8147 = vshrl.u32 %v8146, 7
    %v8148 = vsub.s32 1, %v8147
    %v8149 = vrot.slane %v8140, %v8148
    %v8150 = vlaneseq
    %v8151 = vshrl.u32 %v8150, 7
    %v8152 = vsub.s32 2, %v8151
    %v8153 = vrot.slane %v8140, %v8152
    %v8154 = vlaneseq
    %v8155 = vshrl.u32 %v8154, 7
    %v8156 = vsub.s32 3, %v8155
    %v8157 = vrot.slane %v8140, %v8156
    %v8158 = vlaneseq
    %v8159 = vshrl.u32 %v8158, 7
    %v8160 = vsub.s32 4, %v8159
    %v8161 = vrot.slane %v8140, %v8160
    %v8162 = vlaneseq
    %v8163 = vshrl.u32 %v8162, 7
    %v8164 = vsub.s32 5, %v8163
    %v8165 = vrot.slane %v8140, %v8164
    %v8166 = vlaneseq
    %v8167 = vshrl.u32 %v8166, 7
    %v8168 = vsub.s32 6, %v8167
    %v8169 = vrot.slane %v8140, %v8168
    %v8170 = vlaneseq
    %v8171 = vshrl.u32 %v8170, 7
    %v8172 = vsub.s32 7, %v8171
    %v8173 = vrot.slane %v8140, %v8172
    %v8182 = vsub.f32 %v8026, %v8145
    %v8183 = vsub.f32 %v8027, %v8145
    %v8184 = vsub.f32 %v8028, %v8149
    %v8185 = vsub.f32 %v8029, %v8149
    %v8186 = vsub.f32 %v8030, %v8153
    %v8187 = vsub.f32 %v8031, %v8153
    %v8188 = vsub.f32 %v8032, %v8157
    %v8189 = vsub.f32 %v8033, %v8157
    %v8190 = vsub.f32 %v8034, %v8161
    %v8191 = vsub.f32 %v8035, %v8161
    %v8192 = vsub.f32 %v8036, %v8165
    %v8193 = vsub.f32 %v8037, %v8165
    %v8194 = vsub.f32 %v8038, %v8169
    %v8195 = vsub.f32 %v8039, %v8169
    %v8196 = vsub.f32 %v8040, %v8173
    %v8197 = vsub.f32 %v8041, %v8173
    %v8198 = vmul.f32 %v8182, 1.442695
    %v8199 = vpow.pop %v8198
    %v8200 = vmul.f32 %v8183, 1.442695
    %v8201 = vpow.pop %v8200
    %v8202 = vmul.f32 %v8184, 1.442695
    %v8203 = vpow.pop %v8202
    %v8204 = vmul.f32 %v8185, 1.442695
    %v8205 = vpow.pop %v8204
    %v8206 = vmul.f32 %v8186, 1.442695
    %v8207 = vpow.pop %v8206
    %v8208 = vmul.f32 %v8187, 1.442695
    %v8209 = vpow.pop %v8208
    %v8210 = vmul.f32 %v8188, 1.442695
    %v8211 = vpow.pop %v8210
    %v8212 = vmul.f32 %v8189, 1.442695
    %v8213 = vpow.pop %v8212
    %v8214 = vmul.f32 %v8190, 1.442695
    %v8215 = vpow.pop %v8214
    %v8216 = vmul.f32 %v8191, 1.442695
    %v8217 = vpow.pop %v8216
    %v8218 = vmul.f32 %v8192, 1.442695
    %v8219 = vpow.pop %v8218
    %v8220 = vmul.f32 %v8193, 1.442695
    %v8221 = vpow.pop %v8220
    %v8222 = vmul.f32 %v8194, 1.442695
    %v8223 = vpow.pop %v8222
    %v8224 = vmul.f32 %v8195, 1.442695
    %v8225 = vpow.pop %v8224
    %v8226 = vmul.f32 %v8196, 1.442695
    %v8227 = vpow.pop %v8226
    %v8228 = vmul.f32 %v8197, 1.442695
    %v8229 = vpow.pop %v8228
    %8246 = vset.pattern.permute.xlu0 0
    %8247 = vperm.xlu0 %8246, %v8199
    %v8248 = vpop.permute.xlu0 %8247
    %8249 = vset.pattern.permute.xlu0 0
    %8250 = vperm.xlu0 %8249, %v8201
    %v8251 = vpop.permute.xlu0 %8250
    %8252 = vset.pattern.permute.xlu0 0
    %8253 = vperm.xlu0 %8252, %v8203
    %v8254 = vpop.permute.xlu0 %8253
    %8255 = vset.pattern.permute.xlu0 0
    %8256 = vperm.xlu0 %8255, %v8205
    %v8257 = vpop.permute.xlu0 %8256
    %8258 = vset.pattern.permute.xlu0 0
    %8259 = vperm.xlu0 %8258, %v8207
    %v8260 = vpop.permute.xlu0 %8259
    %8261 = vset.pattern.permute.xlu0 0
    %8262 = vperm.xlu0 %8261, %v8209
    %v8263 = vpop.permute.xlu0 %8262
    %8264 = vset.pattern.permute.xlu0 0
    %8265 = vperm.xlu0 %8264, %v8211
    %v8266 = vpop.permute.xlu0 %8265
    %8267 = vset.pattern.permute.xlu0 0
    %8268 = vperm.xlu0 %8267, %v8213
    %v8269 = vpop.permute.xlu0 %8268
    %8270 = vset.pattern.permute.xlu0 0
    %8271 = vperm.xlu0 %8270, %v8215
    %v8272 = vpop.permute.xlu0 %8271
    %8273 = vset.pattern.permute.xlu0 0
    %8274 = vperm.xlu0 %8273, %v8217
    %v8275 = vpop.permute.xlu0 %8274
    %8276 = vset.pattern.permute.xlu0 0
    %8277 = vperm.xlu0 %8276, %v8219
    %v8278 = vpop.permute.xlu0 %8277
    %8279 = vset.pattern.permute.xlu0 0
    %8280 = vperm.xlu0 %8279, %v8221
    %v8281 = vpop.permute.xlu0 %8280
    %8282 = vset.pattern.permute.xlu0 0
    %8283 = vperm.xlu0 %8282, %v8223
    %v8284 = vpop.permute.xlu0 %8283
    %8285 = vset.pattern.permute.xlu0 0
    %8286 = vperm.xlu0 %8285, %v8225
    %v8287 = vpop.permute.xlu0 %8286
    %8288 = vset.pattern.permute.xlu0 0
    %8289 = vperm.xlu0 %8288, %v8227
    %v8290 = vpop.permute.xlu0 %8289
    %8291 = vset.pattern.permute.xlu0 0
    %8292 = vperm.xlu0 %8291, %v8229
    %v8293 = vpop.permute.xlu0 %8292
    %v8294 = vlaneseq
    %v8295 = vshrl.u32 %v8294, 7
    %v8296 = vsub.s32 %v1031, %v8295
    %v8297 = vrot.slane %v8248, %v8296
    %v8298 = vlaneseq
    %v8299 = vshrl.u32 %v8298, 7
    %v8300 = vsub.s32 %v1036, %v8299
    %v8301 = vrot.slane %v8251, %v8300
    %v8302 = vsel %vm1041, %v8301, %v8297
    %v8303 = vlaneseq
    %v8304 = vshrl.u32 %v8303, 7
    %v8305 = vsub.s32 %v1031, %v8304
    %v8306 = vrot.slane %v8254, %v8305
    %v8307 = vlaneseq
    %v8308 = vshrl.u32 %v8307, 7
    %v8309 = vsub.s32 %v1036, %v8308
    %v8310 = vrot.slane %v8257, %v8309
    %v8311 = vsel %vm1041, %v8310, %v8306
    %v8312 = vlaneseq
    %v8313 = vshrl.u32 %v8312, 7
    %v8314 = vsub.s32 %v1031, %v8313
    %v8315 = vrot.slane %v8260, %v8314
    %v8316 = vlaneseq
    %v8317 = vshrl.u32 %v8316, 7
    %v8318 = vsub.s32 %v1036, %v8317
    %v8319 = vrot.slane %v8263, %v8318
    %v8320 = vsel %vm1041, %v8319, %v8315
    %v8321 = vlaneseq
    %v8322 = vshrl.u32 %v8321, 7
    %v8323 = vsub.s32 %v1031, %v8322
    %v8324 = vrot.slane %v8266, %v8323
    %v8325 = vlaneseq
    %v8326 = vshrl.u32 %v8325, 7
    %v8327 = vsub.s32 %v1036, %v8326
    %v8328 = vrot.slane %v8269, %v8327
    %v8329 = vsel %vm1041, %v8328, %v8324
    %v8330 = vlaneseq
    %v8331 = vshrl.u32 %v8330, 7
    %v8332 = vsub.s32 %v1031, %v8331
    %v8333 = vrot.slane %v8272, %v8332
    %v8334 = vlaneseq
    %v8335 = vshrl.u32 %v8334, 7
    %v8336 = vsub.s32 %v1036, %v8335
    %v8337 = vrot.slane %v8275, %v8336
    %v8338 = vsel %vm1041, %v8337, %v8333
    %v8339 = vlaneseq
    %v8340 = vshrl.u32 %v8339, 7
    %v8341 = vsub.s32 %v1031, %v8340
    %v8342 = vrot.slane %v8278, %v8341
    %v8343 = vlaneseq
    %v8344 = vshrl.u32 %v8343, 7
    %v8345 = vsub.s32 %v1036, %v8344
    %v8346 = vrot.slane %v8281, %v8345
    %v8347 = vsel %vm1041, %v8346, %v8342
    %v8348 = vlaneseq
    %v8349 = vshrl.u32 %v8348, 7
    %v8350 = vsub.s32 %v1031, %v8349
    %v8351 = vrot.slane %v8284, %v8350
    %v8352 = vlaneseq
    %v8353 = vshrl.u32 %v8352, 7
    %v8354 = vsub.s32 %v1036, %v8353
    %v8355 = vrot.slane %v8287, %v8354
    %v8356 = vsel %vm1041, %v8355, %v8351
    %v8357 = vlaneseq
    %v8358 = vshrl.u32 %v8357, 7
    %v8359 = vsub.s32 %v1031, %v8358
    %v8360 = vrot.slane %v8290, %v8359
    %v8361 = vlaneseq
    %v8362 = vshrl.u32 %v8361, 7
    %v8363 = vsub.s32 %v1036, %v8362
    %v8364 = vrot.slane %v8293, %v8363
    %v8365 = vsel %vm1041, %v8364, %v8360
    %v8366 = vsel %vm287, %v8311, %v8302
    %v8367 = vsel %vm289, %v8320, %v8366
    %v8368 = vsel %vm291, %v8329, %v8367
    %v8369 = vsel %vm293, %v8338, %v8368
    %v8370 = vsel %vm295, %v8347, %v8369
    %v8371 = vsel %vm297, %v8356, %v8370
    %v8372 = vsel %vm299, %v8365, %v8371
    %v8374 = vsel %vm586, %v8372, 0.0
    %8375 = vadd.xlane.f32.xlu0 %v8374
    %v8376 = vpop.xlane.xlu0 %8375
    %v8377 = vrcp.pop %v8376
    %v8378 = vmul.f32 %v8376, %v8377
    %v8379 = vsub.f32 2.0, %v8378
    %v8380 = vmul.f32 %v8377, %v8379
    %v8382 = vlaneseq
    %v8383 = vshrl.u32 %v8382, 7
    %v8384 = vsub.s32 0, %v8383
    %v8385 = vrot.slane %v8380, %v8384
    %v8386 = vlaneseq
    %v8387 = vshrl.u32 %v8386, 7
    %v8388 = vsub.s32 1, %v8387
    %v8389 = vrot.slane %v8380, %v8388
    %v8390 = vlaneseq
    %v8391 = vshrl.u32 %v8390, 7
    %v8392 = vsub.s32 2, %v8391
    %v8393 = vrot.slane %v8380, %v8392
    %v8394 = vlaneseq
    %v8395 = vshrl.u32 %v8394, 7
    %v8396 = vsub.s32 3, %v8395
    %v8397 = vrot.slane %v8380, %v8396
    %v8398 = vlaneseq
    %v8399 = vshrl.u32 %v8398, 7
    %v8400 = vsub.s32 4, %v8399
    %v8401 = vrot.slane %v8380, %v8400
    %v8402 = vlaneseq
    %v8403 = vshrl.u32 %v8402, 7
    %v8404 = vsub.s32 5, %v8403
    %v8405 = vrot.slane %v8380, %v8404
    %v8406 = vlaneseq
    %v8407 = vshrl.u32 %v8406, 7
    %v8408 = vsub.s32 6, %v8407
    %v8409 = vrot.slane %v8380, %v8408
    %v8410 = vlaneseq
    %v8411 = vshrl.u32 %v8410, 7
    %v8412 = vsub.s32 7, %v8411
    %v8413 = vrot.slane %v8380, %v8412
    %v8422 = vmul.f32 %v8199, %v8385
    %v8423 = vmul.f32 %v8201, %v8385
    %v8424 = vmul.f32 %v8203, %v8389
    %v8425 = vmul.f32 %v8205, %v8389
    %v8426 = vmul.f32 %v8207, %v8393
    %v8427 = vmul.f32 %v8209, %v8393
    %v8428 = vmul.f32 %v8211, %v8397
    %v8429 = vmul.f32 %v8213, %v8397
    %v8430 = vmul.f32 %v8215, %v8401
    %v8431 = vmul.f32 %v8217, %v8401
    %v8432 = vmul.f32 %v8219, %v8405
    %v8433 = vmul.f32 %v8221, %v8405
    %v8434 = vmul.f32 %v8223, %v8409
    %v8435 = vmul.f32 %v8225, %v8409
    %v8436 = vmul.f32 %v8227, %v8413
    %v8437 = vmul.f32 %v8229, %v8413
    %8439 = vset.pattern.permute.xlu0 0
    %8440 = vperm.xlu0 %8439, %v8422
    %v8441 = vpop.permute.xlu0 %8440
    %8444 = vset.pattern.permute.xlu0 0
    %8445 = vperm.xlu0 %8444, %v8423
    %v8446 = vpop.permute.xlu0 %8445
    %8449 = vset.pattern.permute.xlu0 0
    %8450 = vperm.xlu0 %8449, %v8424
    %v8451 = vpop.permute.xlu0 %8450
    %8454 = vset.pattern.permute.xlu0 0
    %8455 = vperm.xlu0 %8454, %v8425
    %v8456 = vpop.permute.xlu0 %8455
    %8459 = vset.pattern.permute.xlu0 0
    %8460 = vperm.xlu0 %8459, %v8426
    %v8461 = vpop.permute.xlu0 %8460
    %8464 = vset.pattern.permute.xlu0 0
    %8465 = vperm.xlu0 %8464, %v8427
    %v8466 = vpop.permute.xlu0 %8465
    %8469 = vset.pattern.permute.xlu0 0
    %8470 = vperm.xlu0 %8469, %v8428
    %v8471 = vpop.permute.xlu0 %8470
    %8474 = vset.pattern.permute.xlu0 0
    %8475 = vperm.xlu0 %8474, %v8429
    %v8476 = vpop.permute.xlu0 %8475
    %8479 = vset.pattern.permute.xlu0 0
    %8480 = vperm.xlu0 %8479, %v8430
    %v8481 = vpop.permute.xlu0 %8480
    %8484 = vset.pattern.permute.xlu0 0
    %8485 = vperm.xlu0 %8484, %v8431
    %v8486 = vpop.permute.xlu0 %8485
    %8489 = vset.pattern.permute.xlu0 0
    %8490 = vperm.xlu0 %8489, %v8432
    %v8491 = vpop.permute.xlu0 %8490
    %8494 = vset.pattern.permute.xlu0 0
    %8495 = vperm.xlu0 %8494, %v8433
    %v8496 = vpop.permute.xlu0 %8495
    %8499 = vset.pattern.permute.xlu0 0
    %8500 = vperm.xlu0 %8499, %v8434
    %v8501 = vpop.permute.xlu0 %8500
    %8504 = vset.pattern.permute.xlu0 0
    %8505 = vperm.xlu0 %8504, %v8435
    %v8506 = vpop.permute.xlu0 %8505
    %8509 = vset.pattern.permute.xlu0 0
    %8510 = vperm.xlu0 %8509, %v8436
    %v8511 = vpop.permute.xlu0 %8510
    %8514 = vset.pattern.permute.xlu0 0
    %8515 = vperm.xlu0 %8514, %v8437
    %v8516 = vpop.permute.xlu0 %8515
    %v8518 = vmul.f32 %v8441, %v154
    %v8519 = vmul.f32 %v8446, %v155
    %v8520 = vmul.f32 %v8451, %v156
    %v8521 = vmul.f32 %v8456, %v157
    %v8522 = vmul.f32 %v8461, %v158
    %v8523 = vmul.f32 %v8466, %v159
    %v8524 = vmul.f32 %v8471, %v160
    %v8525 = vmul.f32 %v8476, %v161
    %v8526 = vmul.f32 %v8481, %v162
    %v8527 = vmul.f32 %v8486, %v163
    %v8528 = vmul.f32 %v8491, %v164
    %v8529 = vmul.f32 %v8496, %v165
    %v8530 = vmul.f32 %v8501, %v166
    %v8531 = vmul.f32 %v8506, %v167
    %v8532 = vmul.f32 %v8511, %v168
    %v8533 = vmul.f32 %v8516, %v169
    %v8534 = vsel %vm186, %v8518, 0.0
    %v8535 = vsel %vm186, %v8519, 0.0
    %v8536 = vadd.f32 %v8534, %v8535
    %v8537 = vrot.slane %v8536, 4
    %v8538 = vadd.f32 %v8536, %v8537
    %v8539 = vrot.slane %v8538, 2
    %v8540 = vadd.f32 %v8538, %v8539
    %v8541 = vrot.slane %v8540, 1
    %v8542 = vadd.f32 %v8540, %v8541
    %v8543 = vsel %vm186, %v8520, 0.0
    %v8544 = vsel %vm186, %v8521, 0.0
    %v8545 = vadd.f32 %v8543, %v8544
    %v8546 = vrot.slane %v8545, 4
    %v8547 = vadd.f32 %v8545, %v8546
    %v8548 = vrot.slane %v8547, 2
    %v8549 = vadd.f32 %v8547, %v8548
    %v8550 = vrot.slane %v8549, 1
    %v8551 = vadd.f32 %v8549, %v8550
    %v8552 = vsel %vm186, %v8522, 0.0
    %v8553 = vsel %vm186, %v8523, 0.0
    %v8554 = vadd.f32 %v8552, %v8553
    %v8555 = vrot.slane %v8554, 4
    %v8556 = vadd.f32 %v8554, %v8555
    %v8557 = vrot.slane %v8556, 2
    %v8558 = vadd.f32 %v8556, %v8557
    %v8559 = vrot.slane %v8558, 1
    %v8560 = vadd.f32 %v8558, %v8559
    %v8561 = vsel %vm186, %v8524, 0.0
    %v8562 = vsel %vm186, %v8525, 0.0
    %v8563 = vadd.f32 %v8561, %v8562
    %v8564 = vrot.slane %v8563, 4
    %v8565 = vadd.f32 %v8563, %v8564
    %v8566 = vrot.slane %v8565, 2
    %v8567 = vadd.f32 %v8565, %v8566
    %v8568 = vrot.slane %v8567, 1
    %v8569 = vadd.f32 %v8567, %v8568
    %v8570 = vsel %vm186, %v8526, 0.0
    %v8571 = vsel %vm186, %v8527, 0.0
    %v8572 = vadd.f32 %v8570, %v8571
    %v8573 = vrot.slane %v8572, 4
    %v8574 = vadd.f32 %v8572, %v8573
    %v8575 = vrot.slane %v8574, 2
    %v8576 = vadd.f32 %v8574, %v8575
    %v8577 = vrot.slane %v8576, 1
    %v8578 = vadd.f32 %v8576, %v8577
    %v8579 = vsel %vm186, %v8528, 0.0
    %v8580 = vsel %vm186, %v8529, 0.0
    %v8581 = vadd.f32 %v8579, %v8580
    %v8582 = vrot.slane %v8581, 4
    %v8583 = vadd.f32 %v8581, %v8582
    %v8584 = vrot.slane %v8583, 2
    %v8585 = vadd.f32 %v8583, %v8584
    %v8586 = vrot.slane %v8585, 1
    %v8587 = vadd.f32 %v8585, %v8586
    %v8588 = vsel %vm186, %v8530, 0.0
    %v8589 = vsel %vm186, %v8531, 0.0
    %v8590 = vadd.f32 %v8588, %v8589
    %v8591 = vrot.slane %v8590, 4
    %v8592 = vadd.f32 %v8590, %v8591
    %v8593 = vrot.slane %v8592, 2
    %v8594 = vadd.f32 %v8592, %v8593
    %v8595 = vrot.slane %v8594, 1
    %v8596 = vadd.f32 %v8594, %v8595
    %v8597 = vsel %vm186, %v8532, 0.0
    %v8598 = vsel %vm186, %v8533, 0.0
    %v8599 = vadd.f32 %v8597, %v8598
    %v8600 = vrot.slane %v8599, 4
    %v8601 = vadd.f32 %v8599, %v8600
    %v8602 = vrot.slane %v8601, 2
    %v8603 = vadd.f32 %v8601, %v8602
    %v8604 = vrot.slane %v8603, 1
    %v8605 = vadd.f32 %v8603, %v8604
    %v8614 = vsel %vm287, %v8551, %v8542
    %v8615 = vsel %vm289, %v8560, %v8614
    %v8616 = vsel %vm291, %v8569, %v8615
    %v8617 = vsel %vm293, %v8578, %v8616
    %v8618 = vsel %vm295, %v8587, %v8617
    %v8619 = vsel %vm297, %v8596, %v8618
    %v8620 = vsel %vm299, %v8605, %v8619
    %v8621 = vsel %vm186, %v8620, 0
    %8623 = vmatprep.subr.mxu0 0.0
    %8624 = vmatpush1.msra.mxu0 0.0
    %8625 = vmatprep.subr.mxu0 0.0
    %8626 = vmatpush1.msra.mxu0 0.0
    %8627 = vmatprep.subr.mxu0 0.0
    %8628 = vmatpush1.msra.mxu0 0.0
    %8629 = vmatprep.subr.mxu0 0.0
    %8630 = vmatpush1.msra.mxu0 0.0
    %8631 = vmatprep.subr.mxu0 0.0
    %8632 = vmatpush1.msra.mxu0 0.0
    %8633 = vmatprep.subr.mxu0 0.0
    %8634 = vmatpush1.msra.mxu0 0.0
    %8635 = vmatprep.subr.mxu0 0.0
    %8636 = vmatpush1.msra.mxu0 0.0
    %8637 = vmatprep.subr.mxu0 0.0
    %8638 = vmatpush1.msra.mxu0 0.0
    %8639 = vmatprep.subr.mxu0 0.0
    %8640 = vmatpush1.msra.mxu0 0.0
    %8641 = vmatprep.subr.mxu0 0.0
    %8642 = vmatpush1.msra.mxu0 0.0
    %8643 = vmatprep.subr.mxu0 0.0
    %8644 = vmatpush1.msra.mxu0 0.0
    %8645 = vmatprep.subr.mxu0 0.0
    %8646 = vmatpush1.msra.mxu0 0.0
    %8647 = vmatprep.subr.mxu0 0.0
    %8648 = vmatpush1.msra.mxu0 %v181
    %8649 = vmatprep.subr.mxu0 0.0
    %8650 = vmatpush1.msra.mxu0 %v180
    %8651 = vmatprep.subr.mxu0 0.0
    %8652 = vmatpush1.msra.mxu0 %v179
    %8653 = vmatprep.subr.mxu0 0.0
    %8654 = vmatpush1.msra.mxu0 %v178
    %8655 = vmatprep.subr.mxu0 0.0
    %8656 = vmatpush2.msra.mxu0 0.0
    %8657 = vmatprep.subr.mxu0 0.0
    %8658 = vmatpush2.msra.mxu0 0.0
    %8659 = vmatprep.subr.mxu0 0.0
    %8660 = vmatpush2.msra.mxu0 0.0
    %8661 = vmatprep.subr.mxu0 0.0
    %8662 = vmatpush2.msra.mxu0 0.0
    %8663 = vmatprep.subr.mxu0 0.0
    %8664 = vmatpush2.msra.mxu0 0.0
    %8665 = vmatprep.subr.mxu0 0.0
    %8666 = vmatpush2.msra.mxu0 0.0
    %8667 = vmatprep.subr.mxu0 0.0
    %8668 = vmatpush2.msra.mxu0 0.0
    %8669 = vmatprep.subr.mxu0 0.0
    %8670 = vmatpush2.msra.mxu0 0.0
    %8671 = vmatprep.subr.mxu0 0.0
    %8672 = vmatpush2.msra.mxu0 0.0
    %8673 = vmatprep.subr.mxu0 0.0
    %8674 = vmatpush2.msra.mxu0 0.0
    %8675 = vmatprep.subr.mxu0 0.0
    %8676 = vmatpush2.msra.mxu0 0.0
    %8677 = vmatprep.subr.mxu0 0.0
    %8678 = vmatpush2.msra.mxu0 0.0
    %8679 = vmatprep.subr.mxu0 0.0
    %8680 = vmatpush2.msra.mxu0 0.0
    %8681 = vmatprep.subr.mxu0 0.0
    %8682 = vmatpush2.msra.mxu0 0.0
    %8683 = vmatprep.subr.mxu0 0.0
    %8684 = vmatpush2.msra.mxu0 0.0
    %8685 = vmatprep.subr.mxu0 0.0
    %8686 = vmatpush2.msra.mxu0 0.0
    %8687 = vmatprep.mubr.f32.mxu0 0.0
    %8688 = vmatmul.mubr.f32.gmra.mxu0 %v8621
    %v8689 = vpop.f32.mrf.mxu0
    %v8690 = vadd.f32 0.0, %v8689
    %v8691 = vpop.f32.mrf.mxu0
    %8692 = vdwg.mxu0
    %v8694 = vrot.slane %v8690, 3
    %v8695 = vrot.slane %v8690, 4
    %v8696 = vrot.slane %v8690, 5
    %v8697 = vrot.slane %v8690, 6
    %v8698 = vrot.slane %v8690, 7
    %v8699 = vrot.slane %v8690, 1
    %v8700 = vrot.slane %v8690, 2
    %v8709 = vadd.f32 %v678, %v8694
    %v8710 = vadd.f32 %v683, %v8695
    %v8711 = vadd.f32 %v688, %v8696
    %v8712 = vadd.f32 %v693, %v8697
    %v8713 = vadd.f32 %v698, %v8698
    %v8714 = vadd.f32 %v703, %v8690
    %v8715 = vadd.f32 %v708, %v8699
    %v8716 = vadd.f32 %v713, %v8700
    %v8717 = vrot.slane %v7646, 4
    %v8718 = vrot.slane %v7647, 3
    %v8719 = vsel %vm287, %v8718, %v8717
    %v8720 = vrot.slane %v7648, 2
    %v8721 = vsel %vm289, %v8720, %v8719
    %v8722 = vrot.slane %v7649, 1
    %v8723 = vsel %vm291, %v8722, %v8721
    %v8724 = vsel %vm293, %v7650, %v8723
    %v8725 = vrot.slane %v7651, 7
    %v8726 = vsel %vm295, %v8725, %v8724
    %v8727 = vrot.slane %v7652, 6
    %v8728 = vsel %vm297, %v8727, %v8726
    %v8729 = vrot.slane %v7653, 5
    %v8730 = vsel %vm299, %v8729, %v8728
    %8731 = vrot.lane.b32.xlu0 %v8730, 32
    %v8732 = vpop.permute.xlu0 %8731
    %v8733 = vsel %vm186, %v8732, 0
    %8735 = vmatprep.subr.mxu0 0.0
    %8736 = vmatpush1.msra.mxu0 0.0
    %8737 = vmatprep.subr.mxu0 0.0
    %8738 = vmatpush1.msra.mxu0 0.0
    %8739 = vmatprep.subr.mxu0 0.0
    %8740 = vmatpush1.msra.mxu0 0.0
    %8741 = vmatprep.subr.mxu0 0.0
    %8742 = vmatpush1.msra.mxu0 0.0
    %8743 = vmatprep.subr.mxu0 0.0
    %8744 = vmatpush1.msra.mxu0 0.0
    %8745 = vmatprep.subr.mxu0 0.0
    %8746 = vmatpush1.msra.mxu0 0.0
    %8747 = vmatprep.subr.mxu0 0.0
    %8748 = vmatpush1.msra.mxu0 0.0
    %8749 = vmatprep.subr.mxu0 0.0
    %8750 = vmatpush1.msra.mxu0 0.0
    %8751 = vmatprep.subr.mxu0 0.0
    %8752 = vmatpush1.msra.mxu0 0.0
    %8753 = vmatprep.subr.mxu0 0.0
    %8754 = vmatpush1.msra.mxu0 0.0
    %8755 = vmatprep.subr.mxu0 0.0
    %8756 = vmatpush1.msra.mxu0 0.0
    %8757 = vmatprep.subr.mxu0 0.0
    %8758 = vmatpush1.msra.mxu0 0.0
    %8759 = vmatprep.subr.mxu0 0.0
    %8760 = vmatpush1.msra.mxu0 %v185
    %8761 = vmatprep.subr.mxu0 0.0
    %8762 = vmatpush1.msra.mxu0 %v184
    %8763 = vmatprep.subr.mxu0 0.0
    %8764 = vmatpush1.msra.mxu0 %v183
    %8765 = vmatprep.subr.mxu0 0.0
    %8766 = vmatpush1.msra.mxu0 %v182
    %8767 = vmatprep.subr.mxu0 0.0
    %8768 = vmatpush2.msra.mxu0 0.0
    %8769 = vmatprep.subr.mxu0 0.0
    %8770 = vmatpush2.msra.mxu0 0.0
    %8771 = vmatprep.subr.mxu0 0.0
    %8772 = vmatpush2.msra.mxu0 0.0
    %8773 = vmatprep.subr.mxu0 0.0
    %8774 = vmatpush2.msra.mxu0 0.0
    %8775 = vmatprep.subr.mxu0 0.0
    %8776 = vmatpush2.msra.mxu0 0.0
    %8777 = vmatprep.subr.mxu0 0.0
    %8778 = vmatpush2.msra.mxu0 0.0
    %8779 = vmatprep.subr.mxu0 0.0
    %8780 = vmatpush2.msra.mxu0 0.0
    %8781 = vmatprep.subr.mxu0 0.0
    %8782 = vmatpush2.msra.mxu0 0.0
    %8783 = vmatprep.subr.mxu0 0.0
    %8784 = vmatpush2.msra.mxu0 0.0
    %8785 = vmatprep.subr.mxu0 0.0
    %8786 = vmatpush2.msra.mxu0 0.0
    %8787 = vmatprep.subr.mxu0 0.0
    %8788 = vmatpush2.msra.mxu0 0.0
    %8789 = vmatprep.subr.mxu0 0.0
    %8790 = vmatpush2.msra.mxu0 0.0
    %8791 = vmatprep.subr.mxu0 0.0
    %8792 = vmatpush2.msra.mxu0 0.0
    %8793 = vmatprep.subr.mxu0 0.0
    %8794 = vmatpush2.msra.mxu0 0.0
    %8795 = vmatprep.subr.mxu0 0.0
    %8796 = vmatpush2.msra.mxu0 0.0
    %8797 = vmatprep.subr.mxu0 0.0
    %8798 = vmatpush2.msra.mxu0 0.0
    %8799 = vmatprep.mubr.f32.mxu0 0.0
    %8800 = vmatmul.mubr.f32.gmra.mxu0 %v8733
    %v8801 = vpop.f32.mrf.mxu0
    %v8802 = vadd.f32 0.0, %v8801
    %v8803 = vpop.f32.mrf.mxu0
    %8804 = vdwg.mxu0
    %v8806 = vrot.slane %v8802, 3
    %v8807 = vrot.slane %v8802, 4
    %v8808 = vrot.slane %v8802, 5
    %v8809 = vrot.slane %v8802, 6
    %v8810 = vrot.slane %v8802, 7
    %v8811 = vrot.slane %v8802, 1
    %v8812 = vrot.slane %v8802, 2
    %v8821 = vadd.f32 %v8709, %v8806
    %v8822 = vadd.f32 %v8710, %v8807
    %v8823 = vadd.f32 %v8711, %v8808
    %v8824 = vadd.f32 %v8712, %v8809
    %v8825 = vadd.f32 %v8713, %v8810
    %v8826 = vadd.f32 %v8714, %v8802
    %v8827 = vadd.f32 %v8715, %v8811
    %v8828 = vadd.f32 %v8716, %v8812
    %v8829 = vxor.u32 %v8821, 2147483648
    %v8830 = vxor.u32 %v8822, 2147483648
    %v8831 = vxor.u32 %v8823, 2147483648
    %v8832 = vxor.u32 %v8824, 2147483648
    %v8833 = vxor.u32 %v8825, 2147483648
    %v8834 = vxor.u32 %v8826, 2147483648
    %v8835 = vxor.u32 %v8827, 2147483648
    %v8836 = vxor.u32 %v8828, 2147483648
    %v8837 = vmul.f32 %v8829, 1.442695
    %v8838 = vpow.pop %v8837
    %v8839 = vmul.f32 %v8830, 1.442695
    %v8840 = vpow.pop %v8839
    %v8841 = vmul.f32 %v8831, 1.442695
    %v8842 = vpow.pop %v8841
    %v8843 = vmul.f32 %v8832, 1.442695
    %v8844 = vpow.pop %v8843
    %v8845 = vmul.f32 %v8833, 1.442695
    %v8846 = vpow.pop %v8845
    %v8847 = vmul.f32 %v8834, 1.442695
    %v8848 = vpow.pop %v8847
    %v8849 = vmul.f32 %v8835, 1.442695
    %v8850 = vpow.pop %v8849
    %v8851 = vmul.f32 %v8836, 1.442695
    %v8852 = vpow.pop %v8851
    %v8853 = vadd.f32 %v8838, 1.0
    %v8854 = vadd.f32 %v8840, 1.0
    %v8855 = vadd.f32 %v8842, 1.0
    %v8856 = vadd.f32 %v8844, 1.0
    %v8857 = vadd.f32 %v8846, 1.0
    %v8858 = vadd.f32 %v8848, 1.0
    %v8859 = vadd.f32 %v8850, 1.0
    %v8860 = vadd.f32 %v8852, 1.0
    %v8861 = vrcp.pop %v8853
    %v8862 = vmul.f32 1.0, %v8861
    %v8863 = vrcp.pop %v8854
    %v8864 = vmul.f32 1.0, %v8863
    %v8865 = vrcp.pop %v8855
    %v8866 = vmul.f32 1.0, %v8865
    %v8867 = vrcp.pop %v8856
    %v8868 = vmul.f32 1.0, %v8867
    %v8869 = vrcp.pop %v8857
    %v8870 = vmul.f32 1.0, %v8869
    %v8871 = vrcp.pop %v8858
    %v8872 = vmul.f32 1.0, %v8871
    %v8873 = vrcp.pop %v8859
    %v8874 = vmul.f32 1.0, %v8873
    %v8875 = vrcp.pop %v8860
    %v8876 = vmul.f32 1.0, %v8875
    %v8877 = vtanh.pop %v8821
    %v8878 = vtanh.pop %v8822
    %v8879 = vtanh.pop %v8823
    %v8880 = vtanh.pop %v8824
    %v8881 = vtanh.pop %v8825
    %v8882 = vtanh.pop %v8826
    %v8883 = vtanh.pop %v8827
    %v8884 = vtanh.pop %v8828
    %v8893 = vrot.slane %v7598, 7
    %v8894 = vrot.slane %v7599, 7
    %v8895 = vrot.slane %v7600, 7
    %v8896 = vrot.slane %v7601, 7
    %v8897 = vrot.slane %v7602, 7
    %v8898 = vrot.slane %v7603, 7
    %v8899 = vrot.slane %v7604, 7
    %v8900 = vrot.slane %v7605, 7
    %v8909 = vmul.f32 %v8862, %v8893
    %v8910 = vmul.f32 %v8864, %v8894
    %v8911 = vmul.f32 %v8866, %v8895
    %v8912 = vmul.f32 %v8868, %v8896
    %v8913 = vmul.f32 %v8870, %v8897
    %v8914 = vmul.f32 %v8872, %v8898
    %v8915 = vmul.f32 %v8874, %v8899
    %v8916 = vmul.f32 %v8876, %v8900
    %8925 = vrot.lane.b32.xlu0 %v8877, 64
    %v8926 = vpop.permute.xlu0 %8925
    %8927 = vrot.lane.b32.xlu0 %v8878, 64
    %v8928 = vpop.permute.xlu0 %8927
    %8929 = vrot.lane.b32.xlu0 %v8879, 64
    %v8930 = vpop.permute.xlu0 %8929
    %8931 = vrot.lane.b32.xlu0 %v8880, 64
    %v8932 = vpop.permute.xlu0 %8931
    %8933 = vrot.lane.b32.xlu0 %v8881, 64
    %v8934 = vpop.permute.xlu0 %8933
    %8935 = vrot.lane.b32.xlu0 %v8882, 64
    %v8936 = vpop.permute.xlu0 %8935
    %8937 = vrot.lane.b32.xlu0 %v8883, 64
    %v8938 = vpop.permute.xlu0 %8937
    %8939 = vrot.lane.b32.xlu0 %v8884, 64
    %v8940 = vpop.permute.xlu0 %8939
    %v8949 = vmul.f32 %v8862, %v8926
    %v8950 = vmul.f32 %v8864, %v8928
    %v8951 = vmul.f32 %v8866, %v8930
    %v8952 = vmul.f32 %v8868, %v8932
    %v8953 = vmul.f32 %v8870, %v8934
    %v8954 = vmul.f32 %v8872, %v8936
    %v8955 = vmul.f32 %v8874, %v8938
    %v8956 = vmul.f32 %v8876, %v8940
    %8965 = vrot.lane.b32.xlu0 %v8949, 32
    %v8966 = vpop.permute.xlu0 %8965
    %8967 = vrot.lane.b32.xlu0 %v8950, 32
    %v8968 = vpop.permute.xlu0 %8967
    %8969 = vrot.lane.b32.xlu0 %v8951, 32
    %v8970 = vpop.permute.xlu0 %8969
    %8971 = vrot.lane.b32.xlu0 %v8952, 32
    %v8972 = vpop.permute.xlu0 %8971
    %8973 = vrot.lane.b32.xlu0 %v8953, 32
    %v8974 = vpop.permute.xlu0 %8973
    %8975 = vrot.lane.b32.xlu0 %v8954, 32
    %v8976 = vpop.permute.xlu0 %8975
    %8977 = vrot.lane.b32.xlu0 %v8955, 32
    %v8978 = vpop.permute.xlu0 %8977
    %8979 = vrot.lane.b32.xlu0 %v8956, 32
    %v8980 = vpop.permute.xlu0 %8979
    %v8989 = vadd.f32 %v8909, %v8966
    %v8990 = vadd.f32 %v8910, %v8968
    %v8991 = vadd.f32 %v8911, %v8970
    %v8992 = vadd.f32 %v8912, %v8972
    %v8993 = vadd.f32 %v8913, %v8974
    %v8994 = vadd.f32 %v8914, %v8976
    %v8995 = vadd.f32 %v8915, %v8978
    %v8996 = vadd.f32 %v8916, %v8980
    %v8997 = vtanh.pop %v8989
    %v8998 = vtanh.pop %v8990
    %v8999 = vtanh.pop %v8991
    %v9000 = vtanh.pop %v8992
    %v9001 = vtanh.pop %v8993
    %v9002 = vtanh.pop %v8994
    %v9003 = vtanh.pop %v8995
    %v9004 = vtanh.pop %v8996
    %9013 = vrot.lane.b32.xlu0 %v8997, 64
    %v9014 = vpop.permute.xlu0 %9013
    %9015 = vrot.lane.b32.xlu0 %v8998, 64
    %v9016 = vpop.permute.xlu0 %9015
    %9017 = vrot.lane.b32.xlu0 %v8999, 64
    %v9018 = vpop.permute.xlu0 %9017
    %9019 = vrot.lane.b32.xlu0 %v9000, 64
    %v9020 = vpop.permute.xlu0 %9019
    %9021 = vrot.lane.b32.xlu0 %v9001, 64
    %v9022 = vpop.permute.xlu0 %9021
    %9023 = vrot.lane.b32.xlu0 %v9002, 64
    %v9024 = vpop.permute.xlu0 %9023
    %9025 = vrot.lane.b32.xlu0 %v9003, 64
    %v9026 = vpop.permute.xlu0 %9025
    %9027 = vrot.lane.b32.xlu0 %v9004, 64
    %v9028 = vpop.permute.xlu0 %9027
    %v9037 = vmul.f32 %v8862, %v9014
    %v9038 = vmul.f32 %v8864, %v9016
    %v9039 = vmul.f32 %v8866, %v9018
    %v9040 = vmul.f32 %v8868, %v9020
    %v9041 = vmul.f32 %v8870, %v9022
    %v9042 = vmul.f32 %v8872, %v9024
    %v9043 = vmul.f32 %v8874, %v9026
    %v9044 = vmul.f32 %v8876, %v9028
    %v9053 = vrot.slane %v9038, 7
    %v9054 = vsel %vm297, %v9053, %v9037
    %v9055 = vrot.slane %v9039, 6
    %v9056 = vsel %vm299, %v9055, %v9054
    %v9057 = vrot.slane %v9040, 5
    %v9058 = vrot.slane %v9041, 4
    %v9059 = vsel %vm287, %v9058, %v9057
    %v9060 = vrot.slane %v9042, 3
    %v9061 = vsel %vm289, %v9060, %v9059
    %v9062 = vrot.slane %v9043, 2
    %v9063 = vsel %vm291, %v9062, %v9061
    %v9064 = vrot.slane %v9044, 1
    %v9065 = vsel %vm293, %v9064, %v9063
    %9066 = vrot.lane.b32.xlu0 %v9056, 32
    %v9067 = vpop.permute.xlu0 %9066
    %9068 = vrot.lane.b32.xlu0 %v9065, 32
    %v9069 = vpop.permute.xlu0 %9068
    %v9072 = vsel %vm297, %v8551, %v8542
    %v9073 = vsel %vm299, %v8560, %v9072
    %v9074 = vsel %vm287, %v8578, %v8569
    %v9075 = vsel %vm289, %v8587, %v9074
    %v9076 = vsel %vm291, %v8596, %v9075
    %v9077 = vsel %vm293, %v8605, %v9076
    %9078 = vrot.lane.b32.xlu0 %v9073, 32
    %v9079 = vpop.permute.xlu0 %9078
    %9080 = vrot.lane.b32.xlu0 %v9077, 32
    %v9081 = vpop.permute.xlu0 %9080
    %v9084 = vsel %vm297, %v2042, %v170
    %v9085 = vsel %vm299, %v2044, %v9084
    %v9086 = vsel %vm287, %v2048, %v2046
    %v9087 = vsel %vm289, %v2050, %v9086
    %v9088 = vsel %vm291, %v2052, %v9087
    %v9089 = vsel %vm293, %v2054, %v9088
    %9090 = vrot.lane.b32.xlu0 %v9085, 64
    %v9091 = vpop.permute.xlu0 %9090
    %9092 = vrot.lane.b32.xlu0 %v9089, 64
    %v9093 = vpop.permute.xlu0 %9092
    %v9096 = vsel %vm186, %v9067, %v9079
    %v9097 = vsel %vm186, %v9069, %v9081
    %v9098 = vsel %vm2060, %v9096, %v9091
    %v9099 = vsel %vm2060, %v9097, %v9093
    %v9100 = vsel %vm2062, %v9098, 0.0
    %v9101 = vsel %vm2062, %v9099, 0.0
    %v9104 = vcombine.high %v9100, %v9100
    %v9106 = vunpack.c.l.s4 1966171168
    %v9107 = vunpack.c.0.s8 %v9106
    %v9108 = vlaneseq
    %v9109 = vshrl.u32 %v9108, 7
    %v9110 = vsub.s32 %v9107, %v9109
    %v9111 = vrot.slane %v9104, %v9110
    %v9112 = vcombine.high %v9111, %v9111
    %v9114 = vunpack.c.l.s4 1966171168
    %v9115 = vunpack.c.0.s8 %v9114
    %v9116 = vlaneseq
    %v9117 = vshrl.u32 %v9116, 7
    %v9118 = vsub.s32 %v9115, %v9117
    %v9119 = vrot.slane %v9111, %v9118
    %v9121 = vunpack.c.l.s4 1966171168
    %v9122 = vunpack.c.0.s8 %v9121
    %v9123 = vlaneseq
    %v9124 = vshrl.u32 %v9123, 7
    %v9125 = vsub.s32 %v9122, %v9124
    %v9126 = vrot.slane %v9112, %v9125
    %v9127 = vcombine.high %v9119, %v9119
    %v9128 = vcombine.high %v9126, %v9126
    %v9129 = vcombine.high %v9101, %v9101
    %v9131 = vunpack.c.l.s4 1966171168
    %v9132 = vunpack.c.0.s8 %v9131
    %v9133 = vlaneseq
    %v9134 = vshrl.u32 %v9133, 7
    %v9135 = vsub.s32 %v9132, %v9134
    %v9136 = vrot.slane %v9101, %v9135
    %v9138 = vunpack.c.l.s4 1966171168
    %v9139 = vunpack.c.0.s8 %v9138
    %v9140 = vlaneseq
    %v9141 = vshrl.u32 %v9140, 7
    %v9142 = vsub.s32 %v9139, %v9141
    %v9143 = vrot.slane %v9129, %v9142
    %v9144 = vcombine.high %v9136, %v9136
    %v9146 = vunpack.c.l.s4 1966171168
    %v9147 = vunpack.c.0.s8 %v9146
    %v9148 = vlaneseq
    %v9149 = vshrl.u32 %v9148, 7
    %v9150 = vsub.s32 %v9147, %v9149
    %v9151 = vrot.slane %v9136, %v9150
    %v9153 = vunpack.c.l.s4 1966171168
    %v9154 = vunpack.c.0.s8 %v9153
    %v9155 = vlaneseq
    %v9156 = vshrl.u32 %v9155, 7
    %v9157 = vsub.s32 %v9154, %v9156
    %v9158 = vrot.slane %v9143, %v9157
    %v9160 = vunpack.c.l.s4 1966171168
    %v9161 = vunpack.c.0.s8 %v9160
    %v9162 = vlaneseq
    %v9163 = vshrl.u32 %v9162, 7
    %v9164 = vsub.s32 %v9161, %v9163
    %v9165 = vrot.slane %v9144, %v9164
    %v9166 = vcombine.high %v9151, %v9151
    %v9167 = vcombine.high %v9165, %v9165
    %9176 = vst [vmem:[#allocation2 + $0x5] sm:$0x1] %v9126
    %9177 = vst [vmem:[#allocation2 + $0xd] sm:$0x1] %v9127
    %9178 = vst [vmem:[#allocation2 + $0x15] sm:$0x1] %v9128
    %9179 = vst [vmem:[#allocation2 + $0x1d] sm:$0x1] %v9151
    %9180 = vst [vmem:[#allocation2 + $0x25] sm:$0x1] %v9165
    %9181 = vst [vmem:[#allocation2 + $0x2d] sm:$0x1] %v9166
    %9182 = vst [vmem:[#allocation2 + $0x35] sm:$0x1] %v9167
    %9183 = vst [vmem:[#allocation2 + $0x3d] sm:$0x1] %v9158
    %v9184 = vlaneseq
    %v9185 = vshrl.u32 %v9184, 7
    %v9186 = vsub.s32 %v1031, %v9185
    %v9187 = vrot.slane %v8441, %v9186
    %v9188 = vlaneseq
    %v9189 = vshrl.u32 %v9188, 7
    %v9190 = vsub.s32 %v1036, %v9189
    %v9191 = vrot.slane %v8446, %v9190
    %v9192 = vsel %vm1041, %v9191, %v9187
    %v9193 = vlaneseq
    %v9194 = vshrl.u32 %v9193, 7
    %v9195 = vsub.s32 %v1031, %v9194
    %v9196 = vrot.slane %v8451, %v9195
    %v9197 = vlaneseq
    %v9198 = vshrl.u32 %v9197, 7
    %v9199 = vsub.s32 %v1036, %v9198
    %v9200 = vrot.slane %v8456, %v9199
    %v9201 = vsel %vm1041, %v9200, %v9196
    %v9202 = vlaneseq
    %v9203 = vshrl.u32 %v9202, 7
    %v9204 = vsub.s32 %v1031, %v9203
    %v9205 = vrot.slane %v8461, %v9204
    %v9206 = vlaneseq
    %v9207 = vshrl.u32 %v9206, 7
    %v9208 = vsub.s32 %v1036, %v9207
    %v9209 = vrot.slane %v8466, %v9208
    %v9210 = vsel %vm1041, %v9209, %v9205
    %v9211 = vlaneseq
    %v9212 = vshrl.u32 %v9211, 7
    %v9213 = vsub.s32 %v1031, %v9212
    %v9214 = vrot.slane %v8471, %v9213
    %v9215 = vlaneseq
    %v9216 = vshrl.u32 %v9215, 7
    %v9217 = vsub.s32 %v1036, %v9216
    %v9218 = vrot.slane %v8476, %v9217
    %v9219 = vsel %vm1041, %v9218, %v9214
    %v9220 = vlaneseq
    %v9221 = vshrl.u32 %v9220, 7
    %v9222 = vsub.s32 %v1031, %v9221
    %v9223 = vrot.slane %v8481, %v9222
    %v9224 = vlaneseq
    %v9225 = vshrl.u32 %v9224, 7
    %v9226 = vsub.s32 %v1036, %v9225
    %v9227 = vrot.slane %v8486, %v9226
    %v9228 = vsel %vm1041, %v9227, %v9223
    %v9229 = vlaneseq
    %v9230 = vshrl.u32 %v9229, 7
    %v9231 = vsub.s32 %v1031, %v9230
    %v9232 = vrot.slane %v8491, %v9231
    %v9233 = vlaneseq
    %v9234 = vshrl.u32 %v9233, 7
    %v9235 = vsub.s32 %v1036, %v9234
    %v9236 = vrot.slane %v8496, %v9235
    %v9237 = vsel %vm1041, %v9236, %v9232
    %v9238 = vlaneseq
    %v9239 = vshrl.u32 %v9238, 7
    %v9240 = vsub.s32 %v1031, %v9239
    %v9241 = vrot.slane %v8501, %v9240
    %v9242 = vlaneseq
    %v9243 = vshrl.u32 %v9242, 7
    %v9244 = vsub.s32 %v1036, %v9243
    %v9245 = vrot.slane %v8506, %v9244
    %v9246 = vsel %vm1041, %v9245, %v9241
    %v9247 = vlaneseq
    %v9248 = vshrl.u32 %v9247, 7
    %v9249 = vsub.s32 %v1031, %v9248
    %v9250 = vrot.slane %v8511, %v9249
    %v9251 = vlaneseq
    %v9252 = vshrl.u32 %v9251, 7
    %v9253 = vsub.s32 %v1036, %v9252
    %v9254 = vrot.slane %v8516, %v9253
    %v9255 = vsel %vm1041, %v9254, %v9250
    %9264 = vst.msk [vmem:[#allocation18 + $0x5] sm:$0x1] %vm2210, %v9192
    %9265 = vst.msk [vmem:[#allocation18 + $0xd] sm:$0x1] %vm2210, %v9201
    %9266 = vst.msk [vmem:[#allocation18 + $0x15] sm:$0x1] %vm2210, %v9210
    %9267 = vst.msk [vmem:[#allocation18 + $0x1d] sm:$0x1] %vm2210, %v9219
    %9268 = vst.msk [vmem:[#allocation18 + $0x25] sm:$0x1] %vm2210, %v9228
    %9269 = vst.msk [vmem:[#allocation18 + $0x2d] sm:$0x1] %vm2210, %v9237
    %9270 = vst.msk [vmem:[#allocation18 + $0x35] sm:$0x1] %vm2210, %v9246
    %9271 = vst.msk [vmem:[#allocation18 + $0x3d] sm:$0x1] %vm2210, %v9255
    %v9272 = vlaneseq
    %v9273 = vshrl.u32 %v9272, 7
    %v9274 = vsub.s32 5, %v9273
    %v9275 = vrot.slane %v9037, %v9274
    %v9276 = vlaneseq
    %v9277 = vshrl.u32 %v9276, 7
    %v9278 = vsub.s32 5, %v9277
    %v9279 = vrot.slane %v9038, %v9278
    %v9280 = vlaneseq
    %v9281 = vshrl.u32 %v9280, 7
    %v9282 = vsub.s32 5, %v9281
    %v9283 = vrot.slane %v9039, %v9282
    %v9284 = vlaneseq
    %v9285 = vshrl.u32 %v9284, 7
    %v9286 = vsub.s32 5, %v9285
    %v9287 = vrot.slane %v9040, %v9286
    %v9288 = vlaneseq
    %v9289 = vshrl.u32 %v9288, 7
    %v9290 = vsub.s32 5, %v9289
    %v9291 = vrot.slane %v9041, %v9290
    %v9292 = vlaneseq
    %v9293 = vshrl.u32 %v9292, 7
    %v9294 = vsub.s32 5, %v9293
    %v9295 = vrot.slane %v9042, %v9294
    %v9296 = vlaneseq
    %v9297 = vshrl.u32 %v9296, 7
    %v9298 = vsub.s32 5, %v9297
    %v9299 = vrot.slane %v9043, %v9298
    %v9300 = vlaneseq
    %v9301 = vshrl.u32 %v9300, 7
    %v9302 = vsub.s32 5, %v9301
    %v9303 = vrot.slane %v9044, %v9302
    %v9304 = vmul.f32 %v9275, %v2252
    %v9305 = vmul.f32 %v9275, %v2254
    %v9306 = vmul.f32 %v9279, %v2256
    %v9307 = vmul.f32 %v9279, %v2258
    %v9308 = vmul.f32 %v9283, %v2260
    %v9309 = vmul.f32 %v9283, %v2262
    %v9310 = vmul.f32 %v9287, %v2264
    %v9311 = vmul.f32 %v9287, %v2266
    %v9312 = vmul.f32 %v9291, %v2268
    %v9313 = vmul.f32 %v9291, %v2270
    %v9314 = vmul.f32 %v9295, %v2272
    %v9315 = vmul.f32 %v9295, %v2274
    %v9316 = vmul.f32 %v9299, %v2276
    %v9317 = vmul.f32 %v9299, %v2278
    %v9318 = vmul.f32 %v9303, %v2280
    %v9319 = vmul.f32 %v9303, %v2282
    %9336 = vrot.lane.b32.xlu0 %v9304, 32
    %v9337 = vpop.permute.xlu0 %9336
    %9338 = vrot.lane.b32.xlu0 %v9305, 32
    %v9339 = vpop.permute.xlu0 %9338
    %9340 = vrot.lane.b32.xlu0 %v9306, 32
    %v9341 = vpop.permute.xlu0 %9340
    %9342 = vrot.lane.b32.xlu0 %v9307, 32
    %v9343 = vpop.permute.xlu0 %9342
    %9344 = vrot.lane.b32.xlu0 %v9308, 32
    %v9345 = vpop.permute.xlu0 %9344
    %9346 = vrot.lane.b32.xlu0 %v9309, 32
    %v9347 = vpop.permute.xlu0 %9346
    %9348 = vrot.lane.b32.xlu0 %v9310, 32
    %v9349 = vpop.permute.xlu0 %9348
    %9350 = vrot.lane.b32.xlu0 %v9311, 32
    %v9351 = vpop.permute.xlu0 %9350
    %9352 = vrot.lane.b32.xlu0 %v9312, 32
    %v9353 = vpop.permute.xlu0 %9352
    %9354 = vrot.lane.b32.xlu0 %v9313, 32
    %v9355 = vpop.permute.xlu0 %9354
    %9356 = vrot.lane.b32.xlu0 %v9314, 32
    %v9357 = vpop.permute.xlu0 %9356
    %9358 = vrot.lane.b32.xlu0 %v9315, 32
    %v9359 = vpop.permute.xlu0 %9358
    %9360 = vrot.lane.b32.xlu0 %v9316, 32
    %v9361 = vpop.permute.xlu0 %9360
    %9362 = vrot.lane.b32.xlu0 %v9317, 32
    %v9363 = vpop.permute.xlu0 %9362
    %9364 = vrot.lane.b32.xlu0 %v9318, 32
    %v9365 = vpop.permute.xlu0 %9364
    %9366 = vrot.lane.b32.xlu0 %v9319, 32
    %v9367 = vpop.permute.xlu0 %9366
    %v9384 = vsel %vm186, %v9337, 0.0
    %9385 = vadd.xlane.f32.xlu0 %v9384
    %v9386 = vpop.xlane.xlu0 %9385
    %v9387 = vsel %vm186, %v9339, 0.0
    %9388 = vadd.xlane.f32.xlu0 %v9387
    %v9389 = vpop.xlane.xlu0 %9388
    %v9390 = vsel %vm186, %v9341, 0.0
    %9391 = vadd.xlane.f32.xlu0 %v9390
    %v9392 = vpop.xlane.xlu0 %9391
    %v9393 = vsel %vm186, %v9343, 0.0
    %9394 = vadd.xlane.f32.xlu0 %v9393
    %v9395 = vpop.xlane.xlu0 %9394
    %v9396 = vsel %vm186, %v9345, 0.0
    %9397 = vadd.xlane.f32.xlu0 %v9396
    %v9398 = vpop.xlane.xlu0 %9397
    %v9399 = vsel %vm186, %v9347, 0.0
    %9400 = vadd.xlane.f32.xlu0 %v9399
    %v9401 = vpop.xlane.xlu0 %9400
    %v9402 = vsel %vm186, %v9349, 0.0
    %9403 = vadd.xlane.f32.xlu0 %v9402
    %v9404 = vpop.xlane.xlu0 %9403
    %v9405 = vsel %vm186, %v9351, 0.0
    %9406 = vadd.xlane.f32.xlu0 %v9405
    %v9407 = vpop.xlane.xlu0 %9406
    %v9408 = vsel %vm186, %v9353, 0.0
    %9409 = vadd.xlane.f32.xlu0 %v9408
    %v9410 = vpop.xlane.xlu0 %9409
    %v9411 = vsel %vm186, %v9355, 0.0
    %9412 = vadd.xlane.f32.xlu0 %v9411
    %v9413 = vpop.xlane.xlu0 %9412
    %v9414 = vsel %vm186, %v9357, 0.0
    %9415 = vadd.xlane.f32.xlu0 %v9414
    %v9416 = vpop.xlane.xlu0 %9415
    %v9417 = vsel %vm186, %v9359, 0.0
    %9418 = vadd.xlane.f32.xlu0 %v9417
    %v9419 = vpop.xlane.xlu0 %9418
    %v9420 = vsel %vm186, %v9361, 0.0
    %9421 = vadd.xlane.f32.xlu0 %v9420
    %v9422 = vpop.xlane.xlu0 %9421
    %v9423 = vsel %vm186, %v9363, 0.0
    %9424 = vadd.xlane.f32.xlu0 %v9423
    %v9425 = vpop.xlane.xlu0 %9424
    %v9426 = vsel %vm186, %v9365, 0.0
    %9427 = vadd.xlane.f32.xlu0 %v9426
    %v9428 = vpop.xlane.xlu0 %9427
    %v9429 = vsel %vm186, %v9367, 0.0
    %9430 = vadd.xlane.f32.xlu0 %v9429
    %v9431 = vpop.xlane.xlu0 %9430
    %v9432 = vmul.f32 %v9386, 0.17677669
    %v9433 = vmul.f32 %v9389, 0.17677669
    %v9434 = vmul.f32 %v9392, 0.17677669
    %v9435 = vmul.f32 %v9395, 0.17677669
    %v9436 = vmul.f32 %v9398, 0.17677669
    %v9437 = vmul.f32 %v9401, 0.17677669
    %v9438 = vmul.f32 %v9404, 0.17677669
    %v9439 = vmul.f32 %v9407, 0.17677669
    %v9440 = vmul.f32 %v9410, 0.17677669
    %v9441 = vmul.f32 %v9413, 0.17677669
    %v9442 = vmul.f32 %v9416, 0.17677669
    %v9443 = vmul.f32 %v9419, 0.17677669
    %v9444 = vmul.f32 %v9422, 0.17677669
    %v9445 = vmul.f32 %v9425, 0.17677669
    %v9446 = vmul.f32 %v9428, 0.17677669
    %v9447 = vmul.f32 %v9431, 0.17677669
    %v9464 = vlaneseq
    %v9465 = vshrl.u32 %v9464, 7
    %v9466 = vsub.s32 %v1031, %v9465
    %v9467 = vrot.slane %v9432, %v9466
    %v9468 = vlaneseq
    %v9469 = vshrl.u32 %v9468, 7
    %v9470 = vsub.s32 %v1036, %v9469
    %v9471 = vrot.slane %v9433, %v9470
    %v9472 = vsel %vm1041, %v9471, %v9467
    %v9473 = vlaneseq
    %v9474 = vshrl.u32 %v9473, 7
    %v9475 = vsub.s32 %v1031, %v9474
    %v9476 = vrot.slane %v9434, %v9475
    %v9477 = vlaneseq
    %v9478 = vshrl.u32 %v9477, 7
    %v9479 = vsub.s32 %v1036, %v9478
    %v9480 = vrot.slane %v9435, %v9479
    %v9481 = vsel %vm1041, %v9480, %v9476
    %v9482 = vlaneseq
    %v9483 = vshrl.u32 %v9482, 7
    %v9484 = vsub.s32 %v1031, %v9483
    %v9485 = vrot.slane %v9436, %v9484
    %v9486 = vlaneseq
    %v9487 = vshrl.u32 %v9486, 7
    %v9488 = vsub.s32 %v1036, %v9487
    %v9489 = vrot.slane %v9437, %v9488
    %v9490 = vsel %vm1041, %v9489, %v9485
    %v9491 = vlaneseq
    %v9492 = vshrl.u32 %v9491, 7
    %v9493 = vsub.s32 %v1031, %v9492
    %v9494 = vrot.slane %v9438, %v9493
    %v9495 = vlaneseq
    %v9496 = vshrl.u32 %v9495, 7
    %v9497 = vsub.s32 %v1036, %v9496
    %v9498 = vrot.slane %v9439, %v9497
    %v9499 = vsel %vm1041, %v9498, %v9494
    %v9500 = vlaneseq
    %v9501 = vshrl.u32 %v9500, 7
    %v9502 = vsub.s32 %v1031, %v9501
    %v9503 = vrot.slane %v9440, %v9502
    %v9504 = vlaneseq
    %v9505 = vshrl.u32 %v9504, 7
    %v9506 = vsub.s32 %v1036, %v9505
    %v9507 = vrot.slane %v9441, %v9506
    %v9508 = vsel %vm1041, %v9507, %v9503
    %v9509 = vlaneseq
    %v9510 = vshrl.u32 %v9509, 7
    %v9511 = vsub.s32 %v1031, %v9510
    %v9512 = vrot.slane %v9442, %v9511
    %v9513 = vlaneseq
    %v9514 = vshrl.u32 %v9513, 7
    %v9515 = vsub.s32 %v1036, %v9514
    %v9516 = vrot.slane %v9443, %v9515
    %v9517 = vsel %vm1041, %v9516, %v9512
    %v9518 = vlaneseq
    %v9519 = vshrl.u32 %v9518, 7
    %v9520 = vsub.s32 %v1031, %v9519
    %v9521 = vrot.slane %v9444, %v9520
    %v9522 = vlaneseq
    %v9523 = vshrl.u32 %v9522, 7
    %v9524 = vsub.s32 %v1036, %v9523
    %v9525 = vrot.slane %v9445, %v9524
    %v9526 = vsel %vm1041, %v9525, %v9521
    %v9527 = vlaneseq
    %v9528 = vshrl.u32 %v9527, 7
    %v9529 = vsub.s32 %v1031, %v9528
    %v9530 = vrot.slane %v9446, %v9529
    %v9531 = vlaneseq
    %v9532 = vshrl.u32 %v9531, 7
    %v9533 = vsub.s32 %v1036, %v9532
    %v9534 = vrot.slane %v9447, %v9533
    %v9535 = vsel %vm1041, %v9534, %v9530
    %v9536 = vsel %vm287, %v9481, %v9472
    %v9537 = vsel %vm289, %v9490, %v9536
    %v9538 = vsel %vm291, %v9499, %v9537
    %v9539 = vsel %vm293, %v9508, %v9538
    %v9540 = vsel %vm295, %v9517, %v9539
    %v9541 = vsel %vm297, %v9526, %v9540
    %v9542 = vsel %vm299, %v9535, %v9541
    %v9544 = vsel %vm586, %v9542, -inf
    %9545 = vmax.xlane.f32.xlu0 %v9544
    %v9546 = vpop.xlane.xlu0 %9545
    %v9548 = vlaneseq
    %v9549 = vshrl.u32 %v9548, 7
    %v9550 = vsub.s32 0, %v9549
    %v9551 = vrot.slane %v9546, %v9550
    %v9552 = vlaneseq
    %v9553 = vshrl.u32 %v9552, 7
    %v9554 = vsub.s32 1, %v9553
    %v9555 = vrot.slane %v9546, %v9554
    %v9556 = vlaneseq
    %v9557 = vshrl.u32 %v9556, 7
    %v9558 = vsub.s32 2, %v9557
    %v9559 = vrot.slane %v9546, %v9558
    %v9560 = vlaneseq
    %v9561 = vshrl.u32 %v9560, 7
    %v9562 = vsub.s32 3, %v9561
    %v9563 = vrot.slane %v9546, %v9562
    %v9564 = vlaneseq
    %v9565 = vshrl.u32 %v9564, 7
    %v9566 = vsub.s32 4, %v9565
    %v9567 = vrot.slane %v9546, %v9566
    %v9568 = vlaneseq
    %v9569 = vshrl.u32 %v9568, 7
    %v9570 = vsub.s32 5, %v9569
    %v9571 = vrot.slane %v9546, %v9570
    %v9572 = vlaneseq
    %v9573 = vshrl.u32 %v9572, 7
    %v9574 = vsub.s32 6, %v9573
    %v9575 = vrot.slane %v9546, %v9574
    %v9576 = vlaneseq
    %v9577 = vshrl.u32 %v9576, 7
    %v9578 = vsub.s32 7, %v9577
    %v9579 = vrot.slane %v9546, %v9578
    %v9588 = vsub.f32 %v9432, %v9551
    %v9589 = vsub.f32 %v9433, %v9551
    %v9590 = vsub.f32 %v9434, %v9555
    %v9591 = vsub.f32 %v9435, %v9555
    %v9592 = vsub.f32 %v9436, %v9559
    %v9593 = vsub.f32 %v9437, %v9559
    %v9594 = vsub.f32 %v9438, %v9563
    %v9595 = vsub.f32 %v9439, %v9563
    %v9596 = vsub.f32 %v9440, %v9567
    %v9597 = vsub.f32 %v9441, %v9567
    %v9598 = vsub.f32 %v9442, %v9571
    %v9599 = vsub.f32 %v9443, %v9571
    %v9600 = vsub.f32 %v9444, %v9575
    %v9601 = vsub.f32 %v9445, %v9575
    %v9602 = vsub.f32 %v9446, %v9579
    %v9603 = vsub.f32 %v9447, %v9579
    %v9604 = vmul.f32 %v9588, 1.442695
    %v9605 = vpow.pop %v9604
    %v9606 = vmul.f32 %v9589, 1.442695
    %v9607 = vpow.pop %v9606
    %v9608 = vmul.f32 %v9590, 1.442695
    %v9609 = vpow.pop %v9608
    %v9610 = vmul.f32 %v9591, 1.442695
    %v9611 = vpow.pop %v9610
    %v9612 = vmul.f32 %v9592, 1.442695
    %v9613 = vpow.pop %v9612
    %v9614 = vmul.f32 %v9593, 1.442695
    %v9615 = vpow.pop %v9614
    %v9616 = vmul.f32 %v9594, 1.442695
    %v9617 = vpow.pop %v9616
    %v9618 = vmul.f32 %v9595, 1.442695
    %v9619 = vpow.pop %v9618
    %v9620 = vmul.f32 %v9596, 1.442695
    %v9621 = vpow.pop %v9620
    %v9622 = vmul.f32 %v9597, 1.442695
    %v9623 = vpow.pop %v9622
    %v9624 = vmul.f32 %v9598, 1.442695
    %v9625 = vpow.pop %v9624
    %v9626 = vmul.f32 %v9599, 1.442695
    %v9627 = vpow.pop %v9626
    %v9628 = vmul.f32 %v9600, 1.442695
    %v9629 = vpow.pop %v9628
    %v9630 = vmul.f32 %v9601, 1.442695
    %v9631 = vpow.pop %v9630
    %v9632 = vmul.f32 %v9602, 1.442695
    %v9633 = vpow.pop %v9632
    %v9634 = vmul.f32 %v9603, 1.442695
    %v9635 = vpow.pop %v9634
    %9652 = vset.pattern.permute.xlu0 0
    %9653 = vperm.xlu0 %9652, %v9605
    %v9654 = vpop.permute.xlu0 %9653
    %9655 = vset.pattern.permute.xlu0 0
    %9656 = vperm.xlu0 %9655, %v9607
    %v9657 = vpop.permute.xlu0 %9656
    %9658 = vset.pattern.permute.xlu0 0
    %9659 = vperm.xlu0 %9658, %v9609
    %v9660 = vpop.permute.xlu0 %9659
    %9661 = vset.pattern.permute.xlu0 0
    %9662 = vperm.xlu0 %9661, %v9611
    %v9663 = vpop.permute.xlu0 %9662
    %9664 = vset.pattern.permute.xlu0 0
    %9665 = vperm.xlu0 %9664, %v9613
    %v9666 = vpop.permute.xlu0 %9665
    %9667 = vset.pattern.permute.xlu0 0
    %9668 = vperm.xlu0 %9667, %v9615
    %v9669 = vpop.permute.xlu0 %9668
    %9670 = vset.pattern.permute.xlu0 0
    %9671 = vperm.xlu0 %9670, %v9617
    %v9672 = vpop.permute.xlu0 %9671
    %9673 = vset.pattern.permute.xlu0 0
    %9674 = vperm.xlu0 %9673, %v9619
    %v9675 = vpop.permute.xlu0 %9674
    %9676 = vset.pattern.permute.xlu0 0
    %9677 = vperm.xlu0 %9676, %v9621
    %v9678 = vpop.permute.xlu0 %9677
    %9679 = vset.pattern.permute.xlu0 0
    %9680 = vperm.xlu0 %9679, %v9623
    %v9681 = vpop.permute.xlu0 %9680
    %9682 = vset.pattern.permute.xlu0 0
    %9683 = vperm.xlu0 %9682, %v9625
    %v9684 = vpop.permute.xlu0 %9683
    %9685 = vset.pattern.permute.xlu0 0
    %9686 = vperm.xlu0 %9685, %v9627
    %v9687 = vpop.permute.xlu0 %9686
    %9688 = vset.pattern.permute.xlu0 0
    %9689 = vperm.xlu0 %9688, %v9629
    %v9690 = vpop.permute.xlu0 %9689
    %9691 = vset.pattern.permute.xlu0 0
    %9692 = vperm.xlu0 %9691, %v9631
    %v9693 = vpop.permute.xlu0 %9692
    %9694 = vset.pattern.permute.xlu0 0
    %9695 = vperm.xlu0 %9694, %v9633
    %v9696 = vpop.permute.xlu0 %9695
    %9697 = vset.pattern.permute.xlu0 0
    %9698 = vperm.xlu0 %9697, %v9635
    %v9699 = vpop.permute.xlu0 %9698
    %v9700 = vlaneseq
    %v9701 = vshrl.u32 %v9700, 7
    %v9702 = vsub.s32 %v1031, %v9701
    %v9703 = vrot.slane %v9654, %v9702
    %v9704 = vlaneseq
    %v9705 = vshrl.u32 %v9704, 7
    %v9706 = vsub.s32 %v1036, %v9705
    %v9707 = vrot.slane %v9657, %v9706
    %v9708 = vsel %vm1041, %v9707, %v9703
    %v9709 = vlaneseq
    %v9710 = vshrl.u32 %v9709, 7
    %v9711 = vsub.s32 %v1031, %v9710
    %v9712 = vrot.slane %v9660, %v9711
    %v9713 = vlaneseq
    %v9714 = vshrl.u32 %v9713, 7
    %v9715 = vsub.s32 %v1036, %v9714
    %v9716 = vrot.slane %v9663, %v9715
    %v9717 = vsel %vm1041, %v9716, %v9712
    %v9718 = vlaneseq
    %v9719 = vshrl.u32 %v9718, 7
    %v9720 = vsub.s32 %v1031, %v9719
    %v9721 = vrot.slane %v9666, %v9720
    %v9722 = vlaneseq
    %v9723 = vshrl.u32 %v9722, 7
    %v9724 = vsub.s32 %v1036, %v9723
    %v9725 = vrot.slane %v9669, %v9724
    %v9726 = vsel %vm1041, %v9725, %v9721
    %v9727 = vlaneseq
    %v9728 = vshrl.u32 %v9727, 7
    %v9729 = vsub.s32 %v1031, %v9728
    %v9730 = vrot.slane %v9672, %v9729
    %v9731 = vlaneseq
    %v9732 = vshrl.u32 %v9731, 7
    %v9733 = vsub.s32 %v1036, %v9732
    %v9734 = vrot.slane %v9675, %v9733
    %v9735 = vsel %vm1041, %v9734, %v9730
    %v9736 = vlaneseq
    %v9737 = vshrl.u32 %v9736, 7
    %v9738 = vsub.s32 %v1031, %v9737
    %v9739 = vrot.slane %v9678, %v9738
    %v9740 = vlaneseq
    %v9741 = vshrl.u32 %v9740, 7
    %v9742 = vsub.s32 %v1036, %v9741
    %v9743 = vrot.slane %v9681, %v9742
    %v9744 = vsel %vm1041, %v9743, %v9739
    %v9745 = vlaneseq
    %v9746 = vshrl.u32 %v9745, 7
    %v9747 = vsub.s32 %v1031, %v9746
    %v9748 = vrot.slane %v9684, %v9747
    %v9749 = vlaneseq
    %v9750 = vshrl.u32 %v9749, 7
    %v9751 = vsub.s32 %v1036, %v9750
    %v9752 = vrot.slane %v9687, %v9751
    %v9753 = vsel %vm1041, %v9752, %v9748
    %v9754 = vlaneseq
    %v9755 = vshrl.u32 %v9754, 7
    %v9756 = vsub.s32 %v1031, %v9755
    %v9757 = vrot.slane %v9690, %v9756
    %v9758 = vlaneseq
    %v9759 = vshrl.u32 %v9758, 7
    %v9760 = vsub.s32 %v1036, %v9759
    %v9761 = vrot.slane %v9693, %v9760
    %v9762 = vsel %vm1041, %v9761, %v9757
    %v9763 = vlaneseq
    %v9764 = vshrl.u32 %v9763, 7
    %v9765 = vsub.s32 %v1031, %v9764
    %v9766 = vrot.slane %v9696, %v9765
    %v9767 = vlaneseq
    %v9768 = vshrl.u32 %v9767, 7
    %v9769 = vsub.s32 %v1036, %v9768
    %v9770 = vrot.slane %v9699, %v9769
    %v9771 = vsel %vm1041, %v9770, %v9766
    %v9772 = vsel %vm287, %v9717, %v9708
    %v9773 = vsel %vm289, %v9726, %v9772
    %v9774 = vsel %vm291, %v9735, %v9773
    %v9775 = vsel %vm293, %v9744, %v9774
    %v9776 = vsel %vm295, %v9753, %v9775
    %v9777 = vsel %vm297, %v9762, %v9776
    %v9778 = vsel %vm299, %v9771, %v9777
    %v9780 = vsel %vm586, %v9778, 0.0
    %9781 = vadd.xlane.f32.xlu0 %v9780
    %v9782 = vpop.xlane.xlu0 %9781
    %v9783 = vrcp.pop %v9782
    %v9784 = vmul.f32 %v9782, %v9783
    %v9785 = vsub.f32 2.0, %v9784
    %v9786 = vmul.f32 %v9783, %v9785
    %v9788 = vlaneseq
    %v9789 = vshrl.u32 %v9788, 7
    %v9790 = vsub.s32 0, %v9789
    %v9791 = vrot.slane %v9786, %v9790
    %v9792 = vlaneseq
    %v9793 = vshrl.u32 %v9792, 7
    %v9794 = vsub.s32 1, %v9793
    %v9795 = vrot.slane %v9786, %v9794
    %v9796 = vlaneseq
    %v9797 = vshrl.u32 %v9796, 7
    %v9798 = vsub.s32 2, %v9797
    %v9799 = vrot.slane %v9786, %v9798
    %v9800 = vlaneseq
    %v9801 = vshrl.u32 %v9800, 7
    %v9802 = vsub.s32 3, %v9801
    %v9803 = vrot.slane %v9786, %v9802
    %v9804 = vlaneseq
    %v9805 = vshrl.u32 %v9804, 7
    %v9806 = vsub.s32 4, %v9805
    %v9807 = vrot.slane %v9786, %v9806
    %v9808 = vlaneseq
    %v9809 = vshrl.u32 %v9808, 7
    %v9810 = vsub.s32 5, %v9809
    %v9811 = vrot.slane %v9786, %v9810
    %v9812 = vlaneseq
    %v9813 = vshrl.u32 %v9812, 7
    %v9814 = vsub.s32 6, %v9813
    %v9815 = vrot.slane %v9786, %v9814
    %v9816 = vlaneseq
    %v9817 = vshrl.u32 %v9816, 7
    %v9818 = vsub.s32 7, %v9817
    %v9819 = vrot.slane %v9786, %v9818
    %v9828 = vmul.f32 %v9605, %v9791
    %v9829 = vmul.f32 %v9607, %v9791
    %v9830 = vmul.f32 %v9609, %v9795
    %v9831 = vmul.f32 %v9611, %v9795
    %v9832 = vmul.f32 %v9613, %v9799
    %v9833 = vmul.f32 %v9615, %v9799
    %v9834 = vmul.f32 %v9617, %v9803
    %v9835 = vmul.f32 %v9619, %v9803
    %v9836 = vmul.f32 %v9621, %v9807
    %v9837 = vmul.f32 %v9623, %v9807
    %v9838 = vmul.f32 %v9625, %v9811
    %v9839 = vmul.f32 %v9627, %v9811
    %v9840 = vmul.f32 %v9629, %v9815
    %v9841 = vmul.f32 %v9631, %v9815
    %v9842 = vmul.f32 %v9633, %v9819
    %v9843 = vmul.f32 %v9635, %v9819
    %9845 = vset.pattern.permute.xlu0 0
    %9846 = vperm.xlu0 %9845, %v9828
    %v9847 = vpop.permute.xlu0 %9846
    %9850 = vset.pattern.permute.xlu0 0
    %9851 = vperm.xlu0 %9850, %v9829
    %v9852 = vpop.permute.xlu0 %9851
    %9855 = vset.pattern.permute.xlu0 0
    %9856 = vperm.xlu0 %9855, %v9830
    %v9857 = vpop.permute.xlu0 %9856
    %9860 = vset.pattern.permute.xlu0 0
    %9861 = vperm.xlu0 %9860, %v9831
    %v9862 = vpop.permute.xlu0 %9861
    %9865 = vset.pattern.permute.xlu0 0
    %9866 = vperm.xlu0 %9865, %v9832
    %v9867 = vpop.permute.xlu0 %9866
    %9870 = vset.pattern.permute.xlu0 0
    %9871 = vperm.xlu0 %9870, %v9833
    %v9872 = vpop.permute.xlu0 %9871
    %9875 = vset.pattern.permute.xlu0 0
    %9876 = vperm.xlu0 %9875, %v9834
    %v9877 = vpop.permute.xlu0 %9876
    %9880 = vset.pattern.permute.xlu0 0
    %9881 = vperm.xlu0 %9880, %v9835
    %v9882 = vpop.permute.xlu0 %9881
    %9885 = vset.pattern.permute.xlu0 0
    %9886 = vperm.xlu0 %9885, %v9836
    %v9887 = vpop.permute.xlu0 %9886
    %9890 = vset.pattern.permute.xlu0 0
    %9891 = vperm.xlu0 %9890, %v9837
    %v9892 = vpop.permute.xlu0 %9891
    %9895 = vset.pattern.permute.xlu0 0
    %9896 = vperm.xlu0 %9895, %v9838
    %v9897 = vpop.permute.xlu0 %9896
    %9900 = vset.pattern.permute.xlu0 0
    %9901 = vperm.xlu0 %9900, %v9839
    %v9902 = vpop.permute.xlu0 %9901
    %9905 = vset.pattern.permute.xlu0 0
    %9906 = vperm.xlu0 %9905, %v9840
    %v9907 = vpop.permute.xlu0 %9906
    %9910 = vset.pattern.permute.xlu0 0
    %9911 = vperm.xlu0 %9910, %v9841
    %v9912 = vpop.permute.xlu0 %9911
    %9915 = vset.pattern.permute.xlu0 0
    %9916 = vperm.xlu0 %9915, %v9842
    %v9917 = vpop.permute.xlu0 %9916
    %9920 = vset.pattern.permute.xlu0 0
    %9921 = vperm.xlu0 %9920, %v9843
    %v9922 = vpop.permute.xlu0 %9921
    %v9924 = vmul.f32 %v9847, %v154
    %v9925 = vmul.f32 %v9852, %v155
    %v9926 = vmul.f32 %v9857, %v156
    %v9927 = vmul.f32 %v9862, %v157
    %v9928 = vmul.f32 %v9867, %v158
    %v9929 = vmul.f32 %v9872, %v159
    %v9930 = vmul.f32 %v9877, %v160
    %v9931 = vmul.f32 %v9882, %v161
    %v9932 = vmul.f32 %v9887, %v162
    %v9933 = vmul.f32 %v9892, %v163
    %v9934 = vmul.f32 %v9897, %v164
    %v9935 = vmul.f32 %v9902, %v165
    %v9936 = vmul.f32 %v9907, %v166
    %v9937 = vmul.f32 %v9912, %v167
    %v9938 = vmul.f32 %v9917, %v168
    %v9939 = vmul.f32 %v9922, %v169
    %v9940 = vsel %vm186, %v9924, 0.0
    %v9941 = vsel %vm186, %v9925, 0.0
    %v9942 = vadd.f32 %v9940, %v9941
    %v9943 = vrot.slane %v9942, 4
    %v9944 = vadd.f32 %v9942, %v9943
    %v9945 = vrot.slane %v9944, 2
    %v9946 = vadd.f32 %v9944, %v9945
    %v9947 = vrot.slane %v9946, 1
    %v9948 = vadd.f32 %v9946, %v9947
    %v9949 = vsel %vm186, %v9926, 0.0
    %v9950 = vsel %vm186, %v9927, 0.0
    %v9951 = vadd.f32 %v9949, %v9950
    %v9952 = vrot.slane %v9951, 4
    %v9953 = vadd.f32 %v9951, %v9952
    %v9954 = vrot.slane %v9953, 2
    %v9955 = vadd.f32 %v9953, %v9954
    %v9956 = vrot.slane %v9955, 1
    %v9957 = vadd.f32 %v9955, %v9956
    %v9958 = vsel %vm186, %v9928, 0.0
    %v9959 = vsel %vm186, %v9929, 0.0
    %v9960 = vadd.f32 %v9958, %v9959
    %v9961 = vrot.slane %v9960, 4
    %v9962 = vadd.f32 %v9960, %v9961
    %v9963 = vrot.slane %v9962, 2
    %v9964 = vadd.f32 %v9962, %v9963
    %v9965 = vrot.slane %v9964, 1
    %v9966 = vadd.f32 %v9964, %v9965
    %v9967 = vsel %vm186, %v9930, 0.0
    %v9968 = vsel %vm186, %v9931, 0.0
    %v9969 = vadd.f32 %v9967, %v9968
    %v9970 = vrot.slane %v9969, 4
    %v9971 = vadd.f32 %v9969, %v9970
    %v9972 = vrot.slane %v9971, 2
    %v9973 = vadd.f32 %v9971, %v9972
    %v9974 = vrot.slane %v9973, 1
    %v9975 = vadd.f32 %v9973, %v9974
    %v9976 = vsel %vm186, %v9932, 0.0
    %v9977 = vsel %vm186, %v9933, 0.0
    %v9978 = vadd.f32 %v9976, %v9977
    %v9979 = vrot.slane %v9978, 4
    %v9980 = vadd.f32 %v9978, %v9979
    %v9981 = vrot.slane %v9980, 2
    %v9982 = vadd.f32 %v9980, %v9981
    %v9983 = vrot.slane %v9982, 1
    %v9984 = vadd.f32 %v9982, %v9983
    %v9985 = vsel %vm186, %v9934, 0.0
    %v9986 = vsel %vm186, %v9935, 0.0
    %v9987 = vadd.f32 %v9985, %v9986
    %v9988 = vrot.slane %v9987, 4
    %v9989 = vadd.f32 %v9987, %v9988
    %v9990 = vrot.slane %v9989, 2
    %v9991 = vadd.f32 %v9989, %v9990
    %v9992 = vrot.slane %v9991, 1
    %v9993 = vadd.f32 %v9991, %v9992
    %v9994 = vsel %vm186, %v9936, 0.0
    %v9995 = vsel %vm186, %v9937, 0.0
    %v9996 = vadd.f32 %v9994, %v9995
    %v9997 = vrot.slane %v9996, 4
    %v9998 = vadd.f32 %v9996, %v9997
    %v9999 = vrot.slane %v9998, 2
    %v10000 = vadd.f32 %v9998, %v9999
    %v10001 = vrot.slane %v10000, 1
    %v10002 = vadd.f32 %v10000, %v10001
    %v10003 = vsel %vm186, %v9938, 0.0
    %v10004 = vsel %vm186, %v9939, 0.0
    %v10005 = vadd.f32 %v10003, %v10004
    %v10006 = vrot.slane %v10005, 4
    %v10007 = vadd.f32 %v10005, %v10006
    %v10008 = vrot.slane %v10007, 2
    %v10009 = vadd.f32 %v10007, %v10008
    %v10010 = vrot.slane %v10009, 1
    %v10011 = vadd.f32 %v10009, %v10010
    %v10020 = vsel %vm287, %v9957, %v9948
    %v10021 = vsel %vm289, %v9966, %v10020
    %v10022 = vsel %vm291, %v9975, %v10021
    %v10023 = vsel %vm293, %v9984, %v10022
    %v10024 = vsel %vm295, %v9993, %v10023
    %v10025 = vsel %vm297, %v10002, %v10024
    %v10026 = vsel %vm299, %v10011, %v10025
    %v10027 = vsel %vm186, %v10026, 0
    %10029 = vmatprep.subr.mxu0 0.0
    %10030 = vmatpush1.msra.mxu0 0.0
    %10031 = vmatprep.subr.mxu0 0.0
    %10032 = vmatpush1.msra.mxu0 0.0
    %10033 = vmatprep.subr.mxu0 0.0
    %10034 = vmatpush1.msra.mxu0 0.0
    %10035 = vmatprep.subr.mxu0 0.0
    %10036 = vmatpush1.msra.mxu0 0.0
    %10037 = vmatprep.subr.mxu0 0.0
    %10038 = vmatpush1.msra.mxu0 0.0
    %10039 = vmatprep.subr.mxu0 0.0
    %10040 = vmatpush1.msra.mxu0 0.0
    %10041 = vmatprep.subr.mxu0 0.0
    %10042 = vmatpush1.msra.mxu0 0.0
    %10043 = vmatprep.subr.mxu0 0.0
    %10044 = vmatpush1.msra.mxu0 0.0
    %10045 = vmatprep.subr.mxu0 0.0
    %10046 = vmatpush1.msra.mxu0 0.0
    %10047 = vmatprep.subr.mxu0 0.0
    %10048 = vmatpush1.msra.mxu0 0.0
    %10049 = vmatprep.subr.mxu0 0.0
    %10050 = vmatpush1.msra.mxu0 0.0
    %10051 = vmatprep.subr.mxu0 0.0
    %10052 = vmatpush1.msra.mxu0 0.0
    %10053 = vmatprep.subr.mxu0 0.0
    %10054 = vmatpush1.msra.mxu0 %v181
    %10055 = vmatprep.subr.mxu0 0.0
    %10056 = vmatpush1.msra.mxu0 %v180
    %10057 = vmatprep.subr.mxu0 0.0
    %10058 = vmatpush1.msra.mxu0 %v179
    %10059 = vmatprep.subr.mxu0 0.0
    %10060 = vmatpush1.msra.mxu0 %v178
    %10061 = vmatprep.subr.mxu0 0.0
    %10062 = vmatpush2.msra.mxu0 0.0
    %10063 = vmatprep.subr.mxu0 0.0
    %10064 = vmatpush2.msra.mxu0 0.0
    %10065 = vmatprep.subr.mxu0 0.0
    %10066 = vmatpush2.msra.mxu0 0.0
    %10067 = vmatprep.subr.mxu0 0.0
    %10068 = vmatpush2.msra.mxu0 0.0
    %10069 = vmatprep.subr.mxu0 0.0
    %10070 = vmatpush2.msra.mxu0 0.0
    %10071 = vmatprep.subr.mxu0 0.0
    %10072 = vmatpush2.msra.mxu0 0.0
    %10073 = vmatprep.subr.mxu0 0.0
    %10074 = vmatpush2.msra.mxu0 0.0
    %10075 = vmatprep.subr.mxu0 0.0
    %10076 = vmatpush2.msra.mxu0 0.0
    %10077 = vmatprep.subr.mxu0 0.0
    %10078 = vmatpush2.msra.mxu0 0.0
    %10079 = vmatprep.subr.mxu0 0.0
    %10080 = vmatpush2.msra.mxu0 0.0
    %10081 = vmatprep.subr.mxu0 0.0
    %10082 = vmatpush2.msra.mxu0 0.0
    %10083 = vmatprep.subr.mxu0 0.0
    %10084 = vmatpush2.msra.mxu0 0.0
    %10085 = vmatprep.subr.mxu0 0.0
    %10086 = vmatpush2.msra.mxu0 0.0
    %10087 = vmatprep.subr.mxu0 0.0
    %10088 = vmatpush2.msra.mxu0 0.0
    %10089 = vmatprep.subr.mxu0 0.0
    %10090 = vmatpush2.msra.mxu0 0.0
    %10091 = vmatprep.subr.mxu0 0.0
    %10092 = vmatpush2.msra.mxu0 0.0
    %10093 = vmatprep.mubr.f32.mxu0 0.0
    %10094 = vmatmul.mubr.f32.gmra.mxu0 %v10027
    %v10095 = vpop.f32.mrf.mxu0
    %v10096 = vadd.f32 0.0, %v10095
    %v10097 = vpop.f32.mrf.mxu0
    %10098 = vdwg.mxu0
    %v10100 = vrot.slane %v10096, 2
    %v10101 = vrot.slane %v10096, 3
    %v10102 = vrot.slane %v10096, 4
    %v10103 = vrot.slane %v10096, 5
    %v10104 = vrot.slane %v10096, 6
    %v10105 = vrot.slane %v10096, 7
    %v10106 = vrot.slane %v10096, 1
    %v10115 = vadd.f32 %v678, %v10100
    %v10116 = vadd.f32 %v683, %v10101
    %v10117 = vadd.f32 %v688, %v10102
    %v10118 = vadd.f32 %v693, %v10103
    %v10119 = vadd.f32 %v698, %v10104
    %v10120 = vadd.f32 %v703, %v10105
    %v10121 = vadd.f32 %v708, %v10096
    %v10122 = vadd.f32 %v713, %v10106
    %v10123 = vrot.slane %v9037, 5
    %v10124 = vrot.slane %v9038, 4
    %v10125 = vsel %vm287, %v10124, %v10123
    %v10126 = vrot.slane %v9039, 3
    %v10127 = vsel %vm289, %v10126, %v10125
    %v10128 = vrot.slane %v9040, 2
    %v10129 = vsel %vm291, %v10128, %v10127
    %v10130 = vrot.slane %v9041, 1
    %v10131 = vsel %vm293, %v10130, %v10129
    %v10132 = vsel %vm295, %v9042, %v10131
    %v10133 = vrot.slane %v9043, 7
    %v10134 = vsel %vm297, %v10133, %v10132
    %v10135 = vrot.slane %v9044, 6
    %v10136 = vsel %vm299, %v10135, %v10134
    %10137 = vrot.lane.b32.xlu0 %v10136, 32
    %v10138 = vpop.permute.xlu0 %10137
    %v10139 = vsel %vm186, %v10138, 0
    %10141 = vmatprep.subr.mxu0 0.0
    %10142 = vmatpush1.msra.mxu0 0.0
    %10143 = vmatprep.subr.mxu0 0.0
    %10144 = vmatpush1.msra.mxu0 0.0
    %10145 = vmatprep.subr.mxu0 0.0
    %10146 = vmatpush1.msra.mxu0 0.0
    %10147 = vmatprep.subr.mxu0 0.0
    %10148 = vmatpush1.msra.mxu0 0.0
    %10149 = vmatprep.subr.mxu0 0.0
    %10150 = vmatpush1.msra.mxu0 0.0
    %10151 = vmatprep.subr.mxu0 0.0
    %10152 = vmatpush1.msra.mxu0 0.0
    %10153 = vmatprep.subr.mxu0 0.0
    %10154 = vmatpush1.msra.mxu0 0.0
    %10155 = vmatprep.subr.mxu0 0.0
    %10156 = vmatpush1.msra.mxu0 0.0
    %10157 = vmatprep.subr.mxu0 0.0
    %10158 = vmatpush1.msra.mxu0 0.0
    %10159 = vmatprep.subr.mxu0 0.0
    %10160 = vmatpush1.msra.mxu0 0.0
    %10161 = vmatprep.subr.mxu0 0.0
    %10162 = vmatpush1.msra.mxu0 0.0
    %10163 = vmatprep.subr.mxu0 0.0
    %10164 = vmatpush1.msra.mxu0 0.0
    %10165 = vmatprep.subr.mxu0 0.0
    %10166 = vmatpush1.msra.mxu0 %v185
    %10167 = vmatprep.subr.mxu0 0.0
    %10168 = vmatpush1.msra.mxu0 %v184
    %10169 = vmatprep.subr.mxu0 0.0
    %10170 = vmatpush1.msra.mxu0 %v183
    %10171 = vmatprep.subr.mxu0 0.0
    %10172 = vmatpush1.msra.mxu0 %v182
    %10173 = vmatprep.subr.mxu0 0.0
    %10174 = vmatpush2.msra.mxu0 0.0
    %10175 = vmatprep.subr.mxu0 0.0
    %10176 = vmatpush2.msra.mxu0 0.0
    %10177 = vmatprep.subr.mxu0 0.0
    %10178 = vmatpush2.msra.mxu0 0.0
    %10179 = vmatprep.subr.mxu0 0.0
    %10180 = vmatpush2.msra.mxu0 0.0
    %10181 = vmatprep.subr.mxu0 0.0
    %10182 = vmatpush2.msra.mxu0 0.0
    %10183 = vmatprep.subr.mxu0 0.0
    %10184 = vmatpush2.msra.mxu0 0.0
    %10185 = vmatprep.subr.mxu0 0.0
    %10186 = vmatpush2.msra.mxu0 0.0
    %10187 = vmatprep.subr.mxu0 0.0
    %10188 = vmatpush2.msra.mxu0 0.0
    %10189 = vmatprep.subr.mxu0 0.0
    %10190 = vmatpush2.msra.mxu0 0.0
    %10191 = vmatprep.subr.mxu0 0.0
    %10192 = vmatpush2.msra.mxu0 0.0
    %10193 = vmatprep.subr.mxu0 0.0
    %10194 = vmatpush2.msra.mxu0 0.0
    %10195 = vmatprep.subr.mxu0 0.0
    %10196 = vmatpush2.msra.mxu0 0.0
    %10197 = vmatprep.subr.mxu0 0.0
    %10198 = vmatpush2.msra.mxu0 0.0
    %10199 = vmatprep.subr.mxu0 0.0
    %10200 = vmatpush2.msra.mxu0 0.0
    %10201 = vmatprep.subr.mxu0 0.0
    %10202 = vmatpush2.msra.mxu0 0.0
    %10203 = vmatprep.subr.mxu0 0.0
    %10204 = vmatpush2.msra.mxu0 0.0
    %10205 = vmatprep.mubr.f32.mxu0 0.0
    %10206 = vmatmul.mubr.f32.gmra.mxu0 %v10139
    %v10207 = vpop.f32.mrf.mxu0
    %v10208 = vadd.f32 0.0, %v10207
    %v10209 = vpop.f32.mrf.mxu0
    %10210 = vdwg.mxu0
    %v10212 = vrot.slane %v10208, 2
    %v10213 = vrot.slane %v10208, 3
    %v10214 = vrot.slane %v10208, 4
    %v10215 = vrot.slane %v10208, 5
    %v10216 = vrot.slane %v10208, 6
    %v10217 = vrot.slane %v10208, 7
    %v10218 = vrot.slane %v10208, 1
    %v10227 = vadd.f32 %v10115, %v10212
    %v10228 = vadd.f32 %v10116, %v10213
    %v10229 = vadd.f32 %v10117, %v10214
    %v10230 = vadd.f32 %v10118, %v10215
    %v10231 = vadd.f32 %v10119, %v10216
    %v10232 = vadd.f32 %v10120, %v10217
    %v10233 = vadd.f32 %v10121, %v10208
    %v10234 = vadd.f32 %v10122, %v10218
    %v10235 = vxor.u32 %v10227, 2147483648
    %v10236 = vxor.u32 %v10228, 2147483648
    %v10237 = vxor.u32 %v10229, 2147483648
    %v10238 = vxor.u32 %v10230, 2147483648
    %v10239 = vxor.u32 %v10231, 2147483648
    %v10240 = vxor.u32 %v10232, 2147483648
    %v10241 = vxor.u32 %v10233, 2147483648
    %v10242 = vxor.u32 %v10234, 2147483648
    %v10243 = vmul.f32 %v10235, 1.442695
    %v10244 = vpow.pop %v10243
    %v10245 = vmul.f32 %v10236, 1.442695
    %v10246 = vpow.pop %v10245
    %v10247 = vmul.f32 %v10237, 1.442695
    %v10248 = vpow.pop %v10247
    %v10249 = vmul.f32 %v10238, 1.442695
    %v10250 = vpow.pop %v10249
    %v10251 = vmul.f32 %v10239, 1.442695
    %v10252 = vpow.pop %v10251
    %v10253 = vmul.f32 %v10240, 1.442695
    %v10254 = vpow.pop %v10253
    %v10255 = vmul.f32 %v10241, 1.442695
    %v10256 = vpow.pop %v10255
    %v10257 = vmul.f32 %v10242, 1.442695
    %v10258 = vpow.pop %v10257
    %v10259 = vadd.f32 %v10244, 1.0
    %v10260 = vadd.f32 %v10246, 1.0
    %v10261 = vadd.f32 %v10248, 1.0
    %v10262 = vadd.f32 %v10250, 1.0
    %v10263 = vadd.f32 %v10252, 1.0
    %v10264 = vadd.f32 %v10254, 1.0
    %v10265 = vadd.f32 %v10256, 1.0
    %v10266 = vadd.f32 %v10258, 1.0
    %v10267 = vrcp.pop %v10259
    %v10268 = vmul.f32 1.0, %v10267
    %v10269 = vrcp.pop %v10260
    %v10270 = vmul.f32 1.0, %v10269
    %v10271 = vrcp.pop %v10261
    %v10272 = vmul.f32 1.0, %v10271
    %v10273 = vrcp.pop %v10262
    %v10274 = vmul.f32 1.0, %v10273
    %v10275 = vrcp.pop %v10263
    %v10276 = vmul.f32 1.0, %v10275
    %v10277 = vrcp.pop %v10264
    %v10278 = vmul.f32 1.0, %v10277
    %v10279 = vrcp.pop %v10265
    %v10280 = vmul.f32 1.0, %v10279
    %v10281 = vrcp.pop %v10266
    %v10282 = vmul.f32 1.0, %v10281
    %v10283 = vtanh.pop %v10227
    %v10284 = vtanh.pop %v10228
    %v10285 = vtanh.pop %v10229
    %v10286 = vtanh.pop %v10230
    %v10287 = vtanh.pop %v10231
    %v10288 = vtanh.pop %v10232
    %v10289 = vtanh.pop %v10233
    %v10290 = vtanh.pop %v10234
    %v10299 = vrot.slane %v8989, 7
    %v10300 = vrot.slane %v8990, 7
    %v10301 = vrot.slane %v8991, 7
    %v10302 = vrot.slane %v8992, 7
    %v10303 = vrot.slane %v8993, 7
    %v10304 = vrot.slane %v8994, 7
    %v10305 = vrot.slane %v8995, 7
    %v10306 = vrot.slane %v8996, 7
    %v10315 = vmul.f32 %v10268, %v10299
    %v10316 = vmul.f32 %v10270, %v10300
    %v10317 = vmul.f32 %v10272, %v10301
    %v10318 = vmul.f32 %v10274, %v10302
    %v10319 = vmul.f32 %v10276, %v10303
    %v10320 = vmul.f32 %v10278, %v10304
    %v10321 = vmul.f32 %v10280, %v10305
    %v10322 = vmul.f32 %v10282, %v10306
    %10331 = vrot.lane.b32.xlu0 %v10283, 64
    %v10332 = vpop.permute.xlu0 %10331
    %10333 = vrot.lane.b32.xlu0 %v10284, 64
    %v10334 = vpop.permute.xlu0 %10333
    %10335 = vrot.lane.b32.xlu0 %v10285, 64
    %v10336 = vpop.permute.xlu0 %10335
    %10337 = vrot.lane.b32.xlu0 %v10286, 64
    %v10338 = vpop.permute.xlu0 %10337
    %10339 = vrot.lane.b32.xlu0 %v10287, 64
    %v10340 = vpop.permute.xlu0 %10339
    %10341 = vrot.lane.b32.xlu0 %v10288, 64
    %v10342 = vpop.permute.xlu0 %10341
    %10343 = vrot.lane.b32.xlu0 %v10289, 64
    %v10344 = vpop.permute.xlu0 %10343
    %10345 = vrot.lane.b32.xlu0 %v10290, 64
    %v10346 = vpop.permute.xlu0 %10345
    %v10355 = vmul.f32 %v10268, %v10332
    %v10356 = vmul.f32 %v10270, %v10334
    %v10357 = vmul.f32 %v10272, %v10336
    %v10358 = vmul.f32 %v10274, %v10338
    %v10359 = vmul.f32 %v10276, %v10340
    %v10360 = vmul.f32 %v10278, %v10342
    %v10361 = vmul.f32 %v10280, %v10344
    %v10362 = vmul.f32 %v10282, %v10346
    %10371 = vrot.lane.b32.xlu0 %v10355, 32
    %v10372 = vpop.permute.xlu0 %10371
    %10373 = vrot.lane.b32.xlu0 %v10356, 32
    %v10374 = vpop.permute.xlu0 %10373
    %10375 = vrot.lane.b32.xlu0 %v10357, 32
    %v10376 = vpop.permute.xlu0 %10375
    %10377 = vrot.lane.b32.xlu0 %v10358, 32
    %v10378 = vpop.permute.xlu0 %10377
    %10379 = vrot.lane.b32.xlu0 %v10359, 32
    %v10380 = vpop.permute.xlu0 %10379
    %10381 = vrot.lane.b32.xlu0 %v10360, 32
    %v10382 = vpop.permute.xlu0 %10381
    %10383 = vrot.lane.b32.xlu0 %v10361, 32
    %v10384 = vpop.permute.xlu0 %10383
    %10385 = vrot.lane.b32.xlu0 %v10362, 32
    %v10386 = vpop.permute.xlu0 %10385
    %v10395 = vadd.f32 %v10315, %v10372
    %v10396 = vadd.f32 %v10316, %v10374
    %v10397 = vadd.f32 %v10317, %v10376
    %v10398 = vadd.f32 %v10318, %v10378
    %v10399 = vadd.f32 %v10319, %v10380
    %v10400 = vadd.f32 %v10320, %v10382
    %v10401 = vadd.f32 %v10321, %v10384
    %v10402 = vadd.f32 %v10322, %v10386
    %v10403 = vtanh.pop %v10395
    %v10404 = vtanh.pop %v10396
    %v10405 = vtanh.pop %v10397
    %v10406 = vtanh.pop %v10398
    %v10407 = vtanh.pop %v10399
    %v10408 = vtanh.pop %v10400
    %v10409 = vtanh.pop %v10401
    %v10410 = vtanh.pop %v10402
    %10419 = vrot.lane.b32.xlu0 %v10403, 64
    %v10420 = vpop.permute.xlu0 %10419
    %10421 = vrot.lane.b32.xlu0 %v10404, 64
    %v10422 = vpop.permute.xlu0 %10421
    %10423 = vrot.lane.b32.xlu0 %v10405, 64
    %v10424 = vpop.permute.xlu0 %10423
    %10425 = vrot.lane.b32.xlu0 %v10406, 64
    %v10426 = vpop.permute.xlu0 %10425
    %10427 = vrot.lane.b32.xlu0 %v10407, 64
    %v10428 = vpop.permute.xlu0 %10427
    %10429 = vrot.lane.b32.xlu0 %v10408, 64
    %v10430 = vpop.permute.xlu0 %10429
    %10431 = vrot.lane.b32.xlu0 %v10409, 64
    %v10432 = vpop.permute.xlu0 %10431
    %10433 = vrot.lane.b32.xlu0 %v10410, 64
    %v10434 = vpop.permute.xlu0 %10433
    %v10443 = vmul.f32 %v10268, %v10420
    %v10444 = vmul.f32 %v10270, %v10422
    %v10445 = vmul.f32 %v10272, %v10424
    %v10446 = vmul.f32 %v10274, %v10426
    %v10447 = vmul.f32 %v10276, %v10428
    %v10448 = vmul.f32 %v10278, %v10430
    %v10449 = vmul.f32 %v10280, %v10432
    %v10450 = vmul.f32 %v10282, %v10434
    %v10459 = vrot.slane %v10444, 7
    %v10460 = vsel %vm299, %v10459, %v10443
    %v10461 = vrot.slane %v10445, 6
    %v10462 = vrot.slane %v10446, 5
    %v10463 = vsel %vm287, %v10462, %v10461
    %v10464 = vrot.slane %v10447, 4
    %v10465 = vsel %vm289, %v10464, %v10463
    %v10466 = vrot.slane %v10448, 3
    %v10467 = vsel %vm291, %v10466, %v10465
    %v10468 = vrot.slane %v10449, 2
    %v10469 = vsel %vm293, %v10468, %v10467
    %v10470 = vrot.slane %v10450, 1
    %v10471 = vsel %vm295, %v10470, %v10469
    %10472 = vrot.lane.b32.xlu0 %v10460, 32
    %v10473 = vpop.permute.xlu0 %10472
    %10474 = vrot.lane.b32.xlu0 %v10471, 32
    %v10475 = vpop.permute.xlu0 %10474
    %v10478 = vsel %vm299, %v9957, %v9948
    %v10479 = vsel %vm287, %v9975, %v9966
    %v10480 = vsel %vm289, %v9984, %v10479
    %v10481 = vsel %vm291, %v9993, %v10480
    %v10482 = vsel %vm293, %v10002, %v10481
    %v10483 = vsel %vm295, %v10011, %v10482
    %10484 = vrot.lane.b32.xlu0 %v10478, 32
    %v10485 = vpop.permute.xlu0 %10484
    %10486 = vrot.lane.b32.xlu0 %v10483, 32
    %v10487 = vpop.permute.xlu0 %10486
    %v10490 = vsel %vm299, %v2042, %v170
    %v10491 = vsel %vm287, %v2046, %v2044
    %v10492 = vsel %vm289, %v2048, %v10491
    %v10493 = vsel %vm291, %v2050, %v10492
    %v10494 = vsel %vm293, %v2052, %v10493
    %v10495 = vsel %vm295, %v2054, %v10494
    %10496 = vrot.lane.b32.xlu0 %v10490, 64
    %v10497 = vpop.permute.xlu0 %10496
    %10498 = vrot.lane.b32.xlu0 %v10495, 64
    %v10499 = vpop.permute.xlu0 %10498
    %v10502 = vsel %vm186, %v10473, %v10485
    %v10503 = vsel %vm186, %v10475, %v10487
    %v10504 = vsel %vm2060, %v10502, %v10497
    %v10505 = vsel %vm2060, %v10503, %v10499
    %v10506 = vsel %vm2062, %v10504, 0.0
    %v10507 = vsel %vm2062, %v10505, 0.0
    %v10510 = vcombine.high %v10506, %v10506
    %v10512 = vunpack.c.l.s4 1966171168
    %v10513 = vunpack.c.0.s8 %v10512
    %v10514 = vlaneseq
    %v10515 = vshrl.u32 %v10514, 7
    %v10516 = vsub.s32 %v10513, %v10515
    %v10517 = vrot.slane %v10510, %v10516
    %v10518 = vcombine.high %v10517, %v10517
    %v10520 = vunpack.c.l.s4 1966171168
    %v10521 = vunpack.c.0.s8 %v10520
    %v10522 = vlaneseq
    %v10523 = vshrl.u32 %v10522, 7
    %v10524 = vsub.s32 %v10521, %v10523
    %v10525 = vrot.slane %v10517, %v10524
    %v10527 = vunpack.c.l.s4 1966171168
    %v10528 = vunpack.c.0.s8 %v10527
    %v10529 = vlaneseq
    %v10530 = vshrl.u32 %v10529, 7
    %v10531 = vsub.s32 %v10528, %v10530
    %v10532 = vrot.slane %v10518, %v10531
    %v10533 = vcombine.high %v10525, %v10525
    %v10534 = vcombine.high %v10532, %v10532
    %v10535 = vcombine.high %v10507, %v10507
    %v10537 = vunpack.c.l.s4 1966171168
    %v10538 = vunpack.c.0.s8 %v10537
    %v10539 = vlaneseq
    %v10540 = vshrl.u32 %v10539, 7
    %v10541 = vsub.s32 %v10538, %v10540
    %v10542 = vrot.slane %v10507, %v10541
    %v10544 = vunpack.c.l.s4 1966171168
    %v10545 = vunpack.c.0.s8 %v10544
    %v10546 = vlaneseq
    %v10547 = vshrl.u32 %v10546, 7
    %v10548 = vsub.s32 %v10545, %v10547
    %v10549 = vrot.slane %v10535, %v10548
    %v10550 = vcombine.high %v10542, %v10542
    %v10551 = vcombine.high %v10549, %v10549
    %v10553 = vunpack.c.l.s4 1966171168
    %v10554 = vunpack.c.0.s8 %v10553
    %v10555 = vlaneseq
    %v10556 = vshrl.u32 %v10555, 7
    %v10557 = vsub.s32 %v10554, %v10556
    %v10558 = vrot.slane %v10542, %v10557
    %v10560 = vunpack.c.l.s4 1966171168
    %v10561 = vunpack.c.0.s8 %v10560
    %v10562 = vlaneseq
    %v10563 = vshrl.u32 %v10562, 7
    %v10564 = vsub.s32 %v10561, %v10563
    %v10565 = vrot.slane %v10549, %v10564
    %v10567 = vunpack.c.l.s4 1966171168
    %v10568 = vunpack.c.0.s8 %v10567
    %v10569 = vlaneseq
    %v10570 = vshrl.u32 %v10569, 7
    %v10571 = vsub.s32 %v10568, %v10570
    %v10572 = vrot.slane %v10550, %v10571
    %v10574 = vunpack.c.l.s4 1966171168
    %v10575 = vunpack.c.0.s8 %v10574
    %v10576 = vlaneseq
    %v10577 = vshrl.u32 %v10576, 7
    %v10578 = vsub.s32 %v10575, %v10577
    %v10579 = vrot.slane %v10551, %v10578
    %v10580 = vcombine.high %v10558, %v10558
    %v10581 = vcombine.high %v10572, %v10572
    %10590 = vst [vmem:[#allocation2 + $0x6] sm:$0x1] %v10533
    %10591 = vst [vmem:[#allocation2 + $0xe] sm:$0x1] %v10534
    %10592 = vst [vmem:[#allocation2 + $0x16] sm:$0x1] %v10558
    %10593 = vst [vmem:[#allocation2 + $0x1e] sm:$0x1] %v10572
    %10594 = vst [vmem:[#allocation2 + $0x26] sm:$0x1] %v10580
    %10595 = vst [vmem:[#allocation2 + $0x2e] sm:$0x1] %v10581
    %10596 = vst [vmem:[#allocation2 + $0x36] sm:$0x1] %v10565
    %10597 = vst [vmem:[#allocation2 + $0x3e] sm:$0x1] %v10579
    %v10598 = vlaneseq
    %v10599 = vshrl.u32 %v10598, 7
    %v10600 = vsub.s32 %v1031, %v10599
    %v10601 = vrot.slane %v9847, %v10600
    %v10602 = vlaneseq
    %v10603 = vshrl.u32 %v10602, 7
    %v10604 = vsub.s32 %v1036, %v10603
    %v10605 = vrot.slane %v9852, %v10604
    %v10606 = vsel %vm1041, %v10605, %v10601
    %v10607 = vlaneseq
    %v10608 = vshrl.u32 %v10607, 7
    %v10609 = vsub.s32 %v1031, %v10608
    %v10610 = vrot.slane %v9857, %v10609
    %v10611 = vlaneseq
    %v10612 = vshrl.u32 %v10611, 7
    %v10613 = vsub.s32 %v1036, %v10612
    %v10614 = vrot.slane %v9862, %v10613
    %v10615 = vsel %vm1041, %v10614, %v10610
    %v10616 = vlaneseq
    %v10617 = vshrl.u32 %v10616, 7
    %v10618 = vsub.s32 %v1031, %v10617
    %v10619 = vrot.slane %v9867, %v10618
    %v10620 = vlaneseq
    %v10621 = vshrl.u32 %v10620, 7
    %v10622 = vsub.s32 %v1036, %v10621
    %v10623 = vrot.slane %v9872, %v10622
    %v10624 = vsel %vm1041, %v10623, %v10619
    %v10625 = vlaneseq
    %v10626 = vshrl.u32 %v10625, 7
    %v10627 = vsub.s32 %v1031, %v10626
    %v10628 = vrot.slane %v9877, %v10627
    %v10629 = vlaneseq
    %v10630 = vshrl.u32 %v10629, 7
    %v10631 = vsub.s32 %v1036, %v10630
    %v10632 = vrot.slane %v9882, %v10631
    %v10633 = vsel %vm1041, %v10632, %v10628
    %v10634 = vlaneseq
    %v10635 = vshrl.u32 %v10634, 7
    %v10636 = vsub.s32 %v1031, %v10635
    %v10637 = vrot.slane %v9887, %v10636
    %v10638 = vlaneseq
    %v10639 = vshrl.u32 %v10638, 7
    %v10640 = vsub.s32 %v1036, %v10639
    %v10641 = vrot.slane %v9892, %v10640
    %v10642 = vsel %vm1041, %v10641, %v10637
    %v10643 = vlaneseq
    %v10644 = vshrl.u32 %v10643, 7
    %v10645 = vsub.s32 %v1031, %v10644
    %v10646 = vrot.slane %v9897, %v10645
    %v10647 = vlaneseq
    %v10648 = vshrl.u32 %v10647, 7
    %v10649 = vsub.s32 %v1036, %v10648
    %v10650 = vrot.slane %v9902, %v10649
    %v10651 = vsel %vm1041, %v10650, %v10646
    %v10652 = vlaneseq
    %v10653 = vshrl.u32 %v10652, 7
    %v10654 = vsub.s32 %v1031, %v10653
    %v10655 = vrot.slane %v9907, %v10654
    %v10656 = vlaneseq
    %v10657 = vshrl.u32 %v10656, 7
    %v10658 = vsub.s32 %v1036, %v10657
    %v10659 = vrot.slane %v9912, %v10658
    %v10660 = vsel %vm1041, %v10659, %v10655
    %v10661 = vlaneseq
    %v10662 = vshrl.u32 %v10661, 7
    %v10663 = vsub.s32 %v1031, %v10662
    %v10664 = vrot.slane %v9917, %v10663
    %v10665 = vlaneseq
    %v10666 = vshrl.u32 %v10665, 7
    %v10667 = vsub.s32 %v1036, %v10666
    %v10668 = vrot.slane %v9922, %v10667
    %v10669 = vsel %vm1041, %v10668, %v10664
    %10678 = vst.msk [vmem:[#allocation18 + $0x6] sm:$0x1] %vm2210, %v10606
    %10679 = vst.msk [vmem:[#allocation18 + $0xe] sm:$0x1] %vm2210, %v10615
    %10680 = vst.msk [vmem:[#allocation18 + $0x16] sm:$0x1] %vm2210, %v10624
    %10681 = vst.msk [vmem:[#allocation18 + $0x1e] sm:$0x1] %vm2210, %v10633
    %10682 = vst.msk [vmem:[#allocation18 + $0x26] sm:$0x1] %vm2210, %v10642
    %10683 = vst.msk [vmem:[#allocation18 + $0x2e] sm:$0x1] %vm2210, %v10651
    %10684 = vst.msk [vmem:[#allocation18 + $0x36] sm:$0x1] %vm2210, %v10660
    %10685 = vst.msk [vmem:[#allocation18 + $0x3e] sm:$0x1] %vm2210, %v10669
    %v10686 = vlaneseq
    %v10687 = vshrl.u32 %v10686, 7
    %v10688 = vsub.s32 6, %v10687
    %v10689 = vrot.slane %v10443, %v10688
    %v10690 = vlaneseq
    %v10691 = vshrl.u32 %v10690, 7
    %v10692 = vsub.s32 6, %v10691
    %v10693 = vrot.slane %v10444, %v10692
    %v10694 = vlaneseq
    %v10695 = vshrl.u32 %v10694, 7
    %v10696 = vsub.s32 6, %v10695
    %v10697 = vrot.slane %v10445, %v10696
    %v10698 = vlaneseq
    %v10699 = vshrl.u32 %v10698, 7
    %v10700 = vsub.s32 6, %v10699
    %v10701 = vrot.slane %v10446, %v10700
    %v10702 = vlaneseq
    %v10703 = vshrl.u32 %v10702, 7
    %v10704 = vsub.s32 6, %v10703
    %v10705 = vrot.slane %v10447, %v10704
    %v10706 = vlaneseq
    %v10707 = vshrl.u32 %v10706, 7
    %v10708 = vsub.s32 6, %v10707
    %v10709 = vrot.slane %v10448, %v10708
    %v10710 = vlaneseq
    %v10711 = vshrl.u32 %v10710, 7
    %v10712 = vsub.s32 6, %v10711
    %v10713 = vrot.slane %v10449, %v10712
    %v10714 = vlaneseq
    %v10715 = vshrl.u32 %v10714, 7
    %v10716 = vsub.s32 6, %v10715
    %v10717 = vrot.slane %v10450, %v10716
    %v10718 = vmul.f32 %v10689, %v2252
    %v10719 = vmul.f32 %v10689, %v2254
    %v10720 = vmul.f32 %v10693, %v2256
    %v10721 = vmul.f32 %v10693, %v2258
    %v10722 = vmul.f32 %v10697, %v2260
    %v10723 = vmul.f32 %v10697, %v2262
    %v10724 = vmul.f32 %v10701, %v2264
    %v10725 = vmul.f32 %v10701, %v2266
    %v10726 = vmul.f32 %v10705, %v2268
    %v10727 = vmul.f32 %v10705, %v2270
    %v10728 = vmul.f32 %v10709, %v2272
    %v10729 = vmul.f32 %v10709, %v2274
    %v10730 = vmul.f32 %v10713, %v2276
    %v10731 = vmul.f32 %v10713, %v2278
    %v10732 = vmul.f32 %v10717, %v2280
    %v10733 = vmul.f32 %v10717, %v2282
    %10750 = vrot.lane.b32.xlu0 %v10718, 32
    %v10751 = vpop.permute.xlu0 %10750
    %10752 = vrot.lane.b32.xlu0 %v10719, 32
    %v10753 = vpop.permute.xlu0 %10752
    %10754 = vrot.lane.b32.xlu0 %v10720, 32
    %v10755 = vpop.permute.xlu0 %10754
    %10756 = vrot.lane.b32.xlu0 %v10721, 32
    %v10757 = vpop.permute.xlu0 %10756
    %10758 = vrot.lane.b32.xlu0 %v10722, 32
    %v10759 = vpop.permute.xlu0 %10758
    %10760 = vrot.lane.b32.xlu0 %v10723, 32
    %v10761 = vpop.permute.xlu0 %10760
    %10762 = vrot.lane.b32.xlu0 %v10724, 32
    %v10763 = vpop.permute.xlu0 %10762
    %10764 = vrot.lane.b32.xlu0 %v10725, 32
    %v10765 = vpop.permute.xlu0 %10764
    %10766 = vrot.lane.b32.xlu0 %v10726, 32
    %v10767 = vpop.permute.xlu0 %10766
    %10768 = vrot.lane.b32.xlu0 %v10727, 32
    %v10769 = vpop.permute.xlu0 %10768
    %10770 = vrot.lane.b32.xlu0 %v10728, 32
    %v10771 = vpop.permute.xlu0 %10770
    %10772 = vrot.lane.b32.xlu0 %v10729, 32
    %v10773 = vpop.permute.xlu0 %10772
    %10774 = vrot.lane.b32.xlu0 %v10730, 32
    %v10775 = vpop.permute.xlu0 %10774
    %10776 = vrot.lane.b32.xlu0 %v10731, 32
    %v10777 = vpop.permute.xlu0 %10776
    %10778 = vrot.lane.b32.xlu0 %v10732, 32
    %v10779 = vpop.permute.xlu0 %10778
    %10780 = vrot.lane.b32.xlu0 %v10733, 32
    %v10781 = vpop.permute.xlu0 %10780
    %v10798 = vsel %vm186, %v10751, 0.0
    %10799 = vadd.xlane.f32.xlu0 %v10798
    %v10800 = vpop.xlane.xlu0 %10799
    %v10801 = vsel %vm186, %v10753, 0.0
    %10802 = vadd.xlane.f32.xlu0 %v10801
    %v10803 = vpop.xlane.xlu0 %10802
    %v10804 = vsel %vm186, %v10755, 0.0
    %10805 = vadd.xlane.f32.xlu0 %v10804
    %v10806 = vpop.xlane.xlu0 %10805
    %v10807 = vsel %vm186, %v10757, 0.0
    %10808 = vadd.xlane.f32.xlu0 %v10807
    %v10809 = vpop.xlane.xlu0 %10808
    %v10810 = vsel %vm186, %v10759, 0.0
    %10811 = vadd.xlane.f32.xlu0 %v10810
    %v10812 = vpop.xlane.xlu0 %10811
    %v10813 = vsel %vm186, %v10761, 0.0
    %10814 = vadd.xlane.f32.xlu0 %v10813
    %v10815 = vpop.xlane.xlu0 %10814
    %v10816 = vsel %vm186, %v10763, 0.0
    %10817 = vadd.xlane.f32.xlu0 %v10816
    %v10818 = vpop.xlane.xlu0 %10817
    %v10819 = vsel %vm186, %v10765, 0.0
    %10820 = vadd.xlane.f32.xlu0 %v10819
    %v10821 = vpop.xlane.xlu0 %10820
    %v10822 = vsel %vm186, %v10767, 0.0
    %10823 = vadd.xlane.f32.xlu0 %v10822
    %v10824 = vpop.xlane.xlu0 %10823
    %v10825 = vsel %vm186, %v10769, 0.0
    %10826 = vadd.xlane.f32.xlu0 %v10825
    %v10827 = vpop.xlane.xlu0 %10826
    %v10828 = vsel %vm186, %v10771, 0.0
    %10829 = vadd.xlane.f32.xlu0 %v10828
    %v10830 = vpop.xlane.xlu0 %10829
    %v10831 = vsel %vm186, %v10773, 0.0
    %10832 = vadd.xlane.f32.xlu0 %v10831
    %v10833 = vpop.xlane.xlu0 %10832
    %v10834 = vsel %vm186, %v10775, 0.0
    %10835 = vadd.xlane.f32.xlu0 %v10834
    %v10836 = vpop.xlane.xlu0 %10835
    %v10837 = vsel %vm186, %v10777, 0.0
    %10838 = vadd.xlane.f32.xlu0 %v10837
    %v10839 = vpop.xlane.xlu0 %10838
    %v10840 = vsel %vm186, %v10779, 0.0
    %10841 = vadd.xlane.f32.xlu0 %v10840
    %v10842 = vpop.xlane.xlu0 %10841
    %v10843 = vsel %vm186, %v10781, 0.0
    %10844 = vadd.xlane.f32.xlu0 %v10843
    %v10845 = vpop.xlane.xlu0 %10844
    %v10846 = vmul.f32 %v10800, 0.17677669
    %v10847 = vmul.f32 %v10803, 0.17677669
    %v10848 = vmul.f32 %v10806, 0.17677669
    %v10849 = vmul.f32 %v10809, 0.17677669
    %v10850 = vmul.f32 %v10812, 0.17677669
    %v10851 = vmul.f32 %v10815, 0.17677669
    %v10852 = vmul.f32 %v10818, 0.17677669
    %v10853 = vmul.f32 %v10821, 0.17677669
    %v10854 = vmul.f32 %v10824, 0.17677669
    %v10855 = vmul.f32 %v10827, 0.17677669
    %v10856 = vmul.f32 %v10830, 0.17677669
    %v10857 = vmul.f32 %v10833, 0.17677669
    %v10858 = vmul.f32 %v10836, 0.17677669
    %v10859 = vmul.f32 %v10839, 0.17677669
    %v10860 = vmul.f32 %v10842, 0.17677669
    %v10861 = vmul.f32 %v10845, 0.17677669
    %v10878 = vlaneseq
    %v10879 = vshrl.u32 %v10878, 7
    %v10880 = vsub.s32 %v1031, %v10879
    %v10881 = vrot.slane %v10846, %v10880
    %v10882 = vlaneseq
    %v10883 = vshrl.u32 %v10882, 7
    %v10884 = vsub.s32 %v1036, %v10883
    %v10885 = vrot.slane %v10847, %v10884
    %v10886 = vsel %vm1041, %v10885, %v10881
    %v10887 = vlaneseq
    %v10888 = vshrl.u32 %v10887, 7
    %v10889 = vsub.s32 %v1031, %v10888
    %v10890 = vrot.slane %v10848, %v10889
    %v10891 = vlaneseq
    %v10892 = vshrl.u32 %v10891, 7
    %v10893 = vsub.s32 %v1036, %v10892
    %v10894 = vrot.slane %v10849, %v10893
    %v10895 = vsel %vm1041, %v10894, %v10890
    %v10896 = vlaneseq
    %v10897 = vshrl.u32 %v10896, 7
    %v10898 = vsub.s32 %v1031, %v10897
    %v10899 = vrot.slane %v10850, %v10898
    %v10900 = vlaneseq
    %v10901 = vshrl.u32 %v10900, 7
    %v10902 = vsub.s32 %v1036, %v10901
    %v10903 = vrot.slane %v10851, %v10902
    %v10904 = vsel %vm1041, %v10903, %v10899
    %v10905 = vlaneseq
    %v10906 = vshrl.u32 %v10905, 7
    %v10907 = vsub.s32 %v1031, %v10906
    %v10908 = vrot.slane %v10852, %v10907
    %v10909 = vlaneseq
    %v10910 = vshrl.u32 %v10909, 7
    %v10911 = vsub.s32 %v1036, %v10910
    %v10912 = vrot.slane %v10853, %v10911
    %v10913 = vsel %vm1041, %v10912, %v10908
    %v10914 = vlaneseq
    %v10915 = vshrl.u32 %v10914, 7
    %v10916 = vsub.s32 %v1031, %v10915
    %v10917 = vrot.slane %v10854, %v10916
    %v10918 = vlaneseq
    %v10919 = vshrl.u32 %v10918, 7
    %v10920 = vsub.s32 %v1036, %v10919
    %v10921 = vrot.slane %v10855, %v10920
    %v10922 = vsel %vm1041, %v10921, %v10917
    %v10923 = vlaneseq
    %v10924 = vshrl.u32 %v10923, 7
    %v10925 = vsub.s32 %v1031, %v10924
    %v10926 = vrot.slane %v10856, %v10925
    %v10927 = vlaneseq
    %v10928 = vshrl.u32 %v10927, 7
    %v10929 = vsub.s32 %v1036, %v10928
    %v10930 = vrot.slane %v10857, %v10929
    %v10931 = vsel %vm1041, %v10930, %v10926
    %v10932 = vlaneseq
    %v10933 = vshrl.u32 %v10932, 7
    %v10934 = vsub.s32 %v1031, %v10933
    %v10935 = vrot.slane %v10858, %v10934
    %v10936 = vlaneseq
    %v10937 = vshrl.u32 %v10936, 7
    %v10938 = vsub.s32 %v1036, %v10937
    %v10939 = vrot.slane %v10859, %v10938
    %v10940 = vsel %vm1041, %v10939, %v10935
    %v10941 = vlaneseq
    %v10942 = vshrl.u32 %v10941, 7
    %v10943 = vsub.s32 %v1031, %v10942
    %v10944 = vrot.slane %v10860, %v10943
    %v10945 = vlaneseq
    %v10946 = vshrl.u32 %v10945, 7
    %v10947 = vsub.s32 %v1036, %v10946
    %v10948 = vrot.slane %v10861, %v10947
    %v10949 = vsel %vm1041, %v10948, %v10944
    %v10950 = vsel %vm287, %v10895, %v10886
    %v10951 = vsel %vm289, %v10904, %v10950
    %v10952 = vsel %vm291, %v10913, %v10951
    %v10953 = vsel %vm293, %v10922, %v10952
    %v10954 = vsel %vm295, %v10931, %v10953
    %v10955 = vsel %vm297, %v10940, %v10954
    %v10956 = vsel %vm299, %v10949, %v10955
    %v10958 = vsel %vm586, %v10956, -inf
    %10959 = vmax.xlane.f32.xlu0 %v10958
    %v10960 = vpop.xlane.xlu0 %10959
    %v10962 = vlaneseq
    %v10963 = vshrl.u32 %v10962, 7
    %v10964 = vsub.s32 0, %v10963
    %v10965 = vrot.slane %v10960, %v10964
    %v10966 = vlaneseq
    %v10967 = vshrl.u32 %v10966, 7
    %v10968 = vsub.s32 1, %v10967
    %v10969 = vrot.slane %v10960, %v10968
    %v10970 = vlaneseq
    %v10971 = vshrl.u32 %v10970, 7
    %v10972 = vsub.s32 2, %v10971
    %v10973 = vrot.slane %v10960, %v10972
    %v10974 = vlaneseq
    %v10975 = vshrl.u32 %v10974, 7
    %v10976 = vsub.s32 3, %v10975
    %v10977 = vrot.slane %v10960, %v10976
    %v10978 = vlaneseq
    %v10979 = vshrl.u32 %v10978, 7
    %v10980 = vsub.s32 4, %v10979
    %v10981 = vrot.slane %v10960, %v10980
    %v10982 = vlaneseq
    %v10983 = vshrl.u32 %v10982, 7
    %v10984 = vsub.s32 5, %v10983
    %v10985 = vrot.slane %v10960, %v10984
    %v10986 = vlaneseq
    %v10987 = vshrl.u32 %v10986, 7
    %v10988 = vsub.s32 6, %v10987
    %v10989 = vrot.slane %v10960, %v10988
    %v10990 = vlaneseq
    %v10991 = vshrl.u32 %v10990, 7
    %v10992 = vsub.s32 7, %v10991
    %v10993 = vrot.slane %v10960, %v10992
    %v11002 = vsub.f32 %v10846, %v10965
    %v11003 = vsub.f32 %v10847, %v10965
    %v11004 = vsub.f32 %v10848, %v10969
    %v11005 = vsub.f32 %v10849, %v10969
    %v11006 = vsub.f32 %v10850, %v10973
    %v11007 = vsub.f32 %v10851, %v10973
    %v11008 = vsub.f32 %v10852, %v10977
    %v11009 = vsub.f32 %v10853, %v10977
    %v11010 = vsub.f32 %v10854, %v10981
    %v11011 = vsub.f32 %v10855, %v10981
    %v11012 = vsub.f32 %v10856, %v10985
    %v11013 = vsub.f32 %v10857, %v10985
    %v11014 = vsub.f32 %v10858, %v10989
    %v11015 = vsub.f32 %v10859, %v10989
    %v11016 = vsub.f32 %v10860, %v10993
    %v11017 = vsub.f32 %v10861, %v10993
    %v11018 = vmul.f32 %v11002, 1.442695
    %v11019 = vpow.pop %v11018
    %v11020 = vmul.f32 %v11003, 1.442695
    %v11021 = vpow.pop %v11020
    %v11022 = vmul.f32 %v11004, 1.442695
    %v11023 = vpow.pop %v11022
    %v11024 = vmul.f32 %v11005, 1.442695
    %v11025 = vpow.pop %v11024
    %v11026 = vmul.f32 %v11006, 1.442695
    %v11027 = vpow.pop %v11026
    %v11028 = vmul.f32 %v11007, 1.442695
    %v11029 = vpow.pop %v11028
    %v11030 = vmul.f32 %v11008, 1.442695
    %v11031 = vpow.pop %v11030
    %v11032 = vmul.f32 %v11009, 1.442695
    %v11033 = vpow.pop %v11032
    %v11034 = vmul.f32 %v11010, 1.442695
    %v11035 = vpow.pop %v11034
    %v11036 = vmul.f32 %v11011, 1.442695
    %v11037 = vpow.pop %v11036
    %v11038 = vmul.f32 %v11012, 1.442695
    %v11039 = vpow.pop %v11038
    %v11040 = vmul.f32 %v11013, 1.442695
    %v11041 = vpow.pop %v11040
    %v11042 = vmul.f32 %v11014, 1.442695
    %v11043 = vpow.pop %v11042
    %v11044 = vmul.f32 %v11015, 1.442695
    %v11045 = vpow.pop %v11044
    %v11046 = vmul.f32 %v11016, 1.442695
    %v11047 = vpow.pop %v11046
    %v11048 = vmul.f32 %v11017, 1.442695
    %v11049 = vpow.pop %v11048
    %11066 = vset.pattern.permute.xlu0 0
    %11067 = vperm.xlu0 %11066, %v11019
    %v11068 = vpop.permute.xlu0 %11067
    %11069 = vset.pattern.permute.xlu0 0
    %11070 = vperm.xlu0 %11069, %v11021
    %v11071 = vpop.permute.xlu0 %11070
    %11072 = vset.pattern.permute.xlu0 0
    %11073 = vperm.xlu0 %11072, %v11023
    %v11074 = vpop.permute.xlu0 %11073
    %11075 = vset.pattern.permute.xlu0 0
    %11076 = vperm.xlu0 %11075, %v11025
    %v11077 = vpop.permute.xlu0 %11076
    %11078 = vset.pattern.permute.xlu0 0
    %11079 = vperm.xlu0 %11078, %v11027
    %v11080 = vpop.permute.xlu0 %11079
    %11081 = vset.pattern.permute.xlu0 0
    %11082 = vperm.xlu0 %11081, %v11029
    %v11083 = vpop.permute.xlu0 %11082
    %11084 = vset.pattern.permute.xlu0 0
    %11085 = vperm.xlu0 %11084, %v11031
    %v11086 = vpop.permute.xlu0 %11085
    %11087 = vset.pattern.permute.xlu0 0
    %11088 = vperm.xlu0 %11087, %v11033
    %v11089 = vpop.permute.xlu0 %11088
    %11090 = vset.pattern.permute.xlu0 0
    %11091 = vperm.xlu0 %11090, %v11035
    %v11092 = vpop.permute.xlu0 %11091
    %11093 = vset.pattern.permute.xlu0 0
    %11094 = vperm.xlu0 %11093, %v11037
    %v11095 = vpop.permute.xlu0 %11094
    %11096 = vset.pattern.permute.xlu0 0
    %11097 = vperm.xlu0 %11096, %v11039
    %v11098 = vpop.permute.xlu0 %11097
    %11099 = vset.pattern.permute.xlu0 0
    %11100 = vperm.xlu0 %11099, %v11041
    %v11101 = vpop.permute.xlu0 %11100
    %11102 = vset.pattern.permute.xlu0 0
    %11103 = vperm.xlu0 %11102, %v11043
    %v11104 = vpop.permute.xlu0 %11103
    %11105 = vset.pattern.permute.xlu0 0
    %11106 = vperm.xlu0 %11105, %v11045
    %v11107 = vpop.permute.xlu0 %11106
    %11108 = vset.pattern.permute.xlu0 0
    %11109 = vperm.xlu0 %11108, %v11047
    %v11110 = vpop.permute.xlu0 %11109
    %11111 = vset.pattern.permute.xlu0 0
    %11112 = vperm.xlu0 %11111, %v11049
    %v11113 = vpop.permute.xlu0 %11112
    %v11114 = vlaneseq
    %v11115 = vshrl.u32 %v11114, 7
    %v11116 = vsub.s32 %v1031, %v11115
    %v11117 = vrot.slane %v11068, %v11116
    %v11118 = vlaneseq
    %v11119 = vshrl.u32 %v11118, 7
    %v11120 = vsub.s32 %v1036, %v11119
    %v11121 = vrot.slane %v11071, %v11120
    %v11122 = vsel %vm1041, %v11121, %v11117
    %v11123 = vlaneseq
    %v11124 = vshrl.u32 %v11123, 7
    %v11125 = vsub.s32 %v1031, %v11124
    %v11126 = vrot.slane %v11074, %v11125
    %v11127 = vlaneseq
    %v11128 = vshrl.u32 %v11127, 7
    %v11129 = vsub.s32 %v1036, %v11128
    %v11130 = vrot.slane %v11077, %v11129
    %v11131 = vsel %vm1041, %v11130, %v11126
    %v11132 = vlaneseq
    %v11133 = vshrl.u32 %v11132, 7
    %v11134 = vsub.s32 %v1031, %v11133
    %v11135 = vrot.slane %v11080, %v11134
    %v11136 = vlaneseq
    %v11137 = vshrl.u32 %v11136, 7
    %v11138 = vsub.s32 %v1036, %v11137
    %v11139 = vrot.slane %v11083, %v11138
    %v11140 = vsel %vm1041, %v11139, %v11135
    %v11141 = vlaneseq
    %v11142 = vshrl.u32 %v11141, 7
    %v11143 = vsub.s32 %v1031, %v11142
    %v11144 = vrot.slane %v11086, %v11143
    %v11145 = vlaneseq
    %v11146 = vshrl.u32 %v11145, 7
    %v11147 = vsub.s32 %v1036, %v11146
    %v11148 = vrot.slane %v11089, %v11147
    %v11149 = vsel %vm1041, %v11148, %v11144
    %v11150 = vlaneseq
    %v11151 = vshrl.u32 %v11150, 7
    %v11152 = vsub.s32 %v1031, %v11151
    %v11153 = vrot.slane %v11092, %v11152
    %v11154 = vlaneseq
    %v11155 = vshrl.u32 %v11154, 7
    %v11156 = vsub.s32 %v1036, %v11155
    %v11157 = vrot.slane %v11095, %v11156
    %v11158 = vsel %vm1041, %v11157, %v11153
    %v11159 = vlaneseq
    %v11160 = vshrl.u32 %v11159, 7
    %v11161 = vsub.s32 %v1031, %v11160
    %v11162 = vrot.slane %v11098, %v11161
    %v11163 = vlaneseq
    %v11164 = vshrl.u32 %v11163, 7
    %v11165 = vsub.s32 %v1036, %v11164
    %v11166 = vrot.slane %v11101, %v11165
    %v11167 = vsel %vm1041, %v11166, %v11162
    %v11168 = vlaneseq
    %v11169 = vshrl.u32 %v11168, 7
    %v11170 = vsub.s32 %v1031, %v11169
    %v11171 = vrot.slane %v11104, %v11170
    %v11172 = vlaneseq
    %v11173 = vshrl.u32 %v11172, 7
    %v11174 = vsub.s32 %v1036, %v11173
    %v11175 = vrot.slane %v11107, %v11174
    %v11176 = vsel %vm1041, %v11175, %v11171
    %v11177 = vlaneseq
    %v11178 = vshrl.u32 %v11177, 7
    %v11179 = vsub.s32 %v1031, %v11178
    %v11180 = vrot.slane %v11110, %v11179
    %v11181 = vlaneseq
    %v11182 = vshrl.u32 %v11181, 7
    %v11183 = vsub.s32 %v1036, %v11182
    %v11184 = vrot.slane %v11113, %v11183
    %v11185 = vsel %vm1041, %v11184, %v11180
    %v11186 = vsel %vm287, %v11131, %v11122
    %v11187 = vsel %vm289, %v11140, %v11186
    %v11188 = vsel %vm291, %v11149, %v11187
    %v11189 = vsel %vm293, %v11158, %v11188
    %v11190 = vsel %vm295, %v11167, %v11189
    %v11191 = vsel %vm297, %v11176, %v11190
    %v11192 = vsel %vm299, %v11185, %v11191
    %v11194 = vsel %vm586, %v11192, 0.0
    %11195 = vadd.xlane.f32.xlu0 %v11194
    %v11196 = vpop.xlane.xlu0 %11195
    %v11197 = vrcp.pop %v11196
    %v11198 = vmul.f32 %v11196, %v11197
    %v11199 = vsub.f32 2.0, %v11198
    %v11200 = vmul.f32 %v11197, %v11199
    %v11202 = vlaneseq
    %v11203 = vshrl.u32 %v11202, 7
    %v11204 = vsub.s32 0, %v11203
    %v11205 = vrot.slane %v11200, %v11204
    %v11206 = vlaneseq
    %v11207 = vshrl.u32 %v11206, 7
    %v11208 = vsub.s32 1, %v11207
    %v11209 = vrot.slane %v11200, %v11208
    %v11210 = vlaneseq
    %v11211 = vshrl.u32 %v11210, 7
    %v11212 = vsub.s32 2, %v11211
    %v11213 = vrot.slane %v11200, %v11212
    %v11214 = vlaneseq
    %v11215 = vshrl.u32 %v11214, 7
    %v11216 = vsub.s32 3, %v11215
    %v11217 = vrot.slane %v11200, %v11216
    %v11218 = vlaneseq
    %v11219 = vshrl.u32 %v11218, 7
    %v11220 = vsub.s32 4, %v11219
    %v11221 = vrot.slane %v11200, %v11220
    %v11222 = vlaneseq
    %v11223 = vshrl.u32 %v11222, 7
    %v11224 = vsub.s32 5, %v11223
    %v11225 = vrot.slane %v11200, %v11224
    %v11226 = vlaneseq
    %v11227 = vshrl.u32 %v11226, 7
    %v11228 = vsub.s32 6, %v11227
    %v11229 = vrot.slane %v11200, %v11228
    %v11230 = vlaneseq
    %v11231 = vshrl.u32 %v11230, 7
    %v11232 = vsub.s32 7, %v11231
    %v11233 = vrot.slane %v11200, %v11232
    %v11242 = vmul.f32 %v11019, %v11205
    %v11243 = vmul.f32 %v11021, %v11205
    %v11244 = vmul.f32 %v11023, %v11209
    %v11245 = vmul.f32 %v11025, %v11209
    %v11246 = vmul.f32 %v11027, %v11213
    %v11247 = vmul.f32 %v11029, %v11213
    %v11248 = vmul.f32 %v11031, %v11217
    %v11249 = vmul.f32 %v11033, %v11217
    %v11250 = vmul.f32 %v11035, %v11221
    %v11251 = vmul.f32 %v11037, %v11221
    %v11252 = vmul.f32 %v11039, %v11225
    %v11253 = vmul.f32 %v11041, %v11225
    %v11254 = vmul.f32 %v11043, %v11229
    %v11255 = vmul.f32 %v11045, %v11229
    %v11256 = vmul.f32 %v11047, %v11233
    %v11257 = vmul.f32 %v11049, %v11233
    %11259 = vset.pattern.permute.xlu0 0
    %11260 = vperm.xlu0 %11259, %v11242
    %v11261 = vpop.permute.xlu0 %11260
    %11264 = vset.pattern.permute.xlu0 0
    %11265 = vperm.xlu0 %11264, %v11243
    %v11266 = vpop.permute.xlu0 %11265
    %11269 = vset.pattern.permute.xlu0 0
    %11270 = vperm.xlu0 %11269, %v11244
    %v11271 = vpop.permute.xlu0 %11270
    %11274 = vset.pattern.permute.xlu0 0
    %11275 = vperm.xlu0 %11274, %v11245
    %v11276 = vpop.permute.xlu0 %11275
    %11279 = vset.pattern.permute.xlu0 0
    %11280 = vperm.xlu0 %11279, %v11246
    %v11281 = vpop.permute.xlu0 %11280
    %11284 = vset.pattern.permute.xlu0 0
    %11285 = vperm.xlu0 %11284, %v11247
    %v11286 = vpop.permute.xlu0 %11285
    %11289 = vset.pattern.permute.xlu0 0
    %11290 = vperm.xlu0 %11289, %v11248
    %v11291 = vpop.permute.xlu0 %11290
    %11294 = vset.pattern.permute.xlu0 0
    %11295 = vperm.xlu0 %11294, %v11249
    %v11296 = vpop.permute.xlu0 %11295
    %11299 = vset.pattern.permute.xlu0 0
    %11300 = vperm.xlu0 %11299, %v11250
    %v11301 = vpop.permute.xlu0 %11300
    %11304 = vset.pattern.permute.xlu0 0
    %11305 = vperm.xlu0 %11304, %v11251
    %v11306 = vpop.permute.xlu0 %11305
    %11309 = vset.pattern.permute.xlu0 0
    %11310 = vperm.xlu0 %11309, %v11252
    %v11311 = vpop.permute.xlu0 %11310
    %11314 = vset.pattern.permute.xlu0 0
    %11315 = vperm.xlu0 %11314, %v11253
    %v11316 = vpop.permute.xlu0 %11315
    %11319 = vset.pattern.permute.xlu0 0
    %11320 = vperm.xlu0 %11319, %v11254
    %v11321 = vpop.permute.xlu0 %11320
    %11324 = vset.pattern.permute.xlu0 0
    %11325 = vperm.xlu0 %11324, %v11255
    %v11326 = vpop.permute.xlu0 %11325
    %11329 = vset.pattern.permute.xlu0 0
    %11330 = vperm.xlu0 %11329, %v11256
    %v11331 = vpop.permute.xlu0 %11330
    %11334 = vset.pattern.permute.xlu0 0
    %11335 = vperm.xlu0 %11334, %v11257
    %v11336 = vpop.permute.xlu0 %11335
    %v11338 = vmul.f32 %v11261, %v154
    %v11339 = vmul.f32 %v11266, %v155
    %v11340 = vmul.f32 %v11271, %v156
    %v11341 = vmul.f32 %v11276, %v157
    %v11342 = vmul.f32 %v11281, %v158
    %v11343 = vmul.f32 %v11286, %v159
    %v11344 = vmul.f32 %v11291, %v160
    %v11345 = vmul.f32 %v11296, %v161
    %v11346 = vmul.f32 %v11301, %v162
    %v11347 = vmul.f32 %v11306, %v163
    %v11348 = vmul.f32 %v11311, %v164
    %v11349 = vmul.f32 %v11316, %v165
    %v11350 = vmul.f32 %v11321, %v166
    %v11351 = vmul.f32 %v11326, %v167
    %v11352 = vmul.f32 %v11331, %v168
    %v11353 = vmul.f32 %v11336, %v169
    %v11354 = vsel %vm186, %v11338, 0.0
    %v11355 = vsel %vm186, %v11339, 0.0
    %v11356 = vadd.f32 %v11354, %v11355
    %v11357 = vrot.slane %v11356, 4
    %v11358 = vadd.f32 %v11356, %v11357
    %v11359 = vrot.slane %v11358, 2
    %v11360 = vadd.f32 %v11358, %v11359
    %v11361 = vrot.slane %v11360, 1
    %v11362 = vadd.f32 %v11360, %v11361
    %v11363 = vsel %vm186, %v11340, 0.0
    %v11364 = vsel %vm186, %v11341, 0.0
    %v11365 = vadd.f32 %v11363, %v11364
    %v11366 = vrot.slane %v11365, 4
    %v11367 = vadd.f32 %v11365, %v11366
    %v11368 = vrot.slane %v11367, 2
    %v11369 = vadd.f32 %v11367, %v11368
    %v11370 = vrot.slane %v11369, 1
    %v11371 = vadd.f32 %v11369, %v11370
    %v11372 = vsel %vm186, %v11342, 0.0
    %v11373 = vsel %vm186, %v11343, 0.0
    %v11374 = vadd.f32 %v11372, %v11373
    %v11375 = vrot.slane %v11374, 4
    %v11376 = vadd.f32 %v11374, %v11375
    %v11377 = vrot.slane %v11376, 2
    %v11378 = vadd.f32 %v11376, %v11377
    %v11379 = vrot.slane %v11378, 1
    %v11380 = vadd.f32 %v11378, %v11379
    %v11381 = vsel %vm186, %v11344, 0.0
    %v11382 = vsel %vm186, %v11345, 0.0
    %v11383 = vadd.f32 %v11381, %v11382
    %v11384 = vrot.slane %v11383, 4
    %v11385 = vadd.f32 %v11383, %v11384
    %v11386 = vrot.slane %v11385, 2
    %v11387 = vadd.f32 %v11385, %v11386
    %v11388 = vrot.slane %v11387, 1
    %v11389 = vadd.f32 %v11387, %v11388
    %v11390 = vsel %vm186, %v11346, 0.0
    %v11391 = vsel %vm186, %v11347, 0.0
    %v11392 = vadd.f32 %v11390, %v11391
    %v11393 = vrot.slane %v11392, 4
    %v11394 = vadd.f32 %v11392, %v11393
    %v11395 = vrot.slane %v11394, 2
    %v11396 = vadd.f32 %v11394, %v11395
    %v11397 = vrot.slane %v11396, 1
    %v11398 = vadd.f32 %v11396, %v11397
    %v11399 = vsel %vm186, %v11348, 0.0
    %v11400 = vsel %vm186, %v11349, 0.0
    %v11401 = vadd.f32 %v11399, %v11400
    %v11402 = vrot.slane %v11401, 4
    %v11403 = vadd.f32 %v11401, %v11402
    %v11404 = vrot.slane %v11403, 2
    %v11405 = vadd.f32 %v11403, %v11404
    %v11406 = vrot.slane %v11405, 1
    %v11407 = vadd.f32 %v11405, %v11406
    %v11408 = vsel %vm186, %v11350, 0.0
    %v11409 = vsel %vm186, %v11351, 0.0
    %v11410 = vadd.f32 %v11408, %v11409
    %v11411 = vrot.slane %v11410, 4
    %v11412 = vadd.f32 %v11410, %v11411
    %v11413 = vrot.slane %v11412, 2
    %v11414 = vadd.f32 %v11412, %v11413
    %v11415 = vrot.slane %v11414, 1
    %v11416 = vadd.f32 %v11414, %v11415
    %v11417 = vsel %vm186, %v11352, 0.0
    %v11418 = vsel %vm186, %v11353, 0.0
    %v11419 = vadd.f32 %v11417, %v11418
    %v11420 = vrot.slane %v11419, 4
    %v11421 = vadd.f32 %v11419, %v11420
    %v11422 = vrot.slane %v11421, 2
    %v11423 = vadd.f32 %v11421, %v11422
    %v11424 = vrot.slane %v11423, 1
    %v11425 = vadd.f32 %v11423, %v11424
    %v11434 = vsel %vm287, %v11371, %v11362
    %v11435 = vsel %vm289, %v11380, %v11434
    %v11436 = vsel %vm291, %v11389, %v11435
    %v11437 = vsel %vm293, %v11398, %v11436
    %v11438 = vsel %vm295, %v11407, %v11437
    %v11439 = vsel %vm297, %v11416, %v11438
    %v11440 = vsel %vm299, %v11425, %v11439
    %v11441 = vsel %vm186, %v11440, 0
    %11443 = vmatprep.subr.mxu0 0.0
    %11444 = vmatpush1.msra.mxu0 0.0
    %11445 = vmatprep.subr.mxu0 0.0
    %11446 = vmatpush1.msra.mxu0 0.0
    %11447 = vmatprep.subr.mxu0 0.0
    %11448 = vmatpush1.msra.mxu0 0.0
    %11449 = vmatprep.subr.mxu0 0.0
    %11450 = vmatpush1.msra.mxu0 0.0
    %11451 = vmatprep.subr.mxu0 0.0
    %11452 = vmatpush1.msra.mxu0 0.0
    %11453 = vmatprep.subr.mxu0 0.0
    %11454 = vmatpush1.msra.mxu0 0.0
    %11455 = vmatprep.subr.mxu0 0.0
    %11456 = vmatpush1.msra.mxu0 0.0
    %11457 = vmatprep.subr.mxu0 0.0
    %11458 = vmatpush1.msra.mxu0 0.0
    %11459 = vmatprep.subr.mxu0 0.0
    %11460 = vmatpush1.msra.mxu0 0.0
    %11461 = vmatprep.subr.mxu0 0.0
    %11462 = vmatpush1.msra.mxu0 0.0
    %11463 = vmatprep.subr.mxu0 0.0
    %11464 = vmatpush1.msra.mxu0 0.0
    %11465 = vmatprep.subr.mxu0 0.0
    %11466 = vmatpush1.msra.mxu0 0.0
    %11467 = vmatprep.subr.mxu0 0.0
    %11468 = vmatpush1.msra.mxu0 %v181
    %11469 = vmatprep.subr.mxu0 0.0
    %11470 = vmatpush1.msra.mxu0 %v180
    %11471 = vmatprep.subr.mxu0 0.0
    %11472 = vmatpush1.msra.mxu0 %v179
    %11473 = vmatprep.subr.mxu0 0.0
    %11474 = vmatpush1.msra.mxu0 %v178
    %11475 = vmatprep.subr.mxu0 0.0
    %11476 = vmatpush2.msra.mxu0 0.0
    %11477 = vmatprep.subr.mxu0 0.0
    %11478 = vmatpush2.msra.mxu0 0.0
    %11479 = vmatprep.subr.mxu0 0.0
    %11480 = vmatpush2.msra.mxu0 0.0
    %11481 = vmatprep.subr.mxu0 0.0
    %11482 = vmatpush2.msra.mxu0 0.0
    %11483 = vmatprep.subr.mxu0 0.0
    %11484 = vmatpush2.msra.mxu0 0.0
    %11485 = vmatprep.subr.mxu0 0.0
    %11486 = vmatpush2.msra.mxu0 0.0
    %11487 = vmatprep.subr.mxu0 0.0
    %11488 = vmatpush2.msra.mxu0 0.0
    %11489 = vmatprep.subr.mxu0 0.0
    %11490 = vmatpush2.msra.mxu0 0.0
    %11491 = vmatprep.subr.mxu0 0.0
    %11492 = vmatpush2.msra.mxu0 0.0
    %11493 = vmatprep.subr.mxu0 0.0
    %11494 = vmatpush2.msra.mxu0 0.0
    %11495 = vmatprep.subr.mxu0 0.0
    %11496 = vmatpush2.msra.mxu0 0.0
    %11497 = vmatprep.subr.mxu0 0.0
    %11498 = vmatpush2.msra.mxu0 0.0
    %11499 = vmatprep.subr.mxu0 0.0
    %11500 = vmatpush2.msra.mxu0 0.0
    %11501 = vmatprep.subr.mxu0 0.0
    %11502 = vmatpush2.msra.mxu0 0.0
    %11503 = vmatprep.subr.mxu0 0.0
    %11504 = vmatpush2.msra.mxu0 0.0
    %11505 = vmatprep.subr.mxu0 0.0
    %11506 = vmatpush2.msra.mxu0 0.0
    %11507 = vmatprep.mubr.f32.mxu0 0.0
    %11508 = vmatmul.mubr.f32.gmra.mxu0 %v11441
    %v11509 = vpop.f32.mrf.mxu0
    %v11510 = vadd.f32 0.0, %v11509
    %v11511 = vpop.f32.mrf.mxu0
    %11512 = vdwg.mxu0
    %v11514 = vrot.slane %v11510, 1
    %v11515 = vrot.slane %v11510, 2
    %v11516 = vrot.slane %v11510, 3
    %v11517 = vrot.slane %v11510, 4
    %v11518 = vrot.slane %v11510, 5
    %v11519 = vrot.slane %v11510, 6
    %v11520 = vrot.slane %v11510, 7
    %v11529 = vadd.f32 %v678, %v11514
    %v11530 = vadd.f32 %v683, %v11515
    %v11531 = vadd.f32 %v688, %v11516
    %v11532 = vadd.f32 %v693, %v11517
    %v11533 = vadd.f32 %v698, %v11518
    %v11534 = vadd.f32 %v703, %v11519
    %v11535 = vadd.f32 %v708, %v11520
    %v11536 = vadd.f32 %v713, %v11510
    %v11537 = vrot.slane %v10443, 6
    %v11538 = vrot.slane %v10444, 5
    %v11539 = vsel %vm287, %v11538, %v11537
    %v11540 = vrot.slane %v10445, 4
    %v11541 = vsel %vm289, %v11540, %v11539
    %v11542 = vrot.slane %v10446, 3
    %v11543 = vsel %vm291, %v11542, %v11541
    %v11544 = vrot.slane %v10447, 2
    %v11545 = vsel %vm293, %v11544, %v11543
    %v11546 = vrot.slane %v10448, 1
    %v11547 = vsel %vm295, %v11546, %v11545
    %v11548 = vsel %vm297, %v10449, %v11547
    %v11549 = vrot.slane %v10450, 7
    %v11550 = vsel %vm299, %v11549, %v11548
    %11551 = vrot.lane.b32.xlu0 %v11550, 32
    %v11552 = vpop.permute.xlu0 %11551
    %v11553 = vsel %vm186, %v11552, 0
    %11555 = vmatprep.subr.mxu0 0.0
    %11556 = vmatpush1.msra.mxu0 0.0
    %11557 = vmatprep.subr.mxu0 0.0
    %11558 = vmatpush1.msra.mxu0 0.0
    %11559 = vmatprep.subr.mxu0 0.0
    %11560 = vmatpush1.msra.mxu0 0.0
    %11561 = vmatprep.subr.mxu0 0.0
    %11562 = vmatpush1.msra.mxu0 0.0
    %11563 = vmatprep.subr.mxu0 0.0
    %11564 = vmatpush1.msra.mxu0 0.0
    %11565 = vmatprep.subr.mxu0 0.0
    %11566 = vmatpush1.msra.mxu0 0.0
    %11567 = vmatprep.subr.mxu0 0.0
    %11568 = vmatpush1.msra.mxu0 0.0
    %11569 = vmatprep.subr.mxu0 0.0
    %11570 = vmatpush1.msra.mxu0 0.0
    %11571 = vmatprep.subr.mxu0 0.0
    %11572 = vmatpush1.msra.mxu0 0.0
    %11573 = vmatprep.subr.mxu0 0.0
    %11574 = vmatpush1.msra.mxu0 0.0
    %11575 = vmatprep.subr.mxu0 0.0
    %11576 = vmatpush1.msra.mxu0 0.0
    %11577 = vmatprep.subr.mxu0 0.0
    %11578 = vmatpush1.msra.mxu0 0.0
    %11579 = vmatprep.subr.mxu0 0.0
    %11580 = vmatpush1.msra.mxu0 %v185
    %11581 = vmatprep.subr.mxu0 0.0
    %11582 = vmatpush1.msra.mxu0 %v184
    %11583 = vmatprep.subr.mxu0 0.0
    %11584 = vmatpush1.msra.mxu0 %v183
    %11585 = vmatprep.subr.mxu0 0.0
    %11586 = vmatpush1.msra.mxu0 %v182
    %11587 = vmatprep.subr.mxu0 0.0
    %11588 = vmatpush2.msra.mxu0 0.0
    %11589 = vmatprep.subr.mxu0 0.0
    %11590 = vmatpush2.msra.mxu0 0.0
    %11591 = vmatprep.subr.mxu0 0.0
    %11592 = vmatpush2.msra.mxu0 0.0
    %11593 = vmatprep.subr.mxu0 0.0
    %11594 = vmatpush2.msra.mxu0 0.0
    %11595 = vmatprep.subr.mxu0 0.0
    %11596 = vmatpush2.msra.mxu0 0.0
    %11597 = vmatprep.subr.mxu0 0.0
    %11598 = vmatpush2.msra.mxu0 0.0
    %11599 = vmatprep.subr.mxu0 0.0
    %11600 = vmatpush2.msra.mxu0 0.0
    %11601 = vmatprep.subr.mxu0 0.0
    %11602 = vmatpush2.msra.mxu0 0.0
    %11603 = vmatprep.subr.mxu0 0.0
    %11604 = vmatpush2.msra.mxu0 0.0
    %11605 = vmatprep.subr.mxu0 0.0
    %11606 = vmatpush2.msra.mxu0 0.0
    %11607 = vmatprep.subr.mxu0 0.0
    %11608 = vmatpush2.msra.mxu0 0.0
    %11609 = vmatprep.subr.mxu0 0.0
    %11610 = vmatpush2.msra.mxu0 0.0
    %11611 = vmatprep.subr.mxu0 0.0
    %11612 = vmatpush2.msra.mxu0 0.0
    %11613 = vmatprep.subr.mxu0 0.0
    %11614 = vmatpush2.msra.mxu0 0.0
    %11615 = vmatprep.subr.mxu0 0.0
    %11616 = vmatpush2.msra.mxu0 0.0
    %11617 = vmatprep.subr.mxu0 0.0
    %11618 = vmatpush2.msra.mxu0 0.0
    %11619 = vmatprep.mubr.f32.mxu0 0.0
    %11620 = vmatmul.mubr.f32.gmra.mxu0 %v11553
    %v11621 = vpop.f32.mrf.mxu0
    %v11622 = vadd.f32 0.0, %v11621
    %v11623 = vpop.f32.mrf.mxu0
    %11624 = vdwg.mxu0
    %v11626 = vrot.slane %v11622, 1
    %v11627 = vrot.slane %v11622, 2
    %v11628 = vrot.slane %v11622, 3
    %v11629 = vrot.slane %v11622, 4
    %v11630 = vrot.slane %v11622, 5
    %v11631 = vrot.slane %v11622, 6
    %v11632 = vrot.slane %v11622, 7
    %v11641 = vadd.f32 %v11529, %v11626
    %v11642 = vadd.f32 %v11530, %v11627
    %v11643 = vadd.f32 %v11531, %v11628
    %v11644 = vadd.f32 %v11532, %v11629
    %v11645 = vadd.f32 %v11533, %v11630
    %v11646 = vadd.f32 %v11534, %v11631
    %v11647 = vadd.f32 %v11535, %v11632
    %v11648 = vadd.f32 %v11536, %v11622
    %v11649 = vxor.u32 %v11641, 2147483648
    %v11650 = vxor.u32 %v11642, 2147483648
    %v11651 = vxor.u32 %v11643, 2147483648
    %v11652 = vxor.u32 %v11644, 2147483648
    %v11653 = vxor.u32 %v11645, 2147483648
    %v11654 = vxor.u32 %v11646, 2147483648
    %v11655 = vxor.u32 %v11647, 2147483648
    %v11656 = vxor.u32 %v11648, 2147483648
    %v11657 = vmul.f32 %v11649, 1.442695
    %v11658 = vpow.pop %v11657
    %v11659 = vmul.f32 %v11650, 1.442695
    %v11660 = vpow.pop %v11659
    %v11661 = vmul.f32 %v11651, 1.442695
    %v11662 = vpow.pop %v11661
    %v11663 = vmul.f32 %v11652, 1.442695
    %v11664 = vpow.pop %v11663
    %v11665 = vmul.f32 %v11653, 1.442695
    %v11666 = vpow.pop %v11665
    %v11667 = vmul.f32 %v11654, 1.442695
    %v11668 = vpow.pop %v11667
    %v11669 = vmul.f32 %v11655, 1.442695
    %v11670 = vpow.pop %v11669
    %v11671 = vmul.f32 %v11656, 1.442695
    %v11672 = vpow.pop %v11671
    %v11673 = vadd.f32 %v11658, 1.0
    %v11674 = vadd.f32 %v11660, 1.0
    %v11675 = vadd.f32 %v11662, 1.0
    %v11676 = vadd.f32 %v11664, 1.0
    %v11677 = vadd.f32 %v11666, 1.0
    %v11678 = vadd.f32 %v11668, 1.0
    %v11679 = vadd.f32 %v11670, 1.0
    %v11680 = vadd.f32 %v11672, 1.0
    %v11681 = vrcp.pop %v11673
    %v11682 = vmul.f32 1.0, %v11681
    %v11683 = vrcp.pop %v11674
    %v11684 = vmul.f32 1.0, %v11683
    %v11685 = vrcp.pop %v11675
    %v11686 = vmul.f32 1.0, %v11685
    %v11687 = vrcp.pop %v11676
    %v11688 = vmul.f32 1.0, %v11687
    %v11689 = vrcp.pop %v11677
    %v11690 = vmul.f32 1.0, %v11689
    %v11691 = vrcp.pop %v11678
    %v11692 = vmul.f32 1.0, %v11691
    %v11693 = vrcp.pop %v11679
    %v11694 = vmul.f32 1.0, %v11693
    %v11695 = vrcp.pop %v11680
    %v11696 = vmul.f32 1.0, %v11695
    %v11697 = vtanh.pop %v11641
    %v11698 = vtanh.pop %v11642
    %v11699 = vtanh.pop %v11643
    %v11700 = vtanh.pop %v11644
    %v11701 = vtanh.pop %v11645
    %v11702 = vtanh.pop %v11646
    %v11703 = vtanh.pop %v11647
    %v11704 = vtanh.pop %v11648
    %v11713 = vrot.slane %v10395, 7
    %v11714 = vrot.slane %v10396, 7
    %v11715 = vrot.slane %v10397, 7
    %v11716 = vrot.slane %v10398, 7
    %v11717 = vrot.slane %v10399, 7
    %v11718 = vrot.slane %v10400, 7
    %v11719 = vrot.slane %v10401, 7
    %v11720 = vrot.slane %v10402, 7
    %v11729 = vmul.f32 %v11682, %v11713
    %v11730 = vmul.f32 %v11684, %v11714
    %v11731 = vmul.f32 %v11686, %v11715
    %v11732 = vmul.f32 %v11688, %v11716
    %v11733 = vmul.f32 %v11690, %v11717
    %v11734 = vmul.f32 %v11692, %v11718
    %v11735 = vmul.f32 %v11694, %v11719
    %v11736 = vmul.f32 %v11696, %v11720
    %11745 = vrot.lane.b32.xlu0 %v11697, 64
    %v11746 = vpop.permute.xlu0 %11745
    %11747 = vrot.lane.b32.xlu0 %v11698, 64
    %v11748 = vpop.permute.xlu0 %11747
    %11749 = vrot.lane.b32.xlu0 %v11699, 64
    %v11750 = vpop.permute.xlu0 %11749
    %11751 = vrot.lane.b32.xlu0 %v11700, 64
    %v11752 = vpop.permute.xlu0 %11751
    %11753 = vrot.lane.b32.xlu0 %v11701, 64
    %v11754 = vpop.permute.xlu0 %11753
    %11755 = vrot.lane.b32.xlu0 %v11702, 64
    %v11756 = vpop.permute.xlu0 %11755
    %11757 = vrot.lane.b32.xlu0 %v11703, 64
    %v11758 = vpop.permute.xlu0 %11757
    %11759 = vrot.lane.b32.xlu0 %v11704, 64
    %v11760 = vpop.permute.xlu0 %11759
    %v11769 = vmul.f32 %v11682, %v11746
    %v11770 = vmul.f32 %v11684, %v11748
    %v11771 = vmul.f32 %v11686, %v11750
    %v11772 = vmul.f32 %v11688, %v11752
    %v11773 = vmul.f32 %v11690, %v11754
    %v11774 = vmul.f32 %v11692, %v11756
    %v11775 = vmul.f32 %v11694, %v11758
    %v11776 = vmul.f32 %v11696, %v11760
    %11785 = vrot.lane.b32.xlu0 %v11769, 32
    %v11786 = vpop.permute.xlu0 %11785
    %11787 = vrot.lane.b32.xlu0 %v11770, 32
    %v11788 = vpop.permute.xlu0 %11787
    %11789 = vrot.lane.b32.xlu0 %v11771, 32
    %v11790 = vpop.permute.xlu0 %11789
    %11791 = vrot.lane.b32.xlu0 %v11772, 32
    %v11792 = vpop.permute.xlu0 %11791
    %11793 = vrot.lane.b32.xlu0 %v11773, 32
    %v11794 = vpop.permute.xlu0 %11793
    %11795 = vrot.lane.b32.xlu0 %v11774, 32
    %v11796 = vpop.permute.xlu0 %11795
    %11797 = vrot.lane.b32.xlu0 %v11775, 32
    %v11798 = vpop.permute.xlu0 %11797
    %11799 = vrot.lane.b32.xlu0 %v11776, 32
    %v11800 = vpop.permute.xlu0 %11799
    %v11809 = vadd.f32 %v11729, %v11786
    %v11810 = vadd.f32 %v11730, %v11788
    %v11811 = vadd.f32 %v11731, %v11790
    %v11812 = vadd.f32 %v11732, %v11792
    %v11813 = vadd.f32 %v11733, %v11794
    %v11814 = vadd.f32 %v11734, %v11796
    %v11815 = vadd.f32 %v11735, %v11798
    %v11816 = vadd.f32 %v11736, %v11800
    %v11817 = vtanh.pop %v11809
    %v11818 = vtanh.pop %v11810
    %v11819 = vtanh.pop %v11811
    %v11820 = vtanh.pop %v11812
    %v11821 = vtanh.pop %v11813
    %v11822 = vtanh.pop %v11814
    %v11823 = vtanh.pop %v11815
    %v11824 = vtanh.pop %v11816
    %11833 = vrot.lane.b32.xlu0 %v11817, 64
    %v11834 = vpop.permute.xlu0 %11833
    %11835 = vrot.lane.b32.xlu0 %v11818, 64
    %v11836 = vpop.permute.xlu0 %11835
    %11837 = vrot.lane.b32.xlu0 %v11819, 64
    %v11838 = vpop.permute.xlu0 %11837
    %11839 = vrot.lane.b32.xlu0 %v11820, 64
    %v11840 = vpop.permute.xlu0 %11839
    %11841 = vrot.lane.b32.xlu0 %v11821, 64
    %v11842 = vpop.permute.xlu0 %11841
    %11843 = vrot.lane.b32.xlu0 %v11822, 64
    %v11844 = vpop.permute.xlu0 %11843
    %11845 = vrot.lane.b32.xlu0 %v11823, 64
    %v11846 = vpop.permute.xlu0 %11845
    %11847 = vrot.lane.b32.xlu0 %v11824, 64
    %v11848 = vpop.permute.xlu0 %11847
    %v11857 = vmul.f32 %v11682, %v11834
    %v11858 = vmul.f32 %v11684, %v11836
    %v11859 = vmul.f32 %v11686, %v11838
    %v11860 = vmul.f32 %v11688, %v11840
    %v11861 = vmul.f32 %v11690, %v11842
    %v11862 = vmul.f32 %v11692, %v11844
    %v11863 = vmul.f32 %v11694, %v11846
    %v11864 = vmul.f32 %v11696, %v11848
    %v11873 = vrot.slane %v11858, 7
    %v11874 = vrot.slane %v11859, 6
    %v11875 = vsel %vm287, %v11874, %v11873
    %v11876 = vrot.slane %v11860, 5
    %v11877 = vsel %vm289, %v11876, %v11875
    %v11878 = vrot.slane %v11861, 4
    %v11879 = vsel %vm291, %v11878, %v11877
    %v11880 = vrot.slane %v11862, 3
    %v11881 = vsel %vm293, %v11880, %v11879
    %v11882 = vrot.slane %v11863, 2
    %v11883 = vsel %vm295, %v11882, %v11881
    %v11884 = vrot.slane %v11864, 1
    %v11885 = vsel %vm297, %v11884, %v11883
    %11886 = vrot.lane.b32.xlu0 %v11857, 32
    %v11887 = vpop.permute.xlu0 %11886
    %11888 = vrot.lane.b32.xlu0 %v11885, 32
    %v11889 = vpop.permute.xlu0 %11888
    %v11892 = vsel %vm287, %v11380, %v11371
    %v11893 = vsel %vm289, %v11389, %v11892
    %v11894 = vsel %vm291, %v11398, %v11893
    %v11895 = vsel %vm293, %v11407, %v11894
    %v11896 = vsel %vm295, %v11416, %v11895
    %v11897 = vsel %vm297, %v11425, %v11896
    %11898 = vrot.lane.b32.xlu0 %v11362, 32
    %v11899 = vpop.permute.xlu0 %11898
    %11900 = vrot.lane.b32.xlu0 %v11897, 32
    %v11901 = vpop.permute.xlu0 %11900
    %v11904 = vsel %vm287, %v2044, %v2042
    %v11905 = vsel %vm289, %v2046, %v11904
    %v11906 = vsel %vm291, %v2048, %v11905
    %v11907 = vsel %vm293, %v2050, %v11906
    %v11908 = vsel %vm295, %v2052, %v11907
    %v11909 = vsel %vm297, %v2054, %v11908
    %11910 = vrot.lane.b32.xlu0 %v170, 64
    %v11911 = vpop.permute.xlu0 %11910
    %11912 = vrot.lane.b32.xlu0 %v11909, 64
    %v11913 = vpop.permute.xlu0 %11912
    %v11916 = vsel %vm186, %v11887, %v11899
    %v11917 = vsel %vm186, %v11889, %v11901
    %v11918 = vsel %vm2060, %v11916, %v11911
    %v11919 = vsel %vm2060, %v11917, %v11913
    %v11920 = vsel %vm2062, %v11918, 0.0
    %v11921 = vsel %vm2062, %v11919, 0.0
    %v11924 = vcombine.high %v11920, %v11920
    %v11926 = vunpack.c.l.s4 1966171168
    %v11927 = vunpack.c.0.s8 %v11926
    %v11928 = vlaneseq
    %v11929 = vshrl.u32 %v11928, 7
    %v11930 = vsub.s32 %v11927, %v11929
    %v11931 = vrot.slane %v11924, %v11930
    %v11932 = vcombine.high %v11931, %v11931
    %v11934 = vunpack.c.l.s4 1966171168
    %v11935 = vunpack.c.0.s8 %v11934
    %v11936 = vlaneseq
    %v11937 = vshrl.u32 %v11936, 7
    %v11938 = vsub.s32 %v11935, %v11937
    %v11939 = vrot.slane %v11932, %v11938
    %v11940 = vcombine.high %v11939, %v11939
    %v11941 = vcombine.high %v11921, %v11921
    %v11943 = vunpack.c.l.s4 1966171168
    %v11944 = vunpack.c.0.s8 %v11943
    %v11945 = vlaneseq
    %v11946 = vshrl.u32 %v11945, 7
    %v11947 = vsub.s32 %v11944, %v11946
    %v11948 = vrot.slane %v11921, %v11947
    %v11950 = vunpack.c.l.s4 1966171168
    %v11951 = vunpack.c.0.s8 %v11950
    %v11952 = vlaneseq
    %v11953 = vshrl.u32 %v11952, 7
    %v11954 = vsub.s32 %v11951, %v11953
    %v11955 = vrot.slane %v11941, %v11954
    %v11956 = vcombine.high %v11948, %v11948
    %v11957 = vcombine.high %v11955, %v11955
    %v11959 = vunpack.c.l.s4 1966171168
    %v11960 = vunpack.c.0.s8 %v11959
    %v11961 = vlaneseq
    %v11962 = vshrl.u32 %v11961, 7
    %v11963 = vsub.s32 %v11960, %v11962
    %v11964 = vrot.slane %v11948, %v11963
    %v11966 = vunpack.c.l.s4 1966171168
    %v11967 = vunpack.c.0.s8 %v11966
    %v11968 = vlaneseq
    %v11969 = vshrl.u32 %v11968, 7
    %v11970 = vsub.s32 %v11967, %v11969
    %v11971 = vrot.slane %v11955, %v11970
    %v11973 = vunpack.c.l.s4 1966171168
    %v11974 = vunpack.c.0.s8 %v11973
    %v11975 = vlaneseq
    %v11976 = vshrl.u32 %v11975, 7
    %v11977 = vsub.s32 %v11974, %v11976
    %v11978 = vrot.slane %v11956, %v11977
    %v11980 = vunpack.c.l.s4 1966171168
    %v11981 = vunpack.c.0.s8 %v11980
    %v11982 = vlaneseq
    %v11983 = vshrl.u32 %v11982, 7
    %v11984 = vsub.s32 %v11981, %v11983
    %v11985 = vrot.slane %v11957, %v11984
    %v11986 = vcombine.high %v11964, %v11964
    %v11987 = vcombine.high %v11971, %v11971
    %v11988 = vcombine.high %v11978, %v11978
    %11997 = vst [vmem:[#allocation2 + $0x7] sm:$0x1] %v11940
    %11998 = vst [vmem:[#allocation2 + $0xf] sm:$0x1] %v11964
    %11999 = vst [vmem:[#allocation2 + $0x17] sm:$0x1] %v11978
    %12000 = vst [vmem:[#allocation2 + $0x1f] sm:$0x1] %v11986
    %12001 = vst [vmem:[#allocation2 + $0x27] sm:$0x1] %v11988
    %12002 = vst [vmem:[#allocation2 + $0x2f] sm:$0x1] %v11971
    %12003 = vst [vmem:[#allocation2 + $0x37] sm:$0x1] %v11985
    %12004 = vst [vmem:[#allocation2 + $0x3f] sm:$0x1] %v11987
    %v12005 = vlaneseq
    %v12006 = vshrl.u32 %v12005, 7
    %v12007 = vsub.s32 %v1031, %v12006
    %v12008 = vrot.slane %v11261, %v12007
    %v12009 = vlaneseq
    %v12010 = vshrl.u32 %v12009, 7
    %v12011 = vsub.s32 %v1036, %v12010
    %v12012 = vrot.slane %v11266, %v12011
    %v12013 = vsel %vm1041, %v12012, %v12008
    %v12014 = vlaneseq
    %v12015 = vshrl.u32 %v12014, 7
    %v12016 = vsub.s32 %v1031, %v12015
    %v12017 = vrot.slane %v11271, %v12016
    %v12018 = vlaneseq
    %v12019 = vshrl.u32 %v12018, 7
    %v12020 = vsub.s32 %v1036, %v12019
    %v12021 = vrot.slane %v11276, %v12020
    %v12022 = vsel %vm1041, %v12021, %v12017
    %v12023 = vlaneseq
    %v12024 = vshrl.u32 %v12023, 7
    %v12025 = vsub.s32 %v1031, %v12024
    %v12026 = vrot.slane %v11281, %v12025
    %v12027 = vlaneseq
    %v12028 = vshrl.u32 %v12027, 7
    %v12029 = vsub.s32 %v1036, %v12028
    %v12030 = vrot.slane %v11286, %v12029
    %v12031 = vsel %vm1041, %v12030, %v12026
    %v12032 = vlaneseq
    %v12033 = vshrl.u32 %v12032, 7
    %v12034 = vsub.s32 %v1031, %v12033
    %v12035 = vrot.slane %v11291, %v12034
    %v12036 = vlaneseq
    %v12037 = vshrl.u32 %v12036, 7
    %v12038 = vsub.s32 %v1036, %v12037
    %v12039 = vrot.slane %v11296, %v12038
    %v12040 = vsel %vm1041, %v12039, %v12035
    %v12041 = vlaneseq
    %v12042 = vshrl.u32 %v12041, 7
    %v12043 = vsub.s32 %v1031, %v12042
    %v12044 = vrot.slane %v11301, %v12043
    %v12045 = vlaneseq
    %v12046 = vshrl.u32 %v12045, 7
    %v12047 = vsub.s32 %v1036, %v12046
    %v12048 = vrot.slane %v11306, %v12047
    %v12049 = vsel %vm1041, %v12048, %v12044
    %v12050 = vlaneseq
    %v12051 = vshrl.u32 %v12050, 7
    %v12052 = vsub.s32 %v1031, %v12051
    %v12053 = vrot.slane %v11311, %v12052
    %v12054 = vlaneseq
    %v12055 = vshrl.u32 %v12054, 7
    %v12056 = vsub.s32 %v1036, %v12055
    %v12057 = vrot.slane %v11316, %v12056
    %v12058 = vsel %vm1041, %v12057, %v12053
    %v12059 = vlaneseq
    %v12060 = vshrl.u32 %v12059, 7
    %v12061 = vsub.s32 %v1031, %v12060
    %v12062 = vrot.slane %v11321, %v12061
    %v12063 = vlaneseq
    %v12064 = vshrl.u32 %v12063, 7
    %v12065 = vsub.s32 %v1036, %v12064
    %v12066 = vrot.slane %v11326, %v12065
    %v12067 = vsel %vm1041, %v12066, %v12062
    %v12068 = vlaneseq
    %v12069 = vshrl.u32 %v12068, 7
    %v12070 = vsub.s32 %v1031, %v12069
    %v12071 = vrot.slane %v11331, %v12070
    %v12072 = vlaneseq
    %v12073 = vshrl.u32 %v12072, 7
    %v12074 = vsub.s32 %v1036, %v12073
    %v12075 = vrot.slane %v11336, %v12074
    %v12076 = vsel %vm1041, %v12075, %v12071
    %12085 = vst.msk [vmem:[#allocation18 + $0x7] sm:$0x1] %vm2210, %v12013
    %12086 = vst.msk [vmem:[#allocation18 + $0xf] sm:$0x1] %vm2210, %v12022
    %12087 = vst.msk [vmem:[#allocation18 + $0x17] sm:$0x1] %vm2210, %v12031
    %12088 = vst.msk [vmem:[#allocation18 + $0x1f] sm:$0x1] %vm2210, %v12040
    %12089 = vst.msk [vmem:[#allocation18 + $0x27] sm:$0x1] %vm2210, %v12049
    %12090 = vst.msk [vmem:[#allocation18 + $0x2f] sm:$0x1] %vm2210, %v12058
    %12091 = vst.msk [vmem:[#allocation18 + $0x37] sm:$0x1] %vm2210, %v12067
    %12092 = vst.msk [vmem:[#allocation18 + $0x3f] sm:$0x1] %vm2210, %v12076
    %v12093 = vld [vmem:[#allocation2] sm:$0xff]
    %v12094 = vld [vmem:[#allocation2 + $0x8] sm:$0xff]
    %v12095 = vld [vmem:[#allocation2 + $0x10] sm:$0xff]
    %v12096 = vld [vmem:[#allocation2 + $0x18] sm:$0xff]
    %v12097 = vld [vmem:[#allocation2 + $0x20] sm:$0xff]
    %v12098 = vld [vmem:[#allocation2 + $0x28] sm:$0xff]
    %v12099 = vld [vmem:[#allocation2 + $0x30] sm:$0xff]
    %v12100 = vld [vmem:[#allocation2 + $0x38] sm:$0xff]
    %v12101 = vld [vmem:[#allocation15] sm:$0xff]
    %v12102 = vld [vmem:[#allocation15 + $0x8] sm:$0xff]
    %v12103 = vld [vmem:[#allocation15 + $0x10] sm:$0xff]
    %v12104 = vld [vmem:[#allocation15 + $0x18] sm:$0xff]
    %v12105 = vld [vmem:[#allocation15 + $0x20] sm:$0xff]
    %v12106 = vld [vmem:[#allocation15 + $0x28] sm:$0xff]
    %v12107 = vld [vmem:[#allocation15 + $0x30] sm:$0xff]
    %v12108 = vld [vmem:[#allocation15 + $0x38] sm:$0xff]
    %v12109 = vld [vmem:[#allocation15 + $0x40] sm:$0xff]
    %v12110 = vld [vmem:[#allocation15 + $0x48] sm:$0xff]
    %v12111 = vld [vmem:[#allocation15 + $0x50] sm:$0xff]
    %v12112 = vld [vmem:[#allocation15 + $0x58] sm:$0xff]
    %v12113 = vld [vmem:[#allocation15 + $0x60] sm:$0xff]
    %v12114 = vld [vmem:[#allocation15 + $0x68] sm:$0xff]
    %v12115 = vld [vmem:[#allocation15 + $0x70] sm:$0xff]
    %v12116 = vld [vmem:[#allocation15 + $0x78] sm:$0xff]
    %v12117 = vld [vmem:[%s11] sm:$0x1]
    %v12119 = vlaneseq
    %v12120 = vshrl.u32 %v12119, 7
    %v12121 = vsub.s32 0, %v12120
    %v12122 = vrot.slane %v12117, %v12121
    %12124 = vmatprep.subr.mxu0 0.0
    %12125 = vmatpush1.msra.mxu0 %v12116
    %12126 = vmatprep.subr.mxu0 0.0
    %12127 = vmatpush1.msra.mxu0 %v12115
    %12128 = vmatprep.subr.mxu0 0.0
    %12129 = vmatpush1.msra.mxu0 %v12114
    %12130 = vmatprep.subr.mxu0 0.0
    %12131 = vmatpush1.msra.mxu0 %v12113
    %12132 = vmatprep.subr.mxu0 0.0
    %12133 = vmatpush1.msra.mxu0 %v12112
    %12134 = vmatprep.subr.mxu0 0.0
    %12135 = vmatpush1.msra.mxu0 %v12111
    %12136 = vmatprep.subr.mxu0 0.0
    %12137 = vmatpush1.msra.mxu0 %v12110
    %12138 = vmatprep.subr.mxu0 0.0
    %12139 = vmatpush1.msra.mxu0 %v12109
    %12140 = vmatprep.subr.mxu0 0.0
    %12141 = vmatpush1.msra.mxu0 %v12108
    %12142 = vmatprep.subr.mxu0 0.0
    %12143 = vmatpush1.msra.mxu0 %v12107
    %12144 = vmatprep.subr.mxu0 0.0
    %12145 = vmatpush1.msra.mxu0 %v12106
    %12146 = vmatprep.subr.mxu0 0.0
    %12147 = vmatpush1.msra.mxu0 %v12105
    %12148 = vmatprep.subr.mxu0 0.0
    %12149 = vmatpush1.msra.mxu0 %v12104
    %12150 = vmatprep.subr.mxu0 0.0
    %12151 = vmatpush1.msra.mxu0 %v12103
    %12152 = vmatprep.subr.mxu0 0.0
    %12153 = vmatpush1.msra.mxu0 %v12102
    %12154 = vmatprep.subr.mxu0 0.0
    %12155 = vmatpush1.msra.mxu0 %v12101
    %12156 = vmatprep.subr.mxu0 0.0
    %12157 = vmatpush2.msra.mxu0 0.0
    %12158 = vmatprep.subr.mxu0 0.0
    %12159 = vmatpush2.msra.mxu0 0.0
    %12160 = vmatprep.subr.mxu0 0.0
    %12161 = vmatpush2.msra.mxu0 0.0
    %12162 = vmatprep.subr.mxu0 0.0
    %12163 = vmatpush2.msra.mxu0 0.0
    %12164 = vmatprep.subr.mxu0 0.0
    %12165 = vmatpush2.msra.mxu0 0.0
    %12166 = vmatprep.subr.mxu0 0.0
    %12167 = vmatpush2.msra.mxu0 0.0
    %12168 = vmatprep.subr.mxu0 0.0
    %12169 = vmatpush2.msra.mxu0 0.0
    %12170 = vmatprep.subr.mxu0 0.0
    %12171 = vmatpush2.msra.mxu0 0.0
    %12172 = vmatprep.subr.mxu0 0.0
    %12173 = vmatpush2.msra.mxu0 0.0
    %12174 = vmatprep.subr.mxu0 0.0
    %12175 = vmatpush2.msra.mxu0 0.0
    %12176 = vmatprep.subr.mxu0 0.0
    %12177 = vmatpush2.msra.mxu0 0.0
    %12178 = vmatprep.subr.mxu0 0.0
    %12179 = vmatpush2.msra.mxu0 0.0
    %12180 = vmatprep.subr.mxu0 0.0
    %12181 = vmatpush2.msra.mxu0 0.0
    %12182 = vmatprep.subr.mxu0 0.0
    %12183 = vmatpush2.msra.mxu0 0.0
    %12184 = vmatprep.subr.mxu0 0.0
    %12185 = vmatpush2.msra.mxu0 0.0
    %12186 = vmatprep.subr.mxu0 0.0
    %12187 = vmatpush2.msra.mxu0 0.0
    %12188 = vmatprep.mubr.f32.mxu0 0.0
    %12189 = vmatmul.mubr.f32.gmra.mxu0 %v12093
    %v12190 = vpop.f32.mrf.mxu0
    %v12191 = vadd.f32 %v12122, %v12190
    %v12192 = vpop.f32.mrf.mxu0
    %12193 = vmatprep.mubr.f32.mxu0 0.0
    %12194 = vmatmul.mubr.f32.gmra.mxu0 %v12094
    %v12195 = vpop.f32.mrf.mxu0
    %v12196 = vadd.f32 %v12122, %v12195
    %v12197 = vpop.f32.mrf.mxu0
    %12198 = vmatprep.mubr.f32.mxu0 0.0
    %12199 = vmatmul.mubr.f32.gmra.mxu0 %v12095
    %v12200 = vpop.f32.mrf.mxu0
    %v12201 = vadd.f32 %v12122, %v12200
    %v12202 = vpop.f32.mrf.mxu0
    %12203 = vmatprep.mubr.f32.mxu0 0.0
    %12204 = vmatmul.mubr.f32.gmra.mxu0 %v12096
    %v12205 = vpop.f32.mrf.mxu0
    %v12206 = vadd.f32 %v12122, %v12205
    %v12207 = vpop.f32.mrf.mxu0
    %12208 = vmatprep.mubr.f32.mxu0 0.0
    %12209 = vmatmul.mubr.f32.gmra.mxu0 %v12097
    %v12210 = vpop.f32.mrf.mxu0
    %v12211 = vadd.f32 %v12122, %v12210
    %v12212 = vpop.f32.mrf.mxu0
    %12213 = vmatprep.mubr.f32.mxu0 0.0
    %12214 = vmatmul.mubr.f32.gmra.mxu0 %v12098
    %v12215 = vpop.f32.mrf.mxu0
    %v12216 = vadd.f32 %v12122, %v12215
    %v12217 = vpop.f32.mrf.mxu0
    %12218 = vmatprep.mubr.f32.mxu0 0.0
    %12219 = vmatmul.mubr.f32.gmra.mxu0 %v12099
    %v12220 = vpop.f32.mrf.mxu0
    %v12221 = vadd.f32 %v12122, %v12220
    %v12222 = vpop.f32.mrf.mxu0
    %12223 = vmatprep.mubr.f32.mxu0 0.0
    %12224 = vmatmul.mubr.f32.gmra.mxu0 %v12100
    %v12225 = vpop.f32.mrf.mxu0
    %v12226 = vadd.f32 %v12122, %v12225
    %v12227 = vpop.f32.mrf.mxu0
    %12228 = vdwg.mxu0
    %12229 = vst [vmem:[#allocation17] sm:$0xff] %v12191
    %12230 = vst [vmem:[#allocation17 + $0x8] sm:$0xff] %v12196
    %12231 = vst [vmem:[#allocation17 + $0x10] sm:$0xff] %v12201
    %12232 = vst [vmem:[#allocation17 + $0x18] sm:$0xff] %v12206
    %12233 = vst [vmem:[#allocation17 + $0x20] sm:$0xff] %v12211
    %12234 = vst [vmem:[#allocation17 + $0x28] sm:$0xff] %v12216
    %12235 = vst [vmem:[#allocation17 + $0x30] sm:$0xff] %v12221
    %12236 = vst [vmem:[#allocation17 + $0x38] sm:$0xff] %v12226
    // Predicated region
    $region82: #{tpu_custom_call.1} parent=1 // pred_check
      _
    $region83: #{tpu_custom_call.1} parent=1 // pred_check_branch
      %12238 = sbr.rel (0) target = $region85
    $region84: #{tpu_custom_call.1} parent=1 // pred_region
      %s12240 = ssub.s32 1024, 1024
      %12241 = vsyncadd [#allocation5], %s12240
      %s12242 = sshll.u32 [#allocation17], 4
      %s12243 = int_to_ptr.vmem [resolvable:$true] %s12242
      %12248 = dma.vmem_to_hbm [thread:$0]  %s12243, 1024, %s12, [#allocation5], 128, 128, 8
    $region85: #{tpu_custom_call.1} parent=1 // pred_fallthru
      _
    // Predicated region
    $region86: #{tpu_custom_call.1} parent=1 // pred_check
      _
    $region87: #{tpu_custom_call.1} parent=1 // pred_check_branch
      %12250 = sbr.rel (0) target = $region89
    $region88: #{tpu_custom_call.1} parent=1 // pred_region
      %s12252 = ssub.s32 1024, 1024
      %12253 = vsyncadd [#allocation19], %s12252
      %s12254 = sshll.u32 [#allocation18], 4
      %s12255 = int_to_ptr.vmem [resolvable:$true] %s12254
      %12260 = dma.vmem_to_hbm [thread:$0]  %s12255, 1024, %s13, [#allocation19], 128, 128, 8
    $region89: #{tpu_custom_call.1} parent=1 // pred_fallthru
      _
    // Predicated region
    $region90: #{tpu_custom_call.1} parent=1 // pred_check
      _
    $region91: #{tpu_custom_call.1} parent=1 // pred_check_branch
      %12262 = sbr.rel (0) target = $region93
    $region92: #{tpu_custom_call.1} parent=1 // pred_region
      %12263 = dma.done [#allocation5], 1024
    $region93: #{tpu_custom_call.1} parent=1 // pred_fallthru
      _
    // Predicated region
    $region94: #{tpu_custom_call.1} parent=1 // pred_check
      _
    $region95: #{tpu_custom_call.1} parent=1 // pred_check_branch
      %12265 = sbr.rel (0) target = $region97
    $region96: #{tpu_custom_call.1} parent=1 // pred_region
      %12266 = dma.done [#allocation19], 1024
    $region97: #{tpu_custom_call.1} parent=1 // pred_fallthru
      _
    %12267 = vsyncpa [#allocation4], 1
    %12268 = vsyncpa [#allocation7], 1
    %12269 = vsyncpa [#allocation10], 1
    %12270 = vsyncpa [#allocation13], 1
    %12271 = vsyncpa [#allocation16], 1
    %12272 = vsyncpa [#allocation5], 1
    %12273 = vsyncpa [#allocation19], 1

</llo_original>
